<compile_context>
chip_gen: v7x
topology: tpu7x:2x2x1
jax: 0.10.0
libtpu: 0.0.40
codegen_flags: <defaults>
</compile_context>

<pallas_src>
import functools

import jax
import jax.numpy as jnp
from jax.experimental import pallas as pl
from jax.experimental.pallas import tpu as pltpu

NEG_SLOPE = 0.2       # PyG GATConv default LeakyReLU negative slope
MASK_VAL = -1e9       # additive attention bias for non-edges
LANE = 128
VMEM_LIMIT = 32 * 1024 * 1024


def _round_up(v, m):
    return ((v + m - 1) // m) * m


def _block_diag(att):
    """[heads, f] per-head attention vectors -> [heads*f, heads] block-diagonal."""
    heads, f = att.shape
    eye = jnp.eye(heads, dtype=att.dtype)
    return (att[:, :, None] * eye[:, None, :]).reshape(heads * f, heads)


# --------------------------------------------------------------- projection
def _project_kernel(x_ref, w_ref, o_ref):
    o_ref[...] = jnp.dot(x_ref[...], w_ref[...],
                         preferred_element_type=jnp.float32)


def _project(x, w, tile):
    """Row-tiled bf16 x bf16 -> f32 matmul (W resident)."""
    n, k = x.shape
    f = w.shape[1]
    return pl.pallas_call(
        _project_kernel,
        out_shape=jax.ShapeDtypeStruct((n, f), jnp.float32),
        grid=(n // tile,),
        in_specs=[pl.BlockSpec((tile, k), lambda i: (i, 0)),   # x rows, blocked
                  pl.BlockSpec((k, f), lambda i: (0, 0))],     # W_aug, resident
        out_specs=pl.BlockSpec((tile, f), lambda i: (i, 0)),
        compiler_params=pltpu.CompilerParams(
            dimension_semantics=("parallel",),
            vmem_limit_bytes=VMEM_LIMIT),
    )(x, w)


# ------------------------------------------------------------ GAT attention
def _gat_attention_kernel(mask_ref, asrcT_ref, adst_ref, haug_ref, b_ref,
                          out_ref, *, heads, fh, den_col, nclass, mode,
                          exp_dtype):
    """One destination-node tile of a GATConv layer.

    mask_ref : [T, Np]       int8 {0,1} adjacency (+ self-loop) mask
    asrcT_ref: [H, Np]       f32 per-head source attention logits (resident)
    adst_ref : [T, H]        f32 per-head destination attention logits (blocked)
    haug_ref : [H, Np, R]    bf16 aggregation RHS (features + ones column, resident)
    b_ref    : [1, C]        f32 layer bias
    out_ref  : [T, C]
    """
    # additive bias: mask==1 -> 0 , mask==0 -> -1e9  (one convert + mul per tile)
    bias = (mask_ref[...].astype(jnp.float32) - 1.0) * (-MASK_VAL)   # [T, Np]
    a_dst = adst_ref[...]                                            # [T, H]
    a_srcT = asrcT_ref[...]                                          # [H, Np]

    # TODO(synk): for very large N, stream the source axis in [T, Nk] chunks
    # with an online softmax instead of materializing full [T, Np] logits.
    outs = []
    for hd in range(heads):                                          # static unroll
        # e[i, j] = a_dst[i] + a_src[j]; LeakyReLU(0.2); additive mask bias
        e = a_dst[:, hd:hd + 1] + a_srcT[hd:hd + 1, :]               # [T, Np]
        e = jnp.maximum(e, NEG_SLOPE * e) + bias
        m = jnp.max(e, axis=-1, keepdims=True)
        p = jnp.exp((e - m).astype(exp_dtype)).astype(jnp.bfloat16)  # [T, Np]

        # Aggregation with fused softmax denominator: RHS column `den_col` is
        # all ones, so res[:, den_col] = sum_j p[i, j].  bf16 operands, f32 acc.
        res = jnp.dot(p, haug_ref[hd], preferred_element_type=jnp.float32)
        inv = pl.reciprocal(res[:, den_col:den_col + 1], approx=True)

        if mode == "relu":
            outs.append(res[:, :fh] * inv)                           # [T, fh]
        else:
            # heads == 1 here: bias, mask the lane padding, log_softmax.
            y = res * inv + b_ref[...]
            lane = jax.lax.broadcasted_iota(jnp.int32, y.shape, 1)
            y = jnp.where(lane < nclass, y, -1e30)
            mx = jnp.max(y, axis=-1, keepdims=True)
            lse = mx + jnp.log(jnp.sum(jnp.exp(y - mx), axis=-1, keepdims=True))
            out_ref[...] = (y - lse).astype(out_ref.dtype)

    if mode == "relu":
        # single full-width (128-lane) store per tile
        full = jnp.concatenate(outs, axis=-1) + b_ref[...]
        out_ref[...] = jnp.maximum(full, 0.0).astype(out_ref.dtype)


def _gat_attention(mask, a_srcT, a_dst, h_aug, b, *, tile, mode, den_col,
                   nclass, out_dtype, exp_dtype):
    heads, n_pad, rhs = h_aug.shape
    out_cols = b.shape[1]
    kernel = functools.partial(
        _gat_attention_kernel, heads=heads, fh=rhs - 1, den_col=den_col,
        nclass=nclass, mode=mode, exp_dtype=exp_dtype)
    return pl.pallas_call(
        kernel,
        out_shape=jax.ShapeDtypeStruct((n_pad, out_cols), out_dtype),
        grid=(n_pad // tile,),
        in_specs=[
            pl.BlockSpec((tile, n_pad), lambda i: (i, 0)),          # int8 mask tile
            pl.BlockSpec((heads, n_pad), lambda i: (0, 0)),         # a_src^T (resident)
            pl.BlockSpec((tile, heads), lambda i: (i, 0)),          # a_dst rows
            pl.BlockSpec((heads, n_pad, rhs), lambda i: (0, 0, 0)), # bf16 agg RHS
            pl.BlockSpec((1, out_cols), lambda i: (0, 0)),          # layer bias
        ],
        out_specs=pl.BlockSpec((tile, out_cols), lambda i: (i, 0)),
        compiler_params=pltpu.CompilerParams(
            dimension_semantics=("parallel",),
            vmem_limit_bytes=VMEM_LIMIT),
    )(mask, a_srcT, a_dst, h_aug, b)


# ------------------------------------------------------------------ wrapper
def netgat_forward(x, adj, params):
    n = x.shape[0]
    heads, nhid = params["att_src1"].shape
    nclass = params["w2"].shape[1]
    hf1 = heads * nhid
    n_pad = _round_up(n, LANE)
    tile = LANE

    # bf16 exp only where the VPU/EUP have a bf16 path (v6e / v7x); f32 on v2-v5.
    kind = jax.devices()[0].device_kind.lower()
    exp_dtype = (jnp.float32 if any(v in kind for v in ("v2", "v3", "v4", "v5"))
                 else jnp.bfloat16)

    # ---- one-time operand prep (wrapper side) ----
    if n_pad != n:
        x = jnp.pad(x, ((0, n_pad - n), (0, 0)))
        adj = jnp.pad(adj, ((0, n_pad - n), (0, n_pad - n)))
    mask = ((adj != 0) | jnp.eye(n_pad, dtype=bool)).astype(jnp.int8)

    # layer-1 augmented weight: one bf16 matmul produces h, a_src and a_dst.
    w1_aug = jnp.concatenate(
        [params["w1"],
         params["w1"] @ _block_diag(params["att_src1"]),
         params["w1"] @ _block_diag(params["att_dst1"])], axis=1)     # [nfeat, HF+2H]

    proj1 = _project(x.astype(jnp.bfloat16), w1_aug.astype(jnp.bfloat16), tile)
    h1 = proj1[:, :hf1]                                               # [Np, HF] f32
    a_src1T = proj1[:, hf1:hf1 + heads].T                             # [H, Np]
    a_dst1 = proj1[:, hf1 + heads:hf1 + 2 * heads]                    # [Np, H]
    h_aug1 = jnp.concatenate(
        [h1.reshape(n_pad, heads, nhid).transpose(1, 0, 2),
         jnp.ones((heads, n_pad, 1), jnp.float32)],
        axis=-1).astype(jnp.bfloat16)                                 # [H, Np, F+1]

    # ---- layer 1: GATConv(nfeat -> nhid, heads=8, concat=True) + ReLU ----
    x1 = _gat_attention(mask, a_src1T, a_dst1, h_aug1, params["b1"],
                        tile=tile, mode="relu", den_col=nhid, nclass=0,
                        out_dtype=jnp.bfloat16, exp_dtype=exp_dtype)  # [Np, HF] bf16

    # TODO(synk): F.dropout is the identity in eval mode; training-mode RNG
    # dropout (pltpu.prng_*) is intentionally not applied here.

    # ---- layer 2: GATConv(heads*nhid -> nclass, heads=1) + log_softmax ----
    w2_aug = jnp.zeros((hf1, LANE + 2), jnp.float32)
    w2_aug = w2_aug.at[:, :nclass].set(params["w2"])
    w2_aug = w2_aug.at[:, LANE].set((params["w2"] @ params["att_src2"].T)[:, 0])
    w2_aug = w2_aug.at[:, LANE + 1].set((params["w2"] @ params["att_dst2"].T)[:, 0])

    proj2 = _project(x1, w2_aug.astype(jnp.bfloat16), tile)           # [Np, 130] f32
    # cols nclass..127 of h2 are exact zeros -> put the ones column in the padding
    h_aug2 = proj2[:, :LANE].at[:, nclass].set(1.0).astype(jnp.bfloat16)[None]
    a_src2T = proj2[:, LANE:LANE + 1].T                               # [1, Np]
    a_dst2 = proj2[:, LANE + 1:LANE + 2]                              # [Np, 1]
    b2p = jnp.zeros((1, LANE), jnp.float32).at[:, :nclass].set(params["b2"])

    out = _gat_attention(mask, a_src2T, a_dst2, h_aug2, b2p,
                         tile=tile, mode="log_softmax", den_col=nclass,
                         nclass=nclass, out_dtype=jnp.float32,
                         exp_dtype=exp_dtype)                         # [Np, 128]
    return out[:n, :nclass]


# ---------------------------------------------------------------- reference
def netgat_reference(x, adj, params):
    """Pure-JAX reference mirroring the kernel's mixed-precision recipe."""
    n = x.shape[0]
    heads, nhid = params["att_src1"].shape
    nclass = params["w2"].shape[1]
    mask = (adj != 0) | jnp.eye(n, dtype=bool)

    def proj(a, w):
        return jnp.dot(a.astype(jnp.bfloat16), w.astype(jnp.bfloat16),
                       preferred_element_type=jnp.float32)

    def gat(h, att_src, att_dst):          # h: [N, H, F]
        a_s = jnp.einsum("nhf,hf->nh", h, att_src)
        a_d = jnp.einsum("nhf,hf->nh", h, att_dst)
        e = a_d[:, None, :] + a_s[None, :, :]                  # [Ndst, Nsrc, H]
        e = jnp.where(e > 0, e, NEG_SLOPE * e)
        e = jnp.where(mask[:, :, None], e, MASK_VAL)
        e = e - jnp.max(e, axis=1, keepdims=True)
        p16 = jnp.exp(e).astype(jnp.bfloat16)
        num = jnp.einsum("ijh,jhf->ihf", p16, h.astype(jnp.bfloat16),
                         preferred_element_type=jnp.float32)
        den = jnp.sum(p16.astype(jnp.float32), axis=1)
        return num / den[:, :, None]

    h1 = proj(x, params["w1"]).reshape(n, heads, nhid)
    x1 = gat(h1, params["att_src1"], params["att_dst1"]).reshape(n, heads * nhid)
    x1 = jnp.maximum(x1 + params["b1"], 0.0)
    x1 = x1.astype(jnp.bfloat16).astype(jnp.float32)           # mirror bf16 hand-off
    h2 = proj(x1, params["w2"]).reshape(n, 1, nclass)
    y = gat(h2, params["att_src2"], params["att_dst2"]).reshape(n, nclass)
    return jax.nn.log_softmax(y + params["b2"], axis=1)


def init_params(key, nfeat, nhid, nclass, heads):
    """Deterministic glorot-ish init matching GATConv parameter shapes."""
    ks = jax.random.split(key, 8)

    def glorot(k, shape):
        fan_in = shape[0] if len(shape) > 1 else shape[-1]
        fan_out = shape[-1]
        scale = jnp.sqrt(6.0 / (fan_in + fan_out))
        return jax.random.uniform(k, shape, jnp.float32, -scale, scale)

    return {
        "w1":       glorot(ks[0], (nfeat, heads * nhid)),
        "att_src1": glorot(ks[1], (heads, nhid)),
        "att_dst1": glorot(ks[2], (heads, nhid)),
        "b1":       jnp.zeros((1, heads * nhid), jnp.float32),
        "w2":       glorot(ks[3], (heads * nhid, nclass)),
        "att_src2": glorot(ks[4], (1, nclass)),
        "att_dst2": glorot(ks[5], (1, nclass)),
        "b2":       jnp.zeros((1, nclass), jnp.float32),
    }


if __name__ == "__main__":
    N, NFEAT, NHID, NCLASS, HEADS = 256, 32, 16, 8, 8

    key = jax.random.PRNGKey(0)
    k_x, k_a, k_p = jax.random.split(key, 3)

    x = jax.random.normal(k_x, (N, NFEAT), dtype=jnp.float32)
    # random sparse symmetric adjacency (self-loops added via the mask prep)
    a = (jax.random.uniform(k_a, (N, N)) < 0.05).astype(jnp.float32)
    adj = jnp.clip(a + a.T, 0.0, 1.0)

    params = init_params(k_p, NFEAT, NHID, NCLASS, HEADS)

    out = jax.jit(netgat_forward)(x, adj, params)
    out = jax.block_until_ready(out)
    ref = netgat_reference(x, adj, params)

    assert out.shape == (N, NCLASS)
    assert bool(jnp.all(jnp.isfinite(out)))
    # rows of log_softmax must (log-)sum to ~0
    assert bool(jnp.allclose(jnp.sum(jnp.exp(out), axis=1), 1.0, atol=1e-4))
    err = float(jnp.max(jnp.abs(out - ref)))
    assert err < 1e-1, f"kernel deviates from reference: max abs err {err}"

    print("KERNEL_OK")
</pallas_src>

<mosaic_0001>
module attributes {stable_mosaic.version = 11 : i64} {
  func.func @_project_kernel(%arg0: i32, %arg1: memref<128x32xbf16, #tpu.memory_space<vmem>>, %arg2: memref<32x144xbf16, #tpu.memory_space<vmem>>, %arg3: memref<128x144xf32, #tpu.memory_space<vmem>>) attributes {dimension_semantics = [#tpu.dimension_semantics<parallel>], iteration_bounds = array<i64: 2>, scalar_prefetch = 0 : i64, scratch_operands = 0 : i64, tpu.core_type = #tpu.core_type<tc>, window_params = [{transform_indices = @transform_0, window_bounds = array<i64: 128, 32>}, {pipeline_mode = #tpu.pipeline_mode<synchronous>, transform_indices = @transform_1, window_bounds = array<i64: 32, 144>}, {transform_indices = @transform_2, window_bounds = array<i64: 128, 144>}]} {
    %c0 = arith.constant 0 : index
    %c0_0 = arith.constant 0 : index
    %0 = vector.load %arg1[%c0, %c0_0] : memref<128x32xbf16, #tpu.memory_space<vmem>>, vector<128x32xbf16>
    %c0_1 = arith.constant 0 : index
    %c0_2 = arith.constant 0 : index
    %1 = vector.load %arg2[%c0_1, %c0_2] : memref<32x144xbf16, #tpu.memory_space<vmem>>, vector<32x144xbf16>
    %cst = arith.constant dense<0.000000e+00> : vector<128x144xf32>
    %2 = tpu.matmul %0, %1, %cst {dimension_numbers = #tpu.dot_dimension_numbers<[1], [0], [0], [1], [0, 0, 1, 1], [], []>} : vector<128x32xbf16>, vector<32x144xbf16>, vector<128x144xf32> -> vector<128x144xf32>
    %c0_3 = arith.constant 0 : index
    %c0_4 = arith.constant 0 : index
    %3 = vector.load %arg3[%c0_3, %c0_4] : memref<128x144xf32, #tpu.memory_space<vmem>>, vector<128x144xf32>
    tpu.vector_store %arg3[%c0_3, %c0_4], %2 {strides = array<i32>} : memref<128x144xf32, #tpu.memory_space<vmem>>, vector<128x144xf32>,
    return
  }
  func.func @transform_0(%arg0: i32) -> (i32, i32) {
    %c0_i32 = arith.constant 0 : i32
    %c0_i32_0 = arith.constant 0 : i32
    return %arg0, %c0_i32 : i32, i32
  }
  func.func @transform_1(%arg0: i32) -> (i32, i32) {
    %c0_i32 = arith.constant 0 : i32
    %c0_i32_0 = arith.constant 0 : i32
    %c0_i32_1 = arith.constant 0 : i32
    return %c0_i32, %c0_i32_0 : i32, i32
  }
  func.func @transform_2(%arg0: i32) -> (i32, i32) {
    %c0_i32 = arith.constant 0 : i32
    %c0_i32_0 = arith.constant 0 : i32
    return %arg0, %c0_i32 : i32, i32
  }
}

module attributes {stable_mosaic.version = 11 : i64} {
  func.func @_gat_attention_kernel(%arg0: i32, %arg1: memref<128x256xi8, #tpu.memory_space<vmem>>, %arg2: memref<8x256xf32, #tpu.memory_space<vmem>>, %arg3: memref<128x8xf32, #tpu.memory_space<vmem>>, %arg4: memref<8x256x17xbf16, #tpu.memory_space<vmem>>, %arg5: memref<1x128xf32, #tpu.memory_space<vmem>>, %arg6: memref<128x128xbf16, #tpu.memory_space<vmem>>) attributes {dimension_semantics = [#tpu.dimension_semantics<parallel>], iteration_bounds = array<i64: 2>, scalar_prefetch = 0 : i64, scratch_operands = 0 : i64, tpu.core_type = #tpu.core_type<tc>, window_params = [{transform_indices = @transform_0, window_bounds = array<i64: 128, 256>}, {pipeline_mode = #tpu.pipeline_mode<synchronous>, transform_indices = @transform_1, window_bounds = array<i64: 8, 256>}, {transform_indices = @transform_2, window_bounds = array<i64: 128, 8>}, {pipeline_mode = #tpu.pipeline_mode<synchronous>, transform_indices = @transform_3, window_bounds = array<i64: 8, 256, 17>}, {pipeline_mode = #tpu.pipeline_mode<synchronous>, transform_indices = @transform_4, window_bounds = array<i64: 1, 128>}, {transform_indices = @transform_5, window_bounds = array<i64: 128, 128>}]} {
    %c0 = arith.constant 0 : index
    %c0_0 = arith.constant 0 : index
    %0 = vector.load %arg1[%c0, %c0_0] : memref<128x256xi8, #tpu.memory_space<vmem>>, vector<128x256xi8>
    %1 = arith.sitofp %0 : vector<128x256xi8> to vector<128x256xf32>
    %cst = arith.constant 1.000000e+00 : f32
    %2 = vector.broadcast %cst : f32 to vector<128x256xf32>
    %3 = arith.subf %1, %2 : vector<128x256xf32>
    %cst_1 = arith.constant 1.000000e+09 : f32
    %4 = vector.broadcast %cst_1 : f32 to vector<128x256xf32>
    %5 = arith.mulf %3, %4 : vector<128x256xf32>
    %c0_2 = arith.constant 0 : index
    %c0_3 = arith.constant 0 : index
    %6 = vector.load %arg3[%c0_2, %c0_3] : memref<128x8xf32, #tpu.memory_space<vmem>>, vector<128x8xf32>
    %c0_4 = arith.constant 0 : index
    %c0_5 = arith.constant 0 : index
    %7 = vector.load %arg2[%c0_4, %c0_5] : memref<8x256xf32, #tpu.memory_space<vmem>>, vector<8x256xf32>
    %8 = vector.extract_strided_slice %6 {offsets = [0, 0], sizes = [128, 1], strides = [1, 1]} : vector<128x8xf32> to vector<128x1xf32>
    %9 = vector.extract_strided_slice %7 {offsets = [0, 0], sizes = [1, 256], strides = [1, 1]} : vector<8x256xf32> to vector<1x256xf32>
    %10 = vector.broadcast %8 : vector<128x1xf32> to vector<128x256xf32>
    %11 = vector.broadcast %9 : vector<1x256xf32> to vector<128x256xf32>
    %12 = arith.addf %10, %11 : vector<128x256xf32>
    %cst_6 = arith.constant 2.000000e-01 : f32
    %13 = vector.broadcast %cst_6 : f32 to vector<128x256xf32>
    %14 = arith.mulf %13, %12 : vector<128x256xf32>
    %15 = arith.maximumf %12, %14 : vector<128x256xf32>
    %16 = arith.addf %15, %5 : vector<128x256xf32>
    %cst_7 = arith.constant dense<0xFF800000> : vector<128xf32>
    %17 = vector.multi_reduction <maximumf>, %16, %cst_7 [1] : vector<128x256xf32> to vector<128xf32>
    %18 = vector.shape_cast %17 : vector<128xf32> to vector<128x1xf32>
    %19 = vector.broadcast %18 : vector<128x1xf32> to vector<128x256xf32>
    %20 = arith.subf %16, %19 : vector<128x256xf32>
    %21 = arith.truncf %20 : vector<128x256xf32> to vector<128x256xbf16>
    %22 = math.exp %21 : vector<128x256xbf16>
    %c0_8 = arith.constant 0 : index
    %c0_9 = arith.constant 0 : index
    %c0_10 = arith.constant 0 : index
    %23 = vector.load %arg4[%c0_8, %c0_9, %c0_10] : memref<8x256x17xbf16, #tpu.memory_space<vmem>>, vector<1x256x17xbf16>
    %24 = vector.shape_cast %23 : vector<1x256x17xbf16> to vector<256x17xbf16>
    %cst_11 = arith.constant dense<0.000000e+00> : vector<128x17xf32>
    %25 = tpu.matmul %22, %24, %cst_11 {dimension_numbers = #tpu.dot_dimension_numbers<[1], [0], [0], [1], [0, 0, 1, 1], [], []>} : vector<128x256xbf16>, vector<256x17xbf16>, vector<128x17xf32> -> vector<128x17xf32>
    %26 = vector.extract_strided_slice %25 {offsets = [0, 16], sizes = [128, 1], strides = [1, 1]} : vector<128x17xf32> to vector<128x1xf32>
    %27 = tpu.reciprocal %26 {approx = true} : vector<128x1xf32> -> vector<128x1xf32>
    %28 = vector.extract_strided_slice %25 {offsets = [0, 0], sizes = [128, 16], strides = [1, 1]} : vector<128x17xf32> to vector<128x16xf32>
    %29 = vector.broadcast %27 : vector<128x1xf32> to vector<128x16xf32>
    %30 = arith.mulf %28, %29 : vector<128x16xf32>
    %31 = vector.extract_strided_slice %6 {offsets = [0, 1], sizes = [128, 1], strides = [1, 1]} : vector<128x8xf32> to vector<128x1xf32>
    %32 = vector.extract_strided_slice %7 {offsets = [1, 0], sizes = [1, 256], strides = [1, 1]} : vector<8x256xf32> to vector<1x256xf32>
    %33 = vector.broadcast %31 : vector<128x1xf32> to vector<128x256xf32>
    %34 = vector.broadcast %32 : vector<1x256xf32> to vector<128x256xf32>
    %35 = arith.addf %33, %34 : vector<128x256xf32>
    %cst_12 = arith.constant 2.000000e-01 : f32
    %36 = vector.broadcast %cst_12 : f32 to vector<128x256xf32>
    %37 = arith.mulf %36, %35 : vector<128x256xf32>
    %38 = arith.maximumf %35, %37 : vector<128x256xf32>
    %39 = arith.addf %38, %5 : vector<128x256xf32>
    %cst_13 = arith.constant dense<0xFF800000> : vector<128xf32>
    %40 = vector.multi_reduction <maximumf>, %39, %cst_13 [1] : vector<128x256xf32> to vector<128xf32>
    %41 = vector.shape_cast %40 : vector<128xf32> to vector<128x1xf32>
    %42 = vector.broadcast %41 : vector<128x1xf32> to vector<128x256xf32>
    %43 = arith.subf %39, %42 : vector<128x256xf32>
    %44 = arith.truncf %43 : vector<128x256xf32> to vector<128x256xbf16>
    %45 = math.exp %44 : vector<128x256xbf16>
    %c1 = arith.constant 1 : index
    %c0_14 = arith.constant 0 : index
    %c0_15 = arith.constant 0 : index
    %46 = vector.load %arg4[%c1, %c0_14, %c0_15] : memref<8x256x17xbf16, #tpu.memory_space<vmem>>, vector<1x256x17xbf16>
    %47 = vector.shape_cast %46 : vector<1x256x17xbf16> to vector<256x17xbf16>
    %cst_16 = arith.constant dense<0.000000e+00> : vector<128x17xf32>
    %48 = tpu.matmul %45, %47, %cst_16 {dimension_numbers = #tpu.dot_dimension_numbers<[1], [0], [0], [1], [0, 0, 1, 1], [], []>} : vector<128x256xbf16>, vector<256x17xbf16>, vector<128x17xf32> -> vector<128x17xf32>
    %49 = vector.extract_strided_slice %48 {offsets = [0, 16], sizes = [128, 1], strides = [1, 1]} : vector<128x17xf32> to vector<128x1xf32>
    %50 = tpu.reciprocal %49 {approx = true} : vector<128x1xf32> -> vector<128x1xf32>
    %51 = vector.extract_strided_slice %48 {offsets = [0, 0], sizes = [128, 16], strides = [1, 1]} : vector<128x17xf32> to vector<128x16xf32>
    %52 = vector.broadcast %50 : vector<128x1xf32> to vector<128x16xf32>
    %53 = arith.mulf %51, %52 : vector<128x16xf32>
    %54 = vector.extract_strided_slice %6 {offsets = [0, 2], sizes = [128, 1], strides = [1, 1]} : vector<128x8xf32> to vector<128x1xf32>
    %55 = vector.extract_strided_slice %7 {offsets = [2, 0], sizes = [1, 256], strides = [1, 1]} : vector<8x256xf32> to vector<1x256xf32>
    %56 = vector.broadcast %54 : vector<128x1xf32> to vector<128x256xf32>
    %57 = vector.broadcast %55 : vector<1x256xf32> to vector<128x256xf32>
    %58 = arith.addf %56, %57 : vector<128x256xf32>
    %cst_17 = arith.constant 2.000000e-01 : f32
    %59 = vector.broadcast %cst_17 : f32 to vector<128x256xf32>
    %60 = arith.mulf %59, %58 : vector<128x256xf32>
    %61 = arith.maximumf %58, %60 : vector<128x256xf32>
    %62 = arith.addf %61, %5 : vector<128x256xf32>
    %cst_18 = arith.constant dense<0xFF800000> : vector<128xf32>
    %63 = vector.multi_reduction <maximumf>, %62, %cst_18 [1] : vector<128x256xf32> to vector<128xf32>
    %64 = vector.shape_cast %63 : vector<128xf32> to vector<128x1xf32>
    %65 = vector.broadcast %64 : vector<128x1xf32> to vector<128x256xf32>
    %66 = arith.subf %62, %65 : vector<128x256xf32>
    %67 = arith.truncf %66 : vector<128x256xf32> to vector<128x256xbf16>
    %68 = math.exp %67 : vector<128x256xbf16>
    %c2 = arith.constant 2 : index
    %c0_19 = arith.constant 0 : index
    %c0_20 = arith.constant 0 : index
    %69 = vector.load %arg4[%c2, %c0_19, %c0_20] : memref<8x256x17xbf16, #tpu.memory_space<vmem>>, vector<1x256x17xbf16>
    %70 = vector.shape_cast %69 : vector<1x256x17xbf16> to vector<256x17xbf16>
    %cst_21 = arith.constant dense<0.000000e+00> : vector<128x17xf32>
    %71 = tpu.matmul %68, %70, %cst_21 {dimension_numbers = #tpu.dot_dimension_numbers<[1], [0], [0], [1], [0, 0, 1, 1], [], []>} : vector<128x256xbf16>, vector<256x17xbf16>, vector<128x17xf32> -> vector<128x17xf32>
    %72 = vector.extract_strided_slice %71 {offsets = [0, 16], sizes = [128, 1], strides = [1, 1]} : vector<128x17xf32> to vector<128x1xf32>
    %73 = tpu.reciprocal %72 {approx = true} : vector<128x1xf32> -> vector<128x1xf32>
    %74 = vector.extract_strided_slice %71 {offsets = [0, 0], sizes = [128, 16], strides = [1, 1]} : vector<128x17xf32> to vector<128x16xf32>
    %75 = vector.broadcast %73 : vector<128x1xf32> to vector<128x16xf32>
    %76 = arith.mulf %74, %75 : vector<128x16xf32>
    %77 = vector.extract_strided_slice %6 {offsets = [0, 3], sizes = [128, 1], strides = [1, 1]} : vector<128x8xf32> to vector<128x1xf32>
    %78 = vector.extract_strided_slice %7 {offsets = [3, 0], sizes = [1, 256], strides = [1, 1]} : vector<8x256xf32> to vector<1x256xf32>
    %79 = vector.broadcast %77 : vector<128x1xf32> to vector<128x256xf32>
    %80 = vector.broadcast %78 : vector<1x256xf32> to vector<128x256xf32>
    %81 = arith.addf %79, %80 : vector<128x256xf32>
    %cst_22 = arith.constant 2.000000e-01 : f32
    %82 = vector.broadcast %cst_22 : f32 to vector<128x256xf32>
    %83 = arith.mulf %82, %81 : vector<128x256xf32>
    %84 = arith.maximumf %81, %83 : vector<128x256xf32>
    %85 = arith.addf %84, %5 : vector<128x256xf32>
    %cst_23 = arith.constant dense<0xFF800000> : vector<128xf32>
    %86 = vector.multi_reduction <maximumf>, %85, %cst_23 [1] : vector<128x256xf32> to vector<128xf32>
    %87 = vector.shape_cast %86 : vector<128xf32> to vector<128x1xf32>
    %88 = vector.broadcast %87 : vector<128x1xf32> to vector<128x256xf32>
    %89 = arith.subf %85, %88 : vector<128x256xf32>
    %90 = arith.truncf %89 : vector<128x256xf32> to vector<128x256xbf16>
    %91 = math.exp %90 : vector<128x256xbf16>
    %c3 = arith.constant 3 : index
    %c0_24 = arith.constant 0 : index
    %c0_25 = arith.constant 0 : index
    %92 = vector.load %arg4[%c3, %c0_24, %c0_25] : memref<8x256x17xbf16, #tpu.memory_space<vmem>>, vector<1x256x17xbf16>
    %93 = vector.shape_cast %92 : vector<1x256x17xbf16> to vector<256x17xbf16>
    %cst_26 = arith.constant dense<0.000000e+00> : vector<128x17xf32>
    %94 = tpu.matmul %91, %93, %cst_26 {dimension_numbers = #tpu.dot_dimension_numbers<[1], [0], [0], [1], [0, 0, 1, 1], [], []>} : vector<128x256xbf16>, vector<256x17xbf16>, vector<128x17xf32> -> vector<128x17xf32>
    %95 = vector.extract_strided_slice %94 {offsets = [0, 16], sizes = [128, 1], strides = [1, 1]} : vector<128x17xf32> to vector<128x1xf32>
    %96 = tpu.reciprocal %95 {approx = true} : vector<128x1xf32> -> vector<128x1xf32>
    %97 = vector.extract_strided_slice %94 {offsets = [0, 0], sizes = [128, 16], strides = [1, 1]} : vector<128x17xf32> to vector<128x16xf32>
    %98 = vector.broadcast %96 : vector<128x1xf32> to vector<128x16xf32>
    %99 = arith.mulf %97, %98 : vector<128x16xf32>
    %100 = vector.extract_strided_slice %6 {offsets = [0, 4], sizes = [128, 1], strides = [1, 1]} : vector<128x8xf32> to vector<128x1xf32>
    %101 = vector.extract_strided_slice %7 {offsets = [4, 0], sizes = [1, 256], strides = [1, 1]} : vector<8x256xf32> to vector<1x256xf32>
    %102 = vector.broadcast %100 : vector<128x1xf32> to vector<128x256xf32>
    %103 = vector.broadcast %101 : vector<1x256xf32> to vector<128x256xf32>
    %104 = arith.addf %102, %103 : vector<128x256xf32>
    %cst_27 = arith.constant 2.000000e-01 : f32
    %105 = vector.broadcast %cst_27 : f32 to vector<128x256xf32>
    %106 = arith.mulf %105, %104 : vector<128x256xf32>
    %107 = arith.maximumf %104, %106 : vector<128x256xf32>
    %108 = arith.addf %107, %5 : vector<128x256xf32>
    %cst_28 = arith.constant dense<0xFF800000> : vector<128xf32>
    %109 = vector.multi_reduction <maximumf>, %108, %cst_28 [1] : vector<128x256xf32> to vector<128xf32>
    %110 = vector.shape_cast %109 : vector<128xf32> to vector<128x1xf32>
    %111 = vector.broadcast %110 : vector<128x1xf32> to vector<128x256xf32>
    %112 = arith.subf %108, %111 : vector<128x256xf32>
    %113 = arith.truncf %112 : vector<128x256xf32> to vector<128x256xbf16>
    %114 = math.exp %113 : vector<128x256xbf16>
    %c4 = arith.constant 4 : index
    %c0_29 = arith.constant 0 : index
    %c0_30 = arith.constant 0 : index
    %115 = vector.load %arg4[%c4, %c0_29, %c0_30] : memref<8x256x17xbf16, #tpu.memory_space<vmem>>, vector<1x256x17xbf16>
    %116 = vector.shape_cast %115 : vector<1x256x17xbf16> to vector<256x17xbf16>
    %cst_31 = arith.constant dense<0.000000e+00> : vector<128x17xf32>
    %117 = tpu.matmul %114, %116, %cst_31 {dimension_numbers = #tpu.dot_dimension_numbers<[1], [0], [0], [1], [0, 0, 1, 1], [], []>} : vector<128x256xbf16>, vector<256x17xbf16>, vector<128x17xf32> -> vector<128x17xf32>
    %118 = vector.extract_strided_slice %117 {offsets = [0, 16], sizes = [128, 1], strides = [1, 1]} : vector<128x17xf32> to vector<128x1xf32>
    %119 = tpu.reciprocal %118 {approx = true} : vector<128x1xf32> -> vector<128x1xf32>
    %120 = vector.extract_strided_slice %117 {offsets = [0, 0], sizes = [128, 16], strides = [1, 1]} : vector<128x17xf32> to vector<128x16xf32>
    %121 = vector.broadcast %119 : vector<128x1xf32> to vector<128x16xf32>
    %122 = arith.mulf %120, %121 : vector<128x16xf32>
    %123 = vector.extract_strided_slice %6 {offsets = [0, 5], sizes = [128, 1], strides = [1, 1]} : vector<128x8xf32> to vector<128x1xf32>
    %124 = vector.extract_strided_slice %7 {offsets = [5, 0], sizes = [1, 256], strides = [1, 1]} : vector<8x256xf32> to vector<1x256xf32>
    %125 = vector.broadcast %123 : vector<128x1xf32> to vector<128x256xf32>
    %126 = vector.broadcast %124 : vector<1x256xf32> to vector<128x256xf32>
    %127 = arith.addf %125, %126 : vector<128x256xf32>
    %cst_32 = arith.constant 2.000000e-01 : f32
    %128 = vector.broadcast %cst_32 : f32 to vector<128x256xf32>
    %129 = arith.mulf %128, %127 : vector<128x256xf32>
    %130 = arith.maximumf %127, %129 : vector<128x256xf32>
    %131 = arith.addf %130, %5 : vector<128x256xf32>
    %cst_33 = arith.constant dense<0xFF800000> : vector<128xf32>
    %132 = vector.multi_reduction <maximumf>, %131, %cst_33 [1] : vector<128x256xf32> to vector<128xf32>
    %133 = vector.shape_cast %132 : vector<128xf32> to vector<128x1xf32>
    %134 = vector.broadcast %133 : vector<128x1xf32> to vector<128x256xf32>
    %135 = arith.subf %131, %134 : vector<128x256xf32>
    %136 = arith.truncf %135 : vector<128x256xf32> to vector<128x256xbf16>
    %137 = math.exp %136 : vector<128x256xbf16>
    %c5 = arith.constant 5 : index
    %c0_34 = arith.constant 0 : index
    %c0_35 = arith.constant 0 : index
    %138 = vector.load %arg4[%c5, %c0_34, %c0_35] : memref<8x256x17xbf16, #tpu.memory_space<vmem>>, vector<1x256x17xbf16>
    %139 = vector.shape_cast %138 : vector<1x256x17xbf16> to vector<256x17xbf16>
    %cst_36 = arith.constant dense<0.000000e+00> : vector<128x17xf32>
    %140 = tpu.matmul %137, %139, %cst_36 {dimension_numbers = #tpu.dot_dimension_numbers<[1], [0], [0], [1], [0, 0, 1, 1], [], []>} : vector<128x256xbf16>, vector<256x17xbf16>, vector<128x17xf32> -> vector<128x17xf32>
    %141 = vector.extract_strided_slice %140 {offsets = [0, 16], sizes = [128, 1], strides = [1, 1]} : vector<128x17xf32> to vector<128x1xf32>
    %142 = tpu.reciprocal %141 {approx = true} : vector<128x1xf32> -> vector<128x1xf32>
    %143 = vector.extract_strided_slice %140 {offsets = [0, 0], sizes = [128, 16], strides = [1, 1]} : vector<128x17xf32> to vector<128x16xf32>
    %144 = vector.broadcast %142 : vector<128x1xf32> to vector<128x16xf32>
    %145 = arith.mulf %143, %144 : vector<128x16xf32>
    %146 = vector.extract_strided_slice %6 {offsets = [0, 6], sizes = [128, 1], strides = [1, 1]} : vector<128x8xf32> to vector<128x1xf32>
    %147 = vector.extract_strided_slice %7 {offsets = [6, 0], sizes = [1, 256], strides = [1, 1]} : vector<8x256xf32> to vector<1x256xf32>
    %148 = vector.broadcast %146 : vector<128x1xf32> to vector<128x256xf32>
    %149 = vector.broadcast %147 : vector<1x256xf32> to vector<128x256xf32>
    %150 = arith.addf %148, %149 : vector<128x256xf32>
    %cst_37 = arith.constant 2.000000e-01 : f32
    %151 = vector.broadcast %cst_37 : f32 to vector<128x256xf32>
    %152 = arith.mulf %151, %150 : vector<128x256xf32>
    %153 = arith.maximumf %150, %152 : vector<128x256xf32>
    %154 = arith.addf %153, %5 : vector<128x256xf32>
    %cst_38 = arith.constant dense<0xFF800000> : vector<128xf32>
    %155 = vector.multi_reduction <maximumf>, %154, %cst_38 [1] : vector<128x256xf32> to vector<128xf32>
    %156 = vector.shape_cast %155 : vector<128xf32> to vector<128x1xf32>
    %157 = vector.broadcast %156 : vector<128x1xf32> to vector<128x256xf32>
    %158 = arith.subf %154, %157 : vector<128x256xf32>
    %159 = arith.truncf %158 : vector<128x256xf32> to vector<128x256xbf16>
    %160 = math.exp %159 : vector<128x256xbf16>
    %c6 = arith.constant 6 : index
    %c0_39 = arith.constant 0 : index
    %c0_40 = arith.constant 0 : index
    %161 = vector.load %arg4[%c6, %c0_39, %c0_40] : memref<8x256x17xbf16, #tpu.memory_space<vmem>>, vector<1x256x17xbf16>
    %162 = vector.shape_cast %161 : vector<1x256x17xbf16> to vector<256x17xbf16>
    %cst_41 = arith.constant dense<0.000000e+00> : vector<128x17xf32>
    %163 = tpu.matmul %160, %162, %cst_41 {dimension_numbers = #tpu.dot_dimension_numbers<[1], [0], [0], [1], [0, 0, 1, 1], [], []>} : vector<128x256xbf16>, vector<256x17xbf16>, vector<128x17xf32> -> vector<128x17xf32>
    %164 = vector.extract_strided_slice %163 {offsets = [0, 16], sizes = [128, 1], strides = [1, 1]} : vector<128x17xf32> to vector<128x1xf32>
    %165 = tpu.reciprocal %164 {approx = true} : vector<128x1xf32> -> vector<128x1xf32>
    %166 = vector.extract_strided_slice %163 {offsets = [0, 0], sizes = [128, 16], strides = [1, 1]} : vector<128x17xf32> to vector<128x16xf32>
    %167 = vector.broadcast %165 : vector<128x1xf32> to vector<128x16xf32>
    %168 = arith.mulf %166, %167 : vector<128x16xf32>
    %169 = vector.extract_strided_slice %6 {offsets = [0, 7], sizes = [128, 1], strides = [1, 1]} : vector<128x8xf32> to vector<128x1xf32>
    %170 = vector.extract_strided_slice %7 {offsets = [7, 0], sizes = [1, 256], strides = [1, 1]} : vector<8x256xf32> to vector<1x256xf32>
    %171 = vector.broadcast %169 : vector<128x1xf32> to vector<128x256xf32>
    %172 = vector.broadcast %170 : vector<1x256xf32> to vector<128x256xf32>
    %173 = arith.addf %171, %172 : vector<128x256xf32>
    %cst_42 = arith.constant 2.000000e-01 : f32
    %174 = vector.broadcast %cst_42 : f32 to vector<128x256xf32>
    %175 = arith.mulf %174, %173 : vector<128x256xf32>
    %176 = arith.maximumf %173, %175 : vector<128x256xf32>
    %177 = arith.addf %176, %5 : vector<128x256xf32>
    %cst_43 = arith.constant dense<0xFF800000> : vector<128xf32>
    %178 = vector.multi_reduction <maximumf>, %177, %cst_43 [1] : vector<128x256xf32> to vector<128xf32>
    %179 = vector.shape_cast %178 : vector<128xf32> to vector<128x1xf32>
    %180 = vector.broadcast %179 : vector<128x1xf32> to vector<128x256xf32>
    %181 = arith.subf %177, %180 : vector<128x256xf32>
    %182 = arith.truncf %181 : vector<128x256xf32> to vector<128x256xbf16>
    %183 = math.exp %182 : vector<128x256xbf16>
    %c7 = arith.constant 7 : index
    %c0_44 = arith.constant 0 : index
    %c0_45 = arith.constant 0 : index
    %184 = vector.load %arg4[%c7, %c0_44, %c0_45] : memref<8x256x17xbf16, #tpu.memory_space<vmem>>, vector<1x256x17xbf16>
    %185 = vector.shape_cast %184 : vector<1x256x17xbf16> to vector<256x17xbf16>
    %cst_46 = arith.constant dense<0.000000e+00> : vector<128x17xf32>
    %186 = tpu.matmul %183, %185, %cst_46 {dimension_numbers = #tpu.dot_dimension_numbers<[1], [0], [0], [1], [0, 0, 1, 1], [], []>} : vector<128x256xbf16>, vector<256x17xbf16>, vector<128x17xf32> -> vector<128x17xf32>
    %187 = vector.extract_strided_slice %186 {offsets = [0, 16], sizes = [128, 1], strides = [1, 1]} : vector<128x17xf32> to vector<128x1xf32>
    %188 = tpu.reciprocal %187 {approx = true} : vector<128x1xf32> -> vector<128x1xf32>
    %189 = vector.extract_strided_slice %186 {offsets = [0, 0], sizes = [128, 16], strides = [1, 1]} : vector<128x17xf32> to vector<128x16xf32>
    %190 = vector.broadcast %188 : vector<128x1xf32> to vector<128x16xf32>
    %191 = arith.mulf %189, %190 : vector<128x16xf32>
    %192 = tpu.concatenate %30, %53, %76, %99, %122, %145, %168, %191 in 1 : vector<128x16xf32>, vector<128x16xf32>, vector<128x16xf32>, vector<128x16xf32>, vector<128x16xf32>, vector<128x16xf32>, vector<128x16xf32>, vector<128x16xf32> -> vector<128x128xf32>
    %c0_47 = arith.constant 0 : index
    %c0_48 = arith.constant 0 : index
    %193 = vector.load %arg5[%c0_47, %c0_48] : memref<1x128xf32, #tpu.memory_space<vmem>>, vector<1x128xf32>
    %194 = vector.broadcast %193 : vector<1x128xf32> to vector<128x128xf32>
    %195 = arith.addf %192, %194 : vector<128x128xf32>
    %cst_49 = arith.constant 0.000000e+00 : f32
    %196 = vector.broadcast %cst_49 : f32 to vector<128x128xf32>
    %197 = arith.maximumf %195, %196 : vector<128x128xf32>
    %198 = arith.truncf %197 : vector<128x128xf32> to vector<128x128xbf16>
    %c0_50 = arith.constant 0 : index
    %c0_51 = arith.constant 0 : index
    %199 = vector.load %arg6[%c0_50, %c0_51] : memref<128x128xbf16, #tpu.memory_space<vmem>>, vector<128x128xbf16>
    tpu.vector_store %arg6[%c0_50, %c0_51], %198 {strides = array<i32>} : memref<128x128xbf16, #tpu.memory_space<vmem>>, vector<128x128xbf16>,
    return
  }
  func.func @transform_0(%arg0: i32) -> (i32, i32) {
    %c0_i32 = arith.constant 0 : i32
    %c0_i32_0 = arith.constant 0 : i32
    return %arg0, %c0_i32 : i32, i32
  }
  func.func @transform_1(%arg0: i32) -> (i32, i32) {
    %c0_i32 = arith.constant 0 : i32
    %c0_i32_0 = arith.constant 0 : i32
    %c0_i32_1 = arith.constant 0 : i32
    return %c0_i32, %c0_i32_0 : i32, i32
  }
  func.func @transform_2(%arg0: i32) -> (i32, i32) {
    %c0_i32 = arith.constant 0 : i32
    %c0_i32_0 = arith.constant 0 : i32
    return %arg0, %c0_i32 : i32, i32
  }
  func.func @transform_3(%arg0: i32) -> (i32, i32, i32) {
    %c0_i32 = arith.constant 0 : i32
    %c0_i32_0 = arith.constant 0 : i32
    %c0_i32_1 = arith.constant 0 : i32
    %c0_i32_2 = arith.constant 0 : i32
    return %c0_i32, %c0_i32_0, %c0_i32_1 : i32, i32, i32
  }
  func.func @transform_4(%arg0: i32) -> (i32, i32) {
    %c0_i32 = arith.constant 0 : i32
    %c0_i32_0 = arith.constant 0 : i32
    %c0_i32_1 = arith.constant 0 : i32
    return %c0_i32, %c0_i32_0 : i32, i32
  }
  func.func @transform_5(%arg0: i32) -> (i32, i32) {
    %c0_i32 = arith.constant 0 : i32
    %c0_i32_0 = arith.constant 0 : i32
    return %arg0, %c0_i32 : i32, i32
  }
}

module attributes {stable_mosaic.version = 11 : i64} {
  func.func @_project_kernel(%arg0: i32, %arg1: memref<128x128xbf16, #tpu.memory_space<vmem>>, %arg2: memref<128x130xbf16, #tpu.memory_space<vmem>>, %arg3: memref<128x130xf32, #tpu.memory_space<vmem>>) attributes {dimension_semantics = [#tpu.dimension_semantics<parallel>], iteration_bounds = array<i64: 2>, scalar_prefetch = 0 : i64, scratch_operands = 0 : i64, tpu.core_type = #tpu.core_type<tc>, window_params = [{transform_indices = @transform_0, window_bounds = array<i64: 128, 128>}, {pipeline_mode = #tpu.pipeline_mode<synchronous>, transform_indices = @transform_1, window_bounds = array<i64: 128, 130>}, {transform_indices = @transform_2, window_bounds = array<i64: 128, 130>}]} {
    %c0 = arith.constant 0 : index
    %c0_0 = arith.constant 0 : index
    %0 = vector.load %arg1[%c0, %c0_0] : memref<128x128xbf16, #tpu.memory_space<vmem>>, vector<128x128xbf16>
    %c0_1 = arith.constant 0 : index
    %c0_2 = arith.constant 0 : index
    %1 = vector.load %arg2[%c0_1, %c0_2] : memref<128x130xbf16, #tpu.memory_space<vmem>>, vector<128x130xbf16>
    %cst = arith.constant dense<0.000000e+00> : vector<128x130xf32>
    %2 = tpu.matmul %0, %1, %cst {dimension_numbers = #tpu.dot_dimension_numbers<[1], [0], [0], [1], [0, 0, 1, 1], [], []>} : vector<128x128xbf16>, vector<128x130xbf16>, vector<128x130xf32> -> vector<128x130xf32>
    %c0_3 = arith.constant 0 : index
    %c0_4 = arith.constant 0 : index
    %3 = vector.load %arg3[%c0_3, %c0_4] : memref<128x130xf32, #tpu.memory_space<vmem>>, vector<128x130xf32>
    tpu.vector_store %arg3[%c0_3, %c0_4], %2 {strides = array<i32>} : memref<128x130xf32, #tpu.memory_space<vmem>>, vector<128x130xf32>,
    return
  }
  func.func @transform_0(%arg0: i32) -> (i32, i32) {
    %c0_i32 = arith.constant 0 : i32
    %c0_i32_0 = arith.constant 0 : i32
    return %arg0, %c0_i32 : i32, i32
  }
  func.func @transform_1(%arg0: i32) -> (i32, i32) {
    %c0_i32 = arith.constant 0 : i32
    %c0_i32_0 = arith.constant 0 : i32
    %c0_i32_1 = arith.constant 0 : i32
    return %c0_i32, %c0_i32_0 : i32, i32
  }
  func.func @transform_2(%arg0: i32) -> (i32, i32) {
    %c0_i32 = arith.constant 0 : i32
    %c0_i32_0 = arith.constant 0 : i32
    return %arg0, %c0_i32 : i32, i32
  }
}

module attributes {stable_mosaic.version = 11 : i64} {
  func.func @_gat_attention_kernel(%arg0: i32, %arg1: memref<128x256xi8, #tpu.memory_space<vmem>>, %arg2: memref<1x256xf32, #tpu.memory_space<vmem>>, %arg3: memref<128x1xf32, #tpu.memory_space<vmem>>, %arg4: memref<1x256x128xbf16, #tpu.memory_space<vmem>>, %arg5: memref<1x128xf32, #tpu.memory_space<vmem>>, %arg6: memref<128x128xf32, #tpu.memory_space<vmem>>) attributes {dimension_semantics = [#tpu.dimension_semantics<parallel>], iteration_bounds = array<i64: 2>, scalar_prefetch = 0 : i64, scratch_operands = 0 : i64, tpu.core_type = #tpu.core_type<tc>, window_params = [{transform_indices = @transform_0, window_bounds = array<i64: 128, 256>}, {pipeline_mode = #tpu.pipeline_mode<synchronous>, transform_indices = @transform_1, window_bounds = array<i64: 1, 256>}, {transform_indices = @transform_2, window_bounds = array<i64: 128, 1>}, {pipeline_mode = #tpu.pipeline_mode<synchronous>, transform_indices = @transform_3, window_bounds = array<i64: 1, 256, 128>}, {pipeline_mode = #tpu.pipeline_mode<synchronous>, transform_indices = @transform_4, window_bounds = array<i64: 1, 128>}, {transform_indices = @transform_5, window_bounds = array<i64: 128, 128>}]} {
    %c0 = arith.constant 0 : index
    %c0_0 = arith.constant 0 : index
    %0 = vector.load %arg1[%c0, %c0_0] : memref<128x256xi8, #tpu.memory_space<vmem>>, vector<128x256xi8>
    %1 = arith.sitofp %0 : vector<128x256xi8> to vector<128x256xf32>
    %cst = arith.constant 1.000000e+00 : f32
    %2 = vector.broadcast %cst : f32 to vector<128x256xf32>
    %3 = arith.subf %1, %2 : vector<128x256xf32>
    %cst_1 = arith.constant 1.000000e+09 : f32
    %4 = vector.broadcast %cst_1 : f32 to vector<128x256xf32>
    %5 = arith.mulf %3, %4 : vector<128x256xf32>
    %c0_2 = arith.constant 0 : index
    %c0_3 = arith.constant 0 : index
    %6 = vector.load %arg3[%c0_2, %c0_3] : memref<128x1xf32, #tpu.memory_space<vmem>>, vector<128x1xf32>
    %c0_4 = arith.constant 0 : index
    %c0_5 = arith.constant 0 : index
    %7 = vector.load %arg2[%c0_4, %c0_5] : memref<1x256xf32, #tpu.memory_space<vmem>>, vector<1x256xf32>
    %8 = vector.broadcast %6 : vector<128x1xf32> to vector<128x256xf32>
    %9 = vector.broadcast %7 : vector<1x256xf32> to vector<128x256xf32>
    %10 = arith.addf %8, %9 : vector<128x256xf32>
    %cst_6 = arith.constant 2.000000e-01 : f32
    %11 = vector.broadcast %cst_6 : f32 to vector<128x256xf32>
    %12 = arith.mulf %11, %10 : vector<128x256xf32>
    %13 = arith.maximumf %10, %12 : vector<128x256xf32>
    %14 = arith.addf %13, %5 : vector<128x256xf32>
    %cst_7 = arith.constant dense<0xFF800000> : vector<128xf32>
    %15 = vector.multi_reduction <maximumf>, %14, %cst_7 [1] : vector<128x256xf32> to vector<128xf32>
    %16 = vector.shape_cast %15 : vector<128xf32> to vector<128x1xf32>
    %17 = vector.broadcast %16 : vector<128x1xf32> to vector<128x256xf32>
    %18 = arith.subf %14, %17 : vector<128x256xf32>
    %19 = arith.truncf %18 : vector<128x256xf32> to vector<128x256xbf16>
    %20 = math.exp %19 : vector<128x256xbf16>
    %c0_8 = arith.constant 0 : index
    %c0_9 = arith.constant 0 : index
    %c0_10 = arith.constant 0 : index
    %21 = vector.load %arg4[%c0_8, %c0_9, %c0_10] : memref<1x256x128xbf16, #tpu.memory_space<vmem>>, vector<1x256x128xbf16>
    %22 = vector.shape_cast %21 : vector<1x256x128xbf16> to vector<256x128xbf16>
    %cst_11 = arith.constant dense<0.000000e+00> : vector<128x128xf32>
    %23 = tpu.matmul %20, %22, %cst_11 {dimension_numbers = #tpu.dot_dimension_numbers<[1], [0], [0], [1], [0, 0, 1, 1], [], []>} : vector<128x256xbf16>, vector<256x128xbf16>, vector<128x128xf32> -> vector<128x128xf32>
    %24 = vector.extract_strided_slice %23 {offsets = [0, 8], sizes = [128, 1], strides = [1, 1]} : vector<128x128xf32> to vector<128x1xf32>
    %25 = tpu.reciprocal %24 {approx = true} : vector<128x1xf32> -> vector<128x1xf32>
    %26 = vector.broadcast %25 : vector<128x1xf32> to vector<128x128xf32>
    %27 = arith.mulf %23, %26 : vector<128x128xf32>
    %c0_12 = arith.constant 0 : index
    %c0_13 = arith.constant 0 : index
    %28 = vector.load %arg5[%c0_12, %c0_13] : memref<1x128xf32, #tpu.memory_space<vmem>>, vector<1x128xf32>
    %29 = vector.broadcast %28 : vector<1x128xf32> to vector<128x128xf32>
    %30 = arith.addf %27, %29 : vector<128x128xf32>
    %31 = tpu.iota {dimensions = array<i32: 1>} : vector<128x128xi32>
    %c8_i32 = arith.constant 8 : i32
    %32 = vector.broadcast %c8_i32 : i32 to vector<128x128xi32>
    %33 = arith.cmpi slt, %31, %32 : vector<128x128xi32>
    %cst_14 = arith.constant -1.000000e+30 : f32
    %34 = vector.broadcast %cst_14 : f32 to vector<128x128xf32>
    %35 = arith.select %33, %30, %34 : vector<128x128xi1>, vector<128x128xf32>
    %cst_15 = arith.constant dense<0xFF800000> : vector<128xf32>
    %36 = vector.multi_reduction <maximumf>, %35, %cst_15 [1] : vector<128x128xf32> to vector<128xf32>
    %37 = vector.shape_cast %36 : vector<128xf32> to vector<128x1xf32>
    %38 = vector.broadcast %37 : vector<128x1xf32> to vector<128x128xf32>
    %39 = arith.subf %35, %38 : vector<128x128xf32>
    %40 = math.exp %39 : vector<128x128xf32>
    %cst_16 = arith.constant dense<0.000000e+00> : vector<128xf32>
    %41 = vector.multi_reduction <add>, %40, %cst_16 [1] : vector<128x128xf32> to vector<128xf32>
    %42 = vector.shape_cast %41 : vector<128xf32> to vector<128x1xf32>
    %43 = math.log %42 : vector<128x1xf32>
    %44 = arith.addf %37, %43 : vector<128x1xf32>
    %45 = vector.broadcast %44 : vector<128x1xf32> to vector<128x128xf32>
    %46 = arith.subf %35, %45 : vector<128x128xf32>
    %c0_17 = arith.constant 0 : index
    %c0_18 = arith.constant 0 : index
    %47 = vector.load %arg6[%c0_17, %c0_18] : memref<128x128xf32, #tpu.memory_space<vmem>>, vector<128x128xf32>
    tpu.vector_store %arg6[%c0_17, %c0_18], %46 {strides = array<i32>} : memref<128x128xf32, #tpu.memory_space<vmem>>, vector<128x128xf32>,
    return
  }
  func.func @transform_0(%arg0: i32) -> (i32, i32) {
    %c0_i32 = arith.constant 0 : i32
    %c0_i32_0 = arith.constant 0 : i32
    return %arg0, %c0_i32 : i32, i32
  }
  func.func @transform_1(%arg0: i32) -> (i32, i32) {
    %c0_i32 = arith.constant 0 : i32
    %c0_i32_0 = arith.constant 0 : i32
    %c0_i32_1 = arith.constant 0 : i32
    return %c0_i32, %c0_i32_0 : i32, i32
  }
  func.func @transform_2(%arg0: i32) -> (i32, i32) {
    %c0_i32 = arith.constant 0 : i32
    %c0_i32_0 = arith.constant 0 : i32
    return %arg0, %c0_i32 : i32, i32
  }
  func.func @transform_3(%arg0: i32) -> (i32, i32, i32) {
    %c0_i32 = arith.constant 0 : i32
    %c0_i32_0 = arith.constant 0 : i32
    %c0_i32_1 = arith.constant 0 : i32
    %c0_i32_2 = arith.constant 0 : i32
    return %c0_i32, %c0_i32_0, %c0_i32_1 : i32, i32, i32
  }
  func.func @transform_4(%arg0: i32) -> (i32, i32) {
    %c0_i32 = arith.constant 0 : i32
    %c0_i32_0 = arith.constant 0 : i32
    %c0_i32_1 = arith.constant 0 : i32
    return %c0_i32, %c0_i32_0 : i32, i32
  }
  func.func @transform_5(%arg0: i32) -> (i32, i32) {
    %c0_i32 = arith.constant 0 : i32
    %c0_i32_0 = arith.constant 0 : i32
    return %arg0, %c0_i32 : i32, i32
  }
}

</mosaic_0001>

<llo_original>
// kernel: netgat_forward.4
$region0: #{netgat_forward.4}
  #allocation0 [shape = 'u32[]', space=smem, size = 0x4, offset = 0x4, fixed_abs, tag = 'smem constant byte address 0x4 - core index']
  #allocation1 [shape = 'u32[144,128]{1,0:T(1,128)}', space=vmem, size = 0x12000, scoped, tag = 'internal scratch']
  %s0 = inlined_call_operand.vmem [shape: bf16[256,32], index: 0, kind: input, shape index: {}]
  %s1 = inlined_call_operand.vmem [shape: bf16[32,144], index: 1, kind: input, shape index: {}]
  %s2 = inlined_call_operand.vmem [shape: f32[256,144], index: 2, kind: output, shape index: {}]
  %s3 = sld [smem:[#allocation0]]
  $region41: #{netgat_forward.4} parent=0
    _
  %s5 = ssub.s32 1, %s3
  %s6 = scalar_select 0, %s5, %s3
  loop: start=0, step=1, limit=4
  $region2: #{netgat_forward.4} parent=0 // loop_pre_header
    _
  $region3: #{netgat_forward.4} parent=0 // loop_header
    %s8 = sphi 0, %s12
    %p9 = scmp.ge.s32.totalorder %s8, 4
    %s18 = sphi 0, %s20
    %s21 = sphi 0, %s18
    %s22 = sphi 0, %s21
    %s38 = sphi 0, %s22
    %s42 = sphi 0, %s42
    %s44 = sphi 0, %s42
    %s45 = sphi 0, %s44
    %s59 = sphi 0, %s45
    %s65 = sphi 0, %s67
    %s68 = sphi 0, %s65
    %s69 = sphi 0, %s68
    %s85 = sphi 0, %s69
  $region4: #{netgat_forward.4} parent=0 // loop_header_branch
    %11 = sbr.rel (%p9) target = $region8
  $region5: #{netgat_forward.4} parent=0 // loop_body
    %s13 = ssub.s32 %s8, 1
    %s14 = ssub.s32 %s8, 2
    %s15 = sadd.s32 %s8, 1
    %s16 = ssub.s32 %s8, %s15
    %p17 = scmp.eq.s32.totalorder %s16, 0
    %s19 = sadd.s32 %s18, 1
    %s20 = scalar_select %p17, %s18, %s19
    %p23 = pneg %p17
    %p24 = scmp.eq.s32.totalorder %s8, 1
    %p25 = por %p23, %p24
    %p26 = scmp.ne.s32.totalorder %s18, %s21
    %p27 = scmp.eq.s32.totalorder %s8, 0
    %p28 = por %p26, %p27
    %p29 = scmp.ne.s32.totalorder %s18, %s21
    %p30 = scmp.eq.s32.totalorder %s13, 1
    %p31 = por %p29, %p30
    %p32 = scmp.ne.s32.totalorder %s21, %s22
    %p33 = scmp.eq.s32.totalorder %s13, 0
    %p34 = por %p32, %p33
    %p35 = scmp.ne.s32.totalorder %s21, %s22
    %p36 = scmp.eq.s32.totalorder %s14, 1
    %p37 = por %p35, %p36
    %p39 = scmp.ne.s32.totalorder %s22, %s38
    %p40 = scmp.eq.s32.totalorder %s14, 0
    %p41 = por %p39, %p40
    %s43 = sadd.s32 %s42, 1
    %p46 = scmp.eq.s32.totalorder %s8, 1
    %p47 = scmp.ne.s32.totalorder %s42, %s44
    %p48 = scmp.eq.s32.totalorder %s8, 0
    %p49 = por %p47, %p48
    %p50 = scmp.ne.s32.totalorder %s42, %s44
    %p51 = scmp.eq.s32.totalorder %s13, 1
    %p52 = por %p50, %p51
    %p53 = scmp.ne.s32.totalorder %s44, %s45
    %p54 = scmp.eq.s32.totalorder %s13, 0
    %p55 = por %p53, %p54
    %p56 = scmp.ne.s32.totalorder %s44, %s45
    %p57 = scmp.eq.s32.totalorder %s14, 1
    %p58 = por %p56, %p57
    %p60 = scmp.ne.s32.totalorder %s45, %s59
    %p61 = scmp.eq.s32.totalorder %s14, 0
    %p62 = por %p60, %p61
    %s63 = ssub.s32 %s8, %s15
    %p64 = scmp.eq.s32.totalorder %s63, 0
    %s66 = sadd.s32 %s65, 1
    %s67 = scalar_select %p64, %s65, %s66
    %p70 = pneg %p64
    %p71 = scmp.eq.s32.totalorder %s8, 1
    %p72 = por %p70, %p71
    %p73 = scmp.ne.s32.totalorder %s65, %s68
    %p74 = scmp.eq.s32.totalorder %s8, 0
    %p75 = por %p73, %p74
    %p76 = scmp.ne.s32.totalorder %s65, %s68
    %p77 = scmp.eq.s32.totalorder %s13, 1
    %p78 = por %p76, %p77
    %p79 = scmp.ne.s32.totalorder %s68, %s69
    %p80 = scmp.eq.s32.totalorder %s13, 0
    %p81 = por %p79, %p80
    %p82 = scmp.ne.s32.totalorder %s68, %s69
    %p83 = scmp.eq.s32.totalorder %s14, 1
    %p84 = por %p82, %p83
    %p86 = scmp.ne.s32.totalorder %s69, %s85
    %p87 = scmp.eq.s32.totalorder %s14, 0
    %p88 = por %p86, %p87
    %p89 = scmp.le.s32.totalorder 1, %s8
    %p90 = scmp.lt.s32.totalorder %s8, 3
    %p91 = pnand %p89, %p90
    %p92 = pneg %p91
    // Predicated region
    $region9: #{netgat_forward.4} parent=5 // pred_check
      _
    $region10: #{netgat_forward.4} parent=5 // pred_check_branch
      %94 = sbr.rel (%p91) target = $region12
    $region11: #{netgat_forward.4} parent=5 // pred_region
      %s95 = ssub.s32 %s8, 1
      // Predicated region
      $region13: #{netgat_forward.4} parent=11 // pred_check
        %p96 = pneg %p55
      $region14: #{netgat_forward.4} parent=11 // pred_check_branch
        %98 = sbr.rel (%p96) target = $region16
      $region15: #{netgat_forward.4} parent=11 // pred_region
        _
      $region16: #{netgat_forward.4} parent=11 // pred_fallthru
        _
    $region12: #{netgat_forward.4} parent=5 // pred_fallthru
      _
    %p99 = scmp.lt.s32.totalorder %s8, 2
    // Predicated region
    $region17: #{netgat_forward.4} parent=5 // pred_check
      %p100 = pneg %p99
    $region18: #{netgat_forward.4} parent=5 // pred_check_branch
      %102 = sbr.rel (%p100) target = $region20
    $region19: #{netgat_forward.4} parent=5 // pred_region
      // Predicated region
      $region21: #{netgat_forward.4} parent=19 // pred_check
        %p103 = pneg %p28
      $region22: #{netgat_forward.4} parent=19 // pred_check_branch
        %105 = sbr.rel (%p103) target = $region24
      $region23: #{netgat_forward.4} parent=19 // pred_region
        %s106 = smul.u32 16, %s8
        %p107 = scmp.lt.s32.totalorder %s106, 31
        %s108 = scalar_select %p107, %s106, 31
        %s109 = smul.addr %s108, 4
        %s110 = scalar_lea.vmem %s0, %s109
        %s111 = smul.u32 16, %s8
      $region24: #{netgat_forward.4} parent=19 // pred_fallthru
        _
    $region20: #{netgat_forward.4} parent=5 // pred_fallthru
      _
    %p112 = scmp.le.s32.totalorder 1, %s8
    %p113 = scmp.lt.s32.totalorder %s8, 3
    %p114 = pnand %p112, %p113
    %p115 = pneg %p114
    // Predicated region
    $region25: #{netgat_forward.4} parent=5 // pred_check
      _
    $region26: #{netgat_forward.4} parent=5 // pred_check_branch
      %117 = sbr.rel (%p114) target = $region28
    $region27: #{netgat_forward.4} parent=5 // pred_region
      %s118 = ssub.s32 %s8, 1
      %s119 = smul.u32 16, %s13
      %p120 = scmp.lt.s32.totalorder %s119, 31
      %s121 = scalar_select %p120, %s119, 31
      %s122 = smul.addr %s121, 4
      %s123 = scalar_lea.vmem %s0, %s122
      %p124 = pneg %p34
      %p125 = pneg %p31
      %p126 = pneg %p55
      %p127 = pneg %p52
      %p128 = pneg %p81
      %p129 = pneg %p78
      %s130 = smul.u32 16, %s13
      %p131 = scmp.lt.s32.totalorder %s130, 31
      %s132 = scalar_select %p131, %s130, 31
      %s133 = smul.addr %s132, 2
      %s134 = smul.addr %s133, 8
      %s135 = scalar_lea.vmem %s2, %s134
      %s136 = smul.u32 16, %s13
      %p137 = scmp.lt.s32.totalorder %s136, 31
      %s138 = scalar_select %p137, %s136, 31
      %s139 = smul.addr %s138, 4
      %s140 = scalar_lea.vmem %s0, %s139
      %s141 = smul.u32 16, %s13
      %s142 = smul.u32 16, %s13
      %p143 = scmp.lt.s32.totalorder %s142, 31
      %s144 = scalar_select %p143, %s142, 31
      %s145 = smul.addr %s144, 2
      %s146 = smul.addr %s145, 8
      %s147 = scalar_lea.vmem %s2, %s146
      %s148 = smul.u32 16, %s13
      %v150 = vld [vmem:[%s140] sm:$0xf]
      %v151 = vld [vmem:[%s140 + $0x4] sm:$0xf]
      %v152 = vld [vmem:[%s140 + $0x8] sm:$0xf]
      %v153 = vld [vmem:[%s140 + $0xc] sm:$0xf]
      %v154 = vld [vmem:[%s140 + $0x10] sm:$0xf]
      %v155 = vld [vmem:[%s140 + $0x14] sm:$0xf]
      %v156 = vld [vmem:[%s140 + $0x18] sm:$0xf]
      %v157 = vld [vmem:[%s140 + $0x1c] sm:$0xf]
      %v158 = vld [vmem:[%s140 + $0x20] sm:$0xf]
      %v159 = vld [vmem:[%s140 + $0x24] sm:$0xf]
      %v160 = vld [vmem:[%s140 + $0x28] sm:$0xf]
      %v161 = vld [vmem:[%s140 + $0x2c] sm:$0xf]
      %v162 = vld [vmem:[%s140 + $0x30] sm:$0xf]
      %v163 = vld [vmem:[%s140 + $0x34] sm:$0xf]
      %v164 = vld [vmem:[%s140 + $0x38] sm:$0xf]
      %v165 = vld [vmem:[%s140 + $0x3c] sm:$0xf]
      %v166 = vld [vmem:[%s1] sm:$0xff]
      %v167 = vld [vmem:[%s1 + $0x8] sm:$0xff]
      %v168 = vld [vmem:[%s1 + $0x10] sm:$0xff]
      %v169 = vld [vmem:[%s1 + $0x18] sm:$0xff]
      %v186 = vunpack.c.l.b16 %v150
      %v187 = vunpack.c.l.b16 %v151
      %v188 = vunpack.c.l.b16 %v152
      %v189 = vunpack.c.l.b16 %v153
      %v190 = vunpack.c.l.b16 %v154
      %v191 = vunpack.c.l.b16 %v155
      %v192 = vunpack.c.l.b16 %v156
      %v193 = vunpack.c.l.b16 %v157
      %v194 = vunpack.c.l.b16 %v158
      %v195 = vunpack.c.l.b16 %v159
      %v196 = vunpack.c.l.b16 %v160
      %v197 = vunpack.c.l.b16 %v161
      %v198 = vunpack.c.l.b16 %v162
      %v199 = vunpack.c.l.b16 %v163
      %v200 = vunpack.c.l.b16 %v164
      %v201 = vunpack.c.l.b16 %v165
      %v202 = vpack.c.b16 %v187, %v186
      %v203 = vpack.c.b16 %v189, %v188
      %v204 = vpack.c.b16 %v191, %v190
      %v205 = vpack.c.b16 %v193, %v192
      %v206 = vpack.c.b16 %v195, %v194
      %v207 = vpack.c.b16 %v197, %v196
      %v208 = vpack.c.b16 %v199, %v198
      %v209 = vpack.c.b16 %v201, %v200
      %v214 = vunpack.c.l.b16 %v166
      %v215 = vunpack.c.h.b16 %v166
      %v216 = vunpack.c.l.b16 %v167
      %v217 = vunpack.c.h.b16 %v167
      %v218 = vunpack.c.l.b16 %v168
      %v219 = vunpack.c.h.b16 %v168
      %v220 = vunpack.c.l.b16 %v169
      %v221 = vunpack.c.h.b16 %v169
      %v222 = vpack.c.b16 %v216, %v214
      %v223 = vpack.c.b16 %v217, %v215
      %v224 = vpack.c.b16 %v220, %v218
      %v225 = vpack.c.b16 %v221, %v219
      %vm230 = vcmask 261120
      %v232 = vsel %vm230, %v202, 0
      %v235 = vsel %vm230, %v203, 0
      %v238 = vsel %vm230, %v204, 0
      %v241 = vsel %vm230, %v205, 0
      %v244 = vsel %vm230, %v206, 0
      %v247 = vsel %vm230, %v207, 0
      %v250 = vsel %vm230, %v208, 0
      %v253 = vsel %vm230, %v209, 0
      %255 = vmatprep.subr.bf16.mxu0 %v223
      %256 = vmatpush1.bf16.msra.mxu0 %v222
      %257 = vmatprep.subr.bf16.mxu0 %v225
      %258 = vmatpush1.bf16.msra.mxu0 %v224
      %259 = vmatprep.subr.bf16.mxu0 0
      %260 = vmatpush1.bf16.msra.mxu0 0
      %261 = vmatprep.subr.bf16.mxu0 0
      %262 = vmatpush1.bf16.msra.mxu0 0
      %263 = vmatprep.subr.bf16.mxu0 0
      %264 = vmatpush1.bf16.msra.mxu0 0
      %265 = vmatprep.subr.bf16.mxu0 0
      %266 = vmatpush1.bf16.msra.mxu0 0
      %267 = vmatprep.subr.bf16.mxu0 0
      %268 = vmatpush1.bf16.msra.mxu0 0
      %269 = vmatprep.subr.bf16.mxu0 0
      %270 = vmatpush1.bf16.msra.mxu0 0
      %271 = vmatprep.subr.bf16.mxu0 0
      %272 = vmatpush1.bf16.msra.mxu0 0
      %273 = vmatprep.subr.bf16.mxu0 0
      %274 = vmatpush1.bf16.msra.mxu0 0
      %275 = vmatprep.subr.bf16.mxu0 0
      %276 = vmatpush1.bf16.msra.mxu0 0
      %277 = vmatprep.subr.bf16.mxu0 0
      %278 = vmatpush1.bf16.msra.mxu0 0
      %279 = vmatprep.subr.bf16.mxu0 0
      %280 = vmatpush1.bf16.msra.mxu0 0
      %281 = vmatprep.subr.bf16.mxu0 0
      %282 = vmatpush1.bf16.msra.mxu0 0
      %283 = vmatprep.subr.bf16.mxu0 0
      %284 = vmatpush1.bf16.msra.mxu0 0
      %285 = vmatprep.subr.bf16.mxu0 0
      %286 = vmatpush1.bf16.msra.mxu0 0
      %287 = vmatprep.mubr.bf16.mxu0 0
      %288 = vmatmul.mubr.bf16.gmra.mrb[0].mxu0 %v232
      %v289 = vpop.f32.mrb[0].mxu0
      %v290 = vadd.f32 0.0, %v289
      %v291 = vpop.f32.mrb[0].mxu0
      %v292 = vadd.f32 0.0, %v291
      %v293 = vpop.f32.mrb[0].mxu0
      %v294 = vadd.f32 0.0, %v293
      %v295 = vpop.f32.mrb[0].mxu0
      %v296 = vadd.f32 0.0, %v295
      %297 = vmatprep.mubr.bf16.mxu0 0
      %298 = vmatmul.mubr.bf16.gmra.mrb[0].mxu0 %v235
      %v299 = vpop.f32.mrb[0].mxu0
      %v300 = vadd.f32 0.0, %v299
      %v301 = vpop.f32.mrb[0].mxu0
      %v302 = vadd.f32 0.0, %v301
      %v303 = vpop.f32.mrb[0].mxu0
      %v304 = vadd.f32 0.0, %v303
      %v305 = vpop.f32.mrb[0].mxu0
      %v306 = vadd.f32 0.0, %v305
      %307 = vmatprep.mubr.bf16.mxu0 0
      %308 = vmatmul.mubr.bf16.gmra.mrb[0].mxu0 %v238
      %v309 = vpop.f32.mrb[0].mxu0
      %v310 = vadd.f32 0.0, %v309
      %v311 = vpop.f32.mrb[0].mxu0
      %v312 = vadd.f32 0.0, %v311
      %v313 = vpop.f32.mrb[0].mxu0
      %v314 = vadd.f32 0.0, %v313
      %v315 = vpop.f32.mrb[0].mxu0
      %v316 = vadd.f32 0.0, %v315
      %317 = vmatprep.mubr.bf16.mxu0 0
      %318 = vmatmul.mubr.bf16.gmra.mrb[0].mxu0 %v241
      %v319 = vpop.f32.mrb[0].mxu0
      %v320 = vadd.f32 0.0, %v319
      %v321 = vpop.f32.mrb[0].mxu0
      %v322 = vadd.f32 0.0, %v321
      %v323 = vpop.f32.mrb[0].mxu0
      %v324 = vadd.f32 0.0, %v323
      %v325 = vpop.f32.mrb[0].mxu0
      %v326 = vadd.f32 0.0, %v325
      %327 = vmatprep.mubr.bf16.mxu0 0
      %328 = vmatmul.mubr.bf16.gmra.mrb[0].mxu0 %v244
      %v329 = vpop.f32.mrb[0].mxu0
      %v330 = vadd.f32 0.0, %v329
      %v331 = vpop.f32.mrb[0].mxu0
      %v332 = vadd.f32 0.0, %v331
      %v333 = vpop.f32.mrb[0].mxu0
      %v334 = vadd.f32 0.0, %v333
      %v335 = vpop.f32.mrb[0].mxu0
      %v336 = vadd.f32 0.0, %v335
      %337 = vmatprep.mubr.bf16.mxu0 0
      %338 = vmatmul.mubr.bf16.gmra.mrb[0].mxu0 %v247
      %v339 = vpop.f32.mrb[0].mxu0
      %v340 = vadd.f32 0.0, %v339
      %v341 = vpop.f32.mrb[0].mxu0
      %v342 = vadd.f32 0.0, %v341
      %v343 = vpop.f32.mrb[0].mxu0
      %v344 = vadd.f32 0.0, %v343
      %v345 = vpop.f32.mrb[0].mxu0
      %v346 = vadd.f32 0.0, %v345
      %347 = vmatprep.mubr.bf16.mxu0 0
      %348 = vmatmul.mubr.bf16.gmra.mrb[0].mxu0 %v250
      %v349 = vpop.f32.mrb[0].mxu0
      %v350 = vadd.f32 0.0, %v349
      %v351 = vpop.f32.mrb[0].mxu0
      %v352 = vadd.f32 0.0, %v351
      %v353 = vpop.f32.mrb[0].mxu0
      %v354 = vadd.f32 0.0, %v353
      %v355 = vpop.f32.mrb[0].mxu0
      %v356 = vadd.f32 0.0, %v355
      %357 = vmatprep.mubr.bf16.mxu0 0
      %358 = vmatmul.mubr.bf16.gmra.mrb[0].mxu0 %v253
      %v359 = vpop.f32.mrb[0].mxu0
      %v360 = vadd.f32 0.0, %v359
      %v361 = vpop.f32.mrb[0].mxu0
      %v362 = vadd.f32 0.0, %v361
      %v363 = vpop.f32.mrb[0].mxu0
      %v364 = vadd.f32 0.0, %v363
      %v365 = vpop.f32.mrb[0].mxu0
      %v366 = vadd.f32 0.0, %v365
      %367 = vdwg.mxu0
      %368 = vst [vmem:[%s147] sm:$0xff] %v290
      %vm369 = vcmask 130048
      %370 = vst.msk [vmem:[%s147 + $0x8] sm:$0xff] %vm369, %v292
      %371 = vst [vmem:[%s147 + $0x10] sm:$0xff] %v294
      %372 = vst.msk [vmem:[%s147 + $0x18] sm:$0xff] %vm369, %v296
      %373 = vst [vmem:[%s147 + $0x20] sm:$0xff] %v300
      %374 = vst.msk [vmem:[%s147 + $0x28] sm:$0xff] %vm369, %v302
      %375 = vst [vmem:[%s147 + $0x30] sm:$0xff] %v304
      %376 = vst.msk [vmem:[%s147 + $0x38] sm:$0xff] %vm369, %v306
      %377 = vst [vmem:[%s147 + $0x40] sm:$0xff] %v310
      %378 = vst.msk [vmem:[%s147 + $0x48] sm:$0xff] %vm369, %v312
      %379 = vst [vmem:[%s147 + $0x50] sm:$0xff] %v314
      %380 = vst.msk [vmem:[%s147 + $0x58] sm:$0xff] %vm369, %v316
      %381 = vst [vmem:[%s147 + $0x60] sm:$0xff] %v320
      %382 = vst.msk [vmem:[%s147 + $0x68] sm:$0xff] %vm369, %v322
      %383 = vst [vmem:[%s147 + $0x70] sm:$0xff] %v324
      %384 = vst.msk [vmem:[%s147 + $0x78] sm:$0xff] %vm369, %v326
      %385 = vst [vmem:[%s147 + $0x80] sm:$0xff] %v330
      %386 = vst.msk [vmem:[%s147 + $0x88] sm:$0xff] %vm369, %v332
      %387 = vst [vmem:[%s147 + $0x90] sm:$0xff] %v334
      %388 = vst.msk [vmem:[%s147 + $0x98] sm:$0xff] %vm369, %v336
      %389 = vst [vmem:[%s147 + $0xa0] sm:$0xff] %v340
      %390 = vst.msk [vmem:[%s147 + $0xa8] sm:$0xff] %vm369, %v342
      %391 = vst [vmem:[%s147 + $0xb0] sm:$0xff] %v344
      %392 = vst.msk [vmem:[%s147 + $0xb8] sm:$0xff] %vm369, %v346
      %393 = vst [vmem:[%s147 + $0xc0] sm:$0xff] %v350
      %394 = vst.msk [vmem:[%s147 + $0xc8] sm:$0xff] %vm369, %v352
      %395 = vst [vmem:[%s147 + $0xd0] sm:$0xff] %v354
      %396 = vst.msk [vmem:[%s147 + $0xd8] sm:$0xff] %vm369, %v356
      %397 = vst [vmem:[%s147 + $0xe0] sm:$0xff] %v360
      %398 = vst.msk [vmem:[%s147 + $0xe8] sm:$0xff] %vm369, %v362
      %399 = vst [vmem:[%s147 + $0xf0] sm:$0xff] %v364
      %400 = vst.msk [vmem:[%s147 + $0xf8] sm:$0xff] %vm369, %v366
      %s401 = smul.u32 16, %s13
      %p402 = scmp.lt.s32.totalorder %s401, 31
      %s403 = scalar_select %p402, %s401, 31
      %s404 = smul.addr %s403, 2
      %s405 = smul.addr %s404, 8
      %s406 = scalar_lea.vmem %s2, %s405
      // Predicated region
      $region29: #{netgat_forward.4} parent=27 // pred_check
        %p407 = pneg %p78
      $region30: #{netgat_forward.4} parent=27 // pred_check_branch
        %409 = sbr.rel (%p407) target = $region32
      $region31: #{netgat_forward.4} parent=27 // pred_region
        %s410 = smul.u32 16, %s13
      $region32: #{netgat_forward.4} parent=27 // pred_fallthru
        _
    $region28: #{netgat_forward.4} parent=5 // pred_fallthru
      _
    %p411 = scmp.le.s32.totalorder 2, %s8
    // Predicated region
    $region33: #{netgat_forward.4} parent=5 // pred_check
      %p412 = pneg %p411
    $region34: #{netgat_forward.4} parent=5 // pred_check_branch
      %414 = sbr.rel (%p412) target = $region36
    $region35: #{netgat_forward.4} parent=5 // pred_region
      %s415 = ssub.s32 %s8, 2
      // Predicated region
      $region37: #{netgat_forward.4} parent=35 // pred_check
        %p416 = pneg %p84
      $region38: #{netgat_forward.4} parent=35 // pred_check_branch
        %418 = sbr.rel (%p416) target = $region40
      $region39: #{netgat_forward.4} parent=35 // pred_region
        %s419 = smul.u32 16, %s14
        %p420 = scmp.lt.s32.totalorder %s419, 31
        %s421 = scalar_select %p420, %s419, 31
        %s422 = smul.addr %s421, 2
        %s423 = smul.addr %s422, 8
        %s424 = scalar_lea.vmem %s2, %s423
      $region40: #{netgat_forward.4} parent=35 // pred_fallthru
        _
    $region36: #{netgat_forward.4} parent=5 // pred_fallthru
      _
  $region6: #{netgat_forward.4} parent=0 // loop_footer
    %s12 = sadd.s32 1, %s8
  $region7: #{netgat_forward.4} parent=0 // loop_footer_branch
    %7 = sbr.rel target = $region3
  $region8: #{netgat_forward.4} parent=0 // loop_exit
    _

// kernel: netgat_forward.6
$region0: #{netgat_forward.6}
  #allocation0 [shape = 'u32[]', space=smem, size = 0x4, offset = 0x4, fixed_abs, tag = 'smem constant byte address 0x4 - core index']
  #allocation1 [shape = 'u32[144,128]{1,0:T(1,128)}', space=vmem, size = 0x12000, scoped, tag = 'internal scratch']
  %s0 = inlined_call_operand.vmem [shape: bf16[256,128], index: 0, kind: input, shape index: {}]
  %s1 = inlined_call_operand.vmem [shape: bf16[128,130], index: 1, kind: input, shape index: {}]
  %s2 = inlined_call_operand.vmem [shape: f32[256,130], index: 2, kind: output, shape index: {}]
  %s3 = sld [smem:[#allocation0]]
  $region41: #{netgat_forward.6} parent=0
    _
  %s5 = ssub.s32 1, %s3
  %s6 = scalar_select 0, %s5, %s3
  loop: start=0, step=1, limit=4
  $region2: #{netgat_forward.6} parent=0 // loop_pre_header
    _
  $region3: #{netgat_forward.6} parent=0 // loop_header
    %s8 = sphi 0, %s12
    %p9 = scmp.ge.s32.totalorder %s8, 4
    %s18 = sphi 0, %s20
    %s21 = sphi 0, %s18
    %s22 = sphi 0, %s21
    %s38 = sphi 0, %s22
    %s42 = sphi 0, %s42
    %s44 = sphi 0, %s42
    %s45 = sphi 0, %s44
    %s59 = sphi 0, %s45
    %s65 = sphi 0, %s67
    %s68 = sphi 0, %s65
    %s69 = sphi 0, %s68
    %s85 = sphi 0, %s69
  $region4: #{netgat_forward.6} parent=0 // loop_header_branch
    %11 = sbr.rel (%p9) target = $region8
  $region5: #{netgat_forward.6} parent=0 // loop_body
    %s13 = ssub.s32 %s8, 1
    %s14 = ssub.s32 %s8, 2
    %s15 = sadd.s32 %s8, 1
    %s16 = ssub.s32 %s8, %s15
    %p17 = scmp.eq.s32.totalorder %s16, 0
    %s19 = sadd.s32 %s18, 1
    %s20 = scalar_select %p17, %s18, %s19
    %p23 = pneg %p17
    %p24 = scmp.eq.s32.totalorder %s8, 1
    %p25 = por %p23, %p24
    %p26 = scmp.ne.s32.totalorder %s18, %s21
    %p27 = scmp.eq.s32.totalorder %s8, 0
    %p28 = por %p26, %p27
    %p29 = scmp.ne.s32.totalorder %s18, %s21
    %p30 = scmp.eq.s32.totalorder %s13, 1
    %p31 = por %p29, %p30
    %p32 = scmp.ne.s32.totalorder %s21, %s22
    %p33 = scmp.eq.s32.totalorder %s13, 0
    %p34 = por %p32, %p33
    %p35 = scmp.ne.s32.totalorder %s21, %s22
    %p36 = scmp.eq.s32.totalorder %s14, 1
    %p37 = por %p35, %p36
    %p39 = scmp.ne.s32.totalorder %s22, %s38
    %p40 = scmp.eq.s32.totalorder %s14, 0
    %p41 = por %p39, %p40
    %s43 = sadd.s32 %s42, 1
    %p46 = scmp.eq.s32.totalorder %s8, 1
    %p47 = scmp.ne.s32.totalorder %s42, %s44
    %p48 = scmp.eq.s32.totalorder %s8, 0
    %p49 = por %p47, %p48
    %p50 = scmp.ne.s32.totalorder %s42, %s44
    %p51 = scmp.eq.s32.totalorder %s13, 1
    %p52 = por %p50, %p51
    %p53 = scmp.ne.s32.totalorder %s44, %s45
    %p54 = scmp.eq.s32.totalorder %s13, 0
    %p55 = por %p53, %p54
    %p56 = scmp.ne.s32.totalorder %s44, %s45
    %p57 = scmp.eq.s32.totalorder %s14, 1
    %p58 = por %p56, %p57
    %p60 = scmp.ne.s32.totalorder %s45, %s59
    %p61 = scmp.eq.s32.totalorder %s14, 0
    %p62 = por %p60, %p61
    %s63 = ssub.s32 %s8, %s15
    %p64 = scmp.eq.s32.totalorder %s63, 0
    %s66 = sadd.s32 %s65, 1
    %s67 = scalar_select %p64, %s65, %s66
    %p70 = pneg %p64
    %p71 = scmp.eq.s32.totalorder %s8, 1
    %p72 = por %p70, %p71
    %p73 = scmp.ne.s32.totalorder %s65, %s68
    %p74 = scmp.eq.s32.totalorder %s8, 0
    %p75 = por %p73, %p74
    %p76 = scmp.ne.s32.totalorder %s65, %s68
    %p77 = scmp.eq.s32.totalorder %s13, 1
    %p78 = por %p76, %p77
    %p79 = scmp.ne.s32.totalorder %s68, %s69
    %p80 = scmp.eq.s32.totalorder %s13, 0
    %p81 = por %p79, %p80
    %p82 = scmp.ne.s32.totalorder %s68, %s69
    %p83 = scmp.eq.s32.totalorder %s14, 1
    %p84 = por %p82, %p83
    %p86 = scmp.ne.s32.totalorder %s69, %s85
    %p87 = scmp.eq.s32.totalorder %s14, 0
    %p88 = por %p86, %p87
    %p89 = scmp.le.s32.totalorder 1, %s8
    %p90 = scmp.lt.s32.totalorder %s8, 3
    %p91 = pnand %p89, %p90
    %p92 = pneg %p91
    // Predicated region
    $region9: #{netgat_forward.6} parent=5 // pred_check
      _
    $region10: #{netgat_forward.6} parent=5 // pred_check_branch
      %94 = sbr.rel (%p91) target = $region12
    $region11: #{netgat_forward.6} parent=5 // pred_region
      %s95 = ssub.s32 %s8, 1
      // Predicated region
      $region13: #{netgat_forward.6} parent=11 // pred_check
        %p96 = pneg %p55
      $region14: #{netgat_forward.6} parent=11 // pred_check_branch
        %98 = sbr.rel (%p96) target = $region16
      $region15: #{netgat_forward.6} parent=11 // pred_region
        _
      $region16: #{netgat_forward.6} parent=11 // pred_fallthru
        _
    $region12: #{netgat_forward.6} parent=5 // pred_fallthru
      _
    %p99 = scmp.lt.s32.totalorder %s8, 2
    // Predicated region
    $region17: #{netgat_forward.6} parent=5 // pred_check
      %p100 = pneg %p99
    $region18: #{netgat_forward.6} parent=5 // pred_check_branch
      %102 = sbr.rel (%p100) target = $region20
    $region19: #{netgat_forward.6} parent=5 // pred_region
      // Predicated region
      $region21: #{netgat_forward.6} parent=19 // pred_check
        %p103 = pneg %p28
      $region22: #{netgat_forward.6} parent=19 // pred_check_branch
        %105 = sbr.rel (%p103) target = $region24
      $region23: #{netgat_forward.6} parent=19 // pred_region
        %s106 = smul.u32 16, %s8
        %p107 = scmp.lt.s32.totalorder %s106, 31
        %s108 = scalar_select %p107, %s106, 31
        %s109 = smul.addr %s108, 4
        %s110 = scalar_lea.vmem %s0, %s109
        %s111 = smul.u32 16, %s8
      $region24: #{netgat_forward.6} parent=19 // pred_fallthru
        _
    $region20: #{netgat_forward.6} parent=5 // pred_fallthru
      _
    %p112 = scmp.le.s32.totalorder 1, %s8
    %p113 = scmp.lt.s32.totalorder %s8, 3
    %p114 = pnand %p112, %p113
    %p115 = pneg %p114
    // Predicated region
    $region25: #{netgat_forward.6} parent=5 // pred_check
      _
    $region26: #{netgat_forward.6} parent=5 // pred_check_branch
      %117 = sbr.rel (%p114) target = $region28
    $region27: #{netgat_forward.6} parent=5 // pred_region
      %s118 = ssub.s32 %s8, 1
      %s119 = smul.u32 16, %s13
      %p120 = scmp.lt.s32.totalorder %s119, 31
      %s121 = scalar_select %p120, %s119, 31
      %s122 = smul.addr %s121, 4
      %s123 = scalar_lea.vmem %s0, %s122
      %p124 = pneg %p34
      %p125 = pneg %p31
      %p126 = pneg %p55
      %p127 = pneg %p52
      %p128 = pneg %p81
      %p129 = pneg %p78
      %s130 = smul.u32 16, %s13
      %p131 = scmp.lt.s32.totalorder %s130, 31
      %s132 = scalar_select %p131, %s130, 31
      %s133 = smul.addr %s132, 2
      %s134 = smul.addr %s133, 8
      %s135 = scalar_lea.vmem %s2, %s134
      %s136 = smul.u32 16, %s13
      %p137 = scmp.lt.s32.totalorder %s136, 31
      %s138 = scalar_select %p137, %s136, 31
      %s139 = smul.addr %s138, 4
      %s140 = scalar_lea.vmem %s0, %s139
      %s141 = smul.u32 16, %s13
      %s142 = smul.u32 16, %s13
      %p143 = scmp.lt.s32.totalorder %s142, 31
      %s144 = scalar_select %p143, %s142, 31
      %s145 = smul.addr %s144, 2
      %s146 = smul.addr %s145, 8
      %s147 = scalar_lea.vmem %s2, %s146
      %s148 = smul.u32 16, %s13
      %v150 = vld [vmem:[%s140] sm:$0xf]
      %v151 = vld [vmem:[%s140 + $0x4] sm:$0xf]
      %v152 = vld [vmem:[%s140 + $0x8] sm:$0xf]
      %v153 = vld [vmem:[%s140 + $0xc] sm:$0xf]
      %v154 = vld [vmem:[%s140 + $0x10] sm:$0xf]
      %v155 = vld [vmem:[%s140 + $0x14] sm:$0xf]
      %v156 = vld [vmem:[%s140 + $0x18] sm:$0xf]
      %v157 = vld [vmem:[%s140 + $0x1c] sm:$0xf]
      %v158 = vld [vmem:[%s140 + $0x20] sm:$0xf]
      %v159 = vld [vmem:[%s140 + $0x24] sm:$0xf]
      %v160 = vld [vmem:[%s140 + $0x28] sm:$0xf]
      %v161 = vld [vmem:[%s140 + $0x2c] sm:$0xf]
      %v162 = vld [vmem:[%s140 + $0x30] sm:$0xf]
      %v163 = vld [vmem:[%s140 + $0x34] sm:$0xf]
      %v164 = vld [vmem:[%s140 + $0x38] sm:$0xf]
      %v165 = vld [vmem:[%s140 + $0x3c] sm:$0xf]
      %v166 = vld [vmem:[%s1] sm:$0xff]
      %v167 = vld [vmem:[%s1 + $0x8] sm:$0xff]
      %v168 = vld [vmem:[%s1 + $0x10] sm:$0xff]
      %v169 = vld [vmem:[%s1 + $0x18] sm:$0xff]
      %v170 = vld [vmem:[%s1 + $0x20] sm:$0xff]
      %v171 = vld [vmem:[%s1 + $0x28] sm:$0xff]
      %v172 = vld [vmem:[%s1 + $0x30] sm:$0xff]
      %v173 = vld [vmem:[%s1 + $0x38] sm:$0xff]
      %v174 = vld [vmem:[%s1 + $0x40] sm:$0xff]
      %v175 = vld [vmem:[%s1 + $0x48] sm:$0xff]
      %v176 = vld [vmem:[%s1 + $0x50] sm:$0xff]
      %v177 = vld [vmem:[%s1 + $0x58] sm:$0xff]
      %v178 = vld [vmem:[%s1 + $0x60] sm:$0xff]
      %v179 = vld [vmem:[%s1 + $0x68] sm:$0xff]
      %v180 = vld [vmem:[%s1 + $0x70] sm:$0xff]
      %v181 = vld [vmem:[%s1 + $0x78] sm:$0xff]
      %v198 = vunpack.c.l.b16 %v150
      %v199 = vunpack.c.l.b16 %v151
      %v200 = vunpack.c.l.b16 %v152
      %v201 = vunpack.c.l.b16 %v153
      %v202 = vunpack.c.l.b16 %v154
      %v203 = vunpack.c.l.b16 %v155
      %v204 = vunpack.c.l.b16 %v156
      %v205 = vunpack.c.l.b16 %v157
      %v206 = vunpack.c.l.b16 %v158
      %v207 = vunpack.c.l.b16 %v159
      %v208 = vunpack.c.l.b16 %v160
      %v209 = vunpack.c.l.b16 %v161
      %v210 = vunpack.c.l.b16 %v162
      %v211 = vunpack.c.l.b16 %v163
      %v212 = vunpack.c.l.b16 %v164
      %v213 = vunpack.c.l.b16 %v165
      %v214 = vpack.c.b16 %v199, %v198
      %v215 = vpack.c.b16 %v201, %v200
      %v216 = vpack.c.b16 %v203, %v202
      %v217 = vpack.c.b16 %v205, %v204
      %v218 = vpack.c.b16 %v207, %v206
      %v219 = vpack.c.b16 %v209, %v208
      %v220 = vpack.c.b16 %v211, %v210
      %v221 = vpack.c.b16 %v213, %v212
      %v246 = vunpack.c.l.b16 %v166
      %v247 = vunpack.c.h.b16 %v166
      %v248 = vunpack.c.l.b16 %v167
      %v249 = vunpack.c.h.b16 %v167
      %v250 = vunpack.c.l.b16 %v168
      %v251 = vunpack.c.h.b16 %v168
      %v252 = vunpack.c.l.b16 %v169
      %v253 = vunpack.c.h.b16 %v169
      %v254 = vunpack.c.l.b16 %v170
      %v255 = vunpack.c.h.b16 %v170
      %v256 = vunpack.c.l.b16 %v171
      %v257 = vunpack.c.h.b16 %v171
      %v258 = vunpack.c.l.b16 %v172
      %v259 = vunpack.c.h.b16 %v172
      %v260 = vunpack.c.l.b16 %v173
      %v261 = vunpack.c.h.b16 %v173
      %v262 = vunpack.c.l.b16 %v174
      %v263 = vunpack.c.h.b16 %v174
      %v264 = vunpack.c.l.b16 %v175
      %v265 = vunpack.c.h.b16 %v175
      %v266 = vunpack.c.l.b16 %v176
      %v267 = vunpack.c.h.b16 %v176
      %v268 = vunpack.c.l.b16 %v177
      %v269 = vunpack.c.h.b16 %v177
      %v270 = vunpack.c.l.b16 %v178
      %v271 = vunpack.c.h.b16 %v178
      %v272 = vunpack.c.l.b16 %v179
      %v273 = vunpack.c.h.b16 %v179
      %v274 = vunpack.c.l.b16 %v180
      %v275 = vunpack.c.h.b16 %v180
      %v276 = vunpack.c.l.b16 %v181
      %v277 = vunpack.c.h.b16 %v181
      %v278 = vpack.c.b16 %v248, %v246
      %v279 = vpack.c.b16 %v249, %v247
      %v280 = vpack.c.b16 %v252, %v250
      %v281 = vpack.c.b16 %v253, %v251
      %v282 = vpack.c.b16 %v256, %v254
      %v283 = vpack.c.b16 %v257, %v255
      %v284 = vpack.c.b16 %v260, %v258
      %v285 = vpack.c.b16 %v261, %v259
      %v286 = vpack.c.b16 %v264, %v262
      %v287 = vpack.c.b16 %v265, %v263
      %v288 = vpack.c.b16 %v268, %v266
      %v289 = vpack.c.b16 %v269, %v267
      %v290 = vpack.c.b16 %v272, %v270
      %v291 = vpack.c.b16 %v273, %v271
      %v292 = vpack.c.b16 %v276, %v274
      %v293 = vpack.c.b16 %v277, %v275
      %310 = vmatprep.subr.bf16.mxu0 %v279
      %311 = vmatpush1.bf16.msra.mxu0 %v278
      %312 = vmatprep.subr.bf16.mxu0 %v281
      %313 = vmatpush1.bf16.msra.mxu0 %v280
      %314 = vmatprep.subr.bf16.mxu0 %v283
      %315 = vmatpush1.bf16.msra.mxu0 %v282
      %316 = vmatprep.subr.bf16.mxu0 %v285
      %317 = vmatpush1.bf16.msra.mxu0 %v284
      %318 = vmatprep.subr.bf16.mxu0 %v287
      %319 = vmatpush1.bf16.msra.mxu0 %v286
      %320 = vmatprep.subr.bf16.mxu0 %v289
      %321 = vmatpush1.bf16.msra.mxu0 %v288
      %322 = vmatprep.subr.bf16.mxu0 %v291
      %323 = vmatpush1.bf16.msra.mxu0 %v290
      %324 = vmatprep.subr.bf16.mxu0 %v293
      %325 = vmatpush1.bf16.msra.mxu0 %v292
      %326 = vmatprep.subr.bf16.mxu0 0
      %327 = vmatpush1.bf16.msra.mxu0 0
      %328 = vmatprep.subr.bf16.mxu0 0
      %329 = vmatpush1.bf16.msra.mxu0 0
      %330 = vmatprep.subr.bf16.mxu0 0
      %331 = vmatpush1.bf16.msra.mxu0 0
      %332 = vmatprep.subr.bf16.mxu0 0
      %333 = vmatpush1.bf16.msra.mxu0 0
      %334 = vmatprep.subr.bf16.mxu0 0
      %335 = vmatpush1.bf16.msra.mxu0 0
      %336 = vmatprep.subr.bf16.mxu0 0
      %337 = vmatpush1.bf16.msra.mxu0 0
      %338 = vmatprep.subr.bf16.mxu0 0
      %339 = vmatpush1.bf16.msra.mxu0 0
      %340 = vmatprep.subr.bf16.mxu0 0
      %341 = vmatpush1.bf16.msra.mxu0 0
      %342 = vmatprep.mubr.bf16.mxu0 0
      %343 = vmatmul.mubr.bf16.gmra.mrb[0].mxu0 %v214
      %v344 = vpop.f32.mrb[0].mxu0
      %v345 = vadd.f32 0.0, %v344
      %v346 = vpop.f32.mrb[0].mxu0
      %v347 = vadd.f32 0.0, %v346
      %v348 = vpop.f32.mrb[0].mxu0
      %v349 = vadd.f32 0.0, %v348
      %v350 = vpop.f32.mrb[0].mxu0
      %v351 = vadd.f32 0.0, %v350
      %352 = vmatprep.mubr.bf16.mxu0 0
      %353 = vmatmul.mubr.bf16.gmra.mrb[0].mxu0 %v215
      %v354 = vpop.f32.mrb[0].mxu0
      %v355 = vadd.f32 0.0, %v354
      %v356 = vpop.f32.mrb[0].mxu0
      %v357 = vadd.f32 0.0, %v356
      %v358 = vpop.f32.mrb[0].mxu0
      %v359 = vadd.f32 0.0, %v358
      %v360 = vpop.f32.mrb[0].mxu0
      %v361 = vadd.f32 0.0, %v360
      %362 = vmatprep.mubr.bf16.mxu0 0
      %363 = vmatmul.mubr.bf16.gmra.mrb[0].mxu0 %v216
      %v364 = vpop.f32.mrb[0].mxu0
      %v365 = vadd.f32 0.0, %v364
      %v366 = vpop.f32.mrb[0].mxu0
      %v367 = vadd.f32 0.0, %v366
      %v368 = vpop.f32.mrb[0].mxu0
      %v369 = vadd.f32 0.0, %v368
      %v370 = vpop.f32.mrb[0].mxu0
      %v371 = vadd.f32 0.0, %v370
      %372 = vmatprep.mubr.bf16.mxu0 0
      %373 = vmatmul.mubr.bf16.gmra.mrb[0].mxu0 %v217
      %v374 = vpop.f32.mrb[0].mxu0
      %v375 = vadd.f32 0.0, %v374
      %v376 = vpop.f32.mrb[0].mxu0
      %v377 = vadd.f32 0.0, %v376
      %v378 = vpop.f32.mrb[0].mxu0
      %v379 = vadd.f32 0.0, %v378
      %v380 = vpop.f32.mrb[0].mxu0
      %v381 = vadd.f32 0.0, %v380
      %382 = vmatprep.mubr.bf16.mxu0 0
      %383 = vmatmul.mubr.bf16.gmra.mrb[0].mxu0 %v218
      %v384 = vpop.f32.mrb[0].mxu0
      %v385 = vadd.f32 0.0, %v384
      %v386 = vpop.f32.mrb[0].mxu0
      %v387 = vadd.f32 0.0, %v386
      %v388 = vpop.f32.mrb[0].mxu0
      %v389 = vadd.f32 0.0, %v388
      %v390 = vpop.f32.mrb[0].mxu0
      %v391 = vadd.f32 0.0, %v390
      %392 = vmatprep.mubr.bf16.mxu0 0
      %393 = vmatmul.mubr.bf16.gmra.mrb[0].mxu0 %v219
      %v394 = vpop.f32.mrb[0].mxu0
      %v395 = vadd.f32 0.0, %v394
      %v396 = vpop.f32.mrb[0].mxu0
      %v397 = vadd.f32 0.0, %v396
      %v398 = vpop.f32.mrb[0].mxu0
      %v399 = vadd.f32 0.0, %v398
      %v400 = vpop.f32.mrb[0].mxu0
      %v401 = vadd.f32 0.0, %v400
      %402 = vmatprep.mubr.bf16.mxu0 0
      %403 = vmatmul.mubr.bf16.gmra.mrb[0].mxu0 %v220
      %v404 = vpop.f32.mrb[0].mxu0
      %v405 = vadd.f32 0.0, %v404
      %v406 = vpop.f32.mrb[0].mxu0
      %v407 = vadd.f32 0.0, %v406
      %v408 = vpop.f32.mrb[0].mxu0
      %v409 = vadd.f32 0.0, %v408
      %v410 = vpop.f32.mrb[0].mxu0
      %v411 = vadd.f32 0.0, %v410
      %412 = vmatprep.mubr.bf16.mxu0 0
      %413 = vmatmul.mubr.bf16.gmra.mrb[0].mxu0 %v221
      %v414 = vpop.f32.mrb[0].mxu0
      %v415 = vadd.f32 0.0, %v414
      %v416 = vpop.f32.mrb[0].mxu0
      %v417 = vadd.f32 0.0, %v416
      %v418 = vpop.f32.mrb[0].mxu0
      %v419 = vadd.f32 0.0, %v418
      %v420 = vpop.f32.mrb[0].mxu0
      %v421 = vadd.f32 0.0, %v420
      %422 = vdwg.mxu0
      %423 = vst [vmem:[%s147] sm:$0xff] %v345
      %vm424 = vcmask 15360
      %425 = vst.msk [vmem:[%s147 + $0x8] sm:$0xff] %vm424, %v347
      %426 = vst [vmem:[%s147 + $0x10] sm:$0xff] %v349
      %427 = vst.msk [vmem:[%s147 + $0x18] sm:$0xff] %vm424, %v351
      %428 = vst [vmem:[%s147 + $0x20] sm:$0xff] %v355
      %429 = vst.msk [vmem:[%s147 + $0x28] sm:$0xff] %vm424, %v357
      %430 = vst [vmem:[%s147 + $0x30] sm:$0xff] %v359
      %431 = vst.msk [vmem:[%s147 + $0x38] sm:$0xff] %vm424, %v361
      %432 = vst [vmem:[%s147 + $0x40] sm:$0xff] %v365
      %433 = vst.msk [vmem:[%s147 + $0x48] sm:$0xff] %vm424, %v367
      %434 = vst [vmem:[%s147 + $0x50] sm:$0xff] %v369
      %435 = vst.msk [vmem:[%s147 + $0x58] sm:$0xff] %vm424, %v371
      %436 = vst [vmem:[%s147 + $0x60] sm:$0xff] %v375
      %437 = vst.msk [vmem:[%s147 + $0x68] sm:$0xff] %vm424, %v377
      %438 = vst [vmem:[%s147 + $0x70] sm:$0xff] %v379
      %439 = vst.msk [vmem:[%s147 + $0x78] sm:$0xff] %vm424, %v381
      %440 = vst [vmem:[%s147 + $0x80] sm:$0xff] %v385
      %441 = vst.msk [vmem:[%s147 + $0x88] sm:$0xff] %vm424, %v387
      %442 = vst [vmem:[%s147 + $0x90] sm:$0xff] %v389
      %443 = vst.msk [vmem:[%s147 + $0x98] sm:$0xff] %vm424, %v391
      %444 = vst [vmem:[%s147 + $0xa0] sm:$0xff] %v395
      %445 = vst.msk [vmem:[%s147 + $0xa8] sm:$0xff] %vm424, %v397
      %446 = vst [vmem:[%s147 + $0xb0] sm:$0xff] %v399
      %447 = vst.msk [vmem:[%s147 + $0xb8] sm:$0xff] %vm424, %v401
      %448 = vst [vmem:[%s147 + $0xc0] sm:$0xff] %v405
      %449 = vst.msk [vmem:[%s147 + $0xc8] sm:$0xff] %vm424, %v407
      %450 = vst [vmem:[%s147 + $0xd0] sm:$0xff] %v409
      %451 = vst.msk [vmem:[%s147 + $0xd8] sm:$0xff] %vm424, %v411
      %452 = vst [vmem:[%s147 + $0xe0] sm:$0xff] %v415
      %453 = vst.msk [vmem:[%s147 + $0xe8] sm:$0xff] %vm424, %v417
      %454 = vst [vmem:[%s147 + $0xf0] sm:$0xff] %v419
      %455 = vst.msk [vmem:[%s147 + $0xf8] sm:$0xff] %vm424, %v421
      %s456 = smul.u32 16, %s13
      %p457 = scmp.lt.s32.totalorder %s456, 31
      %s458 = scalar_select %p457, %s456, 31
      %s459 = smul.addr %s458, 2
      %s460 = smul.addr %s459, 8
      %s461 = scalar_lea.vmem %s2, %s460
      // Predicated region
      $region29: #{netgat_forward.6} parent=27 // pred_check
        %p462 = pneg %p78
      $region30: #{netgat_forward.6} parent=27 // pred_check_branch
        %464 = sbr.rel (%p462) target = $region32
      $region31: #{netgat_forward.6} parent=27 // pred_region
        %s465 = smul.u32 16, %s13
      $region32: #{netgat_forward.6} parent=27 // pred_fallthru
        _
    $region28: #{netgat_forward.6} parent=5 // pred_fallthru
      _
    %p466 = scmp.le.s32.totalorder 2, %s8
    // Predicated region
    $region33: #{netgat_forward.6} parent=5 // pred_check
      %p467 = pneg %p466
    $region34: #{netgat_forward.6} parent=5 // pred_check_branch
      %469 = sbr.rel (%p467) target = $region36
    $region35: #{netgat_forward.6} parent=5 // pred_region
      %s470 = ssub.s32 %s8, 2
      // Predicated region
      $region37: #{netgat_forward.6} parent=35 // pred_check
        %p471 = pneg %p84
      $region38: #{netgat_forward.6} parent=35 // pred_check_branch
        %473 = sbr.rel (%p471) target = $region40
      $region39: #{netgat_forward.6} parent=35 // pred_region
        %s474 = smul.u32 16, %s14
        %p475 = scmp.lt.s32.totalorder %s474, 31
        %s476 = scalar_select %p475, %s474, 31
        %s477 = smul.addr %s476, 2
        %s478 = smul.addr %s477, 8
        %s479 = scalar_lea.vmem %s2, %s478
      $region40: #{netgat_forward.6} parent=35 // pred_fallthru
        _
    $region36: #{netgat_forward.6} parent=5 // pred_fallthru
      _
  $region6: #{netgat_forward.6} parent=0 // loop_footer
    %s12 = sadd.s32 1, %s8
  $region7: #{netgat_forward.6} parent=0 // loop_footer_branch
    %7 = sbr.rel target = $region3
  $region8: #{netgat_forward.6} parent=0 // loop_exit
    _

// kernel: netgat_forward.7
$region0: #{netgat_forward.7}
  #allocation0 [shape = 'u32[]', space=smem, size = 0x4, offset = 0x4, fixed_abs, tag = 'smem constant byte address 0x4 - core index']
  #allocation1 [shape = 'u32[144,128]{1,0:T(1,128)}', space=vmem, size = 0x12000, scoped, tag = 'internal scratch']
  %s0 = inlined_call_operand.vmem [shape: s8[256,256], index: 0, kind: input, shape index: {}]
  %s1 = inlined_call_operand.vmem [shape: f32[1,256], index: 1, kind: input, shape index: {}]
  %s2 = inlined_call_operand.vmem [shape: f32[256,1], index: 2, kind: input, shape index: {}]
  %s3 = inlined_call_operand.vmem [shape: bf16[1,256,128], index: 3, kind: input, shape index: {}]
  %s4 = inlined_call_operand.vmem [shape: f32[1,128], index: 4, kind: input, shape index: {}]
  %s5 = inlined_call_operand.vmem [shape: f32[256,128], index: 5, kind: output, shape index: {}]
  %s6 = sld [smem:[#allocation0]]
  $region53: #{netgat_forward.7} parent=0
    _
  %s8 = ssub.s32 1, %s6
  %s9 = scalar_select 0, %s8, %s6
  loop: start=0, step=1, limit=4
  $region2: #{netgat_forward.7} parent=0 // loop_pre_header
    _
  $region3: #{netgat_forward.7} parent=0 // loop_header
    %s11 = sphi 0, %s15
    %p12 = scmp.ge.s32.totalorder %s11, 4
    %s21 = sphi 0, %s23
    %s24 = sphi 0, %s21
    %s25 = sphi 0, %s24
    %s41 = sphi 0, %s25
    %s45 = sphi 0, %s45
    %s47 = sphi 0, %s45
    %s48 = sphi 0, %s47
    %s62 = sphi 0, %s48
    %s68 = sphi 0, %s70
    %s71 = sphi 0, %s68
    %s72 = sphi 0, %s71
    %s88 = sphi 0, %s72
    %s92 = sphi 0, %s92
    %s94 = sphi 0, %s92
    %s95 = sphi 0, %s94
    %s109 = sphi 0, %s95
    %s113 = sphi 0, %s113
    %s115 = sphi 0, %s113
    %s116 = sphi 0, %s115
    %s130 = sphi 0, %s116
    %s136 = sphi 0, %s138
    %s139 = sphi 0, %s136
    %s140 = sphi 0, %s139
    %s156 = sphi 0, %s140
  $region4: #{netgat_forward.7} parent=0 // loop_header_branch
    %14 = sbr.rel (%p12) target = $region8
  $region5: #{netgat_forward.7} parent=0 // loop_body
    %s16 = ssub.s32 %s11, 1
    %s17 = ssub.s32 %s11, 2
    %s18 = sadd.s32 %s11, 1
    %s19 = ssub.s32 %s11, %s18
    %p20 = scmp.eq.s32.totalorder %s19, 0
    %s22 = sadd.s32 %s21, 1
    %s23 = scalar_select %p20, %s21, %s22
    %p26 = pneg %p20
    %p27 = scmp.eq.s32.totalorder %s11, 1
    %p28 = por %p26, %p27
    %p29 = scmp.ne.s32.totalorder %s21, %s24
    %p30 = scmp.eq.s32.totalorder %s11, 0
    %p31 = por %p29, %p30
    %p32 = scmp.ne.s32.totalorder %s21, %s24
    %p33 = scmp.eq.s32.totalorder %s16, 1
    %p34 = por %p32, %p33
    %p35 = scmp.ne.s32.totalorder %s24, %s25
    %p36 = scmp.eq.s32.totalorder %s16, 0
    %p37 = por %p35, %p36
    %p38 = scmp.ne.s32.totalorder %s24, %s25
    %p39 = scmp.eq.s32.totalorder %s17, 1
    %p40 = por %p38, %p39
    %p42 = scmp.ne.s32.totalorder %s25, %s41
    %p43 = scmp.eq.s32.totalorder %s17, 0
    %p44 = por %p42, %p43
    %s46 = sadd.s32 %s45, 1
    %p49 = scmp.eq.s32.totalorder %s11, 1
    %p50 = scmp.ne.s32.totalorder %s45, %s47
    %p51 = scmp.eq.s32.totalorder %s11, 0
    %p52 = por %p50, %p51
    %p53 = scmp.ne.s32.totalorder %s45, %s47
    %p54 = scmp.eq.s32.totalorder %s16, 1
    %p55 = por %p53, %p54
    %p56 = scmp.ne.s32.totalorder %s47, %s48
    %p57 = scmp.eq.s32.totalorder %s16, 0
    %p58 = por %p56, %p57
    %p59 = scmp.ne.s32.totalorder %s47, %s48
    %p60 = scmp.eq.s32.totalorder %s17, 1
    %p61 = por %p59, %p60
    %p63 = scmp.ne.s32.totalorder %s48, %s62
    %p64 = scmp.eq.s32.totalorder %s17, 0
    %p65 = por %p63, %p64
    %s66 = ssub.s32 %s11, %s18
    %p67 = scmp.eq.s32.totalorder %s66, 0
    %s69 = sadd.s32 %s68, 1
    %s70 = scalar_select %p67, %s68, %s69
    %p73 = pneg %p67
    %p74 = scmp.eq.s32.totalorder %s11, 1
    %p75 = por %p73, %p74
    %p76 = scmp.ne.s32.totalorder %s68, %s71
    %p77 = scmp.eq.s32.totalorder %s11, 0
    %p78 = por %p76, %p77
    %p79 = scmp.ne.s32.totalorder %s68, %s71
    %p80 = scmp.eq.s32.totalorder %s16, 1
    %p81 = por %p79, %p80
    %p82 = scmp.ne.s32.totalorder %s71, %s72
    %p83 = scmp.eq.s32.totalorder %s16, 0
    %p84 = por %p82, %p83
    %p85 = scmp.ne.s32.totalorder %s71, %s72
    %p86 = scmp.eq.s32.totalorder %s17, 1
    %p87 = por %p85, %p86
    %p89 = scmp.ne.s32.totalorder %s72, %s88
    %p90 = scmp.eq.s32.totalorder %s17, 0
    %p91 = por %p89, %p90
    %s93 = sadd.s32 %s92, 1
    %p96 = scmp.eq.s32.totalorder %s11, 1
    %p97 = scmp.ne.s32.totalorder %s92, %s94
    %p98 = scmp.eq.s32.totalorder %s11, 0
    %p99 = por %p97, %p98
    %p100 = scmp.ne.s32.totalorder %s92, %s94
    %p101 = scmp.eq.s32.totalorder %s16, 1
    %p102 = por %p100, %p101
    %p103 = scmp.ne.s32.totalorder %s94, %s95
    %p104 = scmp.eq.s32.totalorder %s16, 0
    %p105 = por %p103, %p104
    %p106 = scmp.ne.s32.totalorder %s94, %s95
    %p107 = scmp.eq.s32.totalorder %s17, 1
    %p108 = por %p106, %p107
    %p110 = scmp.ne.s32.totalorder %s95, %s109
    %p111 = scmp.eq.s32.totalorder %s17, 0
    %p112 = por %p110, %p111
    %s114 = sadd.s32 %s113, 1
    %p117 = scmp.eq.s32.totalorder %s11, 1
    %p118 = scmp.ne.s32.totalorder %s113, %s115
    %p119 = scmp.eq.s32.totalorder %s11, 0
    %p120 = por %p118, %p119
    %p121 = scmp.ne.s32.totalorder %s113, %s115
    %p122 = scmp.eq.s32.totalorder %s16, 1
    %p123 = por %p121, %p122
    %p124 = scmp.ne.s32.totalorder %s115, %s116
    %p125 = scmp.eq.s32.totalorder %s16, 0
    %p126 = por %p124, %p125
    %p127 = scmp.ne.s32.totalorder %s115, %s116
    %p128 = scmp.eq.s32.totalorder %s17, 1
    %p129 = por %p127, %p128
    %p131 = scmp.ne.s32.totalorder %s116, %s130
    %p132 = scmp.eq.s32.totalorder %s17, 0
    %p133 = por %p131, %p132
    %s134 = ssub.s32 %s11, %s18
    %p135 = scmp.eq.s32.totalorder %s134, 0
    %s137 = sadd.s32 %s136, 1
    %s138 = scalar_select %p135, %s136, %s137
    %p141 = pneg %p135
    %p142 = scmp.eq.s32.totalorder %s11, 1
    %p143 = por %p141, %p142
    %p144 = scmp.ne.s32.totalorder %s136, %s139
    %p145 = scmp.eq.s32.totalorder %s11, 0
    %p146 = por %p144, %p145
    %p147 = scmp.ne.s32.totalorder %s136, %s139
    %p148 = scmp.eq.s32.totalorder %s16, 1
    %p149 = por %p147, %p148
    %p150 = scmp.ne.s32.totalorder %s139, %s140
    %p151 = scmp.eq.s32.totalorder %s16, 0
    %p152 = por %p150, %p151
    %p153 = scmp.ne.s32.totalorder %s139, %s140
    %p154 = scmp.eq.s32.totalorder %s17, 1
    %p155 = por %p153, %p154
    %p157 = scmp.ne.s32.totalorder %s140, %s156
    %p158 = scmp.eq.s32.totalorder %s17, 0
    %p159 = por %p157, %p158
    %p160 = scmp.le.s32.totalorder 1, %s11
    %p161 = scmp.lt.s32.totalorder %s11, 3
    %p162 = pnand %p160, %p161
    %p163 = pneg %p162
    // Predicated region
    $region9: #{netgat_forward.7} parent=5 // pred_check
      _
    $region10: #{netgat_forward.7} parent=5 // pred_check_branch
      %165 = sbr.rel (%p162) target = $region12
    $region11: #{netgat_forward.7} parent=5 // pred_region
      %s166 = ssub.s32 %s11, 1
      // Predicated region
      $region13: #{netgat_forward.7} parent=11 // pred_check
        %p167 = pneg %p58
      $region14: #{netgat_forward.7} parent=11 // pred_check_branch
        %169 = sbr.rel (%p167) target = $region16
      $region15: #{netgat_forward.7} parent=11 // pred_region
        _
      $region16: #{netgat_forward.7} parent=11 // pred_fallthru
        _
      // Predicated region
      $region17: #{netgat_forward.7} parent=11 // pred_check
        %p170 = pneg %p105
      $region18: #{netgat_forward.7} parent=11 // pred_check_branch
        %172 = sbr.rel (%p170) target = $region20
      $region19: #{netgat_forward.7} parent=11 // pred_region
        _
      $region20: #{netgat_forward.7} parent=11 // pred_fallthru
        _
      // Predicated region
      $region21: #{netgat_forward.7} parent=11 // pred_check
        %p173 = pneg %p126
      $region22: #{netgat_forward.7} parent=11 // pred_check_branch
        %175 = sbr.rel (%p173) target = $region24
      $region23: #{netgat_forward.7} parent=11 // pred_region
        _
      $region24: #{netgat_forward.7} parent=11 // pred_fallthru
        _
    $region12: #{netgat_forward.7} parent=5 // pred_fallthru
      _
    %p176 = scmp.lt.s32.totalorder %s11, 2
    // Predicated region
    $region25: #{netgat_forward.7} parent=5 // pred_check
      %p177 = pneg %p176
    $region26: #{netgat_forward.7} parent=5 // pred_check_branch
      %179 = sbr.rel (%p177) target = $region28
    $region27: #{netgat_forward.7} parent=5 // pred_region
      // Predicated region
      $region29: #{netgat_forward.7} parent=27 // pred_check
        %p180 = pneg %p31
      $region30: #{netgat_forward.7} parent=27 // pred_check_branch
        %182 = sbr.rel (%p180) target = $region32
      $region31: #{netgat_forward.7} parent=27 // pred_region
        %s183 = smul.u32 4, %s11
        %p184 = scmp.lt.s32.totalorder %s183, 7
        %s185 = scalar_select %p184, %s183, 7
        %s186 = smul.addr %s185, 2
        %s187 = smul.addr %s186, 8
        %s188 = scalar_lea.vmem %s0, %s187
        %s189 = smul.u32 4, %s11
      $region32: #{netgat_forward.7} parent=27 // pred_fallthru
        _
      // Predicated region
      $region33: #{netgat_forward.7} parent=27 // pred_check
        %p190 = pneg %p78
      $region34: #{netgat_forward.7} parent=27 // pred_check_branch
        %192 = sbr.rel (%p190) target = $region36
      $region35: #{netgat_forward.7} parent=27 // pred_region
        %s193 = smul.u32 16, %s11
        %p194 = scmp.lt.s32.totalorder %s193, 31
        %s195 = scalar_select %p194, %s193, 31
        %s196 = smul.addr %s195, 8
        %s197 = scalar_lea.vmem %s2, %s196
        %s198 = smul.u32 16, %s11
      $region36: #{netgat_forward.7} parent=27 // pred_fallthru
        _
    $region28: #{netgat_forward.7} parent=5 // pred_fallthru
      _
    %p199 = scmp.le.s32.totalorder 1, %s11
    %p200 = scmp.lt.s32.totalorder %s11, 3
    %p201 = pnand %p199, %p200
    %p202 = pneg %p201
    // Predicated region
    $region37: #{netgat_forward.7} parent=5 // pred_check
      _
    $region38: #{netgat_forward.7} parent=5 // pred_check_branch
      %204 = sbr.rel (%p201) target = $region40
    $region39: #{netgat_forward.7} parent=5 // pred_region
      %s205 = ssub.s32 %s11, 1
      %s206 = smul.u32 4, %s16
      %p207 = scmp.lt.s32.totalorder %s206, 7
      %s208 = scalar_select %p207, %s206, 7
      %s209 = smul.addr %s208, 2
      %s210 = smul.addr %s209, 8
      %s211 = scalar_lea.vmem %s0, %s210
      %p212 = pneg %p37
      %p213 = pneg %p34
      %p214 = pneg %p58
      %p215 = pneg %p55
      %s216 = smul.u32 16, %s16
      %p217 = scmp.lt.s32.totalorder %s216, 31
      %s218 = scalar_select %p217, %s216, 31
      %s219 = smul.addr %s218, 8
      %s220 = scalar_lea.vmem %s2, %s219
      %p221 = pneg %p84
      %p222 = pneg %p81
      %p223 = pneg %p105
      %p224 = pneg %p102
      %p225 = pneg %p126
      %p226 = pneg %p123
      %p227 = pneg %p152
      %p228 = pneg %p149
      %s229 = smul.u32 16, %s16
      %p230 = scmp.lt.s32.totalorder %s229, 31
      %s231 = scalar_select %p230, %s229, 31
      %s232 = smul.addr %s231, 8
      %s233 = scalar_lea.vmem %s5, %s232
      %s234 = smul.u32 4, %s16
      %p235 = scmp.lt.s32.totalorder %s234, 7
      %s236 = scalar_select %p235, %s234, 7
      %s237 = smul.addr %s236, 2
      %s238 = smul.addr %s237, 8
      %s239 = scalar_lea.vmem %s0, %s238
      %s240 = smul.u32 4, %s16
      %s241 = smul.u32 16, %s16
      %p242 = scmp.lt.s32.totalorder %s241, 31
      %s243 = scalar_select %p242, %s241, 31
      %s244 = smul.addr %s243, 8
      %s245 = scalar_lea.vmem %s2, %s244
      %s246 = smul.u32 16, %s16
      %s247 = smul.u32 16, %s16
      %p248 = scmp.lt.s32.totalorder %s247, 31
      %s249 = scalar_select %p248, %s247, 31
      %s250 = smul.addr %s249, 8
      %s251 = scalar_lea.vmem %s5, %s250
      %s252 = smul.u32 16, %s16
      %v254 = vld [vmem:[%s239] sm:$0xff]
      %v255 = vld [vmem:[%s239 + $0x8] sm:$0xff]
      %v256 = vld [vmem:[%s239 + $0x10] sm:$0xff]
      %v257 = vld [vmem:[%s239 + $0x18] sm:$0xff]
      %v258 = vld [vmem:[%s239 + $0x20] sm:$0xff]
      %v259 = vld [vmem:[%s239 + $0x28] sm:$0xff]
      %v260 = vld [vmem:[%s239 + $0x30] sm:$0xff]
      %v261 = vld [vmem:[%s239 + $0x38] sm:$0xff]
      %v262 = vunpack.c.0.s8 %v254
      %v263 = vunpack.c.0.s8 %v255
      %v264 = vunpack.c.1.s8 %v254
      %v265 = vunpack.c.1.s8 %v255
      %v266 = vunpack.c.2.s8 %v254
      %v267 = vunpack.c.2.s8 %v255
      %v268 = vunpack.c.3.s8 %v254
      %v269 = vunpack.c.3.s8 %v255
      %v270 = vunpack.c.0.s8 %v256
      %v271 = vunpack.c.0.s8 %v257
      %v272 = vunpack.c.1.s8 %v256
      %v273 = vunpack.c.1.s8 %v257
      %v274 = vunpack.c.2.s8 %v256
      %v275 = vunpack.c.2.s8 %v257
      %v276 = vunpack.c.3.s8 %v256
      %v277 = vunpack.c.3.s8 %v257
      %v278 = vunpack.c.0.s8 %v258
      %v279 = vunpack.c.0.s8 %v259
      %v280 = vunpack.c.1.s8 %v258
      %v281 = vunpack.c.1.s8 %v259
      %v282 = vunpack.c.2.s8 %v258
      %v283 = vunpack.c.2.s8 %v259
      %v284 = vunpack.c.3.s8 %v258
      %v285 = vunpack.c.3.s8 %v259
      %v286 = vunpack.c.0.s8 %v260
      %v287 = vunpack.c.0.s8 %v261
      %v288 = vunpack.c.1.s8 %v260
      %v289 = vunpack.c.1.s8 %v261
      %v290 = vunpack.c.2.s8 %v260
      %v291 = vunpack.c.2.s8 %v261
      %v292 = vunpack.c.3.s8 %v260
      %v293 = vunpack.c.3.s8 %v261
      %v294 = vcvt.s32.f32 %v262
      %v295 = vcvt.s32.f32 %v263
      %v296 = vcvt.s32.f32 %v264
      %v297 = vcvt.s32.f32 %v265
      %v298 = vcvt.s32.f32 %v266
      %v299 = vcvt.s32.f32 %v267
      %v300 = vcvt.s32.f32 %v268
      %v301 = vcvt.s32.f32 %v269
      %v302 = vcvt.s32.f32 %v270
      %v303 = vcvt.s32.f32 %v271
      %v304 = vcvt.s32.f32 %v272
      %v305 = vcvt.s32.f32 %v273
      %v306 = vcvt.s32.f32 %v274
      %v307 = vcvt.s32.f32 %v275
      %v308 = vcvt.s32.f32 %v276
      %v309 = vcvt.s32.f32 %v277
      %v310 = vcvt.s32.f32 %v278
      %v311 = vcvt.s32.f32 %v279
      %v312 = vcvt.s32.f32 %v280
      %v313 = vcvt.s32.f32 %v281
      %v314 = vcvt.s32.f32 %v282
      %v315 = vcvt.s32.f32 %v283
      %v316 = vcvt.s32.f32 %v284
      %v317 = vcvt.s32.f32 %v285
      %v318 = vcvt.s32.f32 %v286
      %v319 = vcvt.s32.f32 %v287
      %v320 = vcvt.s32.f32 %v288
      %v321 = vcvt.s32.f32 %v289
      %v322 = vcvt.s32.f32 %v290
      %v323 = vcvt.s32.f32 %v291
      %v324 = vcvt.s32.f32 %v292
      %v325 = vcvt.s32.f32 %v293
      %v326 = vsub.f32 %v294, 1.0
      %v327 = vsub.f32 %v295, 1.0
      %v328 = vsub.f32 %v296, 1.0
      %v329 = vsub.f32 %v297, 1.0
      %v330 = vsub.f32 %v298, 1.0
      %v331 = vsub.f32 %v299, 1.0
      %v332 = vsub.f32 %v300, 1.0
      %v333 = vsub.f32 %v301, 1.0
      %v334 = vsub.f32 %v302, 1.0
      %v335 = vsub.f32 %v303, 1.0
      %v336 = vsub.f32 %v304, 1.0
      %v337 = vsub.f32 %v305, 1.0
      %v338 = vsub.f32 %v306, 1.0
      %v339 = vsub.f32 %v307, 1.0
      %v340 = vsub.f32 %v308, 1.0
      %v341 = vsub.f32 %v309, 1.0
      %v342 = vsub.f32 %v310, 1.0
      %v343 = vsub.f32 %v311, 1.0
      %v344 = vsub.f32 %v312, 1.0
      %v345 = vsub.f32 %v313, 1.0
      %v346 = vsub.f32 %v314, 1.0
      %v347 = vsub.f32 %v315, 1.0
      %v348 = vsub.f32 %v316, 1.0
      %v349 = vsub.f32 %v317, 1.0
      %v350 = vsub.f32 %v318, 1.0
      %v351 = vsub.f32 %v319, 1.0
      %v352 = vsub.f32 %v320, 1.0
      %v353 = vsub.f32 %v321, 1.0
      %v354 = vsub.f32 %v322, 1.0
      %v355 = vsub.f32 %v323, 1.0
      %v356 = vsub.f32 %v324, 1.0
      %v357 = vsub.f32 %v325, 1.0
      %v358 = vmul.f32 %v326, 1e+09
      %v359 = vmul.f32 %v327, 1e+09
      %v360 = vmul.f32 %v328, 1e+09
      %v361 = vmul.f32 %v329, 1e+09
      %v362 = vmul.f32 %v330, 1e+09
      %v363 = vmul.f32 %v331, 1e+09
      %v364 = vmul.f32 %v332, 1e+09
      %v365 = vmul.f32 %v333, 1e+09
      %v366 = vmul.f32 %v334, 1e+09
      %v367 = vmul.f32 %v335, 1e+09
      %v368 = vmul.f32 %v336, 1e+09
      %v369 = vmul.f32 %v337, 1e+09
      %v370 = vmul.f32 %v338, 1e+09
      %v371 = vmul.f32 %v339, 1e+09
      %v372 = vmul.f32 %v340, 1e+09
      %v373 = vmul.f32 %v341, 1e+09
      %v374 = vmul.f32 %v342, 1e+09
      %v375 = vmul.f32 %v343, 1e+09
      %v376 = vmul.f32 %v344, 1e+09
      %v377 = vmul.f32 %v345, 1e+09
      %v378 = vmul.f32 %v346, 1e+09
      %v379 = vmul.f32 %v347, 1e+09
      %v380 = vmul.f32 %v348, 1e+09
      %v381 = vmul.f32 %v349, 1e+09
      %v382 = vmul.f32 %v350, 1e+09
      %v383 = vmul.f32 %v351, 1e+09
      %v384 = vmul.f32 %v352, 1e+09
      %v385 = vmul.f32 %v353, 1e+09
      %v386 = vmul.f32 %v354, 1e+09
      %v387 = vmul.f32 %v355, 1e+09
      %v388 = vmul.f32 %v356, 1e+09
      %v389 = vmul.f32 %v357, 1e+09
      %v390 = vld [vmem:[%s245] sm:$0xff]
      %v391 = vld [vmem:[%s245 + $0x8] sm:$0xff]
      %v392 = vld [vmem:[%s245 + $0x10] sm:$0xff]
      %v393 = vld [vmem:[%s245 + $0x18] sm:$0xff]
      %v394 = vld [vmem:[%s245 + $0x20] sm:$0xff]
      %v395 = vld [vmem:[%s245 + $0x28] sm:$0xff]
      %v396 = vld [vmem:[%s245 + $0x30] sm:$0xff]
      %v397 = vld [vmem:[%s245 + $0x38] sm:$0xff]
      %v398 = vld [vmem:[%s245 + $0x40] sm:$0xff]
      %v399 = vld [vmem:[%s245 + $0x48] sm:$0xff]
      %v400 = vld [vmem:[%s245 + $0x50] sm:$0xff]
      %v401 = vld [vmem:[%s245 + $0x58] sm:$0xff]
      %v402 = vld [vmem:[%s245 + $0x60] sm:$0xff]
      %v403 = vld [vmem:[%s245 + $0x68] sm:$0xff]
      %v404 = vld [vmem:[%s245 + $0x70] sm:$0xff]
      %v405 = vld [vmem:[%s245 + $0x78] sm:$0xff]
      %v406 = vld [vmem:[%s1] sm:$0x3]
      %408 = vset.pattern.permute.xlu0 0
      %409 = vperm.xlu0 %408, %v390
      %v410 = vpop.permute.xlu0 %409
      %413 = vset.pattern.permute.xlu0 0
      %414 = vperm.xlu0 %413, %v391
      %v415 = vpop.permute.xlu0 %414
      %418 = vset.pattern.permute.xlu0 0
      %419 = vperm.xlu0 %418, %v392
      %v420 = vpop.permute.xlu0 %419
      %423 = vset.pattern.permute.xlu0 0
      %424 = vperm.xlu0 %423, %v393
      %v425 = vpop.permute.xlu0 %424
      %428 = vset.pattern.permute.xlu0 0
      %429 = vperm.xlu0 %428, %v394
      %v430 = vpop.permute.xlu0 %429
      %433 = vset.pattern.permute.xlu0 0
      %434 = vperm.xlu0 %433, %v395
      %v435 = vpop.permute.xlu0 %434
      %438 = vset.pattern.permute.xlu0 0
      %439 = vperm.xlu0 %438, %v396
      %v440 = vpop.permute.xlu0 %439
      %443 = vset.pattern.permute.xlu0 0
      %444 = vperm.xlu0 %443, %v397
      %v445 = vpop.permute.xlu0 %444
      %448 = vset.pattern.permute.xlu0 0
      %449 = vperm.xlu0 %448, %v398
      %v450 = vpop.permute.xlu0 %449
      %453 = vset.pattern.permute.xlu0 0
      %454 = vperm.xlu0 %453, %v399
      %v455 = vpop.permute.xlu0 %454
      %458 = vset.pattern.permute.xlu0 0
      %459 = vperm.xlu0 %458, %v400
      %v460 = vpop.permute.xlu0 %459
      %463 = vset.pattern.permute.xlu0 0
      %464 = vperm.xlu0 %463, %v401
      %v465 = vpop.permute.xlu0 %464
      %468 = vset.pattern.permute.xlu0 0
      %469 = vperm.xlu0 %468, %v402
      %v470 = vpop.permute.xlu0 %469
      %473 = vset.pattern.permute.xlu0 0
      %474 = vperm.xlu0 %473, %v403
      %v475 = vpop.permute.xlu0 %474
      %478 = vset.pattern.permute.xlu0 0
      %479 = vperm.xlu0 %478, %v404
      %v480 = vpop.permute.xlu0 %479
      %483 = vset.pattern.permute.xlu0 0
      %484 = vperm.xlu0 %483, %v405
      %v485 = vpop.permute.xlu0 %484
      %v488 = vlaneseq
      %v489 = vshrl.u32 %v488, 7
      %v490 = vsub.s32 0, %v489
      %v491 = vrot.slane %v406, %v490
      %v492 = vlaneseq
      %v493 = vshrl.u32 %v492, 7
      %v494 = vsub.s32 1, %v493
      %v495 = vrot.slane %v406, %v494
      %v498 = vadd.f32 %v410, %v491
      %v499 = vadd.f32 %v410, %v495
      %v500 = vadd.f32 %v415, %v491
      %v501 = vadd.f32 %v415, %v495
      %v502 = vadd.f32 %v420, %v491
      %v503 = vadd.f32 %v420, %v495
      %v504 = vadd.f32 %v425, %v491
      %v505 = vadd.f32 %v425, %v495
      %v506 = vadd.f32 %v430, %v491
      %v507 = vadd.f32 %v430, %v495
      %v508 = vadd.f32 %v435, %v491
      %v509 = vadd.f32 %v435, %v495
      %v510 = vadd.f32 %v440, %v491
      %v511 = vadd.f32 %v440, %v495
      %v512 = vadd.f32 %v445, %v491
      %v513 = vadd.f32 %v445, %v495
      %v514 = vadd.f32 %v450, %v491
      %v515 = vadd.f32 %v450, %v495
      %v516 = vadd.f32 %v455, %v491
      %v517 = vadd.f32 %v455, %v495
      %v518 = vadd.f32 %v460, %v491
      %v519 = vadd.f32 %v460, %v495
      %v520 = vadd.f32 %v465, %v491
      %v521 = vadd.f32 %v465, %v495
      %v522 = vadd.f32 %v470, %v491
      %v523 = vadd.f32 %v470, %v495
      %v524 = vadd.f32 %v475, %v491
      %v525 = vadd.f32 %v475, %v495
      %v526 = vadd.f32 %v480, %v491
      %v527 = vadd.f32 %v480, %v495
      %v528 = vadd.f32 %v485, %v491
      %v529 = vadd.f32 %v485, %v495
      %v530 = vmul.f32 %v498, 0.2
      %v531 = vmul.f32 %v499, 0.2
      %v532 = vmul.f32 %v500, 0.2
      %v533 = vmul.f32 %v501, 0.2
      %v534 = vmul.f32 %v502, 0.2
      %v535 = vmul.f32 %v503, 0.2
      %v536 = vmul.f32 %v504, 0.2
      %v537 = vmul.f32 %v505, 0.2
      %v538 = vmul.f32 %v506, 0.2
      %v539 = vmul.f32 %v507, 0.2
      %v540 = vmul.f32 %v508, 0.2
      %v541 = vmul.f32 %v509, 0.2
      %v542 = vmul.f32 %v510, 0.2
      %v543 = vmul.f32 %v511, 0.2
      %v544 = vmul.f32 %v512, 0.2
      %v545 = vmul.f32 %v513, 0.2
      %v546 = vmul.f32 %v514, 0.2
      %v547 = vmul.f32 %v515, 0.2
      %v548 = vmul.f32 %v516, 0.2
      %v549 = vmul.f32 %v517, 0.2
      %v550 = vmul.f32 %v518, 0.2
      %v551 = vmul.f32 %v519, 0.2
      %v552 = vmul.f32 %v520, 0.2
      %v553 = vmul.f32 %v521, 0.2
      %v554 = vmul.f32 %v522, 0.2
      %v555 = vmul.f32 %v523, 0.2
      %v556 = vmul.f32 %v524, 0.2
      %v557 = vmul.f32 %v525, 0.2
      %v558 = vmul.f32 %v526, 0.2
      %v559 = vmul.f32 %v527, 0.2
      %v560 = vmul.f32 %v528, 0.2
      %v561 = vmul.f32 %v529, 0.2
      %v562 = vmax.f32 %v498, %v530
      %v563 = vmax.f32 %v499, %v531
      %v564 = vmax.f32 %v500, %v532
      %v565 = vmax.f32 %v501, %v533
      %v566 = vmax.f32 %v502, %v534
      %v567 = vmax.f32 %v503, %v535
      %v568 = vmax.f32 %v504, %v536
      %v569 = vmax.f32 %v505, %v537
      %v570 = vmax.f32 %v506, %v538
      %v571 = vmax.f32 %v507, %v539
      %v572 = vmax.f32 %v508, %v540
      %v573 = vmax.f32 %v509, %v541
      %v574 = vmax.f32 %v510, %v542
      %v575 = vmax.f32 %v511, %v543
      %v576 = vmax.f32 %v512, %v544
      %v577 = vmax.f32 %v513, %v545
      %v578 = vmax.f32 %v514, %v546
      %v579 = vmax.f32 %v515, %v547
      %v580 = vmax.f32 %v516, %v548
      %v581 = vmax.f32 %v517, %v549
      %v582 = vmax.f32 %v518, %v550
      %v583 = vmax.f32 %v519, %v551
      %v584 = vmax.f32 %v520, %v552
      %v585 = vmax.f32 %v521, %v553
      %v586 = vmax.f32 %v522, %v554
      %v587 = vmax.f32 %v523, %v555
      %v588 = vmax.f32 %v524, %v556
      %v589 = vmax.f32 %v525, %v557
      %v590 = vmax.f32 %v526, %v558
      %v591 = vmax.f32 %v527, %v559
      %v592 = vmax.f32 %v528, %v560
      %v593 = vmax.f32 %v529, %v561
      %v594 = vadd.f32 %v562, %v358
      %v595 = vadd.f32 %v563, %v359
      %v596 = vadd.f32 %v564, %v360
      %v597 = vadd.f32 %v565, %v361
      %v598 = vadd.f32 %v566, %v362
      %v599 = vadd.f32 %v567, %v363
      %v600 = vadd.f32 %v568, %v364
      %v601 = vadd.f32 %v569, %v365
      %v602 = vadd.f32 %v570, %v366
      %v603 = vadd.f32 %v571, %v367
      %v604 = vadd.f32 %v572, %v368
      %v605 = vadd.f32 %v573, %v369
      %v606 = vadd.f32 %v574, %v370
      %v607 = vadd.f32 %v575, %v371
      %v608 = vadd.f32 %v576, %v372
      %v609 = vadd.f32 %v577, %v373
      %v610 = vadd.f32 %v578, %v374
      %v611 = vadd.f32 %v579, %v375
      %v612 = vadd.f32 %v580, %v376
      %v613 = vadd.f32 %v581, %v377
      %v614 = vadd.f32 %v582, %v378
      %v615 = vadd.f32 %v583, %v379
      %v616 = vadd.f32 %v584, %v380
      %v617 = vadd.f32 %v585, %v381
      %v618 = vadd.f32 %v586, %v382
      %v619 = vadd.f32 %v587, %v383
      %v620 = vadd.f32 %v588, %v384
      %v621 = vadd.f32 %v589, %v385
      %v622 = vadd.f32 %v590, %v386
      %v623 = vadd.f32 %v591, %v387
      %v624 = vadd.f32 %v592, %v388
      %v625 = vadd.f32 %v593, %v389
      %v626 = vmax.f32 %v594, %v595
      %627 = vmax.xlane.f32.xlu0 %v626
      %v628 = vpop.xlane.xlu0 %627
      %v629 = vmax.f32 %v596, %v597
      %630 = vmax.xlane.f32.xlu0 %v629
      %v631 = vpop.xlane.xlu0 %630
      %v632 = vmax.f32 %v598, %v599
      %633 = vmax.xlane.f32.xlu0 %v632
      %v634 = vpop.xlane.xlu0 %633
      %v635 = vmax.f32 %v600, %v601
      %636 = vmax.xlane.f32.xlu0 %v635
      %v637 = vpop.xlane.xlu0 %636
      %v638 = vmax.f32 %v602, %v603
      %639 = vmax.xlane.f32.xlu0 %v638
      %v640 = vpop.xlane.xlu0 %639
      %v641 = vmax.f32 %v604, %v605
      %642 = vmax.xlane.f32.xlu0 %v641
      %v643 = vpop.xlane.xlu0 %642
      %v644 = vmax.f32 %v606, %v607
      %645 = vmax.xlane.f32.xlu0 %v644
      %v646 = vpop.xlane.xlu0 %645
      %v647 = vmax.f32 %v608, %v609
      %648 = vmax.xlane.f32.xlu0 %v647
      %v649 = vpop.xlane.xlu0 %648
      %v650 = vmax.f32 %v610, %v611
      %651 = vmax.xlane.f32.xlu0 %v650
      %v652 = vpop.xlane.xlu0 %651
      %v653 = vmax.f32 %v612, %v613
      %654 = vmax.xlane.f32.xlu0 %v653
      %v655 = vpop.xlane.xlu0 %654
      %v656 = vmax.f32 %v614, %v615
      %657 = vmax.xlane.f32.xlu0 %v656
      %v658 = vpop.xlane.xlu0 %657
      %v659 = vmax.f32 %v616, %v617
      %660 = vmax.xlane.f32.xlu0 %v659
      %v661 = vpop.xlane.xlu0 %660
      %v662 = vmax.f32 %v618, %v619
      %663 = vmax.xlane.f32.xlu0 %v662
      %v664 = vpop.xlane.xlu0 %663
      %v665 = vmax.f32 %v620, %v621
      %666 = vmax.xlane.f32.xlu0 %v665
      %v667 = vpop.xlane.xlu0 %666
      %v668 = vmax.f32 %v622, %v623
      %669 = vmax.xlane.f32.xlu0 %v668
      %v670 = vpop.xlane.xlu0 %669
      %v671 = vmax.f32 %v624, %v625
      %672 = vmax.xlane.f32.xlu0 %v671
      %v673 = vpop.xlane.xlu0 %672
      %v674 = vsub.f32 %v594, %v628
      %v675 = vsub.f32 %v595, %v628
      %v676 = vsub.f32 %v596, %v631
      %v677 = vsub.f32 %v597, %v631
      %v678 = vsub.f32 %v598, %v634
      %v679 = vsub.f32 %v599, %v634
      %v680 = vsub.f32 %v600, %v637
      %v681 = vsub.f32 %v601, %v637
      %v682 = vsub.f32 %v602, %v640
      %v683 = vsub.f32 %v603, %v640
      %v684 = vsub.f32 %v604, %v643
      %v685 = vsub.f32 %v605, %v643
      %v686 = vsub.f32 %v606, %v646
      %v687 = vsub.f32 %v607, %v646
      %v688 = vsub.f32 %v608, %v649
      %v689 = vsub.f32 %v609, %v649
      %v690 = vsub.f32 %v610, %v652
      %v691 = vsub.f32 %v611, %v652
      %v692 = vsub.f32 %v612, %v655
      %v693 = vsub.f32 %v613, %v655
      %v694 = vsub.f32 %v614, %v658
      %v695 = vsub.f32 %v615, %v658
      %v696 = vsub.f32 %v616, %v661
      %v697 = vsub.f32 %v617, %v661
      %v698 = vsub.f32 %v618, %v664
      %v699 = vsub.f32 %v619, %v664
      %v700 = vsub.f32 %v620, %v667
      %v701 = vsub.f32 %v621, %v667
      %v702 = vsub.f32 %v622, %v670
      %v703 = vsub.f32 %v623, %v670
      %v704 = vsub.f32 %v624, %v673
      %v705 = vsub.f32 %v625, %v673
      %v706 = vpack.c.bf16 %v676, %v674
      %v707 = vpack.c.bf16 %v677, %v675
      %v708 = vpack.c.bf16 %v680, %v678
      %v709 = vpack.c.bf16 %v681, %v679
      %v710 = vpack.c.bf16 %v684, %v682
      %v711 = vpack.c.bf16 %v685, %v683
      %v712 = vpack.c.bf16 %v688, %v686
      %v713 = vpack.c.bf16 %v689, %v687
      %v714 = vpack.c.bf16 %v692, %v690
      %v715 = vpack.c.bf16 %v693, %v691
      %v716 = vpack.c.bf16 %v696, %v694
      %v717 = vpack.c.bf16 %v697, %v695
      %v718 = vpack.c.bf16 %v700, %v698
      %v719 = vpack.c.bf16 %v701, %v699
      %v720 = vpack.c.bf16 %v704, %v702
      %v721 = vpack.c.bf16 %v705, %v703
      %v723 = vmul.bf16 %v706, 1069105081
      %v724 = vpow.bf16.pop %v723
      %v726 = vmul.bf16 %v707, 1069105081
      %v727 = vpow.bf16.pop %v726
      %v729 = vmul.bf16 %v708, 1069105081
      %v730 = vpow.bf16.pop %v729
      %v732 = vmul.bf16 %v709, 1069105081
      %v733 = vpow.bf16.pop %v732
      %v735 = vmul.bf16 %v710, 1069105081
      %v736 = vpow.bf16.pop %v735
      %v738 = vmul.bf16 %v711, 1069105081
      %v739 = vpow.bf16.pop %v738
      %v741 = vmul.bf16 %v712, 1069105081
      %v742 = vpow.bf16.pop %v741
      %v744 = vmul.bf16 %v713, 1069105081
      %v745 = vpow.bf16.pop %v744
      %v747 = vmul.bf16 %v714, 1069105081
      %v748 = vpow.bf16.pop %v747
      %v750 = vmul.bf16 %v715, 1069105081
      %v751 = vpow.bf16.pop %v750
      %v753 = vmul.bf16 %v716, 1069105081
      %v754 = vpow.bf16.pop %v753
      %v756 = vmul.bf16 %v717, 1069105081
      %v757 = vpow.bf16.pop %v756
      %v759 = vmul.bf16 %v718, 1069105081
      %v760 = vpow.bf16.pop %v759
      %v762 = vmul.bf16 %v719, 1069105081
      %v763 = vpow.bf16.pop %v762
      %v765 = vmul.bf16 %v720, 1069105081
      %v766 = vpow.bf16.pop %v765
      %v768 = vmul.bf16 %v721, 1069105081
      %v769 = vpow.bf16.pop %v768
      %v770 = vld [vmem:[%s3] sm:$0xf]
      %v771 = vld [vmem:[%s3 + $0x4] sm:$0xf]
      %v772 = vld [vmem:[%s3 + $0x8] sm:$0xf]
      %v773 = vld [vmem:[%s3 + $0xc] sm:$0xf]
      %v774 = vld [vmem:[%s3 + $0x10] sm:$0xf]
      %v775 = vld [vmem:[%s3 + $0x14] sm:$0xf]
      %v776 = vld [vmem:[%s3 + $0x18] sm:$0xf]
      %v777 = vld [vmem:[%s3 + $0x1c] sm:$0xf]
      %v778 = vld [vmem:[%s3 + $0x20] sm:$0xf]
      %v779 = vld [vmem:[%s3 + $0x24] sm:$0xf]
      %v780 = vld [vmem:[%s3 + $0x28] sm:$0xf]
      %v781 = vld [vmem:[%s3 + $0x2c] sm:$0xf]
      %v782 = vld [vmem:[%s3 + $0x30] sm:$0xf]
      %v783 = vld [vmem:[%s3 + $0x34] sm:$0xf]
      %v784 = vld [vmem:[%s3 + $0x38] sm:$0xf]
      %v785 = vld [vmem:[%s3 + $0x3c] sm:$0xf]
      %v786 = vld [vmem:[%s3 + $0x40] sm:$0xf]
      %v787 = vld [vmem:[%s3 + $0x44] sm:$0xf]
      %v788 = vld [vmem:[%s3 + $0x48] sm:$0xf]
      %v789 = vld [vmem:[%s3 + $0x4c] sm:$0xf]
      %v790 = vld [vmem:[%s3 + $0x50] sm:$0xf]
      %v791 = vld [vmem:[%s3 + $0x54] sm:$0xf]
      %v792 = vld [vmem:[%s3 + $0x58] sm:$0xf]
      %v793 = vld [vmem:[%s3 + $0x5c] sm:$0xf]
      %v794 = vld [vmem:[%s3 + $0x60] sm:$0xf]
      %v795 = vld [vmem:[%s3 + $0x64] sm:$0xf]
      %v796 = vld [vmem:[%s3 + $0x68] sm:$0xf]
      %v797 = vld [vmem:[%s3 + $0x6c] sm:$0xf]
      %v798 = vld [vmem:[%s3 + $0x70] sm:$0xf]
      %v799 = vld [vmem:[%s3 + $0x74] sm:$0xf]
      %v800 = vld [vmem:[%s3 + $0x78] sm:$0xf]
      %v801 = vld [vmem:[%s3 + $0x7c] sm:$0xf]
      %v834 = vunpack.c.l.b16 %v770
      %v835 = vunpack.c.l.b16 %v771
      %v836 = vunpack.c.l.b16 %v772
      %v837 = vunpack.c.l.b16 %v773
      %v838 = vunpack.c.l.b16 %v774
      %v839 = vunpack.c.l.b16 %v775
      %v840 = vunpack.c.l.b16 %v776
      %v841 = vunpack.c.l.b16 %v777
      %v842 = vunpack.c.l.b16 %v778
      %v843 = vunpack.c.l.b16 %v779
      %v844 = vunpack.c.l.b16 %v780
      %v845 = vunpack.c.l.b16 %v781
      %v846 = vunpack.c.l.b16 %v782
      %v847 = vunpack.c.l.b16 %v783
      %v848 = vunpack.c.l.b16 %v784
      %v849 = vunpack.c.l.b16 %v785
      %v850 = vunpack.c.l.b16 %v786
      %v851 = vunpack.c.l.b16 %v787
      %v852 = vunpack.c.l.b16 %v788
      %v853 = vunpack.c.l.b16 %v789
      %v854 = vunpack.c.l.b16 %v790
      %v855 = vunpack.c.l.b16 %v791
      %v856 = vunpack.c.l.b16 %v792
      %v857 = vunpack.c.l.b16 %v793
      %v858 = vunpack.c.l.b16 %v794
      %v859 = vunpack.c.l.b16 %v795
      %v860 = vunpack.c.l.b16 %v796
      %v861 = vunpack.c.l.b16 %v797
      %v862 = vunpack.c.l.b16 %v798
      %v863 = vunpack.c.l.b16 %v799
      %v864 = vunpack.c.l.b16 %v800
      %v865 = vunpack.c.l.b16 %v801
      %v866 = vpack.c.b16 %v835, %v834
      %v867 = vpack.c.b16 %v837, %v836
      %v868 = vpack.c.b16 %v839, %v838
      %v869 = vpack.c.b16 %v841, %v840
      %v870 = vpack.c.b16 %v843, %v842
      %v871 = vpack.c.b16 %v845, %v844
      %v872 = vpack.c.b16 %v847, %v846
      %v873 = vpack.c.b16 %v849, %v848
      %v874 = vpack.c.b16 %v851, %v850
      %v875 = vpack.c.b16 %v853, %v852
      %v876 = vpack.c.b16 %v855, %v854
      %v877 = vpack.c.b16 %v857, %v856
      %v878 = vpack.c.b16 %v859, %v858
      %v879 = vpack.c.b16 %v861, %v860
      %v880 = vpack.c.b16 %v863, %v862
      %v881 = vpack.c.b16 %v865, %v864
      %898 = vmatprep.subr.bf16.mxu0 0
      %899 = vmatpush1.bf16.msra.mxu0 %v866
      %900 = vmatprep.subr.bf16.mxu0 0
      %901 = vmatpush1.bf16.msra.mxu0 %v867
      %902 = vmatprep.subr.bf16.mxu0 0
      %903 = vmatpush1.bf16.msra.mxu0 %v868
      %904 = vmatprep.subr.bf16.mxu0 0
      %905 = vmatpush1.bf16.msra.mxu0 %v869
      %906 = vmatprep.subr.bf16.mxu0 0
      %907 = vmatpush1.bf16.msra.mxu0 %v870
      %908 = vmatprep.subr.bf16.mxu0 0
      %909 = vmatpush1.bf16.msra.mxu0 %v871
      %910 = vmatprep.subr.bf16.mxu0 0
      %911 = vmatpush1.bf16.msra.mxu0 %v872
      %912 = vmatprep.subr.bf16.mxu0 0
      %913 = vmatpush1.bf16.msra.mxu0 %v873
      %914 = vmatprep.subr.bf16.mxu0 0
      %915 = vmatpush1.bf16.msra.mxu0 %v874
      %916 = vmatprep.subr.bf16.mxu0 0
      %917 = vmatpush1.bf16.msra.mxu0 %v875
      %918 = vmatprep.subr.bf16.mxu0 0
      %919 = vmatpush1.bf16.msra.mxu0 %v876
      %920 = vmatprep.subr.bf16.mxu0 0
      %921 = vmatpush1.bf16.msra.mxu0 %v877
      %922 = vmatprep.subr.bf16.mxu0 0
      %923 = vmatpush1.bf16.msra.mxu0 %v878
      %924 = vmatprep.subr.bf16.mxu0 0
      %925 = vmatpush1.bf16.msra.mxu0 %v879
      %926 = vmatprep.subr.bf16.mxu0 0
      %927 = vmatpush1.bf16.msra.mxu0 %v880
      %928 = vmatprep.subr.bf16.mxu0 0
      %929 = vmatpush1.bf16.msra.mxu0 %v881
      %930 = vmatprep.mubr.bf16.mxu0 %v727
      %931 = vmatmul.mubr.bf16.gmra.mrb[0].mxu0 %v724
      %v932 = vpop.f32.mrb[0].mxu0
      %v933 = vadd.f32 0.0, %v932
      %v934 = vpop.f32.mrb[0].mxu0
      %v935 = vpop.f32.mrb[0].mxu0
      %v936 = vadd.f32 0.0, %v935
      %v937 = vpop.f32.mrb[0].mxu0
      %938 = vmatprep.mubr.bf16.mxu0 %v733
      %939 = vmatmul.mubr.bf16.gmra.mrb[0].mxu0 %v730
      %v940 = vpop.f32.mrb[0].mxu0
      %v941 = vadd.f32 0.0, %v940
      %v942 = vpop.f32.mrb[0].mxu0
      %v943 = vpop.f32.mrb[0].mxu0
      %v944 = vadd.f32 0.0, %v943
      %v945 = vpop.f32.mrb[0].mxu0
      %946 = vmatprep.mubr.bf16.mxu0 %v739
      %947 = vmatmul.mubr.bf16.gmra.mrb[0].mxu0 %v736
      %v948 = vpop.f32.mrb[0].mxu0
      %v949 = vadd.f32 0.0, %v948
      %v950 = vpop.f32.mrb[0].mxu0
      %v951 = vpop.f32.mrb[0].mxu0
      %v952 = vadd.f32 0.0, %v951
      %v953 = vpop.f32.mrb[0].mxu0
      %954 = vmatprep.mubr.bf16.mxu0 %v745
      %955 = vmatmul.mubr.bf16.gmra.mrb[0].mxu0 %v742
      %v956 = vpop.f32.mrb[0].mxu0
      %v957 = vadd.f32 0.0, %v956
      %v958 = vpop.f32.mrb[0].mxu0
      %v959 = vpop.f32.mrb[0].mxu0
      %v960 = vadd.f32 0.0, %v959
      %v961 = vpop.f32.mrb[0].mxu0
      %962 = vmatprep.mubr.bf16.mxu0 %v751
      %963 = vmatmul.mubr.bf16.gmra.mrb[0].mxu0 %v748
      %v964 = vpop.f32.mrb[0].mxu0
      %v965 = vadd.f32 0.0, %v964
      %v966 = vpop.f32.mrb[0].mxu0
      %v967 = vpop.f32.mrb[0].mxu0
      %v968 = vadd.f32 0.0, %v967
      %v969 = vpop.f32.mrb[0].mxu0
      %970 = vmatprep.mubr.bf16.mxu0 %v757
      %971 = vmatmul.mubr.bf16.gmra.mrb[0].mxu0 %v754
      %v972 = vpop.f32.mrb[0].mxu0
      %v973 = vadd.f32 0.0, %v972
      %v974 = vpop.f32.mrb[0].mxu0
      %v975 = vpop.f32.mrb[0].mxu0
      %v976 = vadd.f32 0.0, %v975
      %v977 = vpop.f32.mrb[0].mxu0
      %978 = vmatprep.mubr.bf16.mxu0 %v763
      %979 = vmatmul.mubr.bf16.gmra.mrb[0].mxu0 %v760
      %v980 = vpop.f32.mrb[0].mxu0
      %v981 = vadd.f32 0.0, %v980
      %v982 = vpop.f32.mrb[0].mxu0
      %v983 = vpop.f32.mrb[0].mxu0
      %v984 = vadd.f32 0.0, %v983
      %v985 = vpop.f32.mrb[0].mxu0
      %986 = vmatprep.mubr.bf16.mxu0 %v769
      %987 = vmatmul.mubr.bf16.gmra.mrb[0].mxu0 %v766
      %v988 = vpop.f32.mrb[0].mxu0
      %v989 = vadd.f32 0.0, %v988
      %v990 = vpop.f32.mrb[0].mxu0
      %v991 = vpop.f32.mrb[0].mxu0
      %v992 = vadd.f32 0.0, %v991
      %v993 = vpop.f32.mrb[0].mxu0
      %994 = vdwg.mxu0
      %v995 = vrcp.pop %v933
      %v996 = vrcp.pop %v936
      %v997 = vrcp.pop %v941
      %v998 = vrcp.pop %v944
      %v999 = vrcp.pop %v949
      %v1000 = vrcp.pop %v952
      %v1001 = vrcp.pop %v957
      %v1002 = vrcp.pop %v960
      %v1003 = vrcp.pop %v965
      %v1004 = vrcp.pop %v968
      %v1005 = vrcp.pop %v973
      %v1006 = vrcp.pop %v976
      %v1007 = vrcp.pop %v981
      %v1008 = vrcp.pop %v984
      %v1009 = vrcp.pop %v989
      %v1010 = vrcp.pop %v992
      %1012 = vset.pattern.permute.xlu0 8
      %1013 = vperm.xlu0 %1012, %v995
      %v1014 = vpop.permute.xlu0 %1013
      %1017 = vset.pattern.permute.xlu0 8
      %1018 = vperm.xlu0 %1017, %v996
      %v1019 = vpop.permute.xlu0 %1018
      %1022 = vset.pattern.permute.xlu0 8
      %1023 = vperm.xlu0 %1022, %v997
      %v1024 = vpop.permute.xlu0 %1023
      %1027 = vset.pattern.permute.xlu0 8
      %1028 = vperm.xlu0 %1027, %v998
      %v1029 = vpop.permute.xlu0 %1028
      %1032 = vset.pattern.permute.xlu0 8
      %1033 = vperm.xlu0 %1032, %v999
      %v1034 = vpop.permute.xlu0 %1033
      %1037 = vset.pattern.permute.xlu0 8
      %1038 = vperm.xlu0 %1037, %v1000
      %v1039 = vpop.permute.xlu0 %1038
      %1042 = vset.pattern.permute.xlu0 8
      %1043 = vperm.xlu0 %1042, %v1001
      %v1044 = vpop.permute.xlu0 %1043
      %1047 = vset.pattern.permute.xlu0 8
      %1048 = vperm.xlu0 %1047, %v1002
      %v1049 = vpop.permute.xlu0 %1048
      %1052 = vset.pattern.permute.xlu0 8
      %1053 = vperm.xlu0 %1052, %v1003
      %v1054 = vpop.permute.xlu0 %1053
      %1057 = vset.pattern.permute.xlu0 8
      %1058 = vperm.xlu0 %1057, %v1004
      %v1059 = vpop.permute.xlu0 %1058
      %1062 = vset.pattern.permute.xlu0 8
      %1063 = vperm.xlu0 %1062, %v1005
      %v1064 = vpop.permute.xlu0 %1063
      %1067 = vset.pattern.permute.xlu0 8
      %1068 = vperm.xlu0 %1067, %v1006
      %v1069 = vpop.permute.xlu0 %1068
      %1072 = vset.pattern.permute.xlu0 8
      %1073 = vperm.xlu0 %1072, %v1007
      %v1074 = vpop.permute.xlu0 %1073
      %1077 = vset.pattern.permute.xlu0 8
      %1078 = vperm.xlu0 %1077, %v1008
      %v1079 = vpop.permute.xlu0 %1078
      %1082 = vset.pattern.permute.xlu0 8
      %1083 = vperm.xlu0 %1082, %v1009
      %v1084 = vpop.permute.xlu0 %1083
      %1087 = vset.pattern.permute.xlu0 8
      %1088 = vperm.xlu0 %1087, %v1010
      %v1089 = vpop.permute.xlu0 %1088
      %v1091 = vmul.f32 %v933, %v1014
      %v1092 = vmul.f32 %v936, %v1019
      %v1093 = vmul.f32 %v941, %v1024
      %v1094 = vmul.f32 %v944, %v1029
      %v1095 = vmul.f32 %v949, %v1034
      %v1096 = vmul.f32 %v952, %v1039
      %v1097 = vmul.f32 %v957, %v1044
      %v1098 = vmul.f32 %v960, %v1049
      %v1099 = vmul.f32 %v965, %v1054
      %v1100 = vmul.f32 %v968, %v1059
      %v1101 = vmul.f32 %v973, %v1064
      %v1102 = vmul.f32 %v976, %v1069
      %v1103 = vmul.f32 %v981, %v1074
      %v1104 = vmul.f32 %v984, %v1079
      %v1105 = vmul.f32 %v989, %v1084
      %v1106 = vmul.f32 %v992, %v1089
      %v1107 = vld [vmem:[%s4] sm:$0x1]
      %v1109 = vlaneseq
      %v1110 = vshrl.u32 %v1109, 7
      %v1111 = vsub.s32 0, %v1110
      %v1112 = vrot.slane %v1107, %v1111
      %v1114 = vadd.f32 %v1091, %v1112
      %v1115 = vadd.f32 %v1092, %v1112
      %v1116 = vadd.f32 %v1093, %v1112
      %v1117 = vadd.f32 %v1094, %v1112
      %v1118 = vadd.f32 %v1095, %v1112
      %v1119 = vadd.f32 %v1096, %v1112
      %v1120 = vadd.f32 %v1097, %v1112
      %v1121 = vadd.f32 %v1098, %v1112
      %v1122 = vadd.f32 %v1099, %v1112
      %v1123 = vadd.f32 %v1100, %v1112
      %v1124 = vadd.f32 %v1101, %v1112
      %v1125 = vadd.f32 %v1102, %v1112
      %v1126 = vadd.f32 %v1103, %v1112
      %v1127 = vadd.f32 %v1104, %v1112
      %v1128 = vadd.f32 %v1105, %v1112
      %v1129 = vadd.f32 %v1106, %v1112
      %v1130 = vlaneseq
      %v1131 = vand.u32 %v1130, 127
      %vm1132 = vcmp.lt.s32.totalorder %v1131, 8
      %v1133 = vsel %vm1132, %v1114, -1e+30
      %v1134 = vsel %vm1132, %v1115, -1e+30
      %v1135 = vsel %vm1132, %v1116, -1e+30
      %v1136 = vsel %vm1132, %v1117, -1e+30
      %v1137 = vsel %vm1132, %v1118, -1e+30
      %v1138 = vsel %vm1132, %v1119, -1e+30
      %v1139 = vsel %vm1132, %v1120, -1e+30
      %v1140 = vsel %vm1132, %v1121, -1e+30
      %v1141 = vsel %vm1132, %v1122, -1e+30
      %v1142 = vsel %vm1132, %v1123, -1e+30
      %v1143 = vsel %vm1132, %v1124, -1e+30
      %v1144 = vsel %vm1132, %v1125, -1e+30
      %v1145 = vsel %vm1132, %v1126, -1e+30
      %v1146 = vsel %vm1132, %v1127, -1e+30
      %v1147 = vsel %vm1132, %v1128, -1e+30
      %v1148 = vsel %vm1132, %v1129, -1e+30
      %1149 = vmax.xlane.f32.xlu0 %v1133
      %v1150 = vpop.xlane.xlu0 %1149
      %1151 = vmax.xlane.f32.xlu0 %v1134
      %v1152 = vpop.xlane.xlu0 %1151
      %1153 = vmax.xlane.f32.xlu0 %v1135
      %v1154 = vpop.xlane.xlu0 %1153
      %1155 = vmax.xlane.f32.xlu0 %v1136
      %v1156 = vpop.xlane.xlu0 %1155
      %1157 = vmax.xlane.f32.xlu0 %v1137
      %v1158 = vpop.xlane.xlu0 %1157
      %1159 = vmax.xlane.f32.xlu0 %v1138
      %v1160 = vpop.xlane.xlu0 %1159
      %1161 = vmax.xlane.f32.xlu0 %v1139
      %v1162 = vpop.xlane.xlu0 %1161
      %1163 = vmax.xlane.f32.xlu0 %v1140
      %v1164 = vpop.xlane.xlu0 %1163
      %1165 = vmax.xlane.f32.xlu0 %v1141
      %v1166 = vpop.xlane.xlu0 %1165
      %1167 = vmax.xlane.f32.xlu0 %v1142
      %v1168 = vpop.xlane.xlu0 %1167
      %1169 = vmax.xlane.f32.xlu0 %v1143
      %v1170 = vpop.xlane.xlu0 %1169
      %1171 = vmax.xlane.f32.xlu0 %v1144
      %v1172 = vpop.xlane.xlu0 %1171
      %1173 = vmax.xlane.f32.xlu0 %v1145
      %v1174 = vpop.xlane.xlu0 %1173
      %1175 = vmax.xlane.f32.xlu0 %v1146
      %v1176 = vpop.xlane.xlu0 %1175
      %1177 = vmax.xlane.f32.xlu0 %v1147
      %v1178 = vpop.xlane.xlu0 %1177
      %1179 = vmax.xlane.f32.xlu0 %v1148
      %v1180 = vpop.xlane.xlu0 %1179
      %v1181 = vsub.f32 %v1133, %v1150
      %v1182 = vsub.f32 %v1134, %v1152
      %v1183 = vsub.f32 %v1135, %v1154
      %v1184 = vsub.f32 %v1136, %v1156
      %v1185 = vsub.f32 %v1137, %v1158
      %v1186 = vsub.f32 %v1138, %v1160
      %v1187 = vsub.f32 %v1139, %v1162
      %v1188 = vsub.f32 %v1140, %v1164
      %v1189 = vsub.f32 %v1141, %v1166
      %v1190 = vsub.f32 %v1142, %v1168
      %v1191 = vsub.f32 %v1143, %v1170
      %v1192 = vsub.f32 %v1144, %v1172
      %v1193 = vsub.f32 %v1145, %v1174
      %v1194 = vsub.f32 %v1146, %v1176
      %v1195 = vsub.f32 %v1147, %v1178
      %v1196 = vsub.f32 %v1148, %v1180
      %v1197 = vmul.f32 %v1181, 1.442695
      %v1198 = vpow.pop %v1197
      %v1199 = vmul.f32 %v1182, 1.442695
      %v1200 = vpow.pop %v1199
      %v1201 = vmul.f32 %v1183, 1.442695
      %v1202 = vpow.pop %v1201
      %v1203 = vmul.f32 %v1184, 1.442695
      %v1204 = vpow.pop %v1203
      %v1205 = vmul.f32 %v1185, 1.442695
      %v1206 = vpow.pop %v1205
      %v1207 = vmul.f32 %v1186, 1.442695
      %v1208 = vpow.pop %v1207
      %v1209 = vmul.f32 %v1187, 1.442695
      %v1210 = vpow.pop %v1209
      %v1211 = vmul.f32 %v1188, 1.442695
      %v1212 = vpow.pop %v1211
      %v1213 = vmul.f32 %v1189, 1.442695
      %v1214 = vpow.pop %v1213
      %v1215 = vmul.f32 %v1190, 1.442695
      %v1216 = vpow.pop %v1215
      %v1217 = vmul.f32 %v1191, 1.442695
      %v1218 = vpow.pop %v1217
      %v1219 = vmul.f32 %v1192, 1.442695
      %v1220 = vpow.pop %v1219
      %v1221 = vmul.f32 %v1193, 1.442695
      %v1222 = vpow.pop %v1221
      %v1223 = vmul.f32 %v1194, 1.442695
      %v1224 = vpow.pop %v1223
      %v1225 = vmul.f32 %v1195, 1.442695
      %v1226 = vpow.pop %v1225
      %v1227 = vmul.f32 %v1196, 1.442695
      %v1228 = vpow.pop %v1227
      %1229 = vadd.xlane.f32.xlu0 %v1198
      %v1230 = vpop.xlane.xlu0 %1229
      %1231 = vadd.xlane.f32.xlu0 %v1200
      %v1232 = vpop.xlane.xlu0 %1231
      %1233 = vadd.xlane.f32.xlu0 %v1202
      %v1234 = vpop.xlane.xlu0 %1233
      %1235 = vadd.xlane.f32.xlu0 %v1204
      %v1236 = vpop.xlane.xlu0 %1235
      %1237 = vadd.xlane.f32.xlu0 %v1206
      %v1238 = vpop.xlane.xlu0 %1237
      %1239 = vadd.xlane.f32.xlu0 %v1208
      %v1240 = vpop.xlane.xlu0 %1239
      %1241 = vadd.xlane.f32.xlu0 %v1210
      %v1242 = vpop.xlane.xlu0 %1241
      %1243 = vadd.xlane.f32.xlu0 %v1212
      %v1244 = vpop.xlane.xlu0 %1243
      %1245 = vadd.xlane.f32.xlu0 %v1214
      %v1246 = vpop.xlane.xlu0 %1245
      %1247 = vadd.xlane.f32.xlu0 %v1216
      %v1248 = vpop.xlane.xlu0 %1247
      %1249 = vadd.xlane.f32.xlu0 %v1218
      %v1250 = vpop.xlane.xlu0 %1249
      %1251 = vadd.xlane.f32.xlu0 %v1220
      %v1252 = vpop.xlane.xlu0 %1251
      %1253 = vadd.xlane.f32.xlu0 %v1222
      %v1254 = vpop.xlane.xlu0 %1253
      %1255 = vadd.xlane.f32.xlu0 %v1224
      %v1256 = vpop.xlane.xlu0 %1255
      %1257 = vadd.xlane.f32.xlu0 %v1226
      %v1258 = vpop.xlane.xlu0 %1257
      %1259 = vadd.xlane.f32.xlu0 %v1228
      %v1260 = vpop.xlane.xlu0 %1259
      %v1261 = vlog2.pop %v1230
      %v1262 = vmul.f32 %v1261, 0.6931472
      %v1263 = vlog2.pop %v1232
      %v1264 = vmul.f32 %v1263, 0.6931472
      %v1265 = vlog2.pop %v1234
      %v1266 = vmul.f32 %v1265, 0.6931472
      %v1267 = vlog2.pop %v1236
      %v1268 = vmul.f32 %v1267, 0.6931472
      %v1269 = vlog2.pop %v1238
      %v1270 = vmul.f32 %v1269, 0.6931472
      %v1271 = vlog2.pop %v1240
      %v1272 = vmul.f32 %v1271, 0.6931472
      %v1273 = vlog2.pop %v1242
      %v1274 = vmul.f32 %v1273, 0.6931472
      %v1275 = vlog2.pop %v1244
      %v1276 = vmul.f32 %v1275, 0.6931472
      %v1277 = vlog2.pop %v1246
      %v1278 = vmul.f32 %v1277, 0.6931472
      %v1279 = vlog2.pop %v1248
      %v1280 = vmul.f32 %v1279, 0.6931472
      %v1281 = vlog2.pop %v1250
      %v1282 = vmul.f32 %v1281, 0.6931472
      %v1283 = vlog2.pop %v1252
      %v1284 = vmul.f32 %v1283, 0.6931472
      %v1285 = vlog2.pop %v1254
      %v1286 = vmul.f32 %v1285, 0.6931472
      %v1287 = vlog2.pop %v1256
      %v1288 = vmul.f32 %v1287, 0.6931472
      %v1289 = vlog2.pop %v1258
      %v1290 = vmul.f32 %v1289, 0.6931472
      %v1291 = vlog2.pop %v1260
      %v1292 = vmul.f32 %v1291, 0.6931472
      %v1293 = vadd.f32 %v1150, %v1262
      %v1294 = vadd.f32 %v1152, %v1264
      %v1295 = vadd.f32 %v1154, %v1266
      %v1296 = vadd.f32 %v1156, %v1268
      %v1297 = vadd.f32 %v1158, %v1270
      %v1298 = vadd.f32 %v1160, %v1272
      %v1299 = vadd.f32 %v1162, %v1274
      %v1300 = vadd.f32 %v1164, %v1276
      %v1301 = vadd.f32 %v1166, %v1278
      %v1302 = vadd.f32 %v1168, %v1280
      %v1303 = vadd.f32 %v1170, %v1282
      %v1304 = vadd.f32 %v1172, %v1284
      %v1305 = vadd.f32 %v1174, %v1286
      %v1306 = vadd.f32 %v1176, %v1288
      %v1307 = vadd.f32 %v1178, %v1290
      %v1308 = vadd.f32 %v1180, %v1292
      %v1309 = vsub.f32 %v1133, %v1293
      %v1310 = vsub.f32 %v1134, %v1294
      %v1311 = vsub.f32 %v1135, %v1295
      %v1312 = vsub.f32 %v1136, %v1296
      %v1313 = vsub.f32 %v1137, %v1297
      %v1314 = vsub.f32 %v1138, %v1298
      %v1315 = vsub.f32 %v1139, %v1299
      %v1316 = vsub.f32 %v1140, %v1300
      %v1317 = vsub.f32 %v1141, %v1301
      %v1318 = vsub.f32 %v1142, %v1302
      %v1319 = vsub.f32 %v1143, %v1303
      %v1320 = vsub.f32 %v1144, %v1304
      %v1321 = vsub.f32 %v1145, %v1305
      %v1322 = vsub.f32 %v1146, %v1306
      %v1323 = vsub.f32 %v1147, %v1307
      %v1324 = vsub.f32 %v1148, %v1308
      %1325 = vst [vmem:[%s251] sm:$0xff] %v1309
      %1326 = vst [vmem:[%s251 + $0x8] sm:$0xff] %v1310
      %1327 = vst [vmem:[%s251 + $0x10] sm:$0xff] %v1311
      %1328 = vst [vmem:[%s251 + $0x18] sm:$0xff] %v1312
      %1329 = vst [vmem:[%s251 + $0x20] sm:$0xff] %v1313
      %1330 = vst [vmem:[%s251 + $0x28] sm:$0xff] %v1314
      %1331 = vst [vmem:[%s251 + $0x30] sm:$0xff] %v1315
      %1332 = vst [vmem:[%s251 + $0x38] sm:$0xff] %v1316
      %1333 = vst [vmem:[%s251 + $0x40] sm:$0xff] %v1317
      %1334 = vst [vmem:[%s251 + $0x48] sm:$0xff] %v1318
      %1335 = vst [vmem:[%s251 + $0x50] sm:$0xff] %v1319
      %1336 = vst [vmem:[%s251 + $0x58] sm:$0xff] %v1320
      %1337 = vst [vmem:[%s251 + $0x60] sm:$0xff] %v1321
      %1338 = vst [vmem:[%s251 + $0x68] sm:$0xff] %v1322
      %1339 = vst [vmem:[%s251 + $0x70] sm:$0xff] %v1323
      %1340 = vst [vmem:[%s251 + $0x78] sm:$0xff] %v1324
      %s1341 = smul.u32 16, %s16
      %p1342 = scmp.lt.s32.totalorder %s1341, 31
      %s1343 = scalar_select %p1342, %s1341, 31
      %s1344 = smul.addr %s1343, 8
      %s1345 = scalar_lea.vmem %s5, %s1344
      // Predicated region
      $region41: #{netgat_forward.7} parent=39 // pred_check
        %p1346 = pneg %p149
      $region42: #{netgat_forward.7} parent=39 // pred_check_branch
        %1348 = sbr.rel (%p1346) target = $region44
      $region43: #{netgat_forward.7} parent=39 // pred_region
        %s1349 = smul.u32 16, %s16
      $region44: #{netgat_forward.7} parent=39 // pred_fallthru
        _
    $region40: #{netgat_forward.7} parent=5 // pred_fallthru
      _
    %p1350 = scmp.le.s32.totalorder 2, %s11
    // Predicated region
    $region45: #{netgat_forward.7} parent=5 // pred_check
      %p1351 = pneg %p1350
    $region46: #{netgat_forward.7} parent=5 // pred_check_branch
      %1353 = sbr.rel (%p1351) target = $region48
    $region47: #{netgat_forward.7} parent=5 // pred_region
      %s1354 = ssub.s32 %s11, 2
      // Predicated region
      $region49: #{netgat_forward.7} parent=47 // pred_check
        %p1355 = pneg %p155
      $region50: #{netgat_forward.7} parent=47 // pred_check_branch
        %1357 = sbr.rel (%p1355) target = $region52
      $region51: #{netgat_forward.7} parent=47 // pred_region
        %s1358 = smul.u32 16, %s17
        %p1359 = scmp.lt.s32.totalorder %s1358, 31
        %s1360 = scalar_select %p1359, %s1358, 31
        %s1361 = smul.addr %s1360, 8
        %s1362 = scalar_lea.vmem %s5, %s1361
      $region52: #{netgat_forward.7} parent=47 // pred_fallthru
        _
    $region48: #{netgat_forward.7} parent=5 // pred_fallthru
      _
  $region6: #{netgat_forward.7} parent=0 // loop_footer
    %s15 = sadd.s32 1, %s11
  $region7: #{netgat_forward.7} parent=0 // loop_footer_branch
    %10 = sbr.rel target = $region3
  $region8: #{netgat_forward.7} parent=0 // loop_exit
    _

// kernel: netgat_forward.5
$region0: #{netgat_forward.5}
  #allocation0 [shape = 'u32[]', space=smem, size = 0x4, offset = 0x4, fixed_abs, tag = 'smem constant byte address 0x4 - core index']
  #allocation1 [shape = 'u32[144,128]{1,0:T(1,128)}', space=vmem, size = 0x12000, scoped, tag = 'internal scratch']
  %s0 = inlined_call_operand.vmem [shape: s8[256,256], index: 0, kind: input, shape index: {}]
  %s1 = inlined_call_operand.vmem [shape: f32[8,256], index: 1, kind: input, shape index: {}]
  %s2 = inlined_call_operand.vmem [shape: f32[256,8], index: 2, kind: input, shape index: {}]
  %s3 = inlined_call_operand.vmem [shape: bf16[8,256,17], index: 3, kind: input, shape index: {}]
  %s4 = inlined_call_operand.vmem [shape: f32[1,128], index: 4, kind: input, shape index: {}]
  %s5 = inlined_call_operand.vmem [shape: bf16[256,128], index: 5, kind: output, shape index: {}]
  %s6 = sld [smem:[#allocation0]]
  $region53: #{netgat_forward.5} parent=0
    _
  %s8 = ssub.s32 1, %s6
  %s9 = scalar_select 0, %s8, %s6
  loop: start=0, step=1, limit=4
  $region2: #{netgat_forward.5} parent=0 // loop_pre_header
    _
  $region3: #{netgat_forward.5} parent=0 // loop_header
    %s11 = sphi 0, %s15
    %p12 = scmp.ge.s32.totalorder %s11, 4
    %s21 = sphi 0, %s23
    %s24 = sphi 0, %s21
    %s25 = sphi 0, %s24
    %s41 = sphi 0, %s25
    %s45 = sphi 0, %s45
    %s47 = sphi 0, %s45
    %s48 = sphi 0, %s47
    %s62 = sphi 0, %s48
    %s68 = sphi 0, %s70
    %s71 = sphi 0, %s68
    %s72 = sphi 0, %s71
    %s88 = sphi 0, %s72
    %s92 = sphi 0, %s92
    %s94 = sphi 0, %s92
    %s95 = sphi 0, %s94
    %s109 = sphi 0, %s95
    %s113 = sphi 0, %s113
    %s115 = sphi 0, %s113
    %s116 = sphi 0, %s115
    %s130 = sphi 0, %s116
    %s136 = sphi 0, %s138
    %s139 = sphi 0, %s136
    %s140 = sphi 0, %s139
    %s156 = sphi 0, %s140
  $region4: #{netgat_forward.5} parent=0 // loop_header_branch
    %14 = sbr.rel (%p12) target = $region8
  $region5: #{netgat_forward.5} parent=0 // loop_body
    %s16 = ssub.s32 %s11, 1
    %s17 = ssub.s32 %s11, 2
    %s18 = sadd.s32 %s11, 1
    %s19 = ssub.s32 %s11, %s18
    %p20 = scmp.eq.s32.totalorder %s19, 0
    %s22 = sadd.s32 %s21, 1
    %s23 = scalar_select %p20, %s21, %s22
    %p26 = pneg %p20
    %p27 = scmp.eq.s32.totalorder %s11, 1
    %p28 = por %p26, %p27
    %p29 = scmp.ne.s32.totalorder %s21, %s24
    %p30 = scmp.eq.s32.totalorder %s11, 0
    %p31 = por %p29, %p30
    %p32 = scmp.ne.s32.totalorder %s21, %s24
    %p33 = scmp.eq.s32.totalorder %s16, 1
    %p34 = por %p32, %p33
    %p35 = scmp.ne.s32.totalorder %s24, %s25
    %p36 = scmp.eq.s32.totalorder %s16, 0
    %p37 = por %p35, %p36
    %p38 = scmp.ne.s32.totalorder %s24, %s25
    %p39 = scmp.eq.s32.totalorder %s17, 1
    %p40 = por %p38, %p39
    %p42 = scmp.ne.s32.totalorder %s25, %s41
    %p43 = scmp.eq.s32.totalorder %s17, 0
    %p44 = por %p42, %p43
    %s46 = sadd.s32 %s45, 1
    %p49 = scmp.eq.s32.totalorder %s11, 1
    %p50 = scmp.ne.s32.totalorder %s45, %s47
    %p51 = scmp.eq.s32.totalorder %s11, 0
    %p52 = por %p50, %p51
    %p53 = scmp.ne.s32.totalorder %s45, %s47
    %p54 = scmp.eq.s32.totalorder %s16, 1
    %p55 = por %p53, %p54
    %p56 = scmp.ne.s32.totalorder %s47, %s48
    %p57 = scmp.eq.s32.totalorder %s16, 0
    %p58 = por %p56, %p57
    %p59 = scmp.ne.s32.totalorder %s47, %s48
    %p60 = scmp.eq.s32.totalorder %s17, 1
    %p61 = por %p59, %p60
    %p63 = scmp.ne.s32.totalorder %s48, %s62
    %p64 = scmp.eq.s32.totalorder %s17, 0
    %p65 = por %p63, %p64
    %s66 = ssub.s32 %s11, %s18
    %p67 = scmp.eq.s32.totalorder %s66, 0
    %s69 = sadd.s32 %s68, 1
    %s70 = scalar_select %p67, %s68, %s69
    %p73 = pneg %p67
    %p74 = scmp.eq.s32.totalorder %s11, 1
    %p75 = por %p73, %p74
    %p76 = scmp.ne.s32.totalorder %s68, %s71
    %p77 = scmp.eq.s32.totalorder %s11, 0
    %p78 = por %p76, %p77
    %p79 = scmp.ne.s32.totalorder %s68, %s71
    %p80 = scmp.eq.s32.totalorder %s16, 1
    %p81 = por %p79, %p80
    %p82 = scmp.ne.s32.totalorder %s71, %s72
    %p83 = scmp.eq.s32.totalorder %s16, 0
    %p84 = por %p82, %p83
    %p85 = scmp.ne.s32.totalorder %s71, %s72
    %p86 = scmp.eq.s32.totalorder %s17, 1
    %p87 = por %p85, %p86
    %p89 = scmp.ne.s32.totalorder %s72, %s88
    %p90 = scmp.eq.s32.totalorder %s17, 0
    %p91 = por %p89, %p90
    %s93 = sadd.s32 %s92, 1
    %p96 = scmp.eq.s32.totalorder %s11, 1
    %p97 = scmp.ne.s32.totalorder %s92, %s94
    %p98 = scmp.eq.s32.totalorder %s11, 0
    %p99 = por %p97, %p98
    %p100 = scmp.ne.s32.totalorder %s92, %s94
    %p101 = scmp.eq.s32.totalorder %s16, 1
    %p102 = por %p100, %p101
    %p103 = scmp.ne.s32.totalorder %s94, %s95
    %p104 = scmp.eq.s32.totalorder %s16, 0
    %p105 = por %p103, %p104
    %p106 = scmp.ne.s32.totalorder %s94, %s95
    %p107 = scmp.eq.s32.totalorder %s17, 1
    %p108 = por %p106, %p107
    %p110 = scmp.ne.s32.totalorder %s95, %s109
    %p111 = scmp.eq.s32.totalorder %s17, 0
    %p112 = por %p110, %p111
    %s114 = sadd.s32 %s113, 1
    %p117 = scmp.eq.s32.totalorder %s11, 1
    %p118 = scmp.ne.s32.totalorder %s113, %s115
    %p119 = scmp.eq.s32.totalorder %s11, 0
    %p120 = por %p118, %p119
    %p121 = scmp.ne.s32.totalorder %s113, %s115
    %p122 = scmp.eq.s32.totalorder %s16, 1
    %p123 = por %p121, %p122
    %p124 = scmp.ne.s32.totalorder %s115, %s116
    %p125 = scmp.eq.s32.totalorder %s16, 0
    %p126 = por %p124, %p125
    %p127 = scmp.ne.s32.totalorder %s115, %s116
    %p128 = scmp.eq.s32.totalorder %s17, 1
    %p129 = por %p127, %p128
    %p131 = scmp.ne.s32.totalorder %s116, %s130
    %p132 = scmp.eq.s32.totalorder %s17, 0
    %p133 = por %p131, %p132
    %s134 = ssub.s32 %s11, %s18
    %p135 = scmp.eq.s32.totalorder %s134, 0
    %s137 = sadd.s32 %s136, 1
    %s138 = scalar_select %p135, %s136, %s137
    %p141 = pneg %p135
    %p142 = scmp.eq.s32.totalorder %s11, 1
    %p143 = por %p141, %p142
    %p144 = scmp.ne.s32.totalorder %s136, %s139
    %p145 = scmp.eq.s32.totalorder %s11, 0
    %p146 = por %p144, %p145
    %p147 = scmp.ne.s32.totalorder %s136, %s139
    %p148 = scmp.eq.s32.totalorder %s16, 1
    %p149 = por %p147, %p148
    %p150 = scmp.ne.s32.totalorder %s139, %s140
    %p151 = scmp.eq.s32.totalorder %s16, 0
    %p152 = por %p150, %p151
    %p153 = scmp.ne.s32.totalorder %s139, %s140
    %p154 = scmp.eq.s32.totalorder %s17, 1
    %p155 = por %p153, %p154
    %p157 = scmp.ne.s32.totalorder %s140, %s156
    %p158 = scmp.eq.s32.totalorder %s17, 0
    %p159 = por %p157, %p158
    %p160 = scmp.le.s32.totalorder 1, %s11
    %p161 = scmp.lt.s32.totalorder %s11, 3
    %p162 = pnand %p160, %p161
    %p163 = pneg %p162
    // Predicated region
    $region9: #{netgat_forward.5} parent=5 // pred_check
      _
    $region10: #{netgat_forward.5} parent=5 // pred_check_branch
      %165 = sbr.rel (%p162) target = $region12
    $region11: #{netgat_forward.5} parent=5 // pred_region
      %s166 = ssub.s32 %s11, 1
      // Predicated region
      $region13: #{netgat_forward.5} parent=11 // pred_check
        %p167 = pneg %p58
      $region14: #{netgat_forward.5} parent=11 // pred_check_branch
        %169 = sbr.rel (%p167) target = $region16
      $region15: #{netgat_forward.5} parent=11 // pred_region
        _
      $region16: #{netgat_forward.5} parent=11 // pred_fallthru
        _
      // Predicated region
      $region17: #{netgat_forward.5} parent=11 // pred_check
        %p170 = pneg %p105
      $region18: #{netgat_forward.5} parent=11 // pred_check_branch
        %172 = sbr.rel (%p170) target = $region20
      $region19: #{netgat_forward.5} parent=11 // pred_region
        _
      $region20: #{netgat_forward.5} parent=11 // pred_fallthru
        _
      // Predicated region
      $region21: #{netgat_forward.5} parent=11 // pred_check
        %p173 = pneg %p126
      $region22: #{netgat_forward.5} parent=11 // pred_check_branch
        %175 = sbr.rel (%p173) target = $region24
      $region23: #{netgat_forward.5} parent=11 // pred_region
        _
      $region24: #{netgat_forward.5} parent=11 // pred_fallthru
        _
    $region12: #{netgat_forward.5} parent=5 // pred_fallthru
      _
    %p176 = scmp.lt.s32.totalorder %s11, 2
    // Predicated region
    $region25: #{netgat_forward.5} parent=5 // pred_check
      %p177 = pneg %p176
    $region26: #{netgat_forward.5} parent=5 // pred_check_branch
      %179 = sbr.rel (%p177) target = $region28
    $region27: #{netgat_forward.5} parent=5 // pred_region
      // Predicated region
      $region29: #{netgat_forward.5} parent=27 // pred_check
        %p180 = pneg %p31
      $region30: #{netgat_forward.5} parent=27 // pred_check_branch
        %182 = sbr.rel (%p180) target = $region32
      $region31: #{netgat_forward.5} parent=27 // pred_region
        %s183 = smul.u32 4, %s11
        %p184 = scmp.lt.s32.totalorder %s183, 7
        %s185 = scalar_select %p184, %s183, 7
        %s186 = smul.addr %s185, 2
        %s187 = smul.addr %s186, 8
        %s188 = scalar_lea.vmem %s0, %s187
        %s189 = smul.u32 4, %s11
      $region32: #{netgat_forward.5} parent=27 // pred_fallthru
        _
      // Predicated region
      $region33: #{netgat_forward.5} parent=27 // pred_check
        %p190 = pneg %p78
      $region34: #{netgat_forward.5} parent=27 // pred_check_branch
        %192 = sbr.rel (%p190) target = $region36
      $region35: #{netgat_forward.5} parent=27 // pred_region
        %s193 = smul.u32 16, %s11
        %p194 = scmp.lt.s32.totalorder %s193, 31
        %s195 = scalar_select %p194, %s193, 31
        %s196 = smul.addr %s195, 8
        %s197 = scalar_lea.vmem %s2, %s196
        %s198 = smul.u32 16, %s11
      $region36: #{netgat_forward.5} parent=27 // pred_fallthru
        _
    $region28: #{netgat_forward.5} parent=5 // pred_fallthru
      _
    %p199 = scmp.le.s32.totalorder 1, %s11
    %p200 = scmp.lt.s32.totalorder %s11, 3
    %p201 = pnand %p199, %p200
    %p202 = pneg %p201
    // Predicated region
    $region37: #{netgat_forward.5} parent=5 // pred_check
      _
    $region38: #{netgat_forward.5} parent=5 // pred_check_branch
      %204 = sbr.rel (%p201) target = $region40
    $region39: #{netgat_forward.5} parent=5 // pred_region
      %s205 = ssub.s32 %s11, 1
      %s206 = smul.u32 4, %s16
      %p207 = scmp.lt.s32.totalorder %s206, 7
      %s208 = scalar_select %p207, %s206, 7
      %s209 = smul.addr %s208, 2
      %s210 = smul.addr %s209, 8
      %s211 = scalar_lea.vmem %s0, %s210
      %p212 = pneg %p37
      %p213 = pneg %p34
      %p214 = pneg %p58
      %p215 = pneg %p55
      %s216 = smul.u32 16, %s16
      %p217 = scmp.lt.s32.totalorder %s216, 31
      %s218 = scalar_select %p217, %s216, 31
      %s219 = smul.addr %s218, 8
      %s220 = scalar_lea.vmem %s2, %s219
      %p221 = pneg %p84
      %p222 = pneg %p81
      %p223 = pneg %p105
      %p224 = pneg %p102
      %p225 = pneg %p126
      %p226 = pneg %p123
      %p227 = pneg %p152
      %p228 = pneg %p149
      %s229 = smul.u32 16, %s16
      %p230 = scmp.lt.s32.totalorder %s229, 31
      %s231 = scalar_select %p230, %s229, 31
      %s232 = smul.addr %s231, 4
      %s233 = scalar_lea.vmem %s5, %s232
      %s234 = smul.u32 4, %s16
      %p235 = scmp.lt.s32.totalorder %s234, 7
      %s236 = scalar_select %p235, %s234, 7
      %s237 = smul.addr %s236, 2
      %s238 = smul.addr %s237, 8
      %s239 = scalar_lea.vmem %s0, %s238
      %s240 = smul.u32 4, %s16
      %s241 = smul.u32 16, %s16
      %p242 = scmp.lt.s32.totalorder %s241, 31
      %s243 = scalar_select %p242, %s241, 31
      %s244 = smul.addr %s243, 8
      %s245 = scalar_lea.vmem %s2, %s244
      %s246 = smul.u32 16, %s16
      %s247 = smul.u32 16, %s16
      %p248 = scmp.lt.s32.totalorder %s247, 31
      %s249 = scalar_select %p248, %s247, 31
      %s250 = smul.addr %s249, 4
      %s251 = scalar_lea.vmem %s5, %s250
      %s252 = smul.u32 16, %s16
      %v254 = vld [vmem:[%s239] sm:$0xff]
      %v255 = vld [vmem:[%s239 + $0x8] sm:$0xff]
      %v256 = vld [vmem:[%s239 + $0x10] sm:$0xff]
      %v257 = vld [vmem:[%s239 + $0x18] sm:$0xff]
      %v258 = vld [vmem:[%s239 + $0x20] sm:$0xff]
      %v259 = vld [vmem:[%s239 + $0x28] sm:$0xff]
      %v260 = vld [vmem:[%s239 + $0x30] sm:$0xff]
      %v261 = vld [vmem:[%s239 + $0x38] sm:$0xff]
      %v262 = vunpack.c.0.s8 %v254
      %v263 = vunpack.c.0.s8 %v255
      %v264 = vunpack.c.1.s8 %v254
      %v265 = vunpack.c.1.s8 %v255
      %v266 = vunpack.c.2.s8 %v254
      %v267 = vunpack.c.2.s8 %v255
      %v268 = vunpack.c.3.s8 %v254
      %v269 = vunpack.c.3.s8 %v255
      %v270 = vunpack.c.0.s8 %v256
      %v271 = vunpack.c.0.s8 %v257
      %v272 = vunpack.c.1.s8 %v256
      %v273 = vunpack.c.1.s8 %v257
      %v274 = vunpack.c.2.s8 %v256
      %v275 = vunpack.c.2.s8 %v257
      %v276 = vunpack.c.3.s8 %v256
      %v277 = vunpack.c.3.s8 %v257
      %v278 = vunpack.c.0.s8 %v258
      %v279 = vunpack.c.0.s8 %v259
      %v280 = vunpack.c.1.s8 %v258
      %v281 = vunpack.c.1.s8 %v259
      %v282 = vunpack.c.2.s8 %v258
      %v283 = vunpack.c.2.s8 %v259
      %v284 = vunpack.c.3.s8 %v258
      %v285 = vunpack.c.3.s8 %v259
      %v286 = vunpack.c.0.s8 %v260
      %v287 = vunpack.c.0.s8 %v261
      %v288 = vunpack.c.1.s8 %v260
      %v289 = vunpack.c.1.s8 %v261
      %v290 = vunpack.c.2.s8 %v260
      %v291 = vunpack.c.2.s8 %v261
      %v292 = vunpack.c.3.s8 %v260
      %v293 = vunpack.c.3.s8 %v261
      %v294 = vcvt.s32.f32 %v262
      %v295 = vcvt.s32.f32 %v263
      %v296 = vcvt.s32.f32 %v264
      %v297 = vcvt.s32.f32 %v265
      %v298 = vcvt.s32.f32 %v266
      %v299 = vcvt.s32.f32 %v267
      %v300 = vcvt.s32.f32 %v268
      %v301 = vcvt.s32.f32 %v269
      %v302 = vcvt.s32.f32 %v270
      %v303 = vcvt.s32.f32 %v271
      %v304 = vcvt.s32.f32 %v272
      %v305 = vcvt.s32.f32 %v273
      %v306 = vcvt.s32.f32 %v274
      %v307 = vcvt.s32.f32 %v275
      %v308 = vcvt.s32.f32 %v276
      %v309 = vcvt.s32.f32 %v277
      %v310 = vcvt.s32.f32 %v278
      %v311 = vcvt.s32.f32 %v279
      %v312 = vcvt.s32.f32 %v280
      %v313 = vcvt.s32.f32 %v281
      %v314 = vcvt.s32.f32 %v282
      %v315 = vcvt.s32.f32 %v283
      %v316 = vcvt.s32.f32 %v284
      %v317 = vcvt.s32.f32 %v285
      %v318 = vcvt.s32.f32 %v286
      %v319 = vcvt.s32.f32 %v287
      %v320 = vcvt.s32.f32 %v288
      %v321 = vcvt.s32.f32 %v289
      %v322 = vcvt.s32.f32 %v290
      %v323 = vcvt.s32.f32 %v291
      %v324 = vcvt.s32.f32 %v292
      %v325 = vcvt.s32.f32 %v293
      %v326 = vsub.f32 %v294, 1.0
      %v327 = vsub.f32 %v295, 1.0
      %v328 = vsub.f32 %v296, 1.0
      %v329 = vsub.f32 %v297, 1.0
      %v330 = vsub.f32 %v298, 1.0
      %v331 = vsub.f32 %v299, 1.0
      %v332 = vsub.f32 %v300, 1.0
      %v333 = vsub.f32 %v301, 1.0
      %v334 = vsub.f32 %v302, 1.0
      %v335 = vsub.f32 %v303, 1.0
      %v336 = vsub.f32 %v304, 1.0
      %v337 = vsub.f32 %v305, 1.0
      %v338 = vsub.f32 %v306, 1.0
      %v339 = vsub.f32 %v307, 1.0
      %v340 = vsub.f32 %v308, 1.0
      %v341 = vsub.f32 %v309, 1.0
      %v342 = vsub.f32 %v310, 1.0
      %v343 = vsub.f32 %v311, 1.0
      %v344 = vsub.f32 %v312, 1.0
      %v345 = vsub.f32 %v313, 1.0
      %v346 = vsub.f32 %v314, 1.0
      %v347 = vsub.f32 %v315, 1.0
      %v348 = vsub.f32 %v316, 1.0
      %v349 = vsub.f32 %v317, 1.0
      %v350 = vsub.f32 %v318, 1.0
      %v351 = vsub.f32 %v319, 1.0
      %v352 = vsub.f32 %v320, 1.0
      %v353 = vsub.f32 %v321, 1.0
      %v354 = vsub.f32 %v322, 1.0
      %v355 = vsub.f32 %v323, 1.0
      %v356 = vsub.f32 %v324, 1.0
      %v357 = vsub.f32 %v325, 1.0
      %v358 = vmul.f32 %v326, 1e+09
      %v359 = vmul.f32 %v327, 1e+09
      %v360 = vmul.f32 %v328, 1e+09
      %v361 = vmul.f32 %v329, 1e+09
      %v362 = vmul.f32 %v330, 1e+09
      %v363 = vmul.f32 %v331, 1e+09
      %v364 = vmul.f32 %v332, 1e+09
      %v365 = vmul.f32 %v333, 1e+09
      %v366 = vmul.f32 %v334, 1e+09
      %v367 = vmul.f32 %v335, 1e+09
      %v368 = vmul.f32 %v336, 1e+09
      %v369 = vmul.f32 %v337, 1e+09
      %v370 = vmul.f32 %v338, 1e+09
      %v371 = vmul.f32 %v339, 1e+09
      %v372 = vmul.f32 %v340, 1e+09
      %v373 = vmul.f32 %v341, 1e+09
      %v374 = vmul.f32 %v342, 1e+09
      %v375 = vmul.f32 %v343, 1e+09
      %v376 = vmul.f32 %v344, 1e+09
      %v377 = vmul.f32 %v345, 1e+09
      %v378 = vmul.f32 %v346, 1e+09
      %v379 = vmul.f32 %v347, 1e+09
      %v380 = vmul.f32 %v348, 1e+09
      %v381 = vmul.f32 %v349, 1e+09
      %v382 = vmul.f32 %v350, 1e+09
      %v383 = vmul.f32 %v351, 1e+09
      %v384 = vmul.f32 %v352, 1e+09
      %v385 = vmul.f32 %v353, 1e+09
      %v386 = vmul.f32 %v354, 1e+09
      %v387 = vmul.f32 %v355, 1e+09
      %v388 = vmul.f32 %v356, 1e+09
      %v389 = vmul.f32 %v357, 1e+09
      %v390 = vld [vmem:[%s245] sm:$0xff]
      %v391 = vld [vmem:[%s245 + $0x8] sm:$0xff]
      %v392 = vld [vmem:[%s245 + $0x10] sm:$0xff]
      %v393 = vld [vmem:[%s245 + $0x18] sm:$0xff]
      %v394 = vld [vmem:[%s245 + $0x20] sm:$0xff]
      %v395 = vld [vmem:[%s245 + $0x28] sm:$0xff]
      %v396 = vld [vmem:[%s245 + $0x30] sm:$0xff]
      %v397 = vld [vmem:[%s245 + $0x38] sm:$0xff]
      %v398 = vld [vmem:[%s245 + $0x40] sm:$0xff]
      %v399 = vld [vmem:[%s245 + $0x48] sm:$0xff]
      %v400 = vld [vmem:[%s245 + $0x50] sm:$0xff]
      %v401 = vld [vmem:[%s245 + $0x58] sm:$0xff]
      %v402 = vld [vmem:[%s245 + $0x60] sm:$0xff]
      %v403 = vld [vmem:[%s245 + $0x68] sm:$0xff]
      %v404 = vld [vmem:[%s245 + $0x70] sm:$0xff]
      %v405 = vld [vmem:[%s245 + $0x78] sm:$0xff]
      %v406 = vld [vmem:[%s1] sm:$0xff]
      %v407 = vld [vmem:[%s1 + $0x8] sm:$0xff]
      %409 = vset.pattern.permute.xlu0 0
      %410 = vperm.xlu0 %409, %v390
      %v411 = vpop.permute.xlu0 %410
      %414 = vset.pattern.permute.xlu0 0
      %415 = vperm.xlu0 %414, %v391
      %v416 = vpop.permute.xlu0 %415
      %419 = vset.pattern.permute.xlu0 0
      %420 = vperm.xlu0 %419, %v392
      %v421 = vpop.permute.xlu0 %420
      %424 = vset.pattern.permute.xlu0 0
      %425 = vperm.xlu0 %424, %v393
      %v426 = vpop.permute.xlu0 %425
      %429 = vset.pattern.permute.xlu0 0
      %430 = vperm.xlu0 %429, %v394
      %v431 = vpop.permute.xlu0 %430
      %434 = vset.pattern.permute.xlu0 0
      %435 = vperm.xlu0 %434, %v395
      %v436 = vpop.permute.xlu0 %435
      %439 = vset.pattern.permute.xlu0 0
      %440 = vperm.xlu0 %439, %v396
      %v441 = vpop.permute.xlu0 %440
      %444 = vset.pattern.permute.xlu0 0
      %445 = vperm.xlu0 %444, %v397
      %v446 = vpop.permute.xlu0 %445
      %449 = vset.pattern.permute.xlu0 0
      %450 = vperm.xlu0 %449, %v398
      %v451 = vpop.permute.xlu0 %450
      %454 = vset.pattern.permute.xlu0 0
      %455 = vperm.xlu0 %454, %v399
      %v456 = vpop.permute.xlu0 %455
      %459 = vset.pattern.permute.xlu0 0
      %460 = vperm.xlu0 %459, %v400
      %v461 = vpop.permute.xlu0 %460
      %464 = vset.pattern.permute.xlu0 0
      %465 = vperm.xlu0 %464, %v401
      %v466 = vpop.permute.xlu0 %465
      %469 = vset.pattern.permute.xlu0 0
      %470 = vperm.xlu0 %469, %v402
      %v471 = vpop.permute.xlu0 %470
      %474 = vset.pattern.permute.xlu0 0
      %475 = vperm.xlu0 %474, %v403
      %v476 = vpop.permute.xlu0 %475
      %479 = vset.pattern.permute.xlu0 0
      %480 = vperm.xlu0 %479, %v404
      %v481 = vpop.permute.xlu0 %480
      %484 = vset.pattern.permute.xlu0 0
      %485 = vperm.xlu0 %484, %v405
      %v486 = vpop.permute.xlu0 %485
      %v488 = vlaneseq
      %v489 = vshrl.u32 %v488, 7
      %v490 = vsub.s32 0, %v489
      %v491 = vrot.slane %v406, %v490
      %v492 = vlaneseq
      %v493 = vshrl.u32 %v492, 7
      %v494 = vsub.s32 0, %v493
      %v495 = vrot.slane %v407, %v494
      %v496 = vadd.f32 %v411, %v491
      %v497 = vadd.f32 %v411, %v495
      %v498 = vadd.f32 %v416, %v491
      %v499 = vadd.f32 %v416, %v495
      %v500 = vadd.f32 %v421, %v491
      %v501 = vadd.f32 %v421, %v495
      %v502 = vadd.f32 %v426, %v491
      %v503 = vadd.f32 %v426, %v495
      %v504 = vadd.f32 %v431, %v491
      %v505 = vadd.f32 %v431, %v495
      %v506 = vadd.f32 %v436, %v491
      %v507 = vadd.f32 %v436, %v495
      %v508 = vadd.f32 %v441, %v491
      %v509 = vadd.f32 %v441, %v495
      %v510 = vadd.f32 %v446, %v491
      %v511 = vadd.f32 %v446, %v495
      %v512 = vadd.f32 %v451, %v491
      %v513 = vadd.f32 %v451, %v495
      %v514 = vadd.f32 %v456, %v491
      %v515 = vadd.f32 %v456, %v495
      %v516 = vadd.f32 %v461, %v491
      %v517 = vadd.f32 %v461, %v495
      %v518 = vadd.f32 %v466, %v491
      %v519 = vadd.f32 %v466, %v495
      %v520 = vadd.f32 %v471, %v491
      %v521 = vadd.f32 %v471, %v495
      %v522 = vadd.f32 %v476, %v491
      %v523 = vadd.f32 %v476, %v495
      %v524 = vadd.f32 %v481, %v491
      %v525 = vadd.f32 %v481, %v495
      %v526 = vadd.f32 %v486, %v491
      %v527 = vadd.f32 %v486, %v495
      %v528 = vmul.f32 %v496, 0.2
      %v529 = vmul.f32 %v497, 0.2
      %v530 = vmul.f32 %v498, 0.2
      %v531 = vmul.f32 %v499, 0.2
      %v532 = vmul.f32 %v500, 0.2
      %v533 = vmul.f32 %v501, 0.2
      %v534 = vmul.f32 %v502, 0.2
      %v535 = vmul.f32 %v503, 0.2
      %v536 = vmul.f32 %v504, 0.2
      %v537 = vmul.f32 %v505, 0.2
      %v538 = vmul.f32 %v506, 0.2
      %v539 = vmul.f32 %v507, 0.2
      %v540 = vmul.f32 %v508, 0.2
      %v541 = vmul.f32 %v509, 0.2
      %v542 = vmul.f32 %v510, 0.2
      %v543 = vmul.f32 %v511, 0.2
      %v544 = vmul.f32 %v512, 0.2
      %v545 = vmul.f32 %v513, 0.2
      %v546 = vmul.f32 %v514, 0.2
      %v547 = vmul.f32 %v515, 0.2
      %v548 = vmul.f32 %v516, 0.2
      %v549 = vmul.f32 %v517, 0.2
      %v550 = vmul.f32 %v518, 0.2
      %v551 = vmul.f32 %v519, 0.2
      %v552 = vmul.f32 %v520, 0.2
      %v553 = vmul.f32 %v521, 0.2
      %v554 = vmul.f32 %v522, 0.2
      %v555 = vmul.f32 %v523, 0.2
      %v556 = vmul.f32 %v524, 0.2
      %v557 = vmul.f32 %v525, 0.2
      %v558 = vmul.f32 %v526, 0.2
      %v559 = vmul.f32 %v527, 0.2
      %v560 = vmax.f32 %v496, %v528
      %v561 = vmax.f32 %v497, %v529
      %v562 = vmax.f32 %v498, %v530
      %v563 = vmax.f32 %v499, %v531
      %v564 = vmax.f32 %v500, %v532
      %v565 = vmax.f32 %v501, %v533
      %v566 = vmax.f32 %v502, %v534
      %v567 = vmax.f32 %v503, %v535
      %v568 = vmax.f32 %v504, %v536
      %v569 = vmax.f32 %v505, %v537
      %v570 = vmax.f32 %v506, %v538
      %v571 = vmax.f32 %v507, %v539
      %v572 = vmax.f32 %v508, %v540
      %v573 = vmax.f32 %v509, %v541
      %v574 = vmax.f32 %v510, %v542
      %v575 = vmax.f32 %v511, %v543
      %v576 = vmax.f32 %v512, %v544
      %v577 = vmax.f32 %v513, %v545
      %v578 = vmax.f32 %v514, %v546
      %v579 = vmax.f32 %v515, %v547
      %v580 = vmax.f32 %v516, %v548
      %v581 = vmax.f32 %v517, %v549
      %v582 = vmax.f32 %v518, %v550
      %v583 = vmax.f32 %v519, %v551
      %v584 = vmax.f32 %v520, %v552
      %v585 = vmax.f32 %v521, %v553
      %v586 = vmax.f32 %v522, %v554
      %v587 = vmax.f32 %v523, %v555
      %v588 = vmax.f32 %v524, %v556
      %v589 = vmax.f32 %v525, %v557
      %v590 = vmax.f32 %v526, %v558
      %v591 = vmax.f32 %v527, %v559
      %v592 = vadd.f32 %v560, %v358
      %v593 = vadd.f32 %v561, %v359
      %v594 = vadd.f32 %v562, %v360
      %v595 = vadd.f32 %v563, %v361
      %v596 = vadd.f32 %v564, %v362
      %v597 = vadd.f32 %v565, %v363
      %v598 = vadd.f32 %v566, %v364
      %v599 = vadd.f32 %v567, %v365
      %v600 = vadd.f32 %v568, %v366
      %v601 = vadd.f32 %v569, %v367
      %v602 = vadd.f32 %v570, %v368
      %v603 = vadd.f32 %v571, %v369
      %v604 = vadd.f32 %v572, %v370
      %v605 = vadd.f32 %v573, %v371
      %v606 = vadd.f32 %v574, %v372
      %v607 = vadd.f32 %v575, %v373
      %v608 = vadd.f32 %v576, %v374
      %v609 = vadd.f32 %v577, %v375
      %v610 = vadd.f32 %v578, %v376
      %v611 = vadd.f32 %v579, %v377
      %v612 = vadd.f32 %v580, %v378
      %v613 = vadd.f32 %v581, %v379
      %v614 = vadd.f32 %v582, %v380
      %v615 = vadd.f32 %v583, %v381
      %v616 = vadd.f32 %v584, %v382
      %v617 = vadd.f32 %v585, %v383
      %v618 = vadd.f32 %v586, %v384
      %v619 = vadd.f32 %v587, %v385
      %v620 = vadd.f32 %v588, %v386
      %v621 = vadd.f32 %v589, %v387
      %v622 = vadd.f32 %v590, %v388
      %v623 = vadd.f32 %v591, %v389
      %v624 = vmax.f32 %v592, %v593
      %625 = vmax.xlane.f32.xlu0 %v624
      %v626 = vpop.xlane.xlu0 %625
      %v627 = vmax.f32 %v594, %v595
      %628 = vmax.xlane.f32.xlu0 %v627
      %v629 = vpop.xlane.xlu0 %628
      %v630 = vmax.f32 %v596, %v597
      %631 = vmax.xlane.f32.xlu0 %v630
      %v632 = vpop.xlane.xlu0 %631
      %v633 = vmax.f32 %v598, %v599
      %634 = vmax.xlane.f32.xlu0 %v633
      %v635 = vpop.xlane.xlu0 %634
      %v636 = vmax.f32 %v600, %v601
      %637 = vmax.xlane.f32.xlu0 %v636
      %v638 = vpop.xlane.xlu0 %637
      %v639 = vmax.f32 %v602, %v603
      %640 = vmax.xlane.f32.xlu0 %v639
      %v641 = vpop.xlane.xlu0 %640
      %v642 = vmax.f32 %v604, %v605
      %643 = vmax.xlane.f32.xlu0 %v642
      %v644 = vpop.xlane.xlu0 %643
      %v645 = vmax.f32 %v606, %v607
      %646 = vmax.xlane.f32.xlu0 %v645
      %v647 = vpop.xlane.xlu0 %646
      %v648 = vmax.f32 %v608, %v609
      %649 = vmax.xlane.f32.xlu0 %v648
      %v650 = vpop.xlane.xlu0 %649
      %v651 = vmax.f32 %v610, %v611
      %652 = vmax.xlane.f32.xlu0 %v651
      %v653 = vpop.xlane.xlu0 %652
      %v654 = vmax.f32 %v612, %v613
      %655 = vmax.xlane.f32.xlu0 %v654
      %v656 = vpop.xlane.xlu0 %655
      %v657 = vmax.f32 %v614, %v615
      %658 = vmax.xlane.f32.xlu0 %v657
      %v659 = vpop.xlane.xlu0 %658
      %v660 = vmax.f32 %v616, %v617
      %661 = vmax.xlane.f32.xlu0 %v660
      %v662 = vpop.xlane.xlu0 %661
      %v663 = vmax.f32 %v618, %v619
      %664 = vmax.xlane.f32.xlu0 %v663
      %v665 = vpop.xlane.xlu0 %664
      %v666 = vmax.f32 %v620, %v621
      %667 = vmax.xlane.f32.xlu0 %v666
      %v668 = vpop.xlane.xlu0 %667
      %v669 = vmax.f32 %v622, %v623
      %670 = vmax.xlane.f32.xlu0 %v669
      %v671 = vpop.xlane.xlu0 %670
      %v672 = vsub.f32 %v592, %v626
      %v673 = vsub.f32 %v593, %v626
      %v674 = vsub.f32 %v594, %v629
      %v675 = vsub.f32 %v595, %v629
      %v676 = vsub.f32 %v596, %v632
      %v677 = vsub.f32 %v597, %v632
      %v678 = vsub.f32 %v598, %v635
      %v679 = vsub.f32 %v599, %v635
      %v680 = vsub.f32 %v600, %v638
      %v681 = vsub.f32 %v601, %v638
      %v682 = vsub.f32 %v602, %v641
      %v683 = vsub.f32 %v603, %v641
      %v684 = vsub.f32 %v604, %v644
      %v685 = vsub.f32 %v605, %v644
      %v686 = vsub.f32 %v606, %v647
      %v687 = vsub.f32 %v607, %v647
      %v688 = vsub.f32 %v608, %v650
      %v689 = vsub.f32 %v609, %v650
      %v690 = vsub.f32 %v610, %v653
      %v691 = vsub.f32 %v611, %v653
      %v692 = vsub.f32 %v612, %v656
      %v693 = vsub.f32 %v613, %v656
      %v694 = vsub.f32 %v614, %v659
      %v695 = vsub.f32 %v615, %v659
      %v696 = vsub.f32 %v616, %v662
      %v697 = vsub.f32 %v617, %v662
      %v698 = vsub.f32 %v618, %v665
      %v699 = vsub.f32 %v619, %v665
      %v700 = vsub.f32 %v620, %v668
      %v701 = vsub.f32 %v621, %v668
      %v702 = vsub.f32 %v622, %v671
      %v703 = vsub.f32 %v623, %v671
      %v704 = vpack.c.bf16 %v674, %v672
      %v705 = vpack.c.bf16 %v675, %v673
      %v706 = vpack.c.bf16 %v678, %v676
      %v707 = vpack.c.bf16 %v679, %v677
      %v708 = vpack.c.bf16 %v682, %v680
      %v709 = vpack.c.bf16 %v683, %v681
      %v710 = vpack.c.bf16 %v686, %v684
      %v711 = vpack.c.bf16 %v687, %v685
      %v712 = vpack.c.bf16 %v690, %v688
      %v713 = vpack.c.bf16 %v691, %v689
      %v714 = vpack.c.bf16 %v694, %v692
      %v715 = vpack.c.bf16 %v695, %v693
      %v716 = vpack.c.bf16 %v698, %v696
      %v717 = vpack.c.bf16 %v699, %v697
      %v718 = vpack.c.bf16 %v702, %v700
      %v719 = vpack.c.bf16 %v703, %v701
      %v721 = vmul.bf16 %v704, 1069105081
      %v722 = vpow.bf16.pop %v721
      %v724 = vmul.bf16 %v705, 1069105081
      %v725 = vpow.bf16.pop %v724
      %v727 = vmul.bf16 %v706, 1069105081
      %v728 = vpow.bf16.pop %v727
      %v730 = vmul.bf16 %v707, 1069105081
      %v731 = vpow.bf16.pop %v730
      %v733 = vmul.bf16 %v708, 1069105081
      %v734 = vpow.bf16.pop %v733
      %v736 = vmul.bf16 %v709, 1069105081
      %v737 = vpow.bf16.pop %v736
      %v739 = vmul.bf16 %v710, 1069105081
      %v740 = vpow.bf16.pop %v739
      %v742 = vmul.bf16 %v711, 1069105081
      %v743 = vpow.bf16.pop %v742
      %v745 = vmul.bf16 %v712, 1069105081
      %v746 = vpow.bf16.pop %v745
      %v748 = vmul.bf16 %v713, 1069105081
      %v749 = vpow.bf16.pop %v748
      %v751 = vmul.bf16 %v714, 1069105081
      %v752 = vpow.bf16.pop %v751
      %v754 = vmul.bf16 %v715, 1069105081
      %v755 = vpow.bf16.pop %v754
      %v757 = vmul.bf16 %v716, 1069105081
      %v758 = vpow.bf16.pop %v757
      %v760 = vmul.bf16 %v717, 1069105081
      %v761 = vpow.bf16.pop %v760
      %v763 = vmul.bf16 %v718, 1069105081
      %v764 = vpow.bf16.pop %v763
      %v766 = vmul.bf16 %v719, 1069105081
      %v767 = vpow.bf16.pop %v766
      %v768 = vld [vmem:[%s3] sm:$0xf]
      %v769 = vld [vmem:[%s3 + $0x4] sm:$0xf]
      %v770 = vld [vmem:[%s3 + $0x8] sm:$0xf]
      %v771 = vld [vmem:[%s3 + $0xc] sm:$0xf]
      %v772 = vld [vmem:[%s3 + $0x10] sm:$0xf]
      %v773 = vld [vmem:[%s3 + $0x14] sm:$0xf]
      %v774 = vld [vmem:[%s3 + $0x18] sm:$0xf]
      %v775 = vld [vmem:[%s3 + $0x1c] sm:$0xf]
      %v776 = vld [vmem:[%s3 + $0x20] sm:$0xf]
      %v777 = vld [vmem:[%s3 + $0x24] sm:$0xf]
      %v778 = vld [vmem:[%s3 + $0x28] sm:$0xf]
      %v779 = vld [vmem:[%s3 + $0x2c] sm:$0xf]
      %v780 = vld [vmem:[%s3 + $0x30] sm:$0xf]
      %v781 = vld [vmem:[%s3 + $0x34] sm:$0xf]
      %v782 = vld [vmem:[%s3 + $0x38] sm:$0xf]
      %v783 = vld [vmem:[%s3 + $0x3c] sm:$0xf]
      %v784 = vld [vmem:[%s3 + $0x40] sm:$0xf]
      %v785 = vld [vmem:[%s3 + $0x44] sm:$0xf]
      %v786 = vld [vmem:[%s3 + $0x48] sm:$0xf]
      %v787 = vld [vmem:[%s3 + $0x4c] sm:$0xf]
      %v788 = vld [vmem:[%s3 + $0x50] sm:$0xf]
      %v789 = vld [vmem:[%s3 + $0x54] sm:$0xf]
      %v790 = vld [vmem:[%s3 + $0x58] sm:$0xf]
      %v791 = vld [vmem:[%s3 + $0x5c] sm:$0xf]
      %v792 = vld [vmem:[%s3 + $0x60] sm:$0xf]
      %v793 = vld [vmem:[%s3 + $0x64] sm:$0xf]
      %v794 = vld [vmem:[%s3 + $0x68] sm:$0xf]
      %v795 = vld [vmem:[%s3 + $0x6c] sm:$0xf]
      %v796 = vld [vmem:[%s3 + $0x70] sm:$0xf]
      %v797 = vld [vmem:[%s3 + $0x74] sm:$0xf]
      %v798 = vld [vmem:[%s3 + $0x78] sm:$0xf]
      %v799 = vld [vmem:[%s3 + $0x7c] sm:$0xf]
      %v832 = vunpack.c.l.b16 %v768
      %v833 = vunpack.c.l.b16 %v769
      %v834 = vunpack.c.l.b16 %v770
      %v835 = vunpack.c.l.b16 %v771
      %v836 = vunpack.c.l.b16 %v772
      %v837 = vunpack.c.l.b16 %v773
      %v838 = vunpack.c.l.b16 %v774
      %v839 = vunpack.c.l.b16 %v775
      %v840 = vunpack.c.l.b16 %v776
      %v841 = vunpack.c.l.b16 %v777
      %v842 = vunpack.c.l.b16 %v778
      %v843 = vunpack.c.l.b16 %v779
      %v844 = vunpack.c.l.b16 %v780
      %v845 = vunpack.c.l.b16 %v781
      %v846 = vunpack.c.l.b16 %v782
      %v847 = vunpack.c.l.b16 %v783
      %v848 = vunpack.c.l.b16 %v784
      %v849 = vunpack.c.l.b16 %v785
      %v850 = vunpack.c.l.b16 %v786
      %v851 = vunpack.c.l.b16 %v787
      %v852 = vunpack.c.l.b16 %v788
      %v853 = vunpack.c.l.b16 %v789
      %v854 = vunpack.c.l.b16 %v790
      %v855 = vunpack.c.l.b16 %v791
      %v856 = vunpack.c.l.b16 %v792
      %v857 = vunpack.c.l.b16 %v793
      %v858 = vunpack.c.l.b16 %v794
      %v859 = vunpack.c.l.b16 %v795
      %v860 = vunpack.c.l.b16 %v796
      %v861 = vunpack.c.l.b16 %v797
      %v862 = vunpack.c.l.b16 %v798
      %v863 = vunpack.c.l.b16 %v799
      %v864 = vpack.c.b16 %v833, %v832
      %v865 = vpack.c.b16 %v835, %v834
      %v866 = vpack.c.b16 %v837, %v836
      %v867 = vpack.c.b16 %v839, %v838
      %v868 = vpack.c.b16 %v841, %v840
      %v869 = vpack.c.b16 %v843, %v842
      %v870 = vpack.c.b16 %v845, %v844
      %v871 = vpack.c.b16 %v847, %v846
      %v872 = vpack.c.b16 %v849, %v848
      %v873 = vpack.c.b16 %v851, %v850
      %v874 = vpack.c.b16 %v853, %v852
      %v875 = vpack.c.b16 %v855, %v854
      %v876 = vpack.c.b16 %v857, %v856
      %v877 = vpack.c.b16 %v859, %v858
      %v878 = vpack.c.b16 %v861, %v860
      %v879 = vpack.c.b16 %v863, %v862
      %896 = vmatprep.subr.bf16.mxu0 0
      %897 = vmatpush1.bf16.msra.mxu0 %v864
      %898 = vmatprep.subr.bf16.mxu0 0
      %899 = vmatpush1.bf16.msra.mxu0 %v865
      %900 = vmatprep.subr.bf16.mxu0 0
      %901 = vmatpush1.bf16.msra.mxu0 %v866
      %902 = vmatprep.subr.bf16.mxu0 0
      %903 = vmatpush1.bf16.msra.mxu0 %v867
      %904 = vmatprep.subr.bf16.mxu0 0
      %905 = vmatpush1.bf16.msra.mxu0 %v868
      %906 = vmatprep.subr.bf16.mxu0 0
      %907 = vmatpush1.bf16.msra.mxu0 %v869
      %908 = vmatprep.subr.bf16.mxu0 0
      %909 = vmatpush1.bf16.msra.mxu0 %v870
      %910 = vmatprep.subr.bf16.mxu0 0
      %911 = vmatpush1.bf16.msra.mxu0 %v871
      %912 = vmatprep.subr.bf16.mxu0 0
      %913 = vmatpush1.bf16.msra.mxu0 %v872
      %914 = vmatprep.subr.bf16.mxu0 0
      %915 = vmatpush1.bf16.msra.mxu0 %v873
      %916 = vmatprep.subr.bf16.mxu0 0
      %917 = vmatpush1.bf16.msra.mxu0 %v874
      %918 = vmatprep.subr.bf16.mxu0 0
      %919 = vmatpush1.bf16.msra.mxu0 %v875
      %920 = vmatprep.subr.bf16.mxu0 0
      %921 = vmatpush1.bf16.msra.mxu0 %v876
      %922 = vmatprep.subr.bf16.mxu0 0
      %923 = vmatpush1.bf16.msra.mxu0 %v877
      %924 = vmatprep.subr.bf16.mxu0 0
      %925 = vmatpush1.bf16.msra.mxu0 %v878
      %926 = vmatprep.subr.bf16.mxu0 0
      %927 = vmatpush1.bf16.msra.mxu0 %v879
      %928 = vmatprep.mubr.bf16.mxu0 %v725
      %929 = vmatmul.mubr.bf16.gmra.mrb[0].mxu0 %v722
      %v930 = vpop.f32.mrb[0].mxu0
      %v931 = vadd.f32 0.0, %v930
      %v932 = vpop.f32.mrb[0].mxu0
      %v933 = vpop.f32.mrb[0].mxu0
      %v934 = vadd.f32 0.0, %v933
      %v935 = vpop.f32.mrb[0].mxu0
      %936 = vmatprep.mubr.bf16.mxu0 %v731
      %937 = vmatmul.mubr.bf16.gmra.mrb[0].mxu0 %v728
      %v938 = vpop.f32.mrb[0].mxu0
      %v939 = vadd.f32 0.0, %v938
      %v940 = vpop.f32.mrb[0].mxu0
      %v941 = vpop.f32.mrb[0].mxu0
      %v942 = vadd.f32 0.0, %v941
      %v943 = vpop.f32.mrb[0].mxu0
      %944 = vmatprep.mubr.bf16.mxu0 %v737
      %945 = vmatmul.mubr.bf16.gmra.mrb[0].mxu0 %v734
      %v946 = vpop.f32.mrb[0].mxu0
      %v947 = vadd.f32 0.0, %v946
      %v948 = vpop.f32.mrb[0].mxu0
      %v949 = vpop.f32.mrb[0].mxu0
      %v950 = vadd.f32 0.0, %v949
      %v951 = vpop.f32.mrb[0].mxu0
      %952 = vmatprep.mubr.bf16.mxu0 %v743
      %953 = vmatmul.mubr.bf16.gmra.mrb[0].mxu0 %v740
      %v954 = vpop.f32.mrb[0].mxu0
      %v955 = vadd.f32 0.0, %v954
      %v956 = vpop.f32.mrb[0].mxu0
      %v957 = vpop.f32.mrb[0].mxu0
      %v958 = vadd.f32 0.0, %v957
      %v959 = vpop.f32.mrb[0].mxu0
      %960 = vmatprep.mubr.bf16.mxu0 %v749
      %961 = vmatmul.mubr.bf16.gmra.mrb[0].mxu0 %v746
      %v962 = vpop.f32.mrb[0].mxu0
      %v963 = vadd.f32 0.0, %v962
      %v964 = vpop.f32.mrb[0].mxu0
      %v965 = vpop.f32.mrb[0].mxu0
      %v966 = vadd.f32 0.0, %v965
      %v967 = vpop.f32.mrb[0].mxu0
      %968 = vmatprep.mubr.bf16.mxu0 %v755
      %969 = vmatmul.mubr.bf16.gmra.mrb[0].mxu0 %v752
      %v970 = vpop.f32.mrb[0].mxu0
      %v971 = vadd.f32 0.0, %v970
      %v972 = vpop.f32.mrb[0].mxu0
      %v973 = vpop.f32.mrb[0].mxu0
      %v974 = vadd.f32 0.0, %v973
      %v975 = vpop.f32.mrb[0].mxu0
      %976 = vmatprep.mubr.bf16.mxu0 %v761
      %977 = vmatmul.mubr.bf16.gmra.mrb[0].mxu0 %v758
      %v978 = vpop.f32.mrb[0].mxu0
      %v979 = vadd.f32 0.0, %v978
      %v980 = vpop.f32.mrb[0].mxu0
      %v981 = vpop.f32.mrb[0].mxu0
      %v982 = vadd.f32 0.0, %v981
      %v983 = vpop.f32.mrb[0].mxu0
      %984 = vmatprep.mubr.bf16.mxu0 %v767
      %985 = vmatmul.mubr.bf16.gmra.mrb[0].mxu0 %v764
      %v986 = vpop.f32.mrb[0].mxu0
      %v987 = vadd.f32 0.0, %v986
      %v988 = vpop.f32.mrb[0].mxu0
      %v989 = vpop.f32.mrb[0].mxu0
      %v990 = vadd.f32 0.0, %v989
      %v991 = vpop.f32.mrb[0].mxu0
      %992 = vdwg.mxu0
      %v993 = vrcp.pop %v931
      %v994 = vrcp.pop %v934
      %v995 = vrcp.pop %v939
      %v996 = vrcp.pop %v942
      %v997 = vrcp.pop %v947
      %v998 = vrcp.pop %v950
      %v999 = vrcp.pop %v955
      %v1000 = vrcp.pop %v958
      %v1001 = vrcp.pop %v963
      %v1002 = vrcp.pop %v966
      %v1003 = vrcp.pop %v971
      %v1004 = vrcp.pop %v974
      %v1005 = vrcp.pop %v979
      %v1006 = vrcp.pop %v982
      %v1007 = vrcp.pop %v987
      %v1008 = vrcp.pop %v990
      %1010 = vset.pattern.permute.xlu0 16
      %1011 = vperm.xlu0 %1010, %v993
      %v1012 = vpop.permute.xlu0 %1011
      %1015 = vset.pattern.permute.xlu0 16
      %1016 = vperm.xlu0 %1015, %v994
      %v1017 = vpop.permute.xlu0 %1016
      %1020 = vset.pattern.permute.xlu0 16
      %1021 = vperm.xlu0 %1020, %v995
      %v1022 = vpop.permute.xlu0 %1021
      %1025 = vset.pattern.permute.xlu0 16
      %1026 = vperm.xlu0 %1025, %v996
      %v1027 = vpop.permute.xlu0 %1026
      %1030 = vset.pattern.permute.xlu0 16
      %1031 = vperm.xlu0 %1030, %v997
      %v1032 = vpop.permute.xlu0 %1031
      %1035 = vset.pattern.permute.xlu0 16
      %1036 = vperm.xlu0 %1035, %v998
      %v1037 = vpop.permute.xlu0 %1036
      %1040 = vset.pattern.permute.xlu0 16
      %1041 = vperm.xlu0 %1040, %v999
      %v1042 = vpop.permute.xlu0 %1041
      %1045 = vset.pattern.permute.xlu0 16
      %1046 = vperm.xlu0 %1045, %v1000
      %v1047 = vpop.permute.xlu0 %1046
      %1050 = vset.pattern.permute.xlu0 16
      %1051 = vperm.xlu0 %1050, %v1001
      %v1052 = vpop.permute.xlu0 %1051
      %1055 = vset.pattern.permute.xlu0 16
      %1056 = vperm.xlu0 %1055, %v1002
      %v1057 = vpop.permute.xlu0 %1056
      %1060 = vset.pattern.permute.xlu0 16
      %1061 = vperm.xlu0 %1060, %v1003
      %v1062 = vpop.permute.xlu0 %1061
      %1065 = vset.pattern.permute.xlu0 16
      %1066 = vperm.xlu0 %1065, %v1004
      %v1067 = vpop.permute.xlu0 %1066
      %1070 = vset.pattern.permute.xlu0 16
      %1071 = vperm.xlu0 %1070, %v1005
      %v1072 = vpop.permute.xlu0 %1071
      %1075 = vset.pattern.permute.xlu0 16
      %1076 = vperm.xlu0 %1075, %v1006
      %v1077 = vpop.permute.xlu0 %1076
      %1080 = vset.pattern.permute.xlu0 16
      %1081 = vperm.xlu0 %1080, %v1007
      %v1082 = vpop.permute.xlu0 %1081
      %1085 = vset.pattern.permute.xlu0 16
      %1086 = vperm.xlu0 %1085, %v1008
      %v1087 = vpop.permute.xlu0 %1086
      %v1089 = vmul.f32 %v931, %v1012
      %v1090 = vmul.f32 %v934, %v1017
      %v1091 = vmul.f32 %v939, %v1022
      %v1092 = vmul.f32 %v942, %v1027
      %v1093 = vmul.f32 %v947, %v1032
      %v1094 = vmul.f32 %v950, %v1037
      %v1095 = vmul.f32 %v955, %v1042
      %v1096 = vmul.f32 %v958, %v1047
      %v1097 = vmul.f32 %v963, %v1052
      %v1098 = vmul.f32 %v966, %v1057
      %v1099 = vmul.f32 %v971, %v1062
      %v1100 = vmul.f32 %v974, %v1067
      %v1101 = vmul.f32 %v979, %v1072
      %v1102 = vmul.f32 %v982, %v1077
      %v1103 = vmul.f32 %v987, %v1082
      %v1104 = vmul.f32 %v990, %v1087
      %1105 = vset.pattern.permute.xlu0 1
      %1106 = vperm.xlu0 %1105, %v390
      %v1107 = vpop.permute.xlu0 %1106
      %1109 = vset.pattern.permute.xlu0 1
      %1110 = vperm.xlu0 %1109, %v391
      %v1111 = vpop.permute.xlu0 %1110
      %1113 = vset.pattern.permute.xlu0 1
      %1114 = vperm.xlu0 %1113, %v392
      %v1115 = vpop.permute.xlu0 %1114
      %1117 = vset.pattern.permute.xlu0 1
      %1118 = vperm.xlu0 %1117, %v393
      %v1119 = vpop.permute.xlu0 %1118
      %1121 = vset.pattern.permute.xlu0 1
      %1122 = vperm.xlu0 %1121, %v394
      %v1123 = vpop.permute.xlu0 %1122
      %1125 = vset.pattern.permute.xlu0 1
      %1126 = vperm.xlu0 %1125, %v395
      %v1127 = vpop.permute.xlu0 %1126
      %1129 = vset.pattern.permute.xlu0 1
      %1130 = vperm.xlu0 %1129, %v396
      %v1131 = vpop.permute.xlu0 %1130
      %1133 = vset.pattern.permute.xlu0 1
      %1134 = vperm.xlu0 %1133, %v397
      %v1135 = vpop.permute.xlu0 %1134
      %1137 = vset.pattern.permute.xlu0 1
      %1138 = vperm.xlu0 %1137, %v398
      %v1139 = vpop.permute.xlu0 %1138
      %1141 = vset.pattern.permute.xlu0 1
      %1142 = vperm.xlu0 %1141, %v399
      %v1143 = vpop.permute.xlu0 %1142
      %1145 = vset.pattern.permute.xlu0 1
      %1146 = vperm.xlu0 %1145, %v400
      %v1147 = vpop.permute.xlu0 %1146
      %1149 = vset.pattern.permute.xlu0 1
      %1150 = vperm.xlu0 %1149, %v401
      %v1151 = vpop.permute.xlu0 %1150
      %1153 = vset.pattern.permute.xlu0 1
      %1154 = vperm.xlu0 %1153, %v402
      %v1155 = vpop.permute.xlu0 %1154
      %1157 = vset.pattern.permute.xlu0 1
      %1158 = vperm.xlu0 %1157, %v403
      %v1159 = vpop.permute.xlu0 %1158
      %1161 = vset.pattern.permute.xlu0 1
      %1162 = vperm.xlu0 %1161, %v404
      %v1163 = vpop.permute.xlu0 %1162
      %1165 = vset.pattern.permute.xlu0 1
      %1166 = vperm.xlu0 %1165, %v405
      %v1167 = vpop.permute.xlu0 %1166
      %v1169 = vlaneseq
      %v1170 = vshrl.u32 %v1169, 7
      %v1171 = vsub.s32 1, %v1170
      %v1172 = vrot.slane %v406, %v1171
      %v1173 = vlaneseq
      %v1174 = vshrl.u32 %v1173, 7
      %v1175 = vsub.s32 1, %v1174
      %v1176 = vrot.slane %v407, %v1175
      %v1177 = vadd.f32 %v1107, %v1172
      %v1178 = vadd.f32 %v1107, %v1176
      %v1179 = vadd.f32 %v1111, %v1172
      %v1180 = vadd.f32 %v1111, %v1176
      %v1181 = vadd.f32 %v1115, %v1172
      %v1182 = vadd.f32 %v1115, %v1176
      %v1183 = vadd.f32 %v1119, %v1172
      %v1184 = vadd.f32 %v1119, %v1176
      %v1185 = vadd.f32 %v1123, %v1172
      %v1186 = vadd.f32 %v1123, %v1176
      %v1187 = vadd.f32 %v1127, %v1172
      %v1188 = vadd.f32 %v1127, %v1176
      %v1189 = vadd.f32 %v1131, %v1172
      %v1190 = vadd.f32 %v1131, %v1176
      %v1191 = vadd.f32 %v1135, %v1172
      %v1192 = vadd.f32 %v1135, %v1176
      %v1193 = vadd.f32 %v1139, %v1172
      %v1194 = vadd.f32 %v1139, %v1176
      %v1195 = vadd.f32 %v1143, %v1172
      %v1196 = vadd.f32 %v1143, %v1176
      %v1197 = vadd.f32 %v1147, %v1172
      %v1198 = vadd.f32 %v1147, %v1176
      %v1199 = vadd.f32 %v1151, %v1172
      %v1200 = vadd.f32 %v1151, %v1176
      %v1201 = vadd.f32 %v1155, %v1172
      %v1202 = vadd.f32 %v1155, %v1176
      %v1203 = vadd.f32 %v1159, %v1172
      %v1204 = vadd.f32 %v1159, %v1176
      %v1205 = vadd.f32 %v1163, %v1172
      %v1206 = vadd.f32 %v1163, %v1176
      %v1207 = vadd.f32 %v1167, %v1172
      %v1208 = vadd.f32 %v1167, %v1176
      %v1209 = vmul.f32 %v1177, 0.2
      %v1210 = vmul.f32 %v1178, 0.2
      %v1211 = vmul.f32 %v1179, 0.2
      %v1212 = vmul.f32 %v1180, 0.2
      %v1213 = vmul.f32 %v1181, 0.2
      %v1214 = vmul.f32 %v1182, 0.2
      %v1215 = vmul.f32 %v1183, 0.2
      %v1216 = vmul.f32 %v1184, 0.2
      %v1217 = vmul.f32 %v1185, 0.2
      %v1218 = vmul.f32 %v1186, 0.2
      %v1219 = vmul.f32 %v1187, 0.2
      %v1220 = vmul.f32 %v1188, 0.2
      %v1221 = vmul.f32 %v1189, 0.2
      %v1222 = vmul.f32 %v1190, 0.2
      %v1223 = vmul.f32 %v1191, 0.2
      %v1224 = vmul.f32 %v1192, 0.2
      %v1225 = vmul.f32 %v1193, 0.2
      %v1226 = vmul.f32 %v1194, 0.2
      %v1227 = vmul.f32 %v1195, 0.2
      %v1228 = vmul.f32 %v1196, 0.2
      %v1229 = vmul.f32 %v1197, 0.2
      %v1230 = vmul.f32 %v1198, 0.2
      %v1231 = vmul.f32 %v1199, 0.2
      %v1232 = vmul.f32 %v1200, 0.2
      %v1233 = vmul.f32 %v1201, 0.2
      %v1234 = vmul.f32 %v1202, 0.2
      %v1235 = vmul.f32 %v1203, 0.2
      %v1236 = vmul.f32 %v1204, 0.2
      %v1237 = vmul.f32 %v1205, 0.2
      %v1238 = vmul.f32 %v1206, 0.2
      %v1239 = vmul.f32 %v1207, 0.2
      %v1240 = vmul.f32 %v1208, 0.2
      %v1241 = vmax.f32 %v1177, %v1209
      %v1242 = vmax.f32 %v1178, %v1210
      %v1243 = vmax.f32 %v1179, %v1211
      %v1244 = vmax.f32 %v1180, %v1212
      %v1245 = vmax.f32 %v1181, %v1213
      %v1246 = vmax.f32 %v1182, %v1214
      %v1247 = vmax.f32 %v1183, %v1215
      %v1248 = vmax.f32 %v1184, %v1216
      %v1249 = vmax.f32 %v1185, %v1217
      %v1250 = vmax.f32 %v1186, %v1218
      %v1251 = vmax.f32 %v1187, %v1219
      %v1252 = vmax.f32 %v1188, %v1220
      %v1253 = vmax.f32 %v1189, %v1221
      %v1254 = vmax.f32 %v1190, %v1222
      %v1255 = vmax.f32 %v1191, %v1223
      %v1256 = vmax.f32 %v1192, %v1224
      %v1257 = vmax.f32 %v1193, %v1225
      %v1258 = vmax.f32 %v1194, %v1226
      %v1259 = vmax.f32 %v1195, %v1227
      %v1260 = vmax.f32 %v1196, %v1228
      %v1261 = vmax.f32 %v1197, %v1229
      %v1262 = vmax.f32 %v1198, %v1230
      %v1263 = vmax.f32 %v1199, %v1231
      %v1264 = vmax.f32 %v1200, %v1232
      %v1265 = vmax.f32 %v1201, %v1233
      %v1266 = vmax.f32 %v1202, %v1234
      %v1267 = vmax.f32 %v1203, %v1235
      %v1268 = vmax.f32 %v1204, %v1236
      %v1269 = vmax.f32 %v1205, %v1237
      %v1270 = vmax.f32 %v1206, %v1238
      %v1271 = vmax.f32 %v1207, %v1239
      %v1272 = vmax.f32 %v1208, %v1240
      %v1273 = vadd.f32 %v1241, %v358
      %v1274 = vadd.f32 %v1242, %v359
      %v1275 = vadd.f32 %v1243, %v360
      %v1276 = vadd.f32 %v1244, %v361
      %v1277 = vadd.f32 %v1245, %v362
      %v1278 = vadd.f32 %v1246, %v363
      %v1279 = vadd.f32 %v1247, %v364
      %v1280 = vadd.f32 %v1248, %v365
      %v1281 = vadd.f32 %v1249, %v366
      %v1282 = vadd.f32 %v1250, %v367
      %v1283 = vadd.f32 %v1251, %v368
      %v1284 = vadd.f32 %v1252, %v369
      %v1285 = vadd.f32 %v1253, %v370
      %v1286 = vadd.f32 %v1254, %v371
      %v1287 = vadd.f32 %v1255, %v372
      %v1288 = vadd.f32 %v1256, %v373
      %v1289 = vadd.f32 %v1257, %v374
      %v1290 = vadd.f32 %v1258, %v375
      %v1291 = vadd.f32 %v1259, %v376
      %v1292 = vadd.f32 %v1260, %v377
      %v1293 = vadd.f32 %v1261, %v378
      %v1294 = vadd.f32 %v1262, %v379
      %v1295 = vadd.f32 %v1263, %v380
      %v1296 = vadd.f32 %v1264, %v381
      %v1297 = vadd.f32 %v1265, %v382
      %v1298 = vadd.f32 %v1266, %v383
      %v1299 = vadd.f32 %v1267, %v384
      %v1300 = vadd.f32 %v1268, %v385
      %v1301 = vadd.f32 %v1269, %v386
      %v1302 = vadd.f32 %v1270, %v387
      %v1303 = vadd.f32 %v1271, %v388
      %v1304 = vadd.f32 %v1272, %v389
      %v1305 = vmax.f32 %v1273, %v1274
      %1306 = vmax.xlane.f32.xlu0 %v1305
      %v1307 = vpop.xlane.xlu0 %1306
      %v1308 = vmax.f32 %v1275, %v1276
      %1309 = vmax.xlane.f32.xlu0 %v1308
      %v1310 = vpop.xlane.xlu0 %1309
      %v1311 = vmax.f32 %v1277, %v1278
      %1312 = vmax.xlane.f32.xlu0 %v1311
      %v1313 = vpop.xlane.xlu0 %1312
      %v1314 = vmax.f32 %v1279, %v1280
      %1315 = vmax.xlane.f32.xlu0 %v1314
      %v1316 = vpop.xlane.xlu0 %1315
      %v1317 = vmax.f32 %v1281, %v1282
      %1318 = vmax.xlane.f32.xlu0 %v1317
      %v1319 = vpop.xlane.xlu0 %1318
      %v1320 = vmax.f32 %v1283, %v1284
      %1321 = vmax.xlane.f32.xlu0 %v1320
      %v1322 = vpop.xlane.xlu0 %1321
      %v1323 = vmax.f32 %v1285, %v1286
      %1324 = vmax.xlane.f32.xlu0 %v1323
      %v1325 = vpop.xlane.xlu0 %1324
      %v1326 = vmax.f32 %v1287, %v1288
      %1327 = vmax.xlane.f32.xlu0 %v1326
      %v1328 = vpop.xlane.xlu0 %1327
      %v1329 = vmax.f32 %v1289, %v1290
      %1330 = vmax.xlane.f32.xlu0 %v1329
      %v1331 = vpop.xlane.xlu0 %1330
      %v1332 = vmax.f32 %v1291, %v1292
      %1333 = vmax.xlane.f32.xlu0 %v1332
      %v1334 = vpop.xlane.xlu0 %1333
      %v1335 = vmax.f32 %v1293, %v1294
      %1336 = vmax.xlane.f32.xlu0 %v1335
      %v1337 = vpop.xlane.xlu0 %1336
      %v1338 = vmax.f32 %v1295, %v1296
      %1339 = vmax.xlane.f32.xlu0 %v1338
      %v1340 = vpop.xlane.xlu0 %1339
      %v1341 = vmax.f32 %v1297, %v1298
      %1342 = vmax.xlane.f32.xlu0 %v1341
      %v1343 = vpop.xlane.xlu0 %1342
      %v1344 = vmax.f32 %v1299, %v1300
      %1345 = vmax.xlane.f32.xlu0 %v1344
      %v1346 = vpop.xlane.xlu0 %1345
      %v1347 = vmax.f32 %v1301, %v1302
      %1348 = vmax.xlane.f32.xlu0 %v1347
      %v1349 = vpop.xlane.xlu0 %1348
      %v1350 = vmax.f32 %v1303, %v1304
      %1351 = vmax.xlane.f32.xlu0 %v1350
      %v1352 = vpop.xlane.xlu0 %1351
      %v1353 = vsub.f32 %v1273, %v1307
      %v1354 = vsub.f32 %v1274, %v1307
      %v1355 = vsub.f32 %v1275, %v1310
      %v1356 = vsub.f32 %v1276, %v1310
      %v1357 = vsub.f32 %v1277, %v1313
      %v1358 = vsub.f32 %v1278, %v1313
      %v1359 = vsub.f32 %v1279, %v1316
      %v1360 = vsub.f32 %v1280, %v1316
      %v1361 = vsub.f32 %v1281, %v1319
      %v1362 = vsub.f32 %v1282, %v1319
      %v1363 = vsub.f32 %v1283, %v1322
      %v1364 = vsub.f32 %v1284, %v1322
      %v1365 = vsub.f32 %v1285, %v1325
      %v1366 = vsub.f32 %v1286, %v1325
      %v1367 = vsub.f32 %v1287, %v1328
      %v1368 = vsub.f32 %v1288, %v1328
      %v1369 = vsub.f32 %v1289, %v1331
      %v1370 = vsub.f32 %v1290, %v1331
      %v1371 = vsub.f32 %v1291, %v1334
      %v1372 = vsub.f32 %v1292, %v1334
      %v1373 = vsub.f32 %v1293, %v1337
      %v1374 = vsub.f32 %v1294, %v1337
      %v1375 = vsub.f32 %v1295, %v1340
      %v1376 = vsub.f32 %v1296, %v1340
      %v1377 = vsub.f32 %v1297, %v1343
      %v1378 = vsub.f32 %v1298, %v1343
      %v1379 = vsub.f32 %v1299, %v1346
      %v1380 = vsub.f32 %v1300, %v1346
      %v1381 = vsub.f32 %v1301, %v1349
      %v1382 = vsub.f32 %v1302, %v1349
      %v1383 = vsub.f32 %v1303, %v1352
      %v1384 = vsub.f32 %v1304, %v1352
      %v1385 = vpack.c.bf16 %v1355, %v1353
      %v1386 = vpack.c.bf16 %v1356, %v1354
      %v1387 = vpack.c.bf16 %v1359, %v1357
      %v1388 = vpack.c.bf16 %v1360, %v1358
      %v1389 = vpack.c.bf16 %v1363, %v1361
      %v1390 = vpack.c.bf16 %v1364, %v1362
      %v1391 = vpack.c.bf16 %v1367, %v1365
      %v1392 = vpack.c.bf16 %v1368, %v1366
      %v1393 = vpack.c.bf16 %v1371, %v1369
      %v1394 = vpack.c.bf16 %v1372, %v1370
      %v1395 = vpack.c.bf16 %v1375, %v1373
      %v1396 = vpack.c.bf16 %v1376, %v1374
      %v1397 = vpack.c.bf16 %v1379, %v1377
      %v1398 = vpack.c.bf16 %v1380, %v1378
      %v1399 = vpack.c.bf16 %v1383, %v1381
      %v1400 = vpack.c.bf16 %v1384, %v1382
      %v1402 = vmul.bf16 %v1385, 1069105081
      %v1403 = vpow.bf16.pop %v1402
      %v1405 = vmul.bf16 %v1386, 1069105081
      %v1406 = vpow.bf16.pop %v1405
      %v1408 = vmul.bf16 %v1387, 1069105081
      %v1409 = vpow.bf16.pop %v1408
      %v1411 = vmul.bf16 %v1388, 1069105081
      %v1412 = vpow.bf16.pop %v1411
      %v1414 = vmul.bf16 %v1389, 1069105081
      %v1415 = vpow.bf16.pop %v1414
      %v1417 = vmul.bf16 %v1390, 1069105081
      %v1418 = vpow.bf16.pop %v1417
      %v1420 = vmul.bf16 %v1391, 1069105081
      %v1421 = vpow.bf16.pop %v1420
      %v1423 = vmul.bf16 %v1392, 1069105081
      %v1424 = vpow.bf16.pop %v1423
      %v1426 = vmul.bf16 %v1393, 1069105081
      %v1427 = vpow.bf16.pop %v1426
      %v1429 = vmul.bf16 %v1394, 1069105081
      %v1430 = vpow.bf16.pop %v1429
      %v1432 = vmul.bf16 %v1395, 1069105081
      %v1433 = vpow.bf16.pop %v1432
      %v1435 = vmul.bf16 %v1396, 1069105081
      %v1436 = vpow.bf16.pop %v1435
      %v1438 = vmul.bf16 %v1397, 1069105081
      %v1439 = vpow.bf16.pop %v1438
      %v1441 = vmul.bf16 %v1398, 1069105081
      %v1442 = vpow.bf16.pop %v1441
      %v1444 = vmul.bf16 %v1399, 1069105081
      %v1445 = vpow.bf16.pop %v1444
      %v1447 = vmul.bf16 %v1400, 1069105081
      %v1448 = vpow.bf16.pop %v1447
      %s1449 = scalar_lea.vmem %s3, 128
      %v1450 = vld [vmem:[%s1449] sm:$0xf]
      %v1451 = vld [vmem:[%s1449 + $0x4] sm:$0xf]
      %v1452 = vld [vmem:[%s1449 + $0x8] sm:$0xf]
      %v1453 = vld [vmem:[%s1449 + $0xc] sm:$0xf]
      %v1454 = vld [vmem:[%s1449 + $0x10] sm:$0xf]
      %v1455 = vld [vmem:[%s1449 + $0x14] sm:$0xf]
      %v1456 = vld [vmem:[%s1449 + $0x18] sm:$0xf]
      %v1457 = vld [vmem:[%s1449 + $0x1c] sm:$0xf]
      %v1458 = vld [vmem:[%s1449 + $0x20] sm:$0xf]
      %v1459 = vld [vmem:[%s1449 + $0x24] sm:$0xf]
      %v1460 = vld [vmem:[%s1449 + $0x28] sm:$0xf]
      %v1461 = vld [vmem:[%s1449 + $0x2c] sm:$0xf]
      %v1462 = vld [vmem:[%s1449 + $0x30] sm:$0xf]
      %v1463 = vld [vmem:[%s1449 + $0x34] sm:$0xf]
      %v1464 = vld [vmem:[%s1449 + $0x38] sm:$0xf]
      %v1465 = vld [vmem:[%s1449 + $0x3c] sm:$0xf]
      %v1466 = vld [vmem:[%s1449 + $0x40] sm:$0xf]
      %v1467 = vld [vmem:[%s1449 + $0x44] sm:$0xf]
      %v1468 = vld [vmem:[%s1449 + $0x48] sm:$0xf]
      %v1469 = vld [vmem:[%s1449 + $0x4c] sm:$0xf]
      %v1470 = vld [vmem:[%s1449 + $0x50] sm:$0xf]
      %v1471 = vld [vmem:[%s1449 + $0x54] sm:$0xf]
      %v1472 = vld [vmem:[%s1449 + $0x58] sm:$0xf]
      %v1473 = vld [vmem:[%s1449 + $0x5c] sm:$0xf]
      %v1474 = vld [vmem:[%s1449 + $0x60] sm:$0xf]
      %v1475 = vld [vmem:[%s1449 + $0x64] sm:$0xf]
      %v1476 = vld [vmem:[%s1449 + $0x68] sm:$0xf]
      %v1477 = vld [vmem:[%s1449 + $0x6c] sm:$0xf]
      %v1478 = vld [vmem:[%s1449 + $0x70] sm:$0xf]
      %v1479 = vld [vmem:[%s1449 + $0x74] sm:$0xf]
      %v1480 = vld [vmem:[%s1449 + $0x78] sm:$0xf]
      %v1481 = vld [vmem:[%s1449 + $0x7c] sm:$0xf]
      %v1514 = vunpack.c.l.b16 %v1450
      %v1515 = vunpack.c.l.b16 %v1451
      %v1516 = vunpack.c.l.b16 %v1452
      %v1517 = vunpack.c.l.b16 %v1453
      %v1518 = vunpack.c.l.b16 %v1454
      %v1519 = vunpack.c.l.b16 %v1455
      %v1520 = vunpack.c.l.b16 %v1456
      %v1521 = vunpack.c.l.b16 %v1457
      %v1522 = vunpack.c.l.b16 %v1458
      %v1523 = vunpack.c.l.b16 %v1459
      %v1524 = vunpack.c.l.b16 %v1460
      %v1525 = vunpack.c.l.b16 %v1461
      %v1526 = vunpack.c.l.b16 %v1462
      %v1527 = vunpack.c.l.b16 %v1463
      %v1528 = vunpack.c.l.b16 %v1464
      %v1529 = vunpack.c.l.b16 %v1465
      %v1530 = vunpack.c.l.b16 %v1466
      %v1531 = vunpack.c.l.b16 %v1467
      %v1532 = vunpack.c.l.b16 %v1468
      %v1533 = vunpack.c.l.b16 %v1469
      %v1534 = vunpack.c.l.b16 %v1470
      %v1535 = vunpack.c.l.b16 %v1471
      %v1536 = vunpack.c.l.b16 %v1472
      %v1537 = vunpack.c.l.b16 %v1473
      %v1538 = vunpack.c.l.b16 %v1474
      %v1539 = vunpack.c.l.b16 %v1475
      %v1540 = vunpack.c.l.b16 %v1476
      %v1541 = vunpack.c.l.b16 %v1477
      %v1542 = vunpack.c.l.b16 %v1478
      %v1543 = vunpack.c.l.b16 %v1479
      %v1544 = vunpack.c.l.b16 %v1480
      %v1545 = vunpack.c.l.b16 %v1481
      %v1546 = vpack.c.b16 %v1515, %v1514
      %v1547 = vpack.c.b16 %v1517, %v1516
      %v1548 = vpack.c.b16 %v1519, %v1518
      %v1549 = vpack.c.b16 %v1521, %v1520
      %v1550 = vpack.c.b16 %v1523, %v1522
      %v1551 = vpack.c.b16 %v1525, %v1524
      %v1552 = vpack.c.b16 %v1527, %v1526
      %v1553 = vpack.c.b16 %v1529, %v1528
      %v1554 = vpack.c.b16 %v1531, %v1530
      %v1555 = vpack.c.b16 %v1533, %v1532
      %v1556 = vpack.c.b16 %v1535, %v1534
      %v1557 = vpack.c.b16 %v1537, %v1536
      %v1558 = vpack.c.b16 %v1539, %v1538
      %v1559 = vpack.c.b16 %v1541, %v1540
      %v1560 = vpack.c.b16 %v1543, %v1542
      %v1561 = vpack.c.b16 %v1545, %v1544
      %1578 = vmatprep.subr.bf16.mxu0 0
      %1579 = vmatpush1.bf16.msra.mxu0 %v1546
      %1580 = vmatprep.subr.bf16.mxu0 0
      %1581 = vmatpush1.bf16.msra.mxu0 %v1547
      %1582 = vmatprep.subr.bf16.mxu0 0
      %1583 = vmatpush1.bf16.msra.mxu0 %v1548
      %1584 = vmatprep.subr.bf16.mxu0 0
      %1585 = vmatpush1.bf16.msra.mxu0 %v1549
      %1586 = vmatprep.subr.bf16.mxu0 0
      %1587 = vmatpush1.bf16.msra.mxu0 %v1550
      %1588 = vmatprep.subr.bf16.mxu0 0
      %1589 = vmatpush1.bf16.msra.mxu0 %v1551
      %1590 = vmatprep.subr.bf16.mxu0 0
      %1591 = vmatpush1.bf16.msra.mxu0 %v1552
      %1592 = vmatprep.subr.bf16.mxu0 0
      %1593 = vmatpush1.bf16.msra.mxu0 %v1553
      %1594 = vmatprep.subr.bf16.mxu0 0
      %1595 = vmatpush1.bf16.msra.mxu0 %v1554
      %1596 = vmatprep.subr.bf16.mxu0 0
      %1597 = vmatpush1.bf16.msra.mxu0 %v1555
      %1598 = vmatprep.subr.bf16.mxu0 0
      %1599 = vmatpush1.bf16.msra.mxu0 %v1556
      %1600 = vmatprep.subr.bf16.mxu0 0
      %1601 = vmatpush1.bf16.msra.mxu0 %v1557
      %1602 = vmatprep.subr.bf16.mxu0 0
      %1603 = vmatpush1.bf16.msra.mxu0 %v1558
      %1604 = vmatprep.subr.bf16.mxu0 0
      %1605 = vmatpush1.bf16.msra.mxu0 %v1559
      %1606 = vmatprep.subr.bf16.mxu0 0
      %1607 = vmatpush1.bf16.msra.mxu0 %v1560
      %1608 = vmatprep.subr.bf16.mxu0 0
      %1609 = vmatpush1.bf16.msra.mxu0 %v1561
      %1610 = vmatprep.mubr.bf16.mxu0 %v1406
      %1611 = vmatmul.mubr.bf16.gmra.mrb[0].mxu0 %v1403
      %v1612 = vpop.f32.mrb[0].mxu0
      %v1613 = vadd.f32 0.0, %v1612
      %v1614 = vpop.f32.mrb[0].mxu0
      %v1615 = vpop.f32.mrb[0].mxu0
      %v1616 = vadd.f32 0.0, %v1615
      %v1617 = vpop.f32.mrb[0].mxu0
      %1618 = vmatprep.mubr.bf16.mxu0 %v1412
      %1619 = vmatmul.mubr.bf16.gmra.mrb[0].mxu0 %v1409
      %v1620 = vpop.f32.mrb[0].mxu0
      %v1621 = vadd.f32 0.0, %v1620
      %v1622 = vpop.f32.mrb[0].mxu0
      %v1623 = vpop.f32.mrb[0].mxu0
      %v1624 = vadd.f32 0.0, %v1623
      %v1625 = vpop.f32.mrb[0].mxu0
      %1626 = vmatprep.mubr.bf16.mxu0 %v1418
      %1627 = vmatmul.mubr.bf16.gmra.mrb[0].mxu0 %v1415
      %v1628 = vpop.f32.mrb[0].mxu0
      %v1629 = vadd.f32 0.0, %v1628
      %v1630 = vpop.f32.mrb[0].mxu0
      %v1631 = vpop.f32.mrb[0].mxu0
      %v1632 = vadd.f32 0.0, %v1631
      %v1633 = vpop.f32.mrb[0].mxu0
      %1634 = vmatprep.mubr.bf16.mxu0 %v1424
      %1635 = vmatmul.mubr.bf16.gmra.mrb[0].mxu0 %v1421
      %v1636 = vpop.f32.mrb[0].mxu0
      %v1637 = vadd.f32 0.0, %v1636
      %v1638 = vpop.f32.mrb[0].mxu0
      %v1639 = vpop.f32.mrb[0].mxu0
      %v1640 = vadd.f32 0.0, %v1639
      %v1641 = vpop.f32.mrb[0].mxu0
      %1642 = vmatprep.mubr.bf16.mxu0 %v1430
      %1643 = vmatmul.mubr.bf16.gmra.mrb[0].mxu0 %v1427
      %v1644 = vpop.f32.mrb[0].mxu0
      %v1645 = vadd.f32 0.0, %v1644
      %v1646 = vpop.f32.mrb[0].mxu0
      %v1647 = vpop.f32.mrb[0].mxu0
      %v1648 = vadd.f32 0.0, %v1647
      %v1649 = vpop.f32.mrb[0].mxu0
      %1650 = vmatprep.mubr.bf16.mxu0 %v1436
      %1651 = vmatmul.mubr.bf16.gmra.mrb[0].mxu0 %v1433
      %v1652 = vpop.f32.mrb[0].mxu0
      %v1653 = vadd.f32 0.0, %v1652
      %v1654 = vpop.f32.mrb[0].mxu0
      %v1655 = vpop.f32.mrb[0].mxu0
      %v1656 = vadd.f32 0.0, %v1655
      %v1657 = vpop.f32.mrb[0].mxu0
      %1658 = vmatprep.mubr.bf16.mxu0 %v1442
      %1659 = vmatmul.mubr.bf16.gmra.mrb[0].mxu0 %v1439
      %v1660 = vpop.f32.mrb[0].mxu0
      %v1661 = vadd.f32 0.0, %v1660
      %v1662 = vpop.f32.mrb[0].mxu0
      %v1663 = vpop.f32.mrb[0].mxu0
      %v1664 = vadd.f32 0.0, %v1663
      %v1665 = vpop.f32.mrb[0].mxu0
      %1666 = vmatprep.mubr.bf16.mxu0 %v1448
      %1667 = vmatmul.mubr.bf16.gmra.mrb[0].mxu0 %v1445
      %v1668 = vpop.f32.mrb[0].mxu0
      %v1669 = vadd.f32 0.0, %v1668
      %v1670 = vpop.f32.mrb[0].mxu0
      %v1671 = vpop.f32.mrb[0].mxu0
      %v1672 = vadd.f32 0.0, %v1671
      %v1673 = vpop.f32.mrb[0].mxu0
      %1674 = vdwg.mxu0
      %v1675 = vrcp.pop %v1613
      %v1676 = vrcp.pop %v1616
      %v1677 = vrcp.pop %v1621
      %v1678 = vrcp.pop %v1624
      %v1679 = vrcp.pop %v1629
      %v1680 = vrcp.pop %v1632
      %v1681 = vrcp.pop %v1637
      %v1682 = vrcp.pop %v1640
      %v1683 = vrcp.pop %v1645
      %v1684 = vrcp.pop %v1648
      %v1685 = vrcp.pop %v1653
      %v1686 = vrcp.pop %v1656
      %v1687 = vrcp.pop %v1661
      %v1688 = vrcp.pop %v1664
      %v1689 = vrcp.pop %v1669
      %v1690 = vrcp.pop %v1672
      %1692 = vset.pattern.permute.xlu0 16
      %1693 = vperm.xlu0 %1692, %v1675
      %v1694 = vpop.permute.xlu0 %1693
      %1697 = vset.pattern.permute.xlu0 16
      %1698 = vperm.xlu0 %1697, %v1676
      %v1699 = vpop.permute.xlu0 %1698
      %1702 = vset.pattern.permute.xlu0 16
      %1703 = vperm.xlu0 %1702, %v1677
      %v1704 = vpop.permute.xlu0 %1703
      %1707 = vset.pattern.permute.xlu0 16
      %1708 = vperm.xlu0 %1707, %v1678
      %v1709 = vpop.permute.xlu0 %1708
      %1712 = vset.pattern.permute.xlu0 16
      %1713 = vperm.xlu0 %1712, %v1679
      %v1714 = vpop.permute.xlu0 %1713
      %1717 = vset.pattern.permute.xlu0 16
      %1718 = vperm.xlu0 %1717, %v1680
      %v1719 = vpop.permute.xlu0 %1718
      %1722 = vset.pattern.permute.xlu0 16
      %1723 = vperm.xlu0 %1722, %v1681
      %v1724 = vpop.permute.xlu0 %1723
      %1727 = vset.pattern.permute.xlu0 16
      %1728 = vperm.xlu0 %1727, %v1682
      %v1729 = vpop.permute.xlu0 %1728
      %1732 = vset.pattern.permute.xlu0 16
      %1733 = vperm.xlu0 %1732, %v1683
      %v1734 = vpop.permute.xlu0 %1733
      %1737 = vset.pattern.permute.xlu0 16
      %1738 = vperm.xlu0 %1737, %v1684
      %v1739 = vpop.permute.xlu0 %1738
      %1742 = vset.pattern.permute.xlu0 16
      %1743 = vperm.xlu0 %1742, %v1685
      %v1744 = vpop.permute.xlu0 %1743
      %1747 = vset.pattern.permute.xlu0 16
      %1748 = vperm.xlu0 %1747, %v1686
      %v1749 = vpop.permute.xlu0 %1748
      %1752 = vset.pattern.permute.xlu0 16
      %1753 = vperm.xlu0 %1752, %v1687
      %v1754 = vpop.permute.xlu0 %1753
      %1757 = vset.pattern.permute.xlu0 16
      %1758 = vperm.xlu0 %1757, %v1688
      %v1759 = vpop.permute.xlu0 %1758
      %1762 = vset.pattern.permute.xlu0 16
      %1763 = vperm.xlu0 %1762, %v1689
      %v1764 = vpop.permute.xlu0 %1763
      %1767 = vset.pattern.permute.xlu0 16
      %1768 = vperm.xlu0 %1767, %v1690
      %v1769 = vpop.permute.xlu0 %1768
      %v1771 = vmul.f32 %v1613, %v1694
      %v1772 = vmul.f32 %v1616, %v1699
      %v1773 = vmul.f32 %v1621, %v1704
      %v1774 = vmul.f32 %v1624, %v1709
      %v1775 = vmul.f32 %v1629, %v1714
      %v1776 = vmul.f32 %v1632, %v1719
      %v1777 = vmul.f32 %v1637, %v1724
      %v1778 = vmul.f32 %v1640, %v1729
      %v1779 = vmul.f32 %v1645, %v1734
      %v1780 = vmul.f32 %v1648, %v1739
      %v1781 = vmul.f32 %v1653, %v1744
      %v1782 = vmul.f32 %v1656, %v1749
      %v1783 = vmul.f32 %v1661, %v1754
      %v1784 = vmul.f32 %v1664, %v1759
      %v1785 = vmul.f32 %v1669, %v1764
      %v1786 = vmul.f32 %v1672, %v1769
      %1787 = vset.pattern.permute.xlu0 2
      %1788 = vperm.xlu0 %1787, %v390
      %v1789 = vpop.permute.xlu0 %1788
      %1791 = vset.pattern.permute.xlu0 2
      %1792 = vperm.xlu0 %1791, %v391
      %v1793 = vpop.permute.xlu0 %1792
      %1795 = vset.pattern.permute.xlu0 2
      %1796 = vperm.xlu0 %1795, %v392
      %v1797 = vpop.permute.xlu0 %1796
      %1799 = vset.pattern.permute.xlu0 2
      %1800 = vperm.xlu0 %1799, %v393
      %v1801 = vpop.permute.xlu0 %1800
      %1803 = vset.pattern.permute.xlu0 2
      %1804 = vperm.xlu0 %1803, %v394
      %v1805 = vpop.permute.xlu0 %1804
      %1807 = vset.pattern.permute.xlu0 2
      %1808 = vperm.xlu0 %1807, %v395
      %v1809 = vpop.permute.xlu0 %1808
      %1811 = vset.pattern.permute.xlu0 2
      %1812 = vperm.xlu0 %1811, %v396
      %v1813 = vpop.permute.xlu0 %1812
      %1815 = vset.pattern.permute.xlu0 2
      %1816 = vperm.xlu0 %1815, %v397
      %v1817 = vpop.permute.xlu0 %1816
      %1819 = vset.pattern.permute.xlu0 2
      %1820 = vperm.xlu0 %1819, %v398
      %v1821 = vpop.permute.xlu0 %1820
      %1823 = vset.pattern.permute.xlu0 2
      %1824 = vperm.xlu0 %1823, %v399
      %v1825 = vpop.permute.xlu0 %1824
      %1827 = vset.pattern.permute.xlu0 2
      %1828 = vperm.xlu0 %1827, %v400
      %v1829 = vpop.permute.xlu0 %1828
      %1831 = vset.pattern.permute.xlu0 2
      %1832 = vperm.xlu0 %1831, %v401
      %v1833 = vpop.permute.xlu0 %1832
      %1835 = vset.pattern.permute.xlu0 2
      %1836 = vperm.xlu0 %1835, %v402
      %v1837 = vpop.permute.xlu0 %1836
      %1839 = vset.pattern.permute.xlu0 2
      %1840 = vperm.xlu0 %1839, %v403
      %v1841 = vpop.permute.xlu0 %1840
      %1843 = vset.pattern.permute.xlu0 2
      %1844 = vperm.xlu0 %1843, %v404
      %v1845 = vpop.permute.xlu0 %1844
      %1847 = vset.pattern.permute.xlu0 2
      %1848 = vperm.xlu0 %1847, %v405
      %v1849 = vpop.permute.xlu0 %1848
      %v1851 = vlaneseq
      %v1852 = vshrl.u32 %v1851, 7
      %v1853 = vsub.s32 2, %v1852
      %v1854 = vrot.slane %v406, %v1853
      %v1855 = vlaneseq
      %v1856 = vshrl.u32 %v1855, 7
      %v1857 = vsub.s32 2, %v1856
      %v1858 = vrot.slane %v407, %v1857
      %v1859 = vadd.f32 %v1789, %v1854
      %v1860 = vadd.f32 %v1789, %v1858
      %v1861 = vadd.f32 %v1793, %v1854
      %v1862 = vadd.f32 %v1793, %v1858
      %v1863 = vadd.f32 %v1797, %v1854
      %v1864 = vadd.f32 %v1797, %v1858
      %v1865 = vadd.f32 %v1801, %v1854
      %v1866 = vadd.f32 %v1801, %v1858
      %v1867 = vadd.f32 %v1805, %v1854
      %v1868 = vadd.f32 %v1805, %v1858
      %v1869 = vadd.f32 %v1809, %v1854
      %v1870 = vadd.f32 %v1809, %v1858
      %v1871 = vadd.f32 %v1813, %v1854
      %v1872 = vadd.f32 %v1813, %v1858
      %v1873 = vadd.f32 %v1817, %v1854
      %v1874 = vadd.f32 %v1817, %v1858
      %v1875 = vadd.f32 %v1821, %v1854
      %v1876 = vadd.f32 %v1821, %v1858
      %v1877 = vadd.f32 %v1825, %v1854
      %v1878 = vadd.f32 %v1825, %v1858
      %v1879 = vadd.f32 %v1829, %v1854
      %v1880 = vadd.f32 %v1829, %v1858
      %v1881 = vadd.f32 %v1833, %v1854
      %v1882 = vadd.f32 %v1833, %v1858
      %v1883 = vadd.f32 %v1837, %v1854
      %v1884 = vadd.f32 %v1837, %v1858
      %v1885 = vadd.f32 %v1841, %v1854
      %v1886 = vadd.f32 %v1841, %v1858
      %v1887 = vadd.f32 %v1845, %v1854
      %v1888 = vadd.f32 %v1845, %v1858
      %v1889 = vadd.f32 %v1849, %v1854
      %v1890 = vadd.f32 %v1849, %v1858
      %v1891 = vmul.f32 %v1859, 0.2
      %v1892 = vmul.f32 %v1860, 0.2
      %v1893 = vmul.f32 %v1861, 0.2
      %v1894 = vmul.f32 %v1862, 0.2
      %v1895 = vmul.f32 %v1863, 0.2
      %v1896 = vmul.f32 %v1864, 0.2
      %v1897 = vmul.f32 %v1865, 0.2
      %v1898 = vmul.f32 %v1866, 0.2
      %v1899 = vmul.f32 %v1867, 0.2
      %v1900 = vmul.f32 %v1868, 0.2
      %v1901 = vmul.f32 %v1869, 0.2
      %v1902 = vmul.f32 %v1870, 0.2
      %v1903 = vmul.f32 %v1871, 0.2
      %v1904 = vmul.f32 %v1872, 0.2
      %v1905 = vmul.f32 %v1873, 0.2
      %v1906 = vmul.f32 %v1874, 0.2
      %v1907 = vmul.f32 %v1875, 0.2
      %v1908 = vmul.f32 %v1876, 0.2
      %v1909 = vmul.f32 %v1877, 0.2
      %v1910 = vmul.f32 %v1878, 0.2
      %v1911 = vmul.f32 %v1879, 0.2
      %v1912 = vmul.f32 %v1880, 0.2
      %v1913 = vmul.f32 %v1881, 0.2
      %v1914 = vmul.f32 %v1882, 0.2
      %v1915 = vmul.f32 %v1883, 0.2
      %v1916 = vmul.f32 %v1884, 0.2
      %v1917 = vmul.f32 %v1885, 0.2
      %v1918 = vmul.f32 %v1886, 0.2
      %v1919 = vmul.f32 %v1887, 0.2
      %v1920 = vmul.f32 %v1888, 0.2
      %v1921 = vmul.f32 %v1889, 0.2
      %v1922 = vmul.f32 %v1890, 0.2
      %v1923 = vmax.f32 %v1859, %v1891
      %v1924 = vmax.f32 %v1860, %v1892
      %v1925 = vmax.f32 %v1861, %v1893
      %v1926 = vmax.f32 %v1862, %v1894
      %v1927 = vmax.f32 %v1863, %v1895
      %v1928 = vmax.f32 %v1864, %v1896
      %v1929 = vmax.f32 %v1865, %v1897
      %v1930 = vmax.f32 %v1866, %v1898
      %v1931 = vmax.f32 %v1867, %v1899
      %v1932 = vmax.f32 %v1868, %v1900
      %v1933 = vmax.f32 %v1869, %v1901
      %v1934 = vmax.f32 %v1870, %v1902
      %v1935 = vmax.f32 %v1871, %v1903
      %v1936 = vmax.f32 %v1872, %v1904
      %v1937 = vmax.f32 %v1873, %v1905
      %v1938 = vmax.f32 %v1874, %v1906
      %v1939 = vmax.f32 %v1875, %v1907
      %v1940 = vmax.f32 %v1876, %v1908
      %v1941 = vmax.f32 %v1877, %v1909
      %v1942 = vmax.f32 %v1878, %v1910
      %v1943 = vmax.f32 %v1879, %v1911
      %v1944 = vmax.f32 %v1880, %v1912
      %v1945 = vmax.f32 %v1881, %v1913
      %v1946 = vmax.f32 %v1882, %v1914
      %v1947 = vmax.f32 %v1883, %v1915
      %v1948 = vmax.f32 %v1884, %v1916
      %v1949 = vmax.f32 %v1885, %v1917
      %v1950 = vmax.f32 %v1886, %v1918
      %v1951 = vmax.f32 %v1887, %v1919
      %v1952 = vmax.f32 %v1888, %v1920
      %v1953 = vmax.f32 %v1889, %v1921
      %v1954 = vmax.f32 %v1890, %v1922
      %v1955 = vadd.f32 %v1923, %v358
      %v1956 = vadd.f32 %v1924, %v359
      %v1957 = vadd.f32 %v1925, %v360
      %v1958 = vadd.f32 %v1926, %v361
      %v1959 = vadd.f32 %v1927, %v362
      %v1960 = vadd.f32 %v1928, %v363
      %v1961 = vadd.f32 %v1929, %v364
      %v1962 = vadd.f32 %v1930, %v365
      %v1963 = vadd.f32 %v1931, %v366
      %v1964 = vadd.f32 %v1932, %v367
      %v1965 = vadd.f32 %v1933, %v368
      %v1966 = vadd.f32 %v1934, %v369
      %v1967 = vadd.f32 %v1935, %v370
      %v1968 = vadd.f32 %v1936, %v371
      %v1969 = vadd.f32 %v1937, %v372
      %v1970 = vadd.f32 %v1938, %v373
      %v1971 = vadd.f32 %v1939, %v374
      %v1972 = vadd.f32 %v1940, %v375
      %v1973 = vadd.f32 %v1941, %v376
      %v1974 = vadd.f32 %v1942, %v377
      %v1975 = vadd.f32 %v1943, %v378
      %v1976 = vadd.f32 %v1944, %v379
      %v1977 = vadd.f32 %v1945, %v380
      %v1978 = vadd.f32 %v1946, %v381
      %v1979 = vadd.f32 %v1947, %v382
      %v1980 = vadd.f32 %v1948, %v383
      %v1981 = vadd.f32 %v1949, %v384
      %v1982 = vadd.f32 %v1950, %v385
      %v1983 = vadd.f32 %v1951, %v386
      %v1984 = vadd.f32 %v1952, %v387
      %v1985 = vadd.f32 %v1953, %v388
      %v1986 = vadd.f32 %v1954, %v389
      %v1987 = vmax.f32 %v1955, %v1956
      %1988 = vmax.xlane.f32.xlu0 %v1987
      %v1989 = vpop.xlane.xlu0 %1988
      %v1990 = vmax.f32 %v1957, %v1958
      %1991 = vmax.xlane.f32.xlu0 %v1990
      %v1992 = vpop.xlane.xlu0 %1991
      %v1993 = vmax.f32 %v1959, %v1960
      %1994 = vmax.xlane.f32.xlu0 %v1993
      %v1995 = vpop.xlane.xlu0 %1994
      %v1996 = vmax.f32 %v1961, %v1962
      %1997 = vmax.xlane.f32.xlu0 %v1996
      %v1998 = vpop.xlane.xlu0 %1997
      %v1999 = vmax.f32 %v1963, %v1964
      %2000 = vmax.xlane.f32.xlu0 %v1999
      %v2001 = vpop.xlane.xlu0 %2000
      %v2002 = vmax.f32 %v1965, %v1966
      %2003 = vmax.xlane.f32.xlu0 %v2002
      %v2004 = vpop.xlane.xlu0 %2003
      %v2005 = vmax.f32 %v1967, %v1968
      %2006 = vmax.xlane.f32.xlu0 %v2005
      %v2007 = vpop.xlane.xlu0 %2006
      %v2008 = vmax.f32 %v1969, %v1970
      %2009 = vmax.xlane.f32.xlu0 %v2008
      %v2010 = vpop.xlane.xlu0 %2009
      %v2011 = vmax.f32 %v1971, %v1972
      %2012 = vmax.xlane.f32.xlu0 %v2011
      %v2013 = vpop.xlane.xlu0 %2012
      %v2014 = vmax.f32 %v1973, %v1974
      %2015 = vmax.xlane.f32.xlu0 %v2014
      %v2016 = vpop.xlane.xlu0 %2015
      %v2017 = vmax.f32 %v1975, %v1976
      %2018 = vmax.xlane.f32.xlu0 %v2017
      %v2019 = vpop.xlane.xlu0 %2018
      %v2020 = vmax.f32 %v1977, %v1978
      %2021 = vmax.xlane.f32.xlu0 %v2020
      %v2022 = vpop.xlane.xlu0 %2021
      %v2023 = vmax.f32 %v1979, %v1980
      %2024 = vmax.xlane.f32.xlu0 %v2023
      %v2025 = vpop.xlane.xlu0 %2024
      %v2026 = vmax.f32 %v1981, %v1982
      %2027 = vmax.xlane.f32.xlu0 %v2026
      %v2028 = vpop.xlane.xlu0 %2027
      %v2029 = vmax.f32 %v1983, %v1984
      %2030 = vmax.xlane.f32.xlu0 %v2029
      %v2031 = vpop.xlane.xlu0 %2030
      %v2032 = vmax.f32 %v1985, %v1986
      %2033 = vmax.xlane.f32.xlu0 %v2032
      %v2034 = vpop.xlane.xlu0 %2033
      %v2035 = vsub.f32 %v1955, %v1989
      %v2036 = vsub.f32 %v1956, %v1989
      %v2037 = vsub.f32 %v1957, %v1992
      %v2038 = vsub.f32 %v1958, %v1992
      %v2039 = vsub.f32 %v1959, %v1995
      %v2040 = vsub.f32 %v1960, %v1995
      %v2041 = vsub.f32 %v1961, %v1998
      %v2042 = vsub.f32 %v1962, %v1998
      %v2043 = vsub.f32 %v1963, %v2001
      %v2044 = vsub.f32 %v1964, %v2001
      %v2045 = vsub.f32 %v1965, %v2004
      %v2046 = vsub.f32 %v1966, %v2004
      %v2047 = vsub.f32 %v1967, %v2007
      %v2048 = vsub.f32 %v1968, %v2007
      %v2049 = vsub.f32 %v1969, %v2010
      %v2050 = vsub.f32 %v1970, %v2010
      %v2051 = vsub.f32 %v1971, %v2013
      %v2052 = vsub.f32 %v1972, %v2013
      %v2053 = vsub.f32 %v1973, %v2016
      %v2054 = vsub.f32 %v1974, %v2016
      %v2055 = vsub.f32 %v1975, %v2019
      %v2056 = vsub.f32 %v1976, %v2019
      %v2057 = vsub.f32 %v1977, %v2022
      %v2058 = vsub.f32 %v1978, %v2022
      %v2059 = vsub.f32 %v1979, %v2025
      %v2060 = vsub.f32 %v1980, %v2025
      %v2061 = vsub.f32 %v1981, %v2028
      %v2062 = vsub.f32 %v1982, %v2028
      %v2063 = vsub.f32 %v1983, %v2031
      %v2064 = vsub.f32 %v1984, %v2031
      %v2065 = vsub.f32 %v1985, %v2034
      %v2066 = vsub.f32 %v1986, %v2034
      %v2067 = vpack.c.bf16 %v2037, %v2035
      %v2068 = vpack.c.bf16 %v2038, %v2036
      %v2069 = vpack.c.bf16 %v2041, %v2039
      %v2070 = vpack.c.bf16 %v2042, %v2040
      %v2071 = vpack.c.bf16 %v2045, %v2043
      %v2072 = vpack.c.bf16 %v2046, %v2044
      %v2073 = vpack.c.bf16 %v2049, %v2047
      %v2074 = vpack.c.bf16 %v2050, %v2048
      %v2075 = vpack.c.bf16 %v2053, %v2051
      %v2076 = vpack.c.bf16 %v2054, %v2052
      %v2077 = vpack.c.bf16 %v2057, %v2055
      %v2078 = vpack.c.bf16 %v2058, %v2056
      %v2079 = vpack.c.bf16 %v2061, %v2059
      %v2080 = vpack.c.bf16 %v2062, %v2060
      %v2081 = vpack.c.bf16 %v2065, %v2063
      %v2082 = vpack.c.bf16 %v2066, %v2064
      %v2084 = vmul.bf16 %v2067, 1069105081
      %v2085 = vpow.bf16.pop %v2084
      %v2087 = vmul.bf16 %v2068, 1069105081
      %v2088 = vpow.bf16.pop %v2087
      %v2090 = vmul.bf16 %v2069, 1069105081
      %v2091 = vpow.bf16.pop %v2090
      %v2093 = vmul.bf16 %v2070, 1069105081
      %v2094 = vpow.bf16.pop %v2093
      %v2096 = vmul.bf16 %v2071, 1069105081
      %v2097 = vpow.bf16.pop %v2096
      %v2099 = vmul.bf16 %v2072, 1069105081
      %v2100 = vpow.bf16.pop %v2099
      %v2102 = vmul.bf16 %v2073, 1069105081
      %v2103 = vpow.bf16.pop %v2102
      %v2105 = vmul.bf16 %v2074, 1069105081
      %v2106 = vpow.bf16.pop %v2105
      %v2108 = vmul.bf16 %v2075, 1069105081
      %v2109 = vpow.bf16.pop %v2108
      %v2111 = vmul.bf16 %v2076, 1069105081
      %v2112 = vpow.bf16.pop %v2111
      %v2114 = vmul.bf16 %v2077, 1069105081
      %v2115 = vpow.bf16.pop %v2114
      %v2117 = vmul.bf16 %v2078, 1069105081
      %v2118 = vpow.bf16.pop %v2117
      %v2120 = vmul.bf16 %v2079, 1069105081
      %v2121 = vpow.bf16.pop %v2120
      %v2123 = vmul.bf16 %v2080, 1069105081
      %v2124 = vpow.bf16.pop %v2123
      %v2126 = vmul.bf16 %v2081, 1069105081
      %v2127 = vpow.bf16.pop %v2126
      %v2129 = vmul.bf16 %v2082, 1069105081
      %v2130 = vpow.bf16.pop %v2129
      %s2131 = scalar_lea.vmem %s3, 256
      %v2132 = vld [vmem:[%s2131] sm:$0xf]
      %v2133 = vld [vmem:[%s2131 + $0x4] sm:$0xf]
      %v2134 = vld [vmem:[%s2131 + $0x8] sm:$0xf]
      %v2135 = vld [vmem:[%s2131 + $0xc] sm:$0xf]
      %v2136 = vld [vmem:[%s2131 + $0x10] sm:$0xf]
      %v2137 = vld [vmem:[%s2131 + $0x14] sm:$0xf]
      %v2138 = vld [vmem:[%s2131 + $0x18] sm:$0xf]
      %v2139 = vld [vmem:[%s2131 + $0x1c] sm:$0xf]
      %v2140 = vld [vmem:[%s2131 + $0x20] sm:$0xf]
      %v2141 = vld [vmem:[%s2131 + $0x24] sm:$0xf]
      %v2142 = vld [vmem:[%s2131 + $0x28] sm:$0xf]
      %v2143 = vld [vmem:[%s2131 + $0x2c] sm:$0xf]
      %v2144 = vld [vmem:[%s2131 + $0x30] sm:$0xf]
      %v2145 = vld [vmem:[%s2131 + $0x34] sm:$0xf]
      %v2146 = vld [vmem:[%s2131 + $0x38] sm:$0xf]
      %v2147 = vld [vmem:[%s2131 + $0x3c] sm:$0xf]
      %v2148 = vld [vmem:[%s2131 + $0x40] sm:$0xf]
      %v2149 = vld [vmem:[%s2131 + $0x44] sm:$0xf]
      %v2150 = vld [vmem:[%s2131 + $0x48] sm:$0xf]
      %v2151 = vld [vmem:[%s2131 + $0x4c] sm:$0xf]
      %v2152 = vld [vmem:[%s2131 + $0x50] sm:$0xf]
      %v2153 = vld [vmem:[%s2131 + $0x54] sm:$0xf]
      %v2154 = vld [vmem:[%s2131 + $0x58] sm:$0xf]
      %v2155 = vld [vmem:[%s2131 + $0x5c] sm:$0xf]
      %v2156 = vld [vmem:[%s2131 + $0x60] sm:$0xf]
      %v2157 = vld [vmem:[%s2131 + $0x64] sm:$0xf]
      %v2158 = vld [vmem:[%s2131 + $0x68] sm:$0xf]
      %v2159 = vld [vmem:[%s2131 + $0x6c] sm:$0xf]
      %v2160 = vld [vmem:[%s2131 + $0x70] sm:$0xf]
      %v2161 = vld [vmem:[%s2131 + $0x74] sm:$0xf]
      %v2162 = vld [vmem:[%s2131 + $0x78] sm:$0xf]
      %v2163 = vld [vmem:[%s2131 + $0x7c] sm:$0xf]
      %v2196 = vunpack.c.l.b16 %v2132
      %v2197 = vunpack.c.l.b16 %v2133
      %v2198 = vunpack.c.l.b16 %v2134
      %v2199 = vunpack.c.l.b16 %v2135
      %v2200 = vunpack.c.l.b16 %v2136
      %v2201 = vunpack.c.l.b16 %v2137
      %v2202 = vunpack.c.l.b16 %v2138
      %v2203 = vunpack.c.l.b16 %v2139
      %v2204 = vunpack.c.l.b16 %v2140
      %v2205 = vunpack.c.l.b16 %v2141
      %v2206 = vunpack.c.l.b16 %v2142
      %v2207 = vunpack.c.l.b16 %v2143
      %v2208 = vunpack.c.l.b16 %v2144
      %v2209 = vunpack.c.l.b16 %v2145
      %v2210 = vunpack.c.l.b16 %v2146
      %v2211 = vunpack.c.l.b16 %v2147
      %v2212 = vunpack.c.l.b16 %v2148
      %v2213 = vunpack.c.l.b16 %v2149
      %v2214 = vunpack.c.l.b16 %v2150
      %v2215 = vunpack.c.l.b16 %v2151
      %v2216 = vunpack.c.l.b16 %v2152
      %v2217 = vunpack.c.l.b16 %v2153
      %v2218 = vunpack.c.l.b16 %v2154
      %v2219 = vunpack.c.l.b16 %v2155
      %v2220 = vunpack.c.l.b16 %v2156
      %v2221 = vunpack.c.l.b16 %v2157
      %v2222 = vunpack.c.l.b16 %v2158
      %v2223 = vunpack.c.l.b16 %v2159
      %v2224 = vunpack.c.l.b16 %v2160
      %v2225 = vunpack.c.l.b16 %v2161
      %v2226 = vunpack.c.l.b16 %v2162
      %v2227 = vunpack.c.l.b16 %v2163
      %v2228 = vpack.c.b16 %v2197, %v2196
      %v2229 = vpack.c.b16 %v2199, %v2198
      %v2230 = vpack.c.b16 %v2201, %v2200
      %v2231 = vpack.c.b16 %v2203, %v2202
      %v2232 = vpack.c.b16 %v2205, %v2204
      %v2233 = vpack.c.b16 %v2207, %v2206
      %v2234 = vpack.c.b16 %v2209, %v2208
      %v2235 = vpack.c.b16 %v2211, %v2210
      %v2236 = vpack.c.b16 %v2213, %v2212
      %v2237 = vpack.c.b16 %v2215, %v2214
      %v2238 = vpack.c.b16 %v2217, %v2216
      %v2239 = vpack.c.b16 %v2219, %v2218
      %v2240 = vpack.c.b16 %v2221, %v2220
      %v2241 = vpack.c.b16 %v2223, %v2222
      %v2242 = vpack.c.b16 %v2225, %v2224
      %v2243 = vpack.c.b16 %v2227, %v2226
      %2260 = vmatprep.subr.bf16.mxu0 0
      %2261 = vmatpush1.bf16.msra.mxu0 %v2228
      %2262 = vmatprep.subr.bf16.mxu0 0
      %2263 = vmatpush1.bf16.msra.mxu0 %v2229
      %2264 = vmatprep.subr.bf16.mxu0 0
      %2265 = vmatpush1.bf16.msra.mxu0 %v2230
      %2266 = vmatprep.subr.bf16.mxu0 0
      %2267 = vmatpush1.bf16.msra.mxu0 %v2231
      %2268 = vmatprep.subr.bf16.mxu0 0
      %2269 = vmatpush1.bf16.msra.mxu0 %v2232
      %2270 = vmatprep.subr.bf16.mxu0 0
      %2271 = vmatpush1.bf16.msra.mxu0 %v2233
      %2272 = vmatprep.subr.bf16.mxu0 0
      %2273 = vmatpush1.bf16.msra.mxu0 %v2234
      %2274 = vmatprep.subr.bf16.mxu0 0
      %2275 = vmatpush1.bf16.msra.mxu0 %v2235
      %2276 = vmatprep.subr.bf16.mxu0 0
      %2277 = vmatpush1.bf16.msra.mxu0 %v2236
      %2278 = vmatprep.subr.bf16.mxu0 0
      %2279 = vmatpush1.bf16.msra.mxu0 %v2237
      %2280 = vmatprep.subr.bf16.mxu0 0
      %2281 = vmatpush1.bf16.msra.mxu0 %v2238
      %2282 = vmatprep.subr.bf16.mxu0 0
      %2283 = vmatpush1.bf16.msra.mxu0 %v2239
      %2284 = vmatprep.subr.bf16.mxu0 0
      %2285 = vmatpush1.bf16.msra.mxu0 %v2240
      %2286 = vmatprep.subr.bf16.mxu0 0
      %2287 = vmatpush1.bf16.msra.mxu0 %v2241
      %2288 = vmatprep.subr.bf16.mxu0 0
      %2289 = vmatpush1.bf16.msra.mxu0 %v2242
      %2290 = vmatprep.subr.bf16.mxu0 0
      %2291 = vmatpush1.bf16.msra.mxu0 %v2243
      %2292 = vmatprep.mubr.bf16.mxu0 %v2088
      %2293 = vmatmul.mubr.bf16.gmra.mrb[0].mxu0 %v2085
      %v2294 = vpop.f32.mrb[0].mxu0
      %v2295 = vadd.f32 0.0, %v2294
      %v2296 = vpop.f32.mrb[0].mxu0
      %v2297 = vpop.f32.mrb[0].mxu0
      %v2298 = vadd.f32 0.0, %v2297
      %v2299 = vpop.f32.mrb[0].mxu0
      %2300 = vmatprep.mubr.bf16.mxu0 %v2094
      %2301 = vmatmul.mubr.bf16.gmra.mrb[0].mxu0 %v2091
      %v2302 = vpop.f32.mrb[0].mxu0
      %v2303 = vadd.f32 0.0, %v2302
      %v2304 = vpop.f32.mrb[0].mxu0
      %v2305 = vpop.f32.mrb[0].mxu0
      %v2306 = vadd.f32 0.0, %v2305
      %v2307 = vpop.f32.mrb[0].mxu0
      %2308 = vmatprep.mubr.bf16.mxu0 %v2100
      %2309 = vmatmul.mubr.bf16.gmra.mrb[0].mxu0 %v2097
      %v2310 = vpop.f32.mrb[0].mxu0
      %v2311 = vadd.f32 0.0, %v2310
      %v2312 = vpop.f32.mrb[0].mxu0
      %v2313 = vpop.f32.mrb[0].mxu0
      %v2314 = vadd.f32 0.0, %v2313
      %v2315 = vpop.f32.mrb[0].mxu0
      %2316 = vmatprep.mubr.bf16.mxu0 %v2106
      %2317 = vmatmul.mubr.bf16.gmra.mrb[0].mxu0 %v2103
      %v2318 = vpop.f32.mrb[0].mxu0
      %v2319 = vadd.f32 0.0, %v2318
      %v2320 = vpop.f32.mrb[0].mxu0
      %v2321 = vpop.f32.mrb[0].mxu0
      %v2322 = vadd.f32 0.0, %v2321
      %v2323 = vpop.f32.mrb[0].mxu0
      %2324 = vmatprep.mubr.bf16.mxu0 %v2112
      %2325 = vmatmul.mubr.bf16.gmra.mrb[0].mxu0 %v2109
      %v2326 = vpop.f32.mrb[0].mxu0
      %v2327 = vadd.f32 0.0, %v2326
      %v2328 = vpop.f32.mrb[0].mxu0
      %v2329 = vpop.f32.mrb[0].mxu0
      %v2330 = vadd.f32 0.0, %v2329
      %v2331 = vpop.f32.mrb[0].mxu0
      %2332 = vmatprep.mubr.bf16.mxu0 %v2118
      %2333 = vmatmul.mubr.bf16.gmra.mrb[0].mxu0 %v2115
      %v2334 = vpop.f32.mrb[0].mxu0
      %v2335 = vadd.f32 0.0, %v2334
      %v2336 = vpop.f32.mrb[0].mxu0
      %v2337 = vpop.f32.mrb[0].mxu0
      %v2338 = vadd.f32 0.0, %v2337
      %v2339 = vpop.f32.mrb[0].mxu0
      %2340 = vmatprep.mubr.bf16.mxu0 %v2124
      %2341 = vmatmul.mubr.bf16.gmra.mrb[0].mxu0 %v2121
      %v2342 = vpop.f32.mrb[0].mxu0
      %v2343 = vadd.f32 0.0, %v2342
      %v2344 = vpop.f32.mrb[0].mxu0
      %v2345 = vpop.f32.mrb[0].mxu0
      %v2346 = vadd.f32 0.0, %v2345
      %v2347 = vpop.f32.mrb[0].mxu0
      %2348 = vmatprep.mubr.bf16.mxu0 %v2130
      %2349 = vmatmul.mubr.bf16.gmra.mrb[0].mxu0 %v2127
      %v2350 = vpop.f32.mrb[0].mxu0
      %v2351 = vadd.f32 0.0, %v2350
      %v2352 = vpop.f32.mrb[0].mxu0
      %v2353 = vpop.f32.mrb[0].mxu0
      %v2354 = vadd.f32 0.0, %v2353
      %v2355 = vpop.f32.mrb[0].mxu0
      %2356 = vdwg.mxu0
      %v2357 = vrcp.pop %v2295
      %v2358 = vrcp.pop %v2298
      %v2359 = vrcp.pop %v2303
      %v2360 = vrcp.pop %v2306
      %v2361 = vrcp.pop %v2311
      %v2362 = vrcp.pop %v2314
      %v2363 = vrcp.pop %v2319
      %v2364 = vrcp.pop %v2322
      %v2365 = vrcp.pop %v2327
      %v2366 = vrcp.pop %v2330
      %v2367 = vrcp.pop %v2335
      %v2368 = vrcp.pop %v2338
      %v2369 = vrcp.pop %v2343
      %v2370 = vrcp.pop %v2346
      %v2371 = vrcp.pop %v2351
      %v2372 = vrcp.pop %v2354
      %2374 = vset.pattern.permute.xlu0 16
      %2375 = vperm.xlu0 %2374, %v2357
      %v2376 = vpop.permute.xlu0 %2375
      %2379 = vset.pattern.permute.xlu0 16
      %2380 = vperm.xlu0 %2379, %v2358
      %v2381 = vpop.permute.xlu0 %2380
      %2384 = vset.pattern.permute.xlu0 16
      %2385 = vperm.xlu0 %2384, %v2359
      %v2386 = vpop.permute.xlu0 %2385
      %2389 = vset.pattern.permute.xlu0 16
      %2390 = vperm.xlu0 %2389, %v2360
      %v2391 = vpop.permute.xlu0 %2390
      %2394 = vset.pattern.permute.xlu0 16
      %2395 = vperm.xlu0 %2394, %v2361
      %v2396 = vpop.permute.xlu0 %2395
      %2399 = vset.pattern.permute.xlu0 16
      %2400 = vperm.xlu0 %2399, %v2362
      %v2401 = vpop.permute.xlu0 %2400
      %2404 = vset.pattern.permute.xlu0 16
      %2405 = vperm.xlu0 %2404, %v2363
      %v2406 = vpop.permute.xlu0 %2405
      %2409 = vset.pattern.permute.xlu0 16
      %2410 = vperm.xlu0 %2409, %v2364
      %v2411 = vpop.permute.xlu0 %2410
      %2414 = vset.pattern.permute.xlu0 16
      %2415 = vperm.xlu0 %2414, %v2365
      %v2416 = vpop.permute.xlu0 %2415
      %2419 = vset.pattern.permute.xlu0 16
      %2420 = vperm.xlu0 %2419, %v2366
      %v2421 = vpop.permute.xlu0 %2420
      %2424 = vset.pattern.permute.xlu0 16
      %2425 = vperm.xlu0 %2424, %v2367
      %v2426 = vpop.permute.xlu0 %2425
      %2429 = vset.pattern.permute.xlu0 16
      %2430 = vperm.xlu0 %2429, %v2368
      %v2431 = vpop.permute.xlu0 %2430
      %2434 = vset.pattern.permute.xlu0 16
      %2435 = vperm.xlu0 %2434, %v2369
      %v2436 = vpop.permute.xlu0 %2435
      %2439 = vset.pattern.permute.xlu0 16
      %2440 = vperm.xlu0 %2439, %v2370
      %v2441 = vpop.permute.xlu0 %2440
      %2444 = vset.pattern.permute.xlu0 16
      %2445 = vperm.xlu0 %2444, %v2371
      %v2446 = vpop.permute.xlu0 %2445
      %2449 = vset.pattern.permute.xlu0 16
      %2450 = vperm.xlu0 %2449, %v2372
      %v2451 = vpop.permute.xlu0 %2450
      %v2453 = vmul.f32 %v2295, %v2376
      %v2454 = vmul.f32 %v2298, %v2381
      %v2455 = vmul.f32 %v2303, %v2386
      %v2456 = vmul.f32 %v2306, %v2391
      %v2457 = vmul.f32 %v2311, %v2396
      %v2458 = vmul.f32 %v2314, %v2401
      %v2459 = vmul.f32 %v2319, %v2406
      %v2460 = vmul.f32 %v2322, %v2411
      %v2461 = vmul.f32 %v2327, %v2416
      %v2462 = vmul.f32 %v2330, %v2421
      %v2463 = vmul.f32 %v2335, %v2426
      %v2464 = vmul.f32 %v2338, %v2431
      %v2465 = vmul.f32 %v2343, %v2436
      %v2466 = vmul.f32 %v2346, %v2441
      %v2467 = vmul.f32 %v2351, %v2446
      %v2468 = vmul.f32 %v2354, %v2451
      %2469 = vset.pattern.permute.xlu0 3
      %2470 = vperm.xlu0 %2469, %v390
      %v2471 = vpop.permute.xlu0 %2470
      %2473 = vset.pattern.permute.xlu0 3
      %2474 = vperm.xlu0 %2473, %v391
      %v2475 = vpop.permute.xlu0 %2474
      %2477 = vset.pattern.permute.xlu0 3
      %2478 = vperm.xlu0 %2477, %v392
      %v2479 = vpop.permute.xlu0 %2478
      %2481 = vset.pattern.permute.xlu0 3
      %2482 = vperm.xlu0 %2481, %v393
      %v2483 = vpop.permute.xlu0 %2482
      %2485 = vset.pattern.permute.xlu0 3
      %2486 = vperm.xlu0 %2485, %v394
      %v2487 = vpop.permute.xlu0 %2486
      %2489 = vset.pattern.permute.xlu0 3
      %2490 = vperm.xlu0 %2489, %v395
      %v2491 = vpop.permute.xlu0 %2490
      %2493 = vset.pattern.permute.xlu0 3
      %2494 = vperm.xlu0 %2493, %v396
      %v2495 = vpop.permute.xlu0 %2494
      %2497 = vset.pattern.permute.xlu0 3
      %2498 = vperm.xlu0 %2497, %v397
      %v2499 = vpop.permute.xlu0 %2498
      %2501 = vset.pattern.permute.xlu0 3
      %2502 = vperm.xlu0 %2501, %v398
      %v2503 = vpop.permute.xlu0 %2502
      %2505 = vset.pattern.permute.xlu0 3
      %2506 = vperm.xlu0 %2505, %v399
      %v2507 = vpop.permute.xlu0 %2506
      %2509 = vset.pattern.permute.xlu0 3
      %2510 = vperm.xlu0 %2509, %v400
      %v2511 = vpop.permute.xlu0 %2510
      %2513 = vset.pattern.permute.xlu0 3
      %2514 = vperm.xlu0 %2513, %v401
      %v2515 = vpop.permute.xlu0 %2514
      %2517 = vset.pattern.permute.xlu0 3
      %2518 = vperm.xlu0 %2517, %v402
      %v2519 = vpop.permute.xlu0 %2518
      %2521 = vset.pattern.permute.xlu0 3
      %2522 = vperm.xlu0 %2521, %v403
      %v2523 = vpop.permute.xlu0 %2522
      %2525 = vset.pattern.permute.xlu0 3
      %2526 = vperm.xlu0 %2525, %v404
      %v2527 = vpop.permute.xlu0 %2526
      %2529 = vset.pattern.permute.xlu0 3
      %2530 = vperm.xlu0 %2529, %v405
      %v2531 = vpop.permute.xlu0 %2530
      %v2533 = vlaneseq
      %v2534 = vshrl.u32 %v2533, 7
      %v2535 = vsub.s32 3, %v2534
      %v2536 = vrot.slane %v406, %v2535
      %v2537 = vlaneseq
      %v2538 = vshrl.u32 %v2537, 7
      %v2539 = vsub.s32 3, %v2538
      %v2540 = vrot.slane %v407, %v2539
      %v2541 = vadd.f32 %v2471, %v2536
      %v2542 = vadd.f32 %v2471, %v2540
      %v2543 = vadd.f32 %v2475, %v2536
      %v2544 = vadd.f32 %v2475, %v2540
      %v2545 = vadd.f32 %v2479, %v2536
      %v2546 = vadd.f32 %v2479, %v2540
      %v2547 = vadd.f32 %v2483, %v2536
      %v2548 = vadd.f32 %v2483, %v2540
      %v2549 = vadd.f32 %v2487, %v2536
      %v2550 = vadd.f32 %v2487, %v2540
      %v2551 = vadd.f32 %v2491, %v2536
      %v2552 = vadd.f32 %v2491, %v2540
      %v2553 = vadd.f32 %v2495, %v2536
      %v2554 = vadd.f32 %v2495, %v2540
      %v2555 = vadd.f32 %v2499, %v2536
      %v2556 = vadd.f32 %v2499, %v2540
      %v2557 = vadd.f32 %v2503, %v2536
      %v2558 = vadd.f32 %v2503, %v2540
      %v2559 = vadd.f32 %v2507, %v2536
      %v2560 = vadd.f32 %v2507, %v2540
      %v2561 = vadd.f32 %v2511, %v2536
      %v2562 = vadd.f32 %v2511, %v2540
      %v2563 = vadd.f32 %v2515, %v2536
      %v2564 = vadd.f32 %v2515, %v2540
      %v2565 = vadd.f32 %v2519, %v2536
      %v2566 = vadd.f32 %v2519, %v2540
      %v2567 = vadd.f32 %v2523, %v2536
      %v2568 = vadd.f32 %v2523, %v2540
      %v2569 = vadd.f32 %v2527, %v2536
      %v2570 = vadd.f32 %v2527, %v2540
      %v2571 = vadd.f32 %v2531, %v2536
      %v2572 = vadd.f32 %v2531, %v2540
      %v2573 = vmul.f32 %v2541, 0.2
      %v2574 = vmul.f32 %v2542, 0.2
      %v2575 = vmul.f32 %v2543, 0.2
      %v2576 = vmul.f32 %v2544, 0.2
      %v2577 = vmul.f32 %v2545, 0.2
      %v2578 = vmul.f32 %v2546, 0.2
      %v2579 = vmul.f32 %v2547, 0.2
      %v2580 = vmul.f32 %v2548, 0.2
      %v2581 = vmul.f32 %v2549, 0.2
      %v2582 = vmul.f32 %v2550, 0.2
      %v2583 = vmul.f32 %v2551, 0.2
      %v2584 = vmul.f32 %v2552, 0.2
      %v2585 = vmul.f32 %v2553, 0.2
      %v2586 = vmul.f32 %v2554, 0.2
      %v2587 = vmul.f32 %v2555, 0.2
      %v2588 = vmul.f32 %v2556, 0.2
      %v2589 = vmul.f32 %v2557, 0.2
      %v2590 = vmul.f32 %v2558, 0.2
      %v2591 = vmul.f32 %v2559, 0.2
      %v2592 = vmul.f32 %v2560, 0.2
      %v2593 = vmul.f32 %v2561, 0.2
      %v2594 = vmul.f32 %v2562, 0.2
      %v2595 = vmul.f32 %v2563, 0.2
      %v2596 = vmul.f32 %v2564, 0.2
      %v2597 = vmul.f32 %v2565, 0.2
      %v2598 = vmul.f32 %v2566, 0.2
      %v2599 = vmul.f32 %v2567, 0.2
      %v2600 = vmul.f32 %v2568, 0.2
      %v2601 = vmul.f32 %v2569, 0.2
      %v2602 = vmul.f32 %v2570, 0.2
      %v2603 = vmul.f32 %v2571, 0.2
      %v2604 = vmul.f32 %v2572, 0.2
      %v2605 = vmax.f32 %v2541, %v2573
      %v2606 = vmax.f32 %v2542, %v2574
      %v2607 = vmax.f32 %v2543, %v2575
      %v2608 = vmax.f32 %v2544, %v2576
      %v2609 = vmax.f32 %v2545, %v2577
      %v2610 = vmax.f32 %v2546, %v2578
      %v2611 = vmax.f32 %v2547, %v2579
      %v2612 = vmax.f32 %v2548, %v2580
      %v2613 = vmax.f32 %v2549, %v2581
      %v2614 = vmax.f32 %v2550, %v2582
      %v2615 = vmax.f32 %v2551, %v2583
      %v2616 = vmax.f32 %v2552, %v2584
      %v2617 = vmax.f32 %v2553, %v2585
      %v2618 = vmax.f32 %v2554, %v2586
      %v2619 = vmax.f32 %v2555, %v2587
      %v2620 = vmax.f32 %v2556, %v2588
      %v2621 = vmax.f32 %v2557, %v2589
      %v2622 = vmax.f32 %v2558, %v2590
      %v2623 = vmax.f32 %v2559, %v2591
      %v2624 = vmax.f32 %v2560, %v2592
      %v2625 = vmax.f32 %v2561, %v2593
      %v2626 = vmax.f32 %v2562, %v2594
      %v2627 = vmax.f32 %v2563, %v2595
      %v2628 = vmax.f32 %v2564, %v2596
      %v2629 = vmax.f32 %v2565, %v2597
      %v2630 = vmax.f32 %v2566, %v2598
      %v2631 = vmax.f32 %v2567, %v2599
      %v2632 = vmax.f32 %v2568, %v2600
      %v2633 = vmax.f32 %v2569, %v2601
      %v2634 = vmax.f32 %v2570, %v2602
      %v2635 = vmax.f32 %v2571, %v2603
      %v2636 = vmax.f32 %v2572, %v2604
      %v2637 = vadd.f32 %v2605, %v358
      %v2638 = vadd.f32 %v2606, %v359
      %v2639 = vadd.f32 %v2607, %v360
      %v2640 = vadd.f32 %v2608, %v361
      %v2641 = vadd.f32 %v2609, %v362
      %v2642 = vadd.f32 %v2610, %v363
      %v2643 = vadd.f32 %v2611, %v364
      %v2644 = vadd.f32 %v2612, %v365
      %v2645 = vadd.f32 %v2613, %v366
      %v2646 = vadd.f32 %v2614, %v367
      %v2647 = vadd.f32 %v2615, %v368
      %v2648 = vadd.f32 %v2616, %v369
      %v2649 = vadd.f32 %v2617, %v370
      %v2650 = vadd.f32 %v2618, %v371
      %v2651 = vadd.f32 %v2619, %v372
      %v2652 = vadd.f32 %v2620, %v373
      %v2653 = vadd.f32 %v2621, %v374
      %v2654 = vadd.f32 %v2622, %v375
      %v2655 = vadd.f32 %v2623, %v376
      %v2656 = vadd.f32 %v2624, %v377
      %v2657 = vadd.f32 %v2625, %v378
      %v2658 = vadd.f32 %v2626, %v379
      %v2659 = vadd.f32 %v2627, %v380
      %v2660 = vadd.f32 %v2628, %v381
      %v2661 = vadd.f32 %v2629, %v382
      %v2662 = vadd.f32 %v2630, %v383
      %v2663 = vadd.f32 %v2631, %v384
      %v2664 = vadd.f32 %v2632, %v385
      %v2665 = vadd.f32 %v2633, %v386
      %v2666 = vadd.f32 %v2634, %v387
      %v2667 = vadd.f32 %v2635, %v388
      %v2668 = vadd.f32 %v2636, %v389
      %v2669 = vmax.f32 %v2637, %v2638
      %2670 = vmax.xlane.f32.xlu0 %v2669
      %v2671 = vpop.xlane.xlu0 %2670
      %v2672 = vmax.f32 %v2639, %v2640
      %2673 = vmax.xlane.f32.xlu0 %v2672
      %v2674 = vpop.xlane.xlu0 %2673
      %v2675 = vmax.f32 %v2641, %v2642
      %2676 = vmax.xlane.f32.xlu0 %v2675
      %v2677 = vpop.xlane.xlu0 %2676
      %v2678 = vmax.f32 %v2643, %v2644
      %2679 = vmax.xlane.f32.xlu0 %v2678
      %v2680 = vpop.xlane.xlu0 %2679
      %v2681 = vmax.f32 %v2645, %v2646
      %2682 = vmax.xlane.f32.xlu0 %v2681
      %v2683 = vpop.xlane.xlu0 %2682
      %v2684 = vmax.f32 %v2647, %v2648
      %2685 = vmax.xlane.f32.xlu0 %v2684
      %v2686 = vpop.xlane.xlu0 %2685
      %v2687 = vmax.f32 %v2649, %v2650
      %2688 = vmax.xlane.f32.xlu0 %v2687
      %v2689 = vpop.xlane.xlu0 %2688
      %v2690 = vmax.f32 %v2651, %v2652
      %2691 = vmax.xlane.f32.xlu0 %v2690
      %v2692 = vpop.xlane.xlu0 %2691
      %v2693 = vmax.f32 %v2653, %v2654
      %2694 = vmax.xlane.f32.xlu0 %v2693
      %v2695 = vpop.xlane.xlu0 %2694
      %v2696 = vmax.f32 %v2655, %v2656
      %2697 = vmax.xlane.f32.xlu0 %v2696
      %v2698 = vpop.xlane.xlu0 %2697
      %v2699 = vmax.f32 %v2657, %v2658
      %2700 = vmax.xlane.f32.xlu0 %v2699
      %v2701 = vpop.xlane.xlu0 %2700
      %v2702 = vmax.f32 %v2659, %v2660
      %2703 = vmax.xlane.f32.xlu0 %v2702
      %v2704 = vpop.xlane.xlu0 %2703
      %v2705 = vmax.f32 %v2661, %v2662
      %2706 = vmax.xlane.f32.xlu0 %v2705
      %v2707 = vpop.xlane.xlu0 %2706
      %v2708 = vmax.f32 %v2663, %v2664
      %2709 = vmax.xlane.f32.xlu0 %v2708
      %v2710 = vpop.xlane.xlu0 %2709
      %v2711 = vmax.f32 %v2665, %v2666
      %2712 = vmax.xlane.f32.xlu0 %v2711
      %v2713 = vpop.xlane.xlu0 %2712
      %v2714 = vmax.f32 %v2667, %v2668
      %2715 = vmax.xlane.f32.xlu0 %v2714
      %v2716 = vpop.xlane.xlu0 %2715
      %v2717 = vsub.f32 %v2637, %v2671
      %v2718 = vsub.f32 %v2638, %v2671
      %v2719 = vsub.f32 %v2639, %v2674
      %v2720 = vsub.f32 %v2640, %v2674
      %v2721 = vsub.f32 %v2641, %v2677
      %v2722 = vsub.f32 %v2642, %v2677
      %v2723 = vsub.f32 %v2643, %v2680
      %v2724 = vsub.f32 %v2644, %v2680
      %v2725 = vsub.f32 %v2645, %v2683
      %v2726 = vsub.f32 %v2646, %v2683
      %v2727 = vsub.f32 %v2647, %v2686
      %v2728 = vsub.f32 %v2648, %v2686
      %v2729 = vsub.f32 %v2649, %v2689
      %v2730 = vsub.f32 %v2650, %v2689
      %v2731 = vsub.f32 %v2651, %v2692
      %v2732 = vsub.f32 %v2652, %v2692
      %v2733 = vsub.f32 %v2653, %v2695
      %v2734 = vsub.f32 %v2654, %v2695
      %v2735 = vsub.f32 %v2655, %v2698
      %v2736 = vsub.f32 %v2656, %v2698
      %v2737 = vsub.f32 %v2657, %v2701
      %v2738 = vsub.f32 %v2658, %v2701
      %v2739 = vsub.f32 %v2659, %v2704
      %v2740 = vsub.f32 %v2660, %v2704
      %v2741 = vsub.f32 %v2661, %v2707
      %v2742 = vsub.f32 %v2662, %v2707
      %v2743 = vsub.f32 %v2663, %v2710
      %v2744 = vsub.f32 %v2664, %v2710
      %v2745 = vsub.f32 %v2665, %v2713
      %v2746 = vsub.f32 %v2666, %v2713
      %v2747 = vsub.f32 %v2667, %v2716
      %v2748 = vsub.f32 %v2668, %v2716
      %v2749 = vpack.c.bf16 %v2719, %v2717
      %v2750 = vpack.c.bf16 %v2720, %v2718
      %v2751 = vpack.c.bf16 %v2723, %v2721
      %v2752 = vpack.c.bf16 %v2724, %v2722
      %v2753 = vpack.c.bf16 %v2727, %v2725
      %v2754 = vpack.c.bf16 %v2728, %v2726
      %v2755 = vpack.c.bf16 %v2731, %v2729
      %v2756 = vpack.c.bf16 %v2732, %v2730
      %v2757 = vpack.c.bf16 %v2735, %v2733
      %v2758 = vpack.c.bf16 %v2736, %v2734
      %v2759 = vpack.c.bf16 %v2739, %v2737
      %v2760 = vpack.c.bf16 %v2740, %v2738
      %v2761 = vpack.c.bf16 %v2743, %v2741
      %v2762 = vpack.c.bf16 %v2744, %v2742
      %v2763 = vpack.c.bf16 %v2747, %v2745
      %v2764 = vpack.c.bf16 %v2748, %v2746
      %v2766 = vmul.bf16 %v2749, 1069105081
      %v2767 = vpow.bf16.pop %v2766
      %v2769 = vmul.bf16 %v2750, 1069105081
      %v2770 = vpow.bf16.pop %v2769
      %v2772 = vmul.bf16 %v2751, 1069105081
      %v2773 = vpow.bf16.pop %v2772
      %v2775 = vmul.bf16 %v2752, 1069105081
      %v2776 = vpow.bf16.pop %v2775
      %v2778 = vmul.bf16 %v2753, 1069105081
      %v2779 = vpow.bf16.pop %v2778
      %v2781 = vmul.bf16 %v2754, 1069105081
      %v2782 = vpow.bf16.pop %v2781
      %v2784 = vmul.bf16 %v2755, 1069105081
      %v2785 = vpow.bf16.pop %v2784
      %v2787 = vmul.bf16 %v2756, 1069105081
      %v2788 = vpow.bf16.pop %v2787
      %v2790 = vmul.bf16 %v2757, 1069105081
      %v2791 = vpow.bf16.pop %v2790
      %v2793 = vmul.bf16 %v2758, 1069105081
      %v2794 = vpow.bf16.pop %v2793
      %v2796 = vmul.bf16 %v2759, 1069105081
      %v2797 = vpow.bf16.pop %v2796
      %v2799 = vmul.bf16 %v2760, 1069105081
      %v2800 = vpow.bf16.pop %v2799
      %v2802 = vmul.bf16 %v2761, 1069105081
      %v2803 = vpow.bf16.pop %v2802
      %v2805 = vmul.bf16 %v2762, 1069105081
      %v2806 = vpow.bf16.pop %v2805
      %v2808 = vmul.bf16 %v2763, 1069105081
      %v2809 = vpow.bf16.pop %v2808
      %v2811 = vmul.bf16 %v2764, 1069105081
      %v2812 = vpow.bf16.pop %v2811
      %s2813 = scalar_lea.vmem %s3, 384
      %v2814 = vld [vmem:[%s2813] sm:$0xf]
      %v2815 = vld [vmem:[%s2813 + $0x4] sm:$0xf]
      %v2816 = vld [vmem:[%s2813 + $0x8] sm:$0xf]
      %v2817 = vld [vmem:[%s2813 + $0xc] sm:$0xf]
      %v2818 = vld [vmem:[%s2813 + $0x10] sm:$0xf]
      %v2819 = vld [vmem:[%s2813 + $0x14] sm:$0xf]
      %v2820 = vld [vmem:[%s2813 + $0x18] sm:$0xf]
      %v2821 = vld [vmem:[%s2813 + $0x1c] sm:$0xf]
      %v2822 = vld [vmem:[%s2813 + $0x20] sm:$0xf]
      %v2823 = vld [vmem:[%s2813 + $0x24] sm:$0xf]
      %v2824 = vld [vmem:[%s2813 + $0x28] sm:$0xf]
      %v2825 = vld [vmem:[%s2813 + $0x2c] sm:$0xf]
      %v2826 = vld [vmem:[%s2813 + $0x30] sm:$0xf]
      %v2827 = vld [vmem:[%s2813 + $0x34] sm:$0xf]
      %v2828 = vld [vmem:[%s2813 + $0x38] sm:$0xf]
      %v2829 = vld [vmem:[%s2813 + $0x3c] sm:$0xf]
      %v2830 = vld [vmem:[%s2813 + $0x40] sm:$0xf]
      %v2831 = vld [vmem:[%s2813 + $0x44] sm:$0xf]
      %v2832 = vld [vmem:[%s2813 + $0x48] sm:$0xf]
      %v2833 = vld [vmem:[%s2813 + $0x4c] sm:$0xf]
      %v2834 = vld [vmem:[%s2813 + $0x50] sm:$0xf]
      %v2835 = vld [vmem:[%s2813 + $0x54] sm:$0xf]
      %v2836 = vld [vmem:[%s2813 + $0x58] sm:$0xf]
      %v2837 = vld [vmem:[%s2813 + $0x5c] sm:$0xf]
      %v2838 = vld [vmem:[%s2813 + $0x60] sm:$0xf]
      %v2839 = vld [vmem:[%s2813 + $0x64] sm:$0xf]
      %v2840 = vld [vmem:[%s2813 + $0x68] sm:$0xf]
      %v2841 = vld [vmem:[%s2813 + $0x6c] sm:$0xf]
      %v2842 = vld [vmem:[%s2813 + $0x70] sm:$0xf]
      %v2843 = vld [vmem:[%s2813 + $0x74] sm:$0xf]
      %v2844 = vld [vmem:[%s2813 + $0x78] sm:$0xf]
      %v2845 = vld [vmem:[%s2813 + $0x7c] sm:$0xf]
      %v2878 = vunpack.c.l.b16 %v2814
      %v2879 = vunpack.c.l.b16 %v2815
      %v2880 = vunpack.c.l.b16 %v2816
      %v2881 = vunpack.c.l.b16 %v2817
      %v2882 = vunpack.c.l.b16 %v2818
      %v2883 = vunpack.c.l.b16 %v2819
      %v2884 = vunpack.c.l.b16 %v2820
      %v2885 = vunpack.c.l.b16 %v2821
      %v2886 = vunpack.c.l.b16 %v2822
      %v2887 = vunpack.c.l.b16 %v2823
      %v2888 = vunpack.c.l.b16 %v2824
      %v2889 = vunpack.c.l.b16 %v2825
      %v2890 = vunpack.c.l.b16 %v2826
      %v2891 = vunpack.c.l.b16 %v2827
      %v2892 = vunpack.c.l.b16 %v2828
      %v2893 = vunpack.c.l.b16 %v2829
      %v2894 = vunpack.c.l.b16 %v2830
      %v2895 = vunpack.c.l.b16 %v2831
      %v2896 = vunpack.c.l.b16 %v2832
      %v2897 = vunpack.c.l.b16 %v2833
      %v2898 = vunpack.c.l.b16 %v2834
      %v2899 = vunpack.c.l.b16 %v2835
      %v2900 = vunpack.c.l.b16 %v2836
      %v2901 = vunpack.c.l.b16 %v2837
      %v2902 = vunpack.c.l.b16 %v2838
      %v2903 = vunpack.c.l.b16 %v2839
      %v2904 = vunpack.c.l.b16 %v2840
      %v2905 = vunpack.c.l.b16 %v2841
      %v2906 = vunpack.c.l.b16 %v2842
      %v2907 = vunpack.c.l.b16 %v2843
      %v2908 = vunpack.c.l.b16 %v2844
      %v2909 = vunpack.c.l.b16 %v2845
      %v2910 = vpack.c.b16 %v2879, %v2878
      %v2911 = vpack.c.b16 %v2881, %v2880
      %v2912 = vpack.c.b16 %v2883, %v2882
      %v2913 = vpack.c.b16 %v2885, %v2884
      %v2914 = vpack.c.b16 %v2887, %v2886
      %v2915 = vpack.c.b16 %v2889, %v2888
      %v2916 = vpack.c.b16 %v2891, %v2890
      %v2917 = vpack.c.b16 %v2893, %v2892
      %v2918 = vpack.c.b16 %v2895, %v2894
      %v2919 = vpack.c.b16 %v2897, %v2896
      %v2920 = vpack.c.b16 %v2899, %v2898
      %v2921 = vpack.c.b16 %v2901, %v2900
      %v2922 = vpack.c.b16 %v2903, %v2902
      %v2923 = vpack.c.b16 %v2905, %v2904
      %v2924 = vpack.c.b16 %v2907, %v2906
      %v2925 = vpack.c.b16 %v2909, %v2908
      %2942 = vmatprep.subr.bf16.mxu0 0
      %2943 = vmatpush1.bf16.msra.mxu0 %v2910
      %2944 = vmatprep.subr.bf16.mxu0 0
      %2945 = vmatpush1.bf16.msra.mxu0 %v2911
      %2946 = vmatprep.subr.bf16.mxu0 0
      %2947 = vmatpush1.bf16.msra.mxu0 %v2912
      %2948 = vmatprep.subr.bf16.mxu0 0
      %2949 = vmatpush1.bf16.msra.mxu0 %v2913
      %2950 = vmatprep.subr.bf16.mxu0 0
      %2951 = vmatpush1.bf16.msra.mxu0 %v2914
      %2952 = vmatprep.subr.bf16.mxu0 0
      %2953 = vmatpush1.bf16.msra.mxu0 %v2915
      %2954 = vmatprep.subr.bf16.mxu0 0
      %2955 = vmatpush1.bf16.msra.mxu0 %v2916
      %2956 = vmatprep.subr.bf16.mxu0 0
      %2957 = vmatpush1.bf16.msra.mxu0 %v2917
      %2958 = vmatprep.subr.bf16.mxu0 0
      %2959 = vmatpush1.bf16.msra.mxu0 %v2918
      %2960 = vmatprep.subr.bf16.mxu0 0
      %2961 = vmatpush1.bf16.msra.mxu0 %v2919
      %2962 = vmatprep.subr.bf16.mxu0 0
      %2963 = vmatpush1.bf16.msra.mxu0 %v2920
      %2964 = vmatprep.subr.bf16.mxu0 0
      %2965 = vmatpush1.bf16.msra.mxu0 %v2921
      %2966 = vmatprep.subr.bf16.mxu0 0
      %2967 = vmatpush1.bf16.msra.mxu0 %v2922
      %2968 = vmatprep.subr.bf16.mxu0 0
      %2969 = vmatpush1.bf16.msra.mxu0 %v2923
      %2970 = vmatprep.subr.bf16.mxu0 0
      %2971 = vmatpush1.bf16.msra.mxu0 %v2924
      %2972 = vmatprep.subr.bf16.mxu0 0
      %2973 = vmatpush1.bf16.msra.mxu0 %v2925
      %2974 = vmatprep.mubr.bf16.mxu0 %v2770
      %2975 = vmatmul.mubr.bf16.gmra.mrb[0].mxu0 %v2767
      %v2976 = vpop.f32.mrb[0].mxu0
      %v2977 = vadd.f32 0.0, %v2976
      %v2978 = vpop.f32.mrb[0].mxu0
      %v2979 = vpop.f32.mrb[0].mxu0
      %v2980 = vadd.f32 0.0, %v2979
      %v2981 = vpop.f32.mrb[0].mxu0
      %2982 = vmatprep.mubr.bf16.mxu0 %v2776
      %2983 = vmatmul.mubr.bf16.gmra.mrb[0].mxu0 %v2773
      %v2984 = vpop.f32.mrb[0].mxu0
      %v2985 = vadd.f32 0.0, %v2984
      %v2986 = vpop.f32.mrb[0].mxu0
      %v2987 = vpop.f32.mrb[0].mxu0
      %v2988 = vadd.f32 0.0, %v2987
      %v2989 = vpop.f32.mrb[0].mxu0
      %2990 = vmatprep.mubr.bf16.mxu0 %v2782
      %2991 = vmatmul.mubr.bf16.gmra.mrb[0].mxu0 %v2779
      %v2992 = vpop.f32.mrb[0].mxu0
      %v2993 = vadd.f32 0.0, %v2992
      %v2994 = vpop.f32.mrb[0].mxu0
      %v2995 = vpop.f32.mrb[0].mxu0
      %v2996 = vadd.f32 0.0, %v2995
      %v2997 = vpop.f32.mrb[0].mxu0
      %2998 = vmatprep.mubr.bf16.mxu0 %v2788
      %2999 = vmatmul.mubr.bf16.gmra.mrb[0].mxu0 %v2785
      %v3000 = vpop.f32.mrb[0].mxu0
      %v3001 = vadd.f32 0.0, %v3000
      %v3002 = vpop.f32.mrb[0].mxu0
      %v3003 = vpop.f32.mrb[0].mxu0
      %v3004 = vadd.f32 0.0, %v3003
      %v3005 = vpop.f32.mrb[0].mxu0
      %3006 = vmatprep.mubr.bf16.mxu0 %v2794
      %3007 = vmatmul.mubr.bf16.gmra.mrb[0].mxu0 %v2791
      %v3008 = vpop.f32.mrb[0].mxu0
      %v3009 = vadd.f32 0.0, %v3008
      %v3010 = vpop.f32.mrb[0].mxu0
      %v3011 = vpop.f32.mrb[0].mxu0
      %v3012 = vadd.f32 0.0, %v3011
      %v3013 = vpop.f32.mrb[0].mxu0
      %3014 = vmatprep.mubr.bf16.mxu0 %v2800
      %3015 = vmatmul.mubr.bf16.gmra.mrb[0].mxu0 %v2797
      %v3016 = vpop.f32.mrb[0].mxu0
      %v3017 = vadd.f32 0.0, %v3016
      %v3018 = vpop.f32.mrb[0].mxu0
      %v3019 = vpop.f32.mrb[0].mxu0
      %v3020 = vadd.f32 0.0, %v3019
      %v3021 = vpop.f32.mrb[0].mxu0
      %3022 = vmatprep.mubr.bf16.mxu0 %v2806
      %3023 = vmatmul.mubr.bf16.gmra.mrb[0].mxu0 %v2803
      %v3024 = vpop.f32.mrb[0].mxu0
      %v3025 = vadd.f32 0.0, %v3024
      %v3026 = vpop.f32.mrb[0].mxu0
      %v3027 = vpop.f32.mrb[0].mxu0
      %v3028 = vadd.f32 0.0, %v3027
      %v3029 = vpop.f32.mrb[0].mxu0
      %3030 = vmatprep.mubr.bf16.mxu0 %v2812
      %3031 = vmatmul.mubr.bf16.gmra.mrb[0].mxu0 %v2809
      %v3032 = vpop.f32.mrb[0].mxu0
      %v3033 = vadd.f32 0.0, %v3032
      %v3034 = vpop.f32.mrb[0].mxu0
      %v3035 = vpop.f32.mrb[0].mxu0
      %v3036 = vadd.f32 0.0, %v3035
      %v3037 = vpop.f32.mrb[0].mxu0
      %3038 = vdwg.mxu0
      %v3039 = vrcp.pop %v2977
      %v3040 = vrcp.pop %v2980
      %v3041 = vrcp.pop %v2985
      %v3042 = vrcp.pop %v2988
      %v3043 = vrcp.pop %v2993
      %v3044 = vrcp.pop %v2996
      %v3045 = vrcp.pop %v3001
      %v3046 = vrcp.pop %v3004
      %v3047 = vrcp.pop %v3009
      %v3048 = vrcp.pop %v3012
      %v3049 = vrcp.pop %v3017
      %v3050 = vrcp.pop %v3020
      %v3051 = vrcp.pop %v3025
      %v3052 = vrcp.pop %v3028
      %v3053 = vrcp.pop %v3033
      %v3054 = vrcp.pop %v3036
      %3056 = vset.pattern.permute.xlu0 16
      %3057 = vperm.xlu0 %3056, %v3039
      %v3058 = vpop.permute.xlu0 %3057
      %3061 = vset.pattern.permute.xlu0 16
      %3062 = vperm.xlu0 %3061, %v3040
      %v3063 = vpop.permute.xlu0 %3062
      %3066 = vset.pattern.permute.xlu0 16
      %3067 = vperm.xlu0 %3066, %v3041
      %v3068 = vpop.permute.xlu0 %3067
      %3071 = vset.pattern.permute.xlu0 16
      %3072 = vperm.xlu0 %3071, %v3042
      %v3073 = vpop.permute.xlu0 %3072
      %3076 = vset.pattern.permute.xlu0 16
      %3077 = vperm.xlu0 %3076, %v3043
      %v3078 = vpop.permute.xlu0 %3077
      %3081 = vset.pattern.permute.xlu0 16
      %3082 = vperm.xlu0 %3081, %v3044
      %v3083 = vpop.permute.xlu0 %3082
      %3086 = vset.pattern.permute.xlu0 16
      %3087 = vperm.xlu0 %3086, %v3045
      %v3088 = vpop.permute.xlu0 %3087
      %3091 = vset.pattern.permute.xlu0 16
      %3092 = vperm.xlu0 %3091, %v3046
      %v3093 = vpop.permute.xlu0 %3092
      %3096 = vset.pattern.permute.xlu0 16
      %3097 = vperm.xlu0 %3096, %v3047
      %v3098 = vpop.permute.xlu0 %3097
      %3101 = vset.pattern.permute.xlu0 16
      %3102 = vperm.xlu0 %3101, %v3048
      %v3103 = vpop.permute.xlu0 %3102
      %3106 = vset.pattern.permute.xlu0 16
      %3107 = vperm.xlu0 %3106, %v3049
      %v3108 = vpop.permute.xlu0 %3107
      %3111 = vset.pattern.permute.xlu0 16
      %3112 = vperm.xlu0 %3111, %v3050
      %v3113 = vpop.permute.xlu0 %3112
      %3116 = vset.pattern.permute.xlu0 16
      %3117 = vperm.xlu0 %3116, %v3051
      %v3118 = vpop.permute.xlu0 %3117
      %3121 = vset.pattern.permute.xlu0 16
      %3122 = vperm.xlu0 %3121, %v3052
      %v3123 = vpop.permute.xlu0 %3122
      %3126 = vset.pattern.permute.xlu0 16
      %3127 = vperm.xlu0 %3126, %v3053
      %v3128 = vpop.permute.xlu0 %3127
      %3131 = vset.pattern.permute.xlu0 16
      %3132 = vperm.xlu0 %3131, %v3054
      %v3133 = vpop.permute.xlu0 %3132
      %v3135 = vmul.f32 %v2977, %v3058
      %v3136 = vmul.f32 %v2980, %v3063
      %v3137 = vmul.f32 %v2985, %v3068
      %v3138 = vmul.f32 %v2988, %v3073
      %v3139 = vmul.f32 %v2993, %v3078
      %v3140 = vmul.f32 %v2996, %v3083
      %v3141 = vmul.f32 %v3001, %v3088
      %v3142 = vmul.f32 %v3004, %v3093
      %v3143 = vmul.f32 %v3009, %v3098
      %v3144 = vmul.f32 %v3012, %v3103
      %v3145 = vmul.f32 %v3017, %v3108
      %v3146 = vmul.f32 %v3020, %v3113
      %v3147 = vmul.f32 %v3025, %v3118
      %v3148 = vmul.f32 %v3028, %v3123
      %v3149 = vmul.f32 %v3033, %v3128
      %v3150 = vmul.f32 %v3036, %v3133
      %3151 = vset.pattern.permute.xlu0 4
      %3152 = vperm.xlu0 %3151, %v390
      %v3153 = vpop.permute.xlu0 %3152
      %3155 = vset.pattern.permute.xlu0 4
      %3156 = vperm.xlu0 %3155, %v391
      %v3157 = vpop.permute.xlu0 %3156
      %3159 = vset.pattern.permute.xlu0 4
      %3160 = vperm.xlu0 %3159, %v392
      %v3161 = vpop.permute.xlu0 %3160
      %3163 = vset.pattern.permute.xlu0 4
      %3164 = vperm.xlu0 %3163, %v393
      %v3165 = vpop.permute.xlu0 %3164
      %3167 = vset.pattern.permute.xlu0 4
      %3168 = vperm.xlu0 %3167, %v394
      %v3169 = vpop.permute.xlu0 %3168
      %3171 = vset.pattern.permute.xlu0 4
      %3172 = vperm.xlu0 %3171, %v395
      %v3173 = vpop.permute.xlu0 %3172
      %3175 = vset.pattern.permute.xlu0 4
      %3176 = vperm.xlu0 %3175, %v396
      %v3177 = vpop.permute.xlu0 %3176
      %3179 = vset.pattern.permute.xlu0 4
      %3180 = vperm.xlu0 %3179, %v397
      %v3181 = vpop.permute.xlu0 %3180
      %3183 = vset.pattern.permute.xlu0 4
      %3184 = vperm.xlu0 %3183, %v398
      %v3185 = vpop.permute.xlu0 %3184
      %3187 = vset.pattern.permute.xlu0 4
      %3188 = vperm.xlu0 %3187, %v399
      %v3189 = vpop.permute.xlu0 %3188
      %3191 = vset.pattern.permute.xlu0 4
      %3192 = vperm.xlu0 %3191, %v400
      %v3193 = vpop.permute.xlu0 %3192
      %3195 = vset.pattern.permute.xlu0 4
      %3196 = vperm.xlu0 %3195, %v401
      %v3197 = vpop.permute.xlu0 %3196
      %3199 = vset.pattern.permute.xlu0 4
      %3200 = vperm.xlu0 %3199, %v402
      %v3201 = vpop.permute.xlu0 %3200
      %3203 = vset.pattern.permute.xlu0 4
      %3204 = vperm.xlu0 %3203, %v403
      %v3205 = vpop.permute.xlu0 %3204
      %3207 = vset.pattern.permute.xlu0 4
      %3208 = vperm.xlu0 %3207, %v404
      %v3209 = vpop.permute.xlu0 %3208
      %3211 = vset.pattern.permute.xlu0 4
      %3212 = vperm.xlu0 %3211, %v405
      %v3213 = vpop.permute.xlu0 %3212
      %v3215 = vlaneseq
      %v3216 = vshrl.u32 %v3215, 7
      %v3217 = vsub.s32 4, %v3216
      %v3218 = vrot.slane %v406, %v3217
      %v3219 = vlaneseq
      %v3220 = vshrl.u32 %v3219, 7
      %v3221 = vsub.s32 4, %v3220
      %v3222 = vrot.slane %v407, %v3221
      %v3223 = vadd.f32 %v3153, %v3218
      %v3224 = vadd.f32 %v3153, %v3222
      %v3225 = vadd.f32 %v3157, %v3218
      %v3226 = vadd.f32 %v3157, %v3222
      %v3227 = vadd.f32 %v3161, %v3218
      %v3228 = vadd.f32 %v3161, %v3222
      %v3229 = vadd.f32 %v3165, %v3218
      %v3230 = vadd.f32 %v3165, %v3222
      %v3231 = vadd.f32 %v3169, %v3218
      %v3232 = vadd.f32 %v3169, %v3222
      %v3233 = vadd.f32 %v3173, %v3218
      %v3234 = vadd.f32 %v3173, %v3222
      %v3235 = vadd.f32 %v3177, %v3218
      %v3236 = vadd.f32 %v3177, %v3222
      %v3237 = vadd.f32 %v3181, %v3218
      %v3238 = vadd.f32 %v3181, %v3222
      %v3239 = vadd.f32 %v3185, %v3218
      %v3240 = vadd.f32 %v3185, %v3222
      %v3241 = vadd.f32 %v3189, %v3218
      %v3242 = vadd.f32 %v3189, %v3222
      %v3243 = vadd.f32 %v3193, %v3218
      %v3244 = vadd.f32 %v3193, %v3222
      %v3245 = vadd.f32 %v3197, %v3218
      %v3246 = vadd.f32 %v3197, %v3222
      %v3247 = vadd.f32 %v3201, %v3218
      %v3248 = vadd.f32 %v3201, %v3222
      %v3249 = vadd.f32 %v3205, %v3218
      %v3250 = vadd.f32 %v3205, %v3222
      %v3251 = vadd.f32 %v3209, %v3218
      %v3252 = vadd.f32 %v3209, %v3222
      %v3253 = vadd.f32 %v3213, %v3218
      %v3254 = vadd.f32 %v3213, %v3222
      %v3255 = vmul.f32 %v3223, 0.2
      %v3256 = vmul.f32 %v3224, 0.2
      %v3257 = vmul.f32 %v3225, 0.2
      %v3258 = vmul.f32 %v3226, 0.2
      %v3259 = vmul.f32 %v3227, 0.2
      %v3260 = vmul.f32 %v3228, 0.2
      %v3261 = vmul.f32 %v3229, 0.2
      %v3262 = vmul.f32 %v3230, 0.2
      %v3263 = vmul.f32 %v3231, 0.2
      %v3264 = vmul.f32 %v3232, 0.2
      %v3265 = vmul.f32 %v3233, 0.2
      %v3266 = vmul.f32 %v3234, 0.2
      %v3267 = vmul.f32 %v3235, 0.2
      %v3268 = vmul.f32 %v3236, 0.2
      %v3269 = vmul.f32 %v3237, 0.2
      %v3270 = vmul.f32 %v3238, 0.2
      %v3271 = vmul.f32 %v3239, 0.2
      %v3272 = vmul.f32 %v3240, 0.2
      %v3273 = vmul.f32 %v3241, 0.2
      %v3274 = vmul.f32 %v3242, 0.2
      %v3275 = vmul.f32 %v3243, 0.2
      %v3276 = vmul.f32 %v3244, 0.2
      %v3277 = vmul.f32 %v3245, 0.2
      %v3278 = vmul.f32 %v3246, 0.2
      %v3279 = vmul.f32 %v3247, 0.2
      %v3280 = vmul.f32 %v3248, 0.2
      %v3281 = vmul.f32 %v3249, 0.2
      %v3282 = vmul.f32 %v3250, 0.2
      %v3283 = vmul.f32 %v3251, 0.2
      %v3284 = vmul.f32 %v3252, 0.2
      %v3285 = vmul.f32 %v3253, 0.2
      %v3286 = vmul.f32 %v3254, 0.2
      %v3287 = vmax.f32 %v3223, %v3255
      %v3288 = vmax.f32 %v3224, %v3256
      %v3289 = vmax.f32 %v3225, %v3257
      %v3290 = vmax.f32 %v3226, %v3258
      %v3291 = vmax.f32 %v3227, %v3259
      %v3292 = vmax.f32 %v3228, %v3260
      %v3293 = vmax.f32 %v3229, %v3261
      %v3294 = vmax.f32 %v3230, %v3262
      %v3295 = vmax.f32 %v3231, %v3263
      %v3296 = vmax.f32 %v3232, %v3264
      %v3297 = vmax.f32 %v3233, %v3265
      %v3298 = vmax.f32 %v3234, %v3266
      %v3299 = vmax.f32 %v3235, %v3267
      %v3300 = vmax.f32 %v3236, %v3268
      %v3301 = vmax.f32 %v3237, %v3269
      %v3302 = vmax.f32 %v3238, %v3270
      %v3303 = vmax.f32 %v3239, %v3271
      %v3304 = vmax.f32 %v3240, %v3272
      %v3305 = vmax.f32 %v3241, %v3273
      %v3306 = vmax.f32 %v3242, %v3274
      %v3307 = vmax.f32 %v3243, %v3275
      %v3308 = vmax.f32 %v3244, %v3276
      %v3309 = vmax.f32 %v3245, %v3277
      %v3310 = vmax.f32 %v3246, %v3278
      %v3311 = vmax.f32 %v3247, %v3279
      %v3312 = vmax.f32 %v3248, %v3280
      %v3313 = vmax.f32 %v3249, %v3281
      %v3314 = vmax.f32 %v3250, %v3282
      %v3315 = vmax.f32 %v3251, %v3283
      %v3316 = vmax.f32 %v3252, %v3284
      %v3317 = vmax.f32 %v3253, %v3285
      %v3318 = vmax.f32 %v3254, %v3286
      %v3319 = vadd.f32 %v3287, %v358
      %v3320 = vadd.f32 %v3288, %v359
      %v3321 = vadd.f32 %v3289, %v360
      %v3322 = vadd.f32 %v3290, %v361
      %v3323 = vadd.f32 %v3291, %v362
      %v3324 = vadd.f32 %v3292, %v363
      %v3325 = vadd.f32 %v3293, %v364
      %v3326 = vadd.f32 %v3294, %v365
      %v3327 = vadd.f32 %v3295, %v366
      %v3328 = vadd.f32 %v3296, %v367
      %v3329 = vadd.f32 %v3297, %v368
      %v3330 = vadd.f32 %v3298, %v369
      %v3331 = vadd.f32 %v3299, %v370
      %v3332 = vadd.f32 %v3300, %v371
      %v3333 = vadd.f32 %v3301, %v372
      %v3334 = vadd.f32 %v3302, %v373
      %v3335 = vadd.f32 %v3303, %v374
      %v3336 = vadd.f32 %v3304, %v375
      %v3337 = vadd.f32 %v3305, %v376
      %v3338 = vadd.f32 %v3306, %v377
      %v3339 = vadd.f32 %v3307, %v378
      %v3340 = vadd.f32 %v3308, %v379
      %v3341 = vadd.f32 %v3309, %v380
      %v3342 = vadd.f32 %v3310, %v381
      %v3343 = vadd.f32 %v3311, %v382
      %v3344 = vadd.f32 %v3312, %v383
      %v3345 = vadd.f32 %v3313, %v384
      %v3346 = vadd.f32 %v3314, %v385
      %v3347 = vadd.f32 %v3315, %v386
      %v3348 = vadd.f32 %v3316, %v387
      %v3349 = vadd.f32 %v3317, %v388
      %v3350 = vadd.f32 %v3318, %v389
      %v3351 = vmax.f32 %v3319, %v3320
      %3352 = vmax.xlane.f32.xlu0 %v3351
      %v3353 = vpop.xlane.xlu0 %3352
      %v3354 = vmax.f32 %v3321, %v3322
      %3355 = vmax.xlane.f32.xlu0 %v3354
      %v3356 = vpop.xlane.xlu0 %3355
      %v3357 = vmax.f32 %v3323, %v3324
      %3358 = vmax.xlane.f32.xlu0 %v3357
      %v3359 = vpop.xlane.xlu0 %3358
      %v3360 = vmax.f32 %v3325, %v3326
      %3361 = vmax.xlane.f32.xlu0 %v3360
      %v3362 = vpop.xlane.xlu0 %3361
      %v3363 = vmax.f32 %v3327, %v3328
      %3364 = vmax.xlane.f32.xlu0 %v3363
      %v3365 = vpop.xlane.xlu0 %3364
      %v3366 = vmax.f32 %v3329, %v3330
      %3367 = vmax.xlane.f32.xlu0 %v3366
      %v3368 = vpop.xlane.xlu0 %3367
      %v3369 = vmax.f32 %v3331, %v3332
      %3370 = vmax.xlane.f32.xlu0 %v3369
      %v3371 = vpop.xlane.xlu0 %3370
      %v3372 = vmax.f32 %v3333, %v3334
      %3373 = vmax.xlane.f32.xlu0 %v3372
      %v3374 = vpop.xlane.xlu0 %3373
      %v3375 = vmax.f32 %v3335, %v3336
      %3376 = vmax.xlane.f32.xlu0 %v3375
      %v3377 = vpop.xlane.xlu0 %3376
      %v3378 = vmax.f32 %v3337, %v3338
      %3379 = vmax.xlane.f32.xlu0 %v3378
      %v3380 = vpop.xlane.xlu0 %3379
      %v3381 = vmax.f32 %v3339, %v3340
      %3382 = vmax.xlane.f32.xlu0 %v3381
      %v3383 = vpop.xlane.xlu0 %3382
      %v3384 = vmax.f32 %v3341, %v3342
      %3385 = vmax.xlane.f32.xlu0 %v3384
      %v3386 = vpop.xlane.xlu0 %3385
      %v3387 = vmax.f32 %v3343, %v3344
      %3388 = vmax.xlane.f32.xlu0 %v3387
      %v3389 = vpop.xlane.xlu0 %3388
      %v3390 = vmax.f32 %v3345, %v3346
      %3391 = vmax.xlane.f32.xlu0 %v3390
      %v3392 = vpop.xlane.xlu0 %3391
      %v3393 = vmax.f32 %v3347, %v3348
      %3394 = vmax.xlane.f32.xlu0 %v3393
      %v3395 = vpop.xlane.xlu0 %3394
      %v3396 = vmax.f32 %v3349, %v3350
      %3397 = vmax.xlane.f32.xlu0 %v3396
      %v3398 = vpop.xlane.xlu0 %3397
      %v3399 = vsub.f32 %v3319, %v3353
      %v3400 = vsub.f32 %v3320, %v3353
      %v3401 = vsub.f32 %v3321, %v3356
      %v3402 = vsub.f32 %v3322, %v3356
      %v3403 = vsub.f32 %v3323, %v3359
      %v3404 = vsub.f32 %v3324, %v3359
      %v3405 = vsub.f32 %v3325, %v3362
      %v3406 = vsub.f32 %v3326, %v3362
      %v3407 = vsub.f32 %v3327, %v3365
      %v3408 = vsub.f32 %v3328, %v3365
      %v3409 = vsub.f32 %v3329, %v3368
      %v3410 = vsub.f32 %v3330, %v3368
      %v3411 = vsub.f32 %v3331, %v3371
      %v3412 = vsub.f32 %v3332, %v3371
      %v3413 = vsub.f32 %v3333, %v3374
      %v3414 = vsub.f32 %v3334, %v3374
      %v3415 = vsub.f32 %v3335, %v3377
      %v3416 = vsub.f32 %v3336, %v3377
      %v3417 = vsub.f32 %v3337, %v3380
      %v3418 = vsub.f32 %v3338, %v3380
      %v3419 = vsub.f32 %v3339, %v3383
      %v3420 = vsub.f32 %v3340, %v3383
      %v3421 = vsub.f32 %v3341, %v3386
      %v3422 = vsub.f32 %v3342, %v3386
      %v3423 = vsub.f32 %v3343, %v3389
      %v3424 = vsub.f32 %v3344, %v3389
      %v3425 = vsub.f32 %v3345, %v3392
      %v3426 = vsub.f32 %v3346, %v3392
      %v3427 = vsub.f32 %v3347, %v3395
      %v3428 = vsub.f32 %v3348, %v3395
      %v3429 = vsub.f32 %v3349, %v3398
      %v3430 = vsub.f32 %v3350, %v3398
      %v3431 = vpack.c.bf16 %v3401, %v3399
      %v3432 = vpack.c.bf16 %v3402, %v3400
      %v3433 = vpack.c.bf16 %v3405, %v3403
      %v3434 = vpack.c.bf16 %v3406, %v3404
      %v3435 = vpack.c.bf16 %v3409, %v3407
      %v3436 = vpack.c.bf16 %v3410, %v3408
      %v3437 = vpack.c.bf16 %v3413, %v3411
      %v3438 = vpack.c.bf16 %v3414, %v3412
      %v3439 = vpack.c.bf16 %v3417, %v3415
      %v3440 = vpack.c.bf16 %v3418, %v3416
      %v3441 = vpack.c.bf16 %v3421, %v3419
      %v3442 = vpack.c.bf16 %v3422, %v3420
      %v3443 = vpack.c.bf16 %v3425, %v3423
      %v3444 = vpack.c.bf16 %v3426, %v3424
      %v3445 = vpack.c.bf16 %v3429, %v3427
      %v3446 = vpack.c.bf16 %v3430, %v3428
      %v3448 = vmul.bf16 %v3431, 1069105081
      %v3449 = vpow.bf16.pop %v3448
      %v3451 = vmul.bf16 %v3432, 1069105081
      %v3452 = vpow.bf16.pop %v3451
      %v3454 = vmul.bf16 %v3433, 1069105081
      %v3455 = vpow.bf16.pop %v3454
      %v3457 = vmul.bf16 %v3434, 1069105081
      %v3458 = vpow.bf16.pop %v3457
      %v3460 = vmul.bf16 %v3435, 1069105081
      %v3461 = vpow.bf16.pop %v3460
      %v3463 = vmul.bf16 %v3436, 1069105081
      %v3464 = vpow.bf16.pop %v3463
      %v3466 = vmul.bf16 %v3437, 1069105081
      %v3467 = vpow.bf16.pop %v3466
      %v3469 = vmul.bf16 %v3438, 1069105081
      %v3470 = vpow.bf16.pop %v3469
      %v3472 = vmul.bf16 %v3439, 1069105081
      %v3473 = vpow.bf16.pop %v3472
      %v3475 = vmul.bf16 %v3440, 1069105081
      %v3476 = vpow.bf16.pop %v3475
      %v3478 = vmul.bf16 %v3441, 1069105081
      %v3479 = vpow.bf16.pop %v3478
      %v3481 = vmul.bf16 %v3442, 1069105081
      %v3482 = vpow.bf16.pop %v3481
      %v3484 = vmul.bf16 %v3443, 1069105081
      %v3485 = vpow.bf16.pop %v3484
      %v3487 = vmul.bf16 %v3444, 1069105081
      %v3488 = vpow.bf16.pop %v3487
      %v3490 = vmul.bf16 %v3445, 1069105081
      %v3491 = vpow.bf16.pop %v3490
      %v3493 = vmul.bf16 %v3446, 1069105081
      %v3494 = vpow.bf16.pop %v3493
      %s3495 = scalar_lea.vmem %s3, 512
      %v3496 = vld [vmem:[%s3495] sm:$0xf]
      %v3497 = vld [vmem:[%s3495 + $0x4] sm:$0xf]
      %v3498 = vld [vmem:[%s3495 + $0x8] sm:$0xf]
      %v3499 = vld [vmem:[%s3495 + $0xc] sm:$0xf]
      %v3500 = vld [vmem:[%s3495 + $0x10] sm:$0xf]
      %v3501 = vld [vmem:[%s3495 + $0x14] sm:$0xf]
      %v3502 = vld [vmem:[%s3495 + $0x18] sm:$0xf]
      %v3503 = vld [vmem:[%s3495 + $0x1c] sm:$0xf]
      %v3504 = vld [vmem:[%s3495 + $0x20] sm:$0xf]
      %v3505 = vld [vmem:[%s3495 + $0x24] sm:$0xf]
      %v3506 = vld [vmem:[%s3495 + $0x28] sm:$0xf]
      %v3507 = vld [vmem:[%s3495 + $0x2c] sm:$0xf]
      %v3508 = vld [vmem:[%s3495 + $0x30] sm:$0xf]
      %v3509 = vld [vmem:[%s3495 + $0x34] sm:$0xf]
      %v3510 = vld [vmem:[%s3495 + $0x38] sm:$0xf]
      %v3511 = vld [vmem:[%s3495 + $0x3c] sm:$0xf]
      %v3512 = vld [vmem:[%s3495 + $0x40] sm:$0xf]
      %v3513 = vld [vmem:[%s3495 + $0x44] sm:$0xf]
      %v3514 = vld [vmem:[%s3495 + $0x48] sm:$0xf]
      %v3515 = vld [vmem:[%s3495 + $0x4c] sm:$0xf]
      %v3516 = vld [vmem:[%s3495 + $0x50] sm:$0xf]
      %v3517 = vld [vmem:[%s3495 + $0x54] sm:$0xf]
      %v3518 = vld [vmem:[%s3495 + $0x58] sm:$0xf]
      %v3519 = vld [vmem:[%s3495 + $0x5c] sm:$0xf]
      %v3520 = vld [vmem:[%s3495 + $0x60] sm:$0xf]
      %v3521 = vld [vmem:[%s3495 + $0x64] sm:$0xf]
      %v3522 = vld [vmem:[%s3495 + $0x68] sm:$0xf]
      %v3523 = vld [vmem:[%s3495 + $0x6c] sm:$0xf]
      %v3524 = vld [vmem:[%s3495 + $0x70] sm:$0xf]
      %v3525 = vld [vmem:[%s3495 + $0x74] sm:$0xf]
      %v3526 = vld [vmem:[%s3495 + $0x78] sm:$0xf]
      %v3527 = vld [vmem:[%s3495 + $0x7c] sm:$0xf]
      %v3560 = vunpack.c.l.b16 %v3496
      %v3561 = vunpack.c.l.b16 %v3497
      %v3562 = vunpack.c.l.b16 %v3498
      %v3563 = vunpack.c.l.b16 %v3499
      %v3564 = vunpack.c.l.b16 %v3500
      %v3565 = vunpack.c.l.b16 %v3501
      %v3566 = vunpack.c.l.b16 %v3502
      %v3567 = vunpack.c.l.b16 %v3503
      %v3568 = vunpack.c.l.b16 %v3504
      %v3569 = vunpack.c.l.b16 %v3505
      %v3570 = vunpack.c.l.b16 %v3506
      %v3571 = vunpack.c.l.b16 %v3507
      %v3572 = vunpack.c.l.b16 %v3508
      %v3573 = vunpack.c.l.b16 %v3509
      %v3574 = vunpack.c.l.b16 %v3510
      %v3575 = vunpack.c.l.b16 %v3511
      %v3576 = vunpack.c.l.b16 %v3512
      %v3577 = vunpack.c.l.b16 %v3513
      %v3578 = vunpack.c.l.b16 %v3514
      %v3579 = vunpack.c.l.b16 %v3515
      %v3580 = vunpack.c.l.b16 %v3516
      %v3581 = vunpack.c.l.b16 %v3517
      %v3582 = vunpack.c.l.b16 %v3518
      %v3583 = vunpack.c.l.b16 %v3519
      %v3584 = vunpack.c.l.b16 %v3520
      %v3585 = vunpack.c.l.b16 %v3521
      %v3586 = vunpack.c.l.b16 %v3522
      %v3587 = vunpack.c.l.b16 %v3523
      %v3588 = vunpack.c.l.b16 %v3524
      %v3589 = vunpack.c.l.b16 %v3525
      %v3590 = vunpack.c.l.b16 %v3526
      %v3591 = vunpack.c.l.b16 %v3527
      %v3592 = vpack.c.b16 %v3561, %v3560
      %v3593 = vpack.c.b16 %v3563, %v3562
      %v3594 = vpack.c.b16 %v3565, %v3564
      %v3595 = vpack.c.b16 %v3567, %v3566
      %v3596 = vpack.c.b16 %v3569, %v3568
      %v3597 = vpack.c.b16 %v3571, %v3570
      %v3598 = vpack.c.b16 %v3573, %v3572
      %v3599 = vpack.c.b16 %v3575, %v3574
      %v3600 = vpack.c.b16 %v3577, %v3576
      %v3601 = vpack.c.b16 %v3579, %v3578
      %v3602 = vpack.c.b16 %v3581, %v3580
      %v3603 = vpack.c.b16 %v3583, %v3582
      %v3604 = vpack.c.b16 %v3585, %v3584
      %v3605 = vpack.c.b16 %v3587, %v3586
      %v3606 = vpack.c.b16 %v3589, %v3588
      %v3607 = vpack.c.b16 %v3591, %v3590
      %3624 = vmatprep.subr.bf16.mxu0 0
      %3625 = vmatpush1.bf16.msra.mxu0 %v3592
      %3626 = vmatprep.subr.bf16.mxu0 0
      %3627 = vmatpush1.bf16.msra.mxu0 %v3593
      %3628 = vmatprep.subr.bf16.mxu0 0
      %3629 = vmatpush1.bf16.msra.mxu0 %v3594
      %3630 = vmatprep.subr.bf16.mxu0 0
      %3631 = vmatpush1.bf16.msra.mxu0 %v3595
      %3632 = vmatprep.subr.bf16.mxu0 0
      %3633 = vmatpush1.bf16.msra.mxu0 %v3596
      %3634 = vmatprep.subr.bf16.mxu0 0
      %3635 = vmatpush1.bf16.msra.mxu0 %v3597
      %3636 = vmatprep.subr.bf16.mxu0 0
      %3637 = vmatpush1.bf16.msra.mxu0 %v3598
      %3638 = vmatprep.subr.bf16.mxu0 0
      %3639 = vmatpush1.bf16.msra.mxu0 %v3599
      %3640 = vmatprep.subr.bf16.mxu0 0
      %3641 = vmatpush1.bf16.msra.mxu0 %v3600
      %3642 = vmatprep.subr.bf16.mxu0 0
      %3643 = vmatpush1.bf16.msra.mxu0 %v3601
      %3644 = vmatprep.subr.bf16.mxu0 0
      %3645 = vmatpush1.bf16.msra.mxu0 %v3602
      %3646 = vmatprep.subr.bf16.mxu0 0
      %3647 = vmatpush1.bf16.msra.mxu0 %v3603
      %3648 = vmatprep.subr.bf16.mxu0 0
      %3649 = vmatpush1.bf16.msra.mxu0 %v3604
      %3650 = vmatprep.subr.bf16.mxu0 0
      %3651 = vmatpush1.bf16.msra.mxu0 %v3605
      %3652 = vmatprep.subr.bf16.mxu0 0
      %3653 = vmatpush1.bf16.msra.mxu0 %v3606
      %3654 = vmatprep.subr.bf16.mxu0 0
      %3655 = vmatpush1.bf16.msra.mxu0 %v3607
      %3656 = vmatprep.mubr.bf16.mxu0 %v3452
      %3657 = vmatmul.mubr.bf16.gmra.mrb[0].mxu0 %v3449
      %v3658 = vpop.f32.mrb[0].mxu0
      %v3659 = vadd.f32 0.0, %v3658
      %v3660 = vpop.f32.mrb[0].mxu0
      %v3661 = vpop.f32.mrb[0].mxu0
      %v3662 = vadd.f32 0.0, %v3661
      %v3663 = vpop.f32.mrb[0].mxu0
      %3664 = vmatprep.mubr.bf16.mxu0 %v3458
      %3665 = vmatmul.mubr.bf16.gmra.mrb[0].mxu0 %v3455
      %v3666 = vpop.f32.mrb[0].mxu0
      %v3667 = vadd.f32 0.0, %v3666
      %v3668 = vpop.f32.mrb[0].mxu0
      %v3669 = vpop.f32.mrb[0].mxu0
      %v3670 = vadd.f32 0.0, %v3669
      %v3671 = vpop.f32.mrb[0].mxu0
      %3672 = vmatprep.mubr.bf16.mxu0 %v3464
      %3673 = vmatmul.mubr.bf16.gmra.mrb[0].mxu0 %v3461
      %v3674 = vpop.f32.mrb[0].mxu0
      %v3675 = vadd.f32 0.0, %v3674
      %v3676 = vpop.f32.mrb[0].mxu0
      %v3677 = vpop.f32.mrb[0].mxu0
      %v3678 = vadd.f32 0.0, %v3677
      %v3679 = vpop.f32.mrb[0].mxu0
      %3680 = vmatprep.mubr.bf16.mxu0 %v3470
      %3681 = vmatmul.mubr.bf16.gmra.mrb[0].mxu0 %v3467
      %v3682 = vpop.f32.mrb[0].mxu0
      %v3683 = vadd.f32 0.0, %v3682
      %v3684 = vpop.f32.mrb[0].mxu0
      %v3685 = vpop.f32.mrb[0].mxu0
      %v3686 = vadd.f32 0.0, %v3685
      %v3687 = vpop.f32.mrb[0].mxu0
      %3688 = vmatprep.mubr.bf16.mxu0 %v3476
      %3689 = vmatmul.mubr.bf16.gmra.mrb[0].mxu0 %v3473
      %v3690 = vpop.f32.mrb[0].mxu0
      %v3691 = vadd.f32 0.0, %v3690
      %v3692 = vpop.f32.mrb[0].mxu0
      %v3693 = vpop.f32.mrb[0].mxu0
      %v3694 = vadd.f32 0.0, %v3693
      %v3695 = vpop.f32.mrb[0].mxu0
      %3696 = vmatprep.mubr.bf16.mxu0 %v3482
      %3697 = vmatmul.mubr.bf16.gmra.mrb[0].mxu0 %v3479
      %v3698 = vpop.f32.mrb[0].mxu0
      %v3699 = vadd.f32 0.0, %v3698
      %v3700 = vpop.f32.mrb[0].mxu0
      %v3701 = vpop.f32.mrb[0].mxu0
      %v3702 = vadd.f32 0.0, %v3701
      %v3703 = vpop.f32.mrb[0].mxu0
      %3704 = vmatprep.mubr.bf16.mxu0 %v3488
      %3705 = vmatmul.mubr.bf16.gmra.mrb[0].mxu0 %v3485
      %v3706 = vpop.f32.mrb[0].mxu0
      %v3707 = vadd.f32 0.0, %v3706
      %v3708 = vpop.f32.mrb[0].mxu0
      %v3709 = vpop.f32.mrb[0].mxu0
      %v3710 = vadd.f32 0.0, %v3709
      %v3711 = vpop.f32.mrb[0].mxu0
      %3712 = vmatprep.mubr.bf16.mxu0 %v3494
      %3713 = vmatmul.mubr.bf16.gmra.mrb[0].mxu0 %v3491
      %v3714 = vpop.f32.mrb[0].mxu0
      %v3715 = vadd.f32 0.0, %v3714
      %v3716 = vpop.f32.mrb[0].mxu0
      %v3717 = vpop.f32.mrb[0].mxu0
      %v3718 = vadd.f32 0.0, %v3717
      %v3719 = vpop.f32.mrb[0].mxu0
      %3720 = vdwg.mxu0
      %v3721 = vrcp.pop %v3659
      %v3722 = vrcp.pop %v3662
      %v3723 = vrcp.pop %v3667
      %v3724 = vrcp.pop %v3670
      %v3725 = vrcp.pop %v3675
      %v3726 = vrcp.pop %v3678
      %v3727 = vrcp.pop %v3683
      %v3728 = vrcp.pop %v3686
      %v3729 = vrcp.pop %v3691
      %v3730 = vrcp.pop %v3694
      %v3731 = vrcp.pop %v3699
      %v3732 = vrcp.pop %v3702
      %v3733 = vrcp.pop %v3707
      %v3734 = vrcp.pop %v3710
      %v3735 = vrcp.pop %v3715
      %v3736 = vrcp.pop %v3718
      %3738 = vset.pattern.permute.xlu0 16
      %3739 = vperm.xlu0 %3738, %v3721
      %v3740 = vpop.permute.xlu0 %3739
      %3743 = vset.pattern.permute.xlu0 16
      %3744 = vperm.xlu0 %3743, %v3722
      %v3745 = vpop.permute.xlu0 %3744
      %3748 = vset.pattern.permute.xlu0 16
      %3749 = vperm.xlu0 %3748, %v3723
      %v3750 = vpop.permute.xlu0 %3749
      %3753 = vset.pattern.permute.xlu0 16
      %3754 = vperm.xlu0 %3753, %v3724
      %v3755 = vpop.permute.xlu0 %3754
      %3758 = vset.pattern.permute.xlu0 16
      %3759 = vperm.xlu0 %3758, %v3725
      %v3760 = vpop.permute.xlu0 %3759
      %3763 = vset.pattern.permute.xlu0 16
      %3764 = vperm.xlu0 %3763, %v3726
      %v3765 = vpop.permute.xlu0 %3764
      %3768 = vset.pattern.permute.xlu0 16
      %3769 = vperm.xlu0 %3768, %v3727
      %v3770 = vpop.permute.xlu0 %3769
      %3773 = vset.pattern.permute.xlu0 16
      %3774 = vperm.xlu0 %3773, %v3728
      %v3775 = vpop.permute.xlu0 %3774
      %3778 = vset.pattern.permute.xlu0 16
      %3779 = vperm.xlu0 %3778, %v3729
      %v3780 = vpop.permute.xlu0 %3779
      %3783 = vset.pattern.permute.xlu0 16
      %3784 = vperm.xlu0 %3783, %v3730
      %v3785 = vpop.permute.xlu0 %3784
      %3788 = vset.pattern.permute.xlu0 16
      %3789 = vperm.xlu0 %3788, %v3731
      %v3790 = vpop.permute.xlu0 %3789
      %3793 = vset.pattern.permute.xlu0 16
      %3794 = vperm.xlu0 %3793, %v3732
      %v3795 = vpop.permute.xlu0 %3794
      %3798 = vset.pattern.permute.xlu0 16
      %3799 = vperm.xlu0 %3798, %v3733
      %v3800 = vpop.permute.xlu0 %3799
      %3803 = vset.pattern.permute.xlu0 16
      %3804 = vperm.xlu0 %3803, %v3734
      %v3805 = vpop.permute.xlu0 %3804
      %3808 = vset.pattern.permute.xlu0 16
      %3809 = vperm.xlu0 %3808, %v3735
      %v3810 = vpop.permute.xlu0 %3809
      %3813 = vset.pattern.permute.xlu0 16
      %3814 = vperm.xlu0 %3813, %v3736
      %v3815 = vpop.permute.xlu0 %3814
      %v3817 = vmul.f32 %v3659, %v3740
      %v3818 = vmul.f32 %v3662, %v3745
      %v3819 = vmul.f32 %v3667, %v3750
      %v3820 = vmul.f32 %v3670, %v3755
      %v3821 = vmul.f32 %v3675, %v3760
      %v3822 = vmul.f32 %v3678, %v3765
      %v3823 = vmul.f32 %v3683, %v3770
      %v3824 = vmul.f32 %v3686, %v3775
      %v3825 = vmul.f32 %v3691, %v3780
      %v3826 = vmul.f32 %v3694, %v3785
      %v3827 = vmul.f32 %v3699, %v3790
      %v3828 = vmul.f32 %v3702, %v3795
      %v3829 = vmul.f32 %v3707, %v3800
      %v3830 = vmul.f32 %v3710, %v3805
      %v3831 = vmul.f32 %v3715, %v3810
      %v3832 = vmul.f32 %v3718, %v3815
      %3833 = vset.pattern.permute.xlu0 5
      %3834 = vperm.xlu0 %3833, %v390
      %v3835 = vpop.permute.xlu0 %3834
      %3837 = vset.pattern.permute.xlu0 5
      %3838 = vperm.xlu0 %3837, %v391
      %v3839 = vpop.permute.xlu0 %3838
      %3841 = vset.pattern.permute.xlu0 5
      %3842 = vperm.xlu0 %3841, %v392
      %v3843 = vpop.permute.xlu0 %3842
      %3845 = vset.pattern.permute.xlu0 5
      %3846 = vperm.xlu0 %3845, %v393
      %v3847 = vpop.permute.xlu0 %3846
      %3849 = vset.pattern.permute.xlu0 5
      %3850 = vperm.xlu0 %3849, %v394
      %v3851 = vpop.permute.xlu0 %3850
      %3853 = vset.pattern.permute.xlu0 5
      %3854 = vperm.xlu0 %3853, %v395
      %v3855 = vpop.permute.xlu0 %3854
      %3857 = vset.pattern.permute.xlu0 5
      %3858 = vperm.xlu0 %3857, %v396
      %v3859 = vpop.permute.xlu0 %3858
      %3861 = vset.pattern.permute.xlu0 5
      %3862 = vperm.xlu0 %3861, %v397
      %v3863 = vpop.permute.xlu0 %3862
      %3865 = vset.pattern.permute.xlu0 5
      %3866 = vperm.xlu0 %3865, %v398
      %v3867 = vpop.permute.xlu0 %3866
      %3869 = vset.pattern.permute.xlu0 5
      %3870 = vperm.xlu0 %3869, %v399
      %v3871 = vpop.permute.xlu0 %3870
      %3873 = vset.pattern.permute.xlu0 5
      %3874 = vperm.xlu0 %3873, %v400
      %v3875 = vpop.permute.xlu0 %3874
      %3877 = vset.pattern.permute.xlu0 5
      %3878 = vperm.xlu0 %3877, %v401
      %v3879 = vpop.permute.xlu0 %3878
      %3881 = vset.pattern.permute.xlu0 5
      %3882 = vperm.xlu0 %3881, %v402
      %v3883 = vpop.permute.xlu0 %3882
      %3885 = vset.pattern.permute.xlu0 5
      %3886 = vperm.xlu0 %3885, %v403
      %v3887 = vpop.permute.xlu0 %3886
      %3889 = vset.pattern.permute.xlu0 5
      %3890 = vperm.xlu0 %3889, %v404
      %v3891 = vpop.permute.xlu0 %3890
      %3893 = vset.pattern.permute.xlu0 5
      %3894 = vperm.xlu0 %3893, %v405
      %v3895 = vpop.permute.xlu0 %3894
      %v3897 = vlaneseq
      %v3898 = vshrl.u32 %v3897, 7
      %v3899 = vsub.s32 5, %v3898
      %v3900 = vrot.slane %v406, %v3899
      %v3901 = vlaneseq
      %v3902 = vshrl.u32 %v3901, 7
      %v3903 = vsub.s32 5, %v3902
      %v3904 = vrot.slane %v407, %v3903
      %v3905 = vadd.f32 %v3835, %v3900
      %v3906 = vadd.f32 %v3835, %v3904
      %v3907 = vadd.f32 %v3839, %v3900
      %v3908 = vadd.f32 %v3839, %v3904
      %v3909 = vadd.f32 %v3843, %v3900
      %v3910 = vadd.f32 %v3843, %v3904
      %v3911 = vadd.f32 %v3847, %v3900
      %v3912 = vadd.f32 %v3847, %v3904
      %v3913 = vadd.f32 %v3851, %v3900
      %v3914 = vadd.f32 %v3851, %v3904
      %v3915 = vadd.f32 %v3855, %v3900
      %v3916 = vadd.f32 %v3855, %v3904
      %v3917 = vadd.f32 %v3859, %v3900
      %v3918 = vadd.f32 %v3859, %v3904
      %v3919 = vadd.f32 %v3863, %v3900
      %v3920 = vadd.f32 %v3863, %v3904
      %v3921 = vadd.f32 %v3867, %v3900
      %v3922 = vadd.f32 %v3867, %v3904
      %v3923 = vadd.f32 %v3871, %v3900
      %v3924 = vadd.f32 %v3871, %v3904
      %v3925 = vadd.f32 %v3875, %v3900
      %v3926 = vadd.f32 %v3875, %v3904
      %v3927 = vadd.f32 %v3879, %v3900
      %v3928 = vadd.f32 %v3879, %v3904
      %v3929 = vadd.f32 %v3883, %v3900
      %v3930 = vadd.f32 %v3883, %v3904
      %v3931 = vadd.f32 %v3887, %v3900
      %v3932 = vadd.f32 %v3887, %v3904
      %v3933 = vadd.f32 %v3891, %v3900
      %v3934 = vadd.f32 %v3891, %v3904
      %v3935 = vadd.f32 %v3895, %v3900
      %v3936 = vadd.f32 %v3895, %v3904
      %v3937 = vmul.f32 %v3905, 0.2
      %v3938 = vmul.f32 %v3906, 0.2
      %v3939 = vmul.f32 %v3907, 0.2
      %v3940 = vmul.f32 %v3908, 0.2
      %v3941 = vmul.f32 %v3909, 0.2
      %v3942 = vmul.f32 %v3910, 0.2
      %v3943 = vmul.f32 %v3911, 0.2
      %v3944 = vmul.f32 %v3912, 0.2
      %v3945 = vmul.f32 %v3913, 0.2
      %v3946 = vmul.f32 %v3914, 0.2
      %v3947 = vmul.f32 %v3915, 0.2
      %v3948 = vmul.f32 %v3916, 0.2
      %v3949 = vmul.f32 %v3917, 0.2
      %v3950 = vmul.f32 %v3918, 0.2
      %v3951 = vmul.f32 %v3919, 0.2
      %v3952 = vmul.f32 %v3920, 0.2
      %v3953 = vmul.f32 %v3921, 0.2
      %v3954 = vmul.f32 %v3922, 0.2
      %v3955 = vmul.f32 %v3923, 0.2
      %v3956 = vmul.f32 %v3924, 0.2
      %v3957 = vmul.f32 %v3925, 0.2
      %v3958 = vmul.f32 %v3926, 0.2
      %v3959 = vmul.f32 %v3927, 0.2
      %v3960 = vmul.f32 %v3928, 0.2
      %v3961 = vmul.f32 %v3929, 0.2
      %v3962 = vmul.f32 %v3930, 0.2
      %v3963 = vmul.f32 %v3931, 0.2
      %v3964 = vmul.f32 %v3932, 0.2
      %v3965 = vmul.f32 %v3933, 0.2
      %v3966 = vmul.f32 %v3934, 0.2
      %v3967 = vmul.f32 %v3935, 0.2
      %v3968 = vmul.f32 %v3936, 0.2
      %v3969 = vmax.f32 %v3905, %v3937
      %v3970 = vmax.f32 %v3906, %v3938
      %v3971 = vmax.f32 %v3907, %v3939
      %v3972 = vmax.f32 %v3908, %v3940
      %v3973 = vmax.f32 %v3909, %v3941
      %v3974 = vmax.f32 %v3910, %v3942
      %v3975 = vmax.f32 %v3911, %v3943
      %v3976 = vmax.f32 %v3912, %v3944
      %v3977 = vmax.f32 %v3913, %v3945
      %v3978 = vmax.f32 %v3914, %v3946
      %v3979 = vmax.f32 %v3915, %v3947
      %v3980 = vmax.f32 %v3916, %v3948
      %v3981 = vmax.f32 %v3917, %v3949
      %v3982 = vmax.f32 %v3918, %v3950
      %v3983 = vmax.f32 %v3919, %v3951
      %v3984 = vmax.f32 %v3920, %v3952
      %v3985 = vmax.f32 %v3921, %v3953
      %v3986 = vmax.f32 %v3922, %v3954
      %v3987 = vmax.f32 %v3923, %v3955
      %v3988 = vmax.f32 %v3924, %v3956
      %v3989 = vmax.f32 %v3925, %v3957
      %v3990 = vmax.f32 %v3926, %v3958
      %v3991 = vmax.f32 %v3927, %v3959
      %v3992 = vmax.f32 %v3928, %v3960
      %v3993 = vmax.f32 %v3929, %v3961
      %v3994 = vmax.f32 %v3930, %v3962
      %v3995 = vmax.f32 %v3931, %v3963
      %v3996 = vmax.f32 %v3932, %v3964
      %v3997 = vmax.f32 %v3933, %v3965
      %v3998 = vmax.f32 %v3934, %v3966
      %v3999 = vmax.f32 %v3935, %v3967
      %v4000 = vmax.f32 %v3936, %v3968
      %v4001 = vadd.f32 %v3969, %v358
      %v4002 = vadd.f32 %v3970, %v359
      %v4003 = vadd.f32 %v3971, %v360
      %v4004 = vadd.f32 %v3972, %v361
      %v4005 = vadd.f32 %v3973, %v362
      %v4006 = vadd.f32 %v3974, %v363
      %v4007 = vadd.f32 %v3975, %v364
      %v4008 = vadd.f32 %v3976, %v365
      %v4009 = vadd.f32 %v3977, %v366
      %v4010 = vadd.f32 %v3978, %v367
      %v4011 = vadd.f32 %v3979, %v368
      %v4012 = vadd.f32 %v3980, %v369
      %v4013 = vadd.f32 %v3981, %v370
      %v4014 = vadd.f32 %v3982, %v371
      %v4015 = vadd.f32 %v3983, %v372
      %v4016 = vadd.f32 %v3984, %v373
      %v4017 = vadd.f32 %v3985, %v374
      %v4018 = vadd.f32 %v3986, %v375
      %v4019 = vadd.f32 %v3987, %v376
      %v4020 = vadd.f32 %v3988, %v377
      %v4021 = vadd.f32 %v3989, %v378
      %v4022 = vadd.f32 %v3990, %v379
      %v4023 = vadd.f32 %v3991, %v380
      %v4024 = vadd.f32 %v3992, %v381
      %v4025 = vadd.f32 %v3993, %v382
      %v4026 = vadd.f32 %v3994, %v383
      %v4027 = vadd.f32 %v3995, %v384
      %v4028 = vadd.f32 %v3996, %v385
      %v4029 = vadd.f32 %v3997, %v386
      %v4030 = vadd.f32 %v3998, %v387
      %v4031 = vadd.f32 %v3999, %v388
      %v4032 = vadd.f32 %v4000, %v389
      %v4033 = vmax.f32 %v4001, %v4002
      %4034 = vmax.xlane.f32.xlu0 %v4033
      %v4035 = vpop.xlane.xlu0 %4034
      %v4036 = vmax.f32 %v4003, %v4004
      %4037 = vmax.xlane.f32.xlu0 %v4036
      %v4038 = vpop.xlane.xlu0 %4037
      %v4039 = vmax.f32 %v4005, %v4006
      %4040 = vmax.xlane.f32.xlu0 %v4039
      %v4041 = vpop.xlane.xlu0 %4040
      %v4042 = vmax.f32 %v4007, %v4008
      %4043 = vmax.xlane.f32.xlu0 %v4042
      %v4044 = vpop.xlane.xlu0 %4043
      %v4045 = vmax.f32 %v4009, %v4010
      %4046 = vmax.xlane.f32.xlu0 %v4045
      %v4047 = vpop.xlane.xlu0 %4046
      %v4048 = vmax.f32 %v4011, %v4012
      %4049 = vmax.xlane.f32.xlu0 %v4048
      %v4050 = vpop.xlane.xlu0 %4049
      %v4051 = vmax.f32 %v4013, %v4014
      %4052 = vmax.xlane.f32.xlu0 %v4051
      %v4053 = vpop.xlane.xlu0 %4052
      %v4054 = vmax.f32 %v4015, %v4016
      %4055 = vmax.xlane.f32.xlu0 %v4054
      %v4056 = vpop.xlane.xlu0 %4055
      %v4057 = vmax.f32 %v4017, %v4018
      %4058 = vmax.xlane.f32.xlu0 %v4057
      %v4059 = vpop.xlane.xlu0 %4058
      %v4060 = vmax.f32 %v4019, %v4020
      %4061 = vmax.xlane.f32.xlu0 %v4060
      %v4062 = vpop.xlane.xlu0 %4061
      %v4063 = vmax.f32 %v4021, %v4022
      %4064 = vmax.xlane.f32.xlu0 %v4063
      %v4065 = vpop.xlane.xlu0 %4064
      %v4066 = vmax.f32 %v4023, %v4024
      %4067 = vmax.xlane.f32.xlu0 %v4066
      %v4068 = vpop.xlane.xlu0 %4067
      %v4069 = vmax.f32 %v4025, %v4026
      %4070 = vmax.xlane.f32.xlu0 %v4069
      %v4071 = vpop.xlane.xlu0 %4070
      %v4072 = vmax.f32 %v4027, %v4028
      %4073 = vmax.xlane.f32.xlu0 %v4072
      %v4074 = vpop.xlane.xlu0 %4073
      %v4075 = vmax.f32 %v4029, %v4030
      %4076 = vmax.xlane.f32.xlu0 %v4075
      %v4077 = vpop.xlane.xlu0 %4076
      %v4078 = vmax.f32 %v4031, %v4032
      %4079 = vmax.xlane.f32.xlu0 %v4078
      %v4080 = vpop.xlane.xlu0 %4079
      %v4081 = vsub.f32 %v4001, %v4035
      %v4082 = vsub.f32 %v4002, %v4035
      %v4083 = vsub.f32 %v4003, %v4038
      %v4084 = vsub.f32 %v4004, %v4038
      %v4085 = vsub.f32 %v4005, %v4041
      %v4086 = vsub.f32 %v4006, %v4041
      %v4087 = vsub.f32 %v4007, %v4044
      %v4088 = vsub.f32 %v4008, %v4044
      %v4089 = vsub.f32 %v4009, %v4047
      %v4090 = vsub.f32 %v4010, %v4047
      %v4091 = vsub.f32 %v4011, %v4050
      %v4092 = vsub.f32 %v4012, %v4050
      %v4093 = vsub.f32 %v4013, %v4053
      %v4094 = vsub.f32 %v4014, %v4053
      %v4095 = vsub.f32 %v4015, %v4056
      %v4096 = vsub.f32 %v4016, %v4056
      %v4097 = vsub.f32 %v4017, %v4059
      %v4098 = vsub.f32 %v4018, %v4059
      %v4099 = vsub.f32 %v4019, %v4062
      %v4100 = vsub.f32 %v4020, %v4062
      %v4101 = vsub.f32 %v4021, %v4065
      %v4102 = vsub.f32 %v4022, %v4065
      %v4103 = vsub.f32 %v4023, %v4068
      %v4104 = vsub.f32 %v4024, %v4068
      %v4105 = vsub.f32 %v4025, %v4071
      %v4106 = vsub.f32 %v4026, %v4071
      %v4107 = vsub.f32 %v4027, %v4074
      %v4108 = vsub.f32 %v4028, %v4074
      %v4109 = vsub.f32 %v4029, %v4077
      %v4110 = vsub.f32 %v4030, %v4077
      %v4111 = vsub.f32 %v4031, %v4080
      %v4112 = vsub.f32 %v4032, %v4080
      %v4113 = vpack.c.bf16 %v4083, %v4081
      %v4114 = vpack.c.bf16 %v4084, %v4082
      %v4115 = vpack.c.bf16 %v4087, %v4085
      %v4116 = vpack.c.bf16 %v4088, %v4086
      %v4117 = vpack.c.bf16 %v4091, %v4089
      %v4118 = vpack.c.bf16 %v4092, %v4090
      %v4119 = vpack.c.bf16 %v4095, %v4093
      %v4120 = vpack.c.bf16 %v4096, %v4094
      %v4121 = vpack.c.bf16 %v4099, %v4097
      %v4122 = vpack.c.bf16 %v4100, %v4098
      %v4123 = vpack.c.bf16 %v4103, %v4101
      %v4124 = vpack.c.bf16 %v4104, %v4102
      %v4125 = vpack.c.bf16 %v4107, %v4105
      %v4126 = vpack.c.bf16 %v4108, %v4106
      %v4127 = vpack.c.bf16 %v4111, %v4109
      %v4128 = vpack.c.bf16 %v4112, %v4110
      %v4130 = vmul.bf16 %v4113, 1069105081
      %v4131 = vpow.bf16.pop %v4130
      %v4133 = vmul.bf16 %v4114, 1069105081
      %v4134 = vpow.bf16.pop %v4133
      %v4136 = vmul.bf16 %v4115, 1069105081
      %v4137 = vpow.bf16.pop %v4136
      %v4139 = vmul.bf16 %v4116, 1069105081
      %v4140 = vpow.bf16.pop %v4139
      %v4142 = vmul.bf16 %v4117, 1069105081
      %v4143 = vpow.bf16.pop %v4142
      %v4145 = vmul.bf16 %v4118, 1069105081
      %v4146 = vpow.bf16.pop %v4145
      %v4148 = vmul.bf16 %v4119, 1069105081
      %v4149 = vpow.bf16.pop %v4148
      %v4151 = vmul.bf16 %v4120, 1069105081
      %v4152 = vpow.bf16.pop %v4151
      %v4154 = vmul.bf16 %v4121, 1069105081
      %v4155 = vpow.bf16.pop %v4154
      %v4157 = vmul.bf16 %v4122, 1069105081
      %v4158 = vpow.bf16.pop %v4157
      %v4160 = vmul.bf16 %v4123, 1069105081
      %v4161 = vpow.bf16.pop %v4160
      %v4163 = vmul.bf16 %v4124, 1069105081
      %v4164 = vpow.bf16.pop %v4163
      %v4166 = vmul.bf16 %v4125, 1069105081
      %v4167 = vpow.bf16.pop %v4166
      %v4169 = vmul.bf16 %v4126, 1069105081
      %v4170 = vpow.bf16.pop %v4169
      %v4172 = vmul.bf16 %v4127, 1069105081
      %v4173 = vpow.bf16.pop %v4172
      %v4175 = vmul.bf16 %v4128, 1069105081
      %v4176 = vpow.bf16.pop %v4175
      %s4177 = scalar_lea.vmem %s3, 640
      %v4178 = vld [vmem:[%s4177] sm:$0xf]
      %v4179 = vld [vmem:[%s4177 + $0x4] sm:$0xf]
      %v4180 = vld [vmem:[%s4177 + $0x8] sm:$0xf]
      %v4181 = vld [vmem:[%s4177 + $0xc] sm:$0xf]
      %v4182 = vld [vmem:[%s4177 + $0x10] sm:$0xf]
      %v4183 = vld [vmem:[%s4177 + $0x14] sm:$0xf]
      %v4184 = vld [vmem:[%s4177 + $0x18] sm:$0xf]
      %v4185 = vld [vmem:[%s4177 + $0x1c] sm:$0xf]
      %v4186 = vld [vmem:[%s4177 + $0x20] sm:$0xf]
      %v4187 = vld [vmem:[%s4177 + $0x24] sm:$0xf]
      %v4188 = vld [vmem:[%s4177 + $0x28] sm:$0xf]
      %v4189 = vld [vmem:[%s4177 + $0x2c] sm:$0xf]
      %v4190 = vld [vmem:[%s4177 + $0x30] sm:$0xf]
      %v4191 = vld [vmem:[%s4177 + $0x34] sm:$0xf]
      %v4192 = vld [vmem:[%s4177 + $0x38] sm:$0xf]
      %v4193 = vld [vmem:[%s4177 + $0x3c] sm:$0xf]
      %v4194 = vld [vmem:[%s4177 + $0x40] sm:$0xf]
      %v4195 = vld [vmem:[%s4177 + $0x44] sm:$0xf]
      %v4196 = vld [vmem:[%s4177 + $0x48] sm:$0xf]
      %v4197 = vld [vmem:[%s4177 + $0x4c] sm:$0xf]
      %v4198 = vld [vmem:[%s4177 + $0x50] sm:$0xf]
      %v4199 = vld [vmem:[%s4177 + $0x54] sm:$0xf]
      %v4200 = vld [vmem:[%s4177 + $0x58] sm:$0xf]
      %v4201 = vld [vmem:[%s4177 + $0x5c] sm:$0xf]
      %v4202 = vld [vmem:[%s4177 + $0x60] sm:$0xf]
      %v4203 = vld [vmem:[%s4177 + $0x64] sm:$0xf]
      %v4204 = vld [vmem:[%s4177 + $0x68] sm:$0xf]
      %v4205 = vld [vmem:[%s4177 + $0x6c] sm:$0xf]
      %v4206 = vld [vmem:[%s4177 + $0x70] sm:$0xf]
      %v4207 = vld [vmem:[%s4177 + $0x74] sm:$0xf]
      %v4208 = vld [vmem:[%s4177 + $0x78] sm:$0xf]
      %v4209 = vld [vmem:[%s4177 + $0x7c] sm:$0xf]
      %v4242 = vunpack.c.l.b16 %v4178
      %v4243 = vunpack.c.l.b16 %v4179
      %v4244 = vunpack.c.l.b16 %v4180
      %v4245 = vunpack.c.l.b16 %v4181
      %v4246 = vunpack.c.l.b16 %v4182
      %v4247 = vunpack.c.l.b16 %v4183
      %v4248 = vunpack.c.l.b16 %v4184
      %v4249 = vunpack.c.l.b16 %v4185
      %v4250 = vunpack.c.l.b16 %v4186
      %v4251 = vunpack.c.l.b16 %v4187
      %v4252 = vunpack.c.l.b16 %v4188
      %v4253 = vunpack.c.l.b16 %v4189
      %v4254 = vunpack.c.l.b16 %v4190
      %v4255 = vunpack.c.l.b16 %v4191
      %v4256 = vunpack.c.l.b16 %v4192
      %v4257 = vunpack.c.l.b16 %v4193
      %v4258 = vunpack.c.l.b16 %v4194
      %v4259 = vunpack.c.l.b16 %v4195
      %v4260 = vunpack.c.l.b16 %v4196
      %v4261 = vunpack.c.l.b16 %v4197
      %v4262 = vunpack.c.l.b16 %v4198
      %v4263 = vunpack.c.l.b16 %v4199
      %v4264 = vunpack.c.l.b16 %v4200
      %v4265 = vunpack.c.l.b16 %v4201
      %v4266 = vunpack.c.l.b16 %v4202
      %v4267 = vunpack.c.l.b16 %v4203
      %v4268 = vunpack.c.l.b16 %v4204
      %v4269 = vunpack.c.l.b16 %v4205
      %v4270 = vunpack.c.l.b16 %v4206
      %v4271 = vunpack.c.l.b16 %v4207
      %v4272 = vunpack.c.l.b16 %v4208
      %v4273 = vunpack.c.l.b16 %v4209
      %v4274 = vpack.c.b16 %v4243, %v4242
      %v4275 = vpack.c.b16 %v4245, %v4244
      %v4276 = vpack.c.b16 %v4247, %v4246
      %v4277 = vpack.c.b16 %v4249, %v4248
      %v4278 = vpack.c.b16 %v4251, %v4250
      %v4279 = vpack.c.b16 %v4253, %v4252
      %v4280 = vpack.c.b16 %v4255, %v4254
      %v4281 = vpack.c.b16 %v4257, %v4256
      %v4282 = vpack.c.b16 %v4259, %v4258
      %v4283 = vpack.c.b16 %v4261, %v4260
      %v4284 = vpack.c.b16 %v4263, %v4262
      %v4285 = vpack.c.b16 %v4265, %v4264
      %v4286 = vpack.c.b16 %v4267, %v4266
      %v4287 = vpack.c.b16 %v4269, %v4268
      %v4288 = vpack.c.b16 %v4271, %v4270
      %v4289 = vpack.c.b16 %v4273, %v4272
      %4306 = vmatprep.subr.bf16.mxu0 0
      %4307 = vmatpush1.bf16.msra.mxu0 %v4274
      %4308 = vmatprep.subr.bf16.mxu0 0
      %4309 = vmatpush1.bf16.msra.mxu0 %v4275
      %4310 = vmatprep.subr.bf16.mxu0 0
      %4311 = vmatpush1.bf16.msra.mxu0 %v4276
      %4312 = vmatprep.subr.bf16.mxu0 0
      %4313 = vmatpush1.bf16.msra.mxu0 %v4277
      %4314 = vmatprep.subr.bf16.mxu0 0
      %4315 = vmatpush1.bf16.msra.mxu0 %v4278
      %4316 = vmatprep.subr.bf16.mxu0 0
      %4317 = vmatpush1.bf16.msra.mxu0 %v4279
      %4318 = vmatprep.subr.bf16.mxu0 0
      %4319 = vmatpush1.bf16.msra.mxu0 %v4280
      %4320 = vmatprep.subr.bf16.mxu0 0
      %4321 = vmatpush1.bf16.msra.mxu0 %v4281
      %4322 = vmatprep.subr.bf16.mxu0 0
      %4323 = vmatpush1.bf16.msra.mxu0 %v4282
      %4324 = vmatprep.subr.bf16.mxu0 0
      %4325 = vmatpush1.bf16.msra.mxu0 %v4283
      %4326 = vmatprep.subr.bf16.mxu0 0
      %4327 = vmatpush1.bf16.msra.mxu0 %v4284
      %4328 = vmatprep.subr.bf16.mxu0 0
      %4329 = vmatpush1.bf16.msra.mxu0 %v4285
      %4330 = vmatprep.subr.bf16.mxu0 0
      %4331 = vmatpush1.bf16.msra.mxu0 %v4286
      %4332 = vmatprep.subr.bf16.mxu0 0
      %4333 = vmatpush1.bf16.msra.mxu0 %v4287
      %4334 = vmatprep.subr.bf16.mxu0 0
      %4335 = vmatpush1.bf16.msra.mxu0 %v4288
      %4336 = vmatprep.subr.bf16.mxu0 0
      %4337 = vmatpush1.bf16.msra.mxu0 %v4289
      %4338 = vmatprep.mubr.bf16.mxu0 %v4134
      %4339 = vmatmul.mubr.bf16.gmra.mrb[0].mxu0 %v4131
      %v4340 = vpop.f32.mrb[0].mxu0
      %v4341 = vadd.f32 0.0, %v4340
      %v4342 = vpop.f32.mrb[0].mxu0
      %v4343 = vpop.f32.mrb[0].mxu0
      %v4344 = vadd.f32 0.0, %v4343
      %v4345 = vpop.f32.mrb[0].mxu0
      %4346 = vmatprep.mubr.bf16.mxu0 %v4140
      %4347 = vmatmul.mubr.bf16.gmra.mrb[0].mxu0 %v4137
      %v4348 = vpop.f32.mrb[0].mxu0
      %v4349 = vadd.f32 0.0, %v4348
      %v4350 = vpop.f32.mrb[0].mxu0
      %v4351 = vpop.f32.mrb[0].mxu0
      %v4352 = vadd.f32 0.0, %v4351
      %v4353 = vpop.f32.mrb[0].mxu0
      %4354 = vmatprep.mubr.bf16.mxu0 %v4146
      %4355 = vmatmul.mubr.bf16.gmra.mrb[0].mxu0 %v4143
      %v4356 = vpop.f32.mrb[0].mxu0
      %v4357 = vadd.f32 0.0, %v4356
      %v4358 = vpop.f32.mrb[0].mxu0
      %v4359 = vpop.f32.mrb[0].mxu0
      %v4360 = vadd.f32 0.0, %v4359
      %v4361 = vpop.f32.mrb[0].mxu0
      %4362 = vmatprep.mubr.bf16.mxu0 %v4152
      %4363 = vmatmul.mubr.bf16.gmra.mrb[0].mxu0 %v4149
      %v4364 = vpop.f32.mrb[0].mxu0
      %v4365 = vadd.f32 0.0, %v4364
      %v4366 = vpop.f32.mrb[0].mxu0
      %v4367 = vpop.f32.mrb[0].mxu0
      %v4368 = vadd.f32 0.0, %v4367
      %v4369 = vpop.f32.mrb[0].mxu0
      %4370 = vmatprep.mubr.bf16.mxu0 %v4158
      %4371 = vmatmul.mubr.bf16.gmra.mrb[0].mxu0 %v4155
      %v4372 = vpop.f32.mrb[0].mxu0
      %v4373 = vadd.f32 0.0, %v4372
      %v4374 = vpop.f32.mrb[0].mxu0
      %v4375 = vpop.f32.mrb[0].mxu0
      %v4376 = vadd.f32 0.0, %v4375
      %v4377 = vpop.f32.mrb[0].mxu0
      %4378 = vmatprep.mubr.bf16.mxu0 %v4164
      %4379 = vmatmul.mubr.bf16.gmra.mrb[0].mxu0 %v4161
      %v4380 = vpop.f32.mrb[0].mxu0
      %v4381 = vadd.f32 0.0, %v4380
      %v4382 = vpop.f32.mrb[0].mxu0
      %v4383 = vpop.f32.mrb[0].mxu0
      %v4384 = vadd.f32 0.0, %v4383
      %v4385 = vpop.f32.mrb[0].mxu0
      %4386 = vmatprep.mubr.bf16.mxu0 %v4170
      %4387 = vmatmul.mubr.bf16.gmra.mrb[0].mxu0 %v4167
      %v4388 = vpop.f32.mrb[0].mxu0
      %v4389 = vadd.f32 0.0, %v4388
      %v4390 = vpop.f32.mrb[0].mxu0
      %v4391 = vpop.f32.mrb[0].mxu0
      %v4392 = vadd.f32 0.0, %v4391
      %v4393 = vpop.f32.mrb[0].mxu0
      %4394 = vmatprep.mubr.bf16.mxu0 %v4176
      %4395 = vmatmul.mubr.bf16.gmra.mrb[0].mxu0 %v4173
      %v4396 = vpop.f32.mrb[0].mxu0
      %v4397 = vadd.f32 0.0, %v4396
      %v4398 = vpop.f32.mrb[0].mxu0
      %v4399 = vpop.f32.mrb[0].mxu0
      %v4400 = vadd.f32 0.0, %v4399
      %v4401 = vpop.f32.mrb[0].mxu0
      %4402 = vdwg.mxu0
      %v4403 = vrcp.pop %v4341
      %v4404 = vrcp.pop %v4344
      %v4405 = vrcp.pop %v4349
      %v4406 = vrcp.pop %v4352
      %v4407 = vrcp.pop %v4357
      %v4408 = vrcp.pop %v4360
      %v4409 = vrcp.pop %v4365
      %v4410 = vrcp.pop %v4368
      %v4411 = vrcp.pop %v4373
      %v4412 = vrcp.pop %v4376
      %v4413 = vrcp.pop %v4381
      %v4414 = vrcp.pop %v4384
      %v4415 = vrcp.pop %v4389
      %v4416 = vrcp.pop %v4392
      %v4417 = vrcp.pop %v4397
      %v4418 = vrcp.pop %v4400
      %4420 = vset.pattern.permute.xlu0 16
      %4421 = vperm.xlu0 %4420, %v4403
      %v4422 = vpop.permute.xlu0 %4421
      %4425 = vset.pattern.permute.xlu0 16
      %4426 = vperm.xlu0 %4425, %v4404
      %v4427 = vpop.permute.xlu0 %4426
      %4430 = vset.pattern.permute.xlu0 16
      %4431 = vperm.xlu0 %4430, %v4405
      %v4432 = vpop.permute.xlu0 %4431
      %4435 = vset.pattern.permute.xlu0 16
      %4436 = vperm.xlu0 %4435, %v4406
      %v4437 = vpop.permute.xlu0 %4436
      %4440 = vset.pattern.permute.xlu0 16
      %4441 = vperm.xlu0 %4440, %v4407
      %v4442 = vpop.permute.xlu0 %4441
      %4445 = vset.pattern.permute.xlu0 16
      %4446 = vperm.xlu0 %4445, %v4408
      %v4447 = vpop.permute.xlu0 %4446
      %4450 = vset.pattern.permute.xlu0 16
      %4451 = vperm.xlu0 %4450, %v4409
      %v4452 = vpop.permute.xlu0 %4451
      %4455 = vset.pattern.permute.xlu0 16
      %4456 = vperm.xlu0 %4455, %v4410
      %v4457 = vpop.permute.xlu0 %4456
      %4460 = vset.pattern.permute.xlu0 16
      %4461 = vperm.xlu0 %4460, %v4411
      %v4462 = vpop.permute.xlu0 %4461
      %4465 = vset.pattern.permute.xlu0 16
      %4466 = vperm.xlu0 %4465, %v4412
      %v4467 = vpop.permute.xlu0 %4466
      %4470 = vset.pattern.permute.xlu0 16
      %4471 = vperm.xlu0 %4470, %v4413
      %v4472 = vpop.permute.xlu0 %4471
      %4475 = vset.pattern.permute.xlu0 16
      %4476 = vperm.xlu0 %4475, %v4414
      %v4477 = vpop.permute.xlu0 %4476
      %4480 = vset.pattern.permute.xlu0 16
      %4481 = vperm.xlu0 %4480, %v4415
      %v4482 = vpop.permute.xlu0 %4481
      %4485 = vset.pattern.permute.xlu0 16
      %4486 = vperm.xlu0 %4485, %v4416
      %v4487 = vpop.permute.xlu0 %4486
      %4490 = vset.pattern.permute.xlu0 16
      %4491 = vperm.xlu0 %4490, %v4417
      %v4492 = vpop.permute.xlu0 %4491
      %4495 = vset.pattern.permute.xlu0 16
      %4496 = vperm.xlu0 %4495, %v4418
      %v4497 = vpop.permute.xlu0 %4496
      %v4499 = vmul.f32 %v4341, %v4422
      %v4500 = vmul.f32 %v4344, %v4427
      %v4501 = vmul.f32 %v4349, %v4432
      %v4502 = vmul.f32 %v4352, %v4437
      %v4503 = vmul.f32 %v4357, %v4442
      %v4504 = vmul.f32 %v4360, %v4447
      %v4505 = vmul.f32 %v4365, %v4452
      %v4506 = vmul.f32 %v4368, %v4457
      %v4507 = vmul.f32 %v4373, %v4462
      %v4508 = vmul.f32 %v4376, %v4467
      %v4509 = vmul.f32 %v4381, %v4472
      %v4510 = vmul.f32 %v4384, %v4477
      %v4511 = vmul.f32 %v4389, %v4482
      %v4512 = vmul.f32 %v4392, %v4487
      %v4513 = vmul.f32 %v4397, %v4492
      %v4514 = vmul.f32 %v4400, %v4497
      %4515 = vset.pattern.permute.xlu0 6
      %4516 = vperm.xlu0 %4515, %v390
      %v4517 = vpop.permute.xlu0 %4516
      %4519 = vset.pattern.permute.xlu0 6
      %4520 = vperm.xlu0 %4519, %v391
      %v4521 = vpop.permute.xlu0 %4520
      %4523 = vset.pattern.permute.xlu0 6
      %4524 = vperm.xlu0 %4523, %v392
      %v4525 = vpop.permute.xlu0 %4524
      %4527 = vset.pattern.permute.xlu0 6
      %4528 = vperm.xlu0 %4527, %v393
      %v4529 = vpop.permute.xlu0 %4528
      %4531 = vset.pattern.permute.xlu0 6
      %4532 = vperm.xlu0 %4531, %v394
      %v4533 = vpop.permute.xlu0 %4532
      %4535 = vset.pattern.permute.xlu0 6
      %4536 = vperm.xlu0 %4535, %v395
      %v4537 = vpop.permute.xlu0 %4536
      %4539 = vset.pattern.permute.xlu0 6
      %4540 = vperm.xlu0 %4539, %v396
      %v4541 = vpop.permute.xlu0 %4540
      %4543 = vset.pattern.permute.xlu0 6
      %4544 = vperm.xlu0 %4543, %v397
      %v4545 = vpop.permute.xlu0 %4544
      %4547 = vset.pattern.permute.xlu0 6
      %4548 = vperm.xlu0 %4547, %v398
      %v4549 = vpop.permute.xlu0 %4548
      %4551 = vset.pattern.permute.xlu0 6
      %4552 = vperm.xlu0 %4551, %v399
      %v4553 = vpop.permute.xlu0 %4552
      %4555 = vset.pattern.permute.xlu0 6
      %4556 = vperm.xlu0 %4555, %v400
      %v4557 = vpop.permute.xlu0 %4556
      %4559 = vset.pattern.permute.xlu0 6
      %4560 = vperm.xlu0 %4559, %v401
      %v4561 = vpop.permute.xlu0 %4560
      %4563 = vset.pattern.permute.xlu0 6
      %4564 = vperm.xlu0 %4563, %v402
      %v4565 = vpop.permute.xlu0 %4564
      %4567 = vset.pattern.permute.xlu0 6
      %4568 = vperm.xlu0 %4567, %v403
      %v4569 = vpop.permute.xlu0 %4568
      %4571 = vset.pattern.permute.xlu0 6
      %4572 = vperm.xlu0 %4571, %v404
      %v4573 = vpop.permute.xlu0 %4572
      %4575 = vset.pattern.permute.xlu0 6
      %4576 = vperm.xlu0 %4575, %v405
      %v4577 = vpop.permute.xlu0 %4576
      %v4579 = vlaneseq
      %v4580 = vshrl.u32 %v4579, 7
      %v4581 = vsub.s32 6, %v4580
      %v4582 = vrot.slane %v406, %v4581
      %v4583 = vlaneseq
      %v4584 = vshrl.u32 %v4583, 7
      %v4585 = vsub.s32 6, %v4584
      %v4586 = vrot.slane %v407, %v4585
      %v4587 = vadd.f32 %v4517, %v4582
      %v4588 = vadd.f32 %v4517, %v4586
      %v4589 = vadd.f32 %v4521, %v4582
      %v4590 = vadd.f32 %v4521, %v4586
      %v4591 = vadd.f32 %v4525, %v4582
      %v4592 = vadd.f32 %v4525, %v4586
      %v4593 = vadd.f32 %v4529, %v4582
      %v4594 = vadd.f32 %v4529, %v4586
      %v4595 = vadd.f32 %v4533, %v4582
      %v4596 = vadd.f32 %v4533, %v4586
      %v4597 = vadd.f32 %v4537, %v4582
      %v4598 = vadd.f32 %v4537, %v4586
      %v4599 = vadd.f32 %v4541, %v4582
      %v4600 = vadd.f32 %v4541, %v4586
      %v4601 = vadd.f32 %v4545, %v4582
      %v4602 = vadd.f32 %v4545, %v4586
      %v4603 = vadd.f32 %v4549, %v4582
      %v4604 = vadd.f32 %v4549, %v4586
      %v4605 = vadd.f32 %v4553, %v4582
      %v4606 = vadd.f32 %v4553, %v4586
      %v4607 = vadd.f32 %v4557, %v4582
      %v4608 = vadd.f32 %v4557, %v4586
      %v4609 = vadd.f32 %v4561, %v4582
      %v4610 = vadd.f32 %v4561, %v4586
      %v4611 = vadd.f32 %v4565, %v4582
      %v4612 = vadd.f32 %v4565, %v4586
      %v4613 = vadd.f32 %v4569, %v4582
      %v4614 = vadd.f32 %v4569, %v4586
      %v4615 = vadd.f32 %v4573, %v4582
      %v4616 = vadd.f32 %v4573, %v4586
      %v4617 = vadd.f32 %v4577, %v4582
      %v4618 = vadd.f32 %v4577, %v4586
      %v4619 = vmul.f32 %v4587, 0.2
      %v4620 = vmul.f32 %v4588, 0.2
      %v4621 = vmul.f32 %v4589, 0.2
      %v4622 = vmul.f32 %v4590, 0.2
      %v4623 = vmul.f32 %v4591, 0.2
      %v4624 = vmul.f32 %v4592, 0.2
      %v4625 = vmul.f32 %v4593, 0.2
      %v4626 = vmul.f32 %v4594, 0.2
      %v4627 = vmul.f32 %v4595, 0.2
      %v4628 = vmul.f32 %v4596, 0.2
      %v4629 = vmul.f32 %v4597, 0.2
      %v4630 = vmul.f32 %v4598, 0.2
      %v4631 = vmul.f32 %v4599, 0.2
      %v4632 = vmul.f32 %v4600, 0.2
      %v4633 = vmul.f32 %v4601, 0.2
      %v4634 = vmul.f32 %v4602, 0.2
      %v4635 = vmul.f32 %v4603, 0.2
      %v4636 = vmul.f32 %v4604, 0.2
      %v4637 = vmul.f32 %v4605, 0.2
      %v4638 = vmul.f32 %v4606, 0.2
      %v4639 = vmul.f32 %v4607, 0.2
      %v4640 = vmul.f32 %v4608, 0.2
      %v4641 = vmul.f32 %v4609, 0.2
      %v4642 = vmul.f32 %v4610, 0.2
      %v4643 = vmul.f32 %v4611, 0.2
      %v4644 = vmul.f32 %v4612, 0.2
      %v4645 = vmul.f32 %v4613, 0.2
      %v4646 = vmul.f32 %v4614, 0.2
      %v4647 = vmul.f32 %v4615, 0.2
      %v4648 = vmul.f32 %v4616, 0.2
      %v4649 = vmul.f32 %v4617, 0.2
      %v4650 = vmul.f32 %v4618, 0.2
      %v4651 = vmax.f32 %v4587, %v4619
      %v4652 = vmax.f32 %v4588, %v4620
      %v4653 = vmax.f32 %v4589, %v4621
      %v4654 = vmax.f32 %v4590, %v4622
      %v4655 = vmax.f32 %v4591, %v4623
      %v4656 = vmax.f32 %v4592, %v4624
      %v4657 = vmax.f32 %v4593, %v4625
      %v4658 = vmax.f32 %v4594, %v4626
      %v4659 = vmax.f32 %v4595, %v4627
      %v4660 = vmax.f32 %v4596, %v4628
      %v4661 = vmax.f32 %v4597, %v4629
      %v4662 = vmax.f32 %v4598, %v4630
      %v4663 = vmax.f32 %v4599, %v4631
      %v4664 = vmax.f32 %v4600, %v4632
      %v4665 = vmax.f32 %v4601, %v4633
      %v4666 = vmax.f32 %v4602, %v4634
      %v4667 = vmax.f32 %v4603, %v4635
      %v4668 = vmax.f32 %v4604, %v4636
      %v4669 = vmax.f32 %v4605, %v4637
      %v4670 = vmax.f32 %v4606, %v4638
      %v4671 = vmax.f32 %v4607, %v4639
      %v4672 = vmax.f32 %v4608, %v4640
      %v4673 = vmax.f32 %v4609, %v4641
      %v4674 = vmax.f32 %v4610, %v4642
      %v4675 = vmax.f32 %v4611, %v4643
      %v4676 = vmax.f32 %v4612, %v4644
      %v4677 = vmax.f32 %v4613, %v4645
      %v4678 = vmax.f32 %v4614, %v4646
      %v4679 = vmax.f32 %v4615, %v4647
      %v4680 = vmax.f32 %v4616, %v4648
      %v4681 = vmax.f32 %v4617, %v4649
      %v4682 = vmax.f32 %v4618, %v4650
      %v4683 = vadd.f32 %v4651, %v358
      %v4684 = vadd.f32 %v4652, %v359
      %v4685 = vadd.f32 %v4653, %v360
      %v4686 = vadd.f32 %v4654, %v361
      %v4687 = vadd.f32 %v4655, %v362
      %v4688 = vadd.f32 %v4656, %v363
      %v4689 = vadd.f32 %v4657, %v364
      %v4690 = vadd.f32 %v4658, %v365
      %v4691 = vadd.f32 %v4659, %v366
      %v4692 = vadd.f32 %v4660, %v367
      %v4693 = vadd.f32 %v4661, %v368
      %v4694 = vadd.f32 %v4662, %v369
      %v4695 = vadd.f32 %v4663, %v370
      %v4696 = vadd.f32 %v4664, %v371
      %v4697 = vadd.f32 %v4665, %v372
      %v4698 = vadd.f32 %v4666, %v373
      %v4699 = vadd.f32 %v4667, %v374
      %v4700 = vadd.f32 %v4668, %v375
      %v4701 = vadd.f32 %v4669, %v376
      %v4702 = vadd.f32 %v4670, %v377
      %v4703 = vadd.f32 %v4671, %v378
      %v4704 = vadd.f32 %v4672, %v379
      %v4705 = vadd.f32 %v4673, %v380
      %v4706 = vadd.f32 %v4674, %v381
      %v4707 = vadd.f32 %v4675, %v382
      %v4708 = vadd.f32 %v4676, %v383
      %v4709 = vadd.f32 %v4677, %v384
      %v4710 = vadd.f32 %v4678, %v385
      %v4711 = vadd.f32 %v4679, %v386
      %v4712 = vadd.f32 %v4680, %v387
      %v4713 = vadd.f32 %v4681, %v388
      %v4714 = vadd.f32 %v4682, %v389
      %v4715 = vmax.f32 %v4683, %v4684
      %4716 = vmax.xlane.f32.xlu0 %v4715
      %v4717 = vpop.xlane.xlu0 %4716
      %v4718 = vmax.f32 %v4685, %v4686
      %4719 = vmax.xlane.f32.xlu0 %v4718
      %v4720 = vpop.xlane.xlu0 %4719
      %v4721 = vmax.f32 %v4687, %v4688
      %4722 = vmax.xlane.f32.xlu0 %v4721
      %v4723 = vpop.xlane.xlu0 %4722
      %v4724 = vmax.f32 %v4689, %v4690
      %4725 = vmax.xlane.f32.xlu0 %v4724
      %v4726 = vpop.xlane.xlu0 %4725
      %v4727 = vmax.f32 %v4691, %v4692
      %4728 = vmax.xlane.f32.xlu0 %v4727
      %v4729 = vpop.xlane.xlu0 %4728
      %v4730 = vmax.f32 %v4693, %v4694
      %4731 = vmax.xlane.f32.xlu0 %v4730
      %v4732 = vpop.xlane.xlu0 %4731
      %v4733 = vmax.f32 %v4695, %v4696
      %4734 = vmax.xlane.f32.xlu0 %v4733
      %v4735 = vpop.xlane.xlu0 %4734
      %v4736 = vmax.f32 %v4697, %v4698
      %4737 = vmax.xlane.f32.xlu0 %v4736
      %v4738 = vpop.xlane.xlu0 %4737
      %v4739 = vmax.f32 %v4699, %v4700
      %4740 = vmax.xlane.f32.xlu0 %v4739
      %v4741 = vpop.xlane.xlu0 %4740
      %v4742 = vmax.f32 %v4701, %v4702
      %4743 = vmax.xlane.f32.xlu0 %v4742
      %v4744 = vpop.xlane.xlu0 %4743
      %v4745 = vmax.f32 %v4703, %v4704
      %4746 = vmax.xlane.f32.xlu0 %v4745
      %v4747 = vpop.xlane.xlu0 %4746
      %v4748 = vmax.f32 %v4705, %v4706
      %4749 = vmax.xlane.f32.xlu0 %v4748
      %v4750 = vpop.xlane.xlu0 %4749
      %v4751 = vmax.f32 %v4707, %v4708
      %4752 = vmax.xlane.f32.xlu0 %v4751
      %v4753 = vpop.xlane.xlu0 %4752
      %v4754 = vmax.f32 %v4709, %v4710
      %4755 = vmax.xlane.f32.xlu0 %v4754
      %v4756 = vpop.xlane.xlu0 %4755
      %v4757 = vmax.f32 %v4711, %v4712
      %4758 = vmax.xlane.f32.xlu0 %v4757
      %v4759 = vpop.xlane.xlu0 %4758
      %v4760 = vmax.f32 %v4713, %v4714
      %4761 = vmax.xlane.f32.xlu0 %v4760
      %v4762 = vpop.xlane.xlu0 %4761
      %v4763 = vsub.f32 %v4683, %v4717
      %v4764 = vsub.f32 %v4684, %v4717
      %v4765 = vsub.f32 %v4685, %v4720
      %v4766 = vsub.f32 %v4686, %v4720
      %v4767 = vsub.f32 %v4687, %v4723
      %v4768 = vsub.f32 %v4688, %v4723
      %v4769 = vsub.f32 %v4689, %v4726
      %v4770 = vsub.f32 %v4690, %v4726
      %v4771 = vsub.f32 %v4691, %v4729
      %v4772 = vsub.f32 %v4692, %v4729
      %v4773 = vsub.f32 %v4693, %v4732
      %v4774 = vsub.f32 %v4694, %v4732
      %v4775 = vsub.f32 %v4695, %v4735
      %v4776 = vsub.f32 %v4696, %v4735
      %v4777 = vsub.f32 %v4697, %v4738
      %v4778 = vsub.f32 %v4698, %v4738
      %v4779 = vsub.f32 %v4699, %v4741
      %v4780 = vsub.f32 %v4700, %v4741
      %v4781 = vsub.f32 %v4701, %v4744
      %v4782 = vsub.f32 %v4702, %v4744
      %v4783 = vsub.f32 %v4703, %v4747
      %v4784 = vsub.f32 %v4704, %v4747
      %v4785 = vsub.f32 %v4705, %v4750
      %v4786 = vsub.f32 %v4706, %v4750
      %v4787 = vsub.f32 %v4707, %v4753
      %v4788 = vsub.f32 %v4708, %v4753
      %v4789 = vsub.f32 %v4709, %v4756
      %v4790 = vsub.f32 %v4710, %v4756
      %v4791 = vsub.f32 %v4711, %v4759
      %v4792 = vsub.f32 %v4712, %v4759
      %v4793 = vsub.f32 %v4713, %v4762
      %v4794 = vsub.f32 %v4714, %v4762
      %v4795 = vpack.c.bf16 %v4765, %v4763
      %v4796 = vpack.c.bf16 %v4766, %v4764
      %v4797 = vpack.c.bf16 %v4769, %v4767
      %v4798 = vpack.c.bf16 %v4770, %v4768
      %v4799 = vpack.c.bf16 %v4773, %v4771
      %v4800 = vpack.c.bf16 %v4774, %v4772
      %v4801 = vpack.c.bf16 %v4777, %v4775
      %v4802 = vpack.c.bf16 %v4778, %v4776
      %v4803 = vpack.c.bf16 %v4781, %v4779
      %v4804 = vpack.c.bf16 %v4782, %v4780
      %v4805 = vpack.c.bf16 %v4785, %v4783
      %v4806 = vpack.c.bf16 %v4786, %v4784
      %v4807 = vpack.c.bf16 %v4789, %v4787
      %v4808 = vpack.c.bf16 %v4790, %v4788
      %v4809 = vpack.c.bf16 %v4793, %v4791
      %v4810 = vpack.c.bf16 %v4794, %v4792
      %v4812 = vmul.bf16 %v4795, 1069105081
      %v4813 = vpow.bf16.pop %v4812
      %v4815 = vmul.bf16 %v4796, 1069105081
      %v4816 = vpow.bf16.pop %v4815
      %v4818 = vmul.bf16 %v4797, 1069105081
      %v4819 = vpow.bf16.pop %v4818
      %v4821 = vmul.bf16 %v4798, 1069105081
      %v4822 = vpow.bf16.pop %v4821
      %v4824 = vmul.bf16 %v4799, 1069105081
      %v4825 = vpow.bf16.pop %v4824
      %v4827 = vmul.bf16 %v4800, 1069105081
      %v4828 = vpow.bf16.pop %v4827
      %v4830 = vmul.bf16 %v4801, 1069105081
      %v4831 = vpow.bf16.pop %v4830
      %v4833 = vmul.bf16 %v4802, 1069105081
      %v4834 = vpow.bf16.pop %v4833
      %v4836 = vmul.bf16 %v4803, 1069105081
      %v4837 = vpow.bf16.pop %v4836
      %v4839 = vmul.bf16 %v4804, 1069105081
      %v4840 = vpow.bf16.pop %v4839
      %v4842 = vmul.bf16 %v4805, 1069105081
      %v4843 = vpow.bf16.pop %v4842
      %v4845 = vmul.bf16 %v4806, 1069105081
      %v4846 = vpow.bf16.pop %v4845
      %v4848 = vmul.bf16 %v4807, 1069105081
      %v4849 = vpow.bf16.pop %v4848
      %v4851 = vmul.bf16 %v4808, 1069105081
      %v4852 = vpow.bf16.pop %v4851
      %v4854 = vmul.bf16 %v4809, 1069105081
      %v4855 = vpow.bf16.pop %v4854
      %v4857 = vmul.bf16 %v4810, 1069105081
      %v4858 = vpow.bf16.pop %v4857
      %s4859 = scalar_lea.vmem %s3, 768
      %v4860 = vld [vmem:[%s4859] sm:$0xf]
      %v4861 = vld [vmem:[%s4859 + $0x4] sm:$0xf]
      %v4862 = vld [vmem:[%s4859 + $0x8] sm:$0xf]
      %v4863 = vld [vmem:[%s4859 + $0xc] sm:$0xf]
      %v4864 = vld [vmem:[%s4859 + $0x10] sm:$0xf]
      %v4865 = vld [vmem:[%s4859 + $0x14] sm:$0xf]
      %v4866 = vld [vmem:[%s4859 + $0x18] sm:$0xf]
      %v4867 = vld [vmem:[%s4859 + $0x1c] sm:$0xf]
      %v4868 = vld [vmem:[%s4859 + $0x20] sm:$0xf]
      %v4869 = vld [vmem:[%s4859 + $0x24] sm:$0xf]
      %v4870 = vld [vmem:[%s4859 + $0x28] sm:$0xf]
      %v4871 = vld [vmem:[%s4859 + $0x2c] sm:$0xf]
      %v4872 = vld [vmem:[%s4859 + $0x30] sm:$0xf]
      %v4873 = vld [vmem:[%s4859 + $0x34] sm:$0xf]
      %v4874 = vld [vmem:[%s4859 + $0x38] sm:$0xf]
      %v4875 = vld [vmem:[%s4859 + $0x3c] sm:$0xf]
      %v4876 = vld [vmem:[%s4859 + $0x40] sm:$0xf]
      %v4877 = vld [vmem:[%s4859 + $0x44] sm:$0xf]
      %v4878 = vld [vmem:[%s4859 + $0x48] sm:$0xf]
      %v4879 = vld [vmem:[%s4859 + $0x4c] sm:$0xf]
      %v4880 = vld [vmem:[%s4859 + $0x50] sm:$0xf]
      %v4881 = vld [vmem:[%s4859 + $0x54] sm:$0xf]
      %v4882 = vld [vmem:[%s4859 + $0x58] sm:$0xf]
      %v4883 = vld [vmem:[%s4859 + $0x5c] sm:$0xf]
      %v4884 = vld [vmem:[%s4859 + $0x60] sm:$0xf]
      %v4885 = vld [vmem:[%s4859 + $0x64] sm:$0xf]
      %v4886 = vld [vmem:[%s4859 + $0x68] sm:$0xf]
      %v4887 = vld [vmem:[%s4859 + $0x6c] sm:$0xf]
      %v4888 = vld [vmem:[%s4859 + $0x70] sm:$0xf]
      %v4889 = vld [vmem:[%s4859 + $0x74] sm:$0xf]
      %v4890 = vld [vmem:[%s4859 + $0x78] sm:$0xf]
      %v4891 = vld [vmem:[%s4859 + $0x7c] sm:$0xf]
      %v4924 = vunpack.c.l.b16 %v4860
      %v4925 = vunpack.c.l.b16 %v4861
      %v4926 = vunpack.c.l.b16 %v4862
      %v4927 = vunpack.c.l.b16 %v4863
      %v4928 = vunpack.c.l.b16 %v4864
      %v4929 = vunpack.c.l.b16 %v4865
      %v4930 = vunpack.c.l.b16 %v4866
      %v4931 = vunpack.c.l.b16 %v4867
      %v4932 = vunpack.c.l.b16 %v4868
      %v4933 = vunpack.c.l.b16 %v4869
      %v4934 = vunpack.c.l.b16 %v4870
      %v4935 = vunpack.c.l.b16 %v4871
      %v4936 = vunpack.c.l.b16 %v4872
      %v4937 = vunpack.c.l.b16 %v4873
      %v4938 = vunpack.c.l.b16 %v4874
      %v4939 = vunpack.c.l.b16 %v4875
      %v4940 = vunpack.c.l.b16 %v4876
      %v4941 = vunpack.c.l.b16 %v4877
      %v4942 = vunpack.c.l.b16 %v4878
      %v4943 = vunpack.c.l.b16 %v4879
      %v4944 = vunpack.c.l.b16 %v4880
      %v4945 = vunpack.c.l.b16 %v4881
      %v4946 = vunpack.c.l.b16 %v4882
      %v4947 = vunpack.c.l.b16 %v4883
      %v4948 = vunpack.c.l.b16 %v4884
      %v4949 = vunpack.c.l.b16 %v4885
      %v4950 = vunpack.c.l.b16 %v4886
      %v4951 = vunpack.c.l.b16 %v4887
      %v4952 = vunpack.c.l.b16 %v4888
      %v4953 = vunpack.c.l.b16 %v4889
      %v4954 = vunpack.c.l.b16 %v4890
      %v4955 = vunpack.c.l.b16 %v4891
      %v4956 = vpack.c.b16 %v4925, %v4924
      %v4957 = vpack.c.b16 %v4927, %v4926
      %v4958 = vpack.c.b16 %v4929, %v4928
      %v4959 = vpack.c.b16 %v4931, %v4930
      %v4960 = vpack.c.b16 %v4933, %v4932
      %v4961 = vpack.c.b16 %v4935, %v4934
      %v4962 = vpack.c.b16 %v4937, %v4936
      %v4963 = vpack.c.b16 %v4939, %v4938
      %v4964 = vpack.c.b16 %v4941, %v4940
      %v4965 = vpack.c.b16 %v4943, %v4942
      %v4966 = vpack.c.b16 %v4945, %v4944
      %v4967 = vpack.c.b16 %v4947, %v4946
      %v4968 = vpack.c.b16 %v4949, %v4948
      %v4969 = vpack.c.b16 %v4951, %v4950
      %v4970 = vpack.c.b16 %v4953, %v4952
      %v4971 = vpack.c.b16 %v4955, %v4954
      %4988 = vmatprep.subr.bf16.mxu0 0
      %4989 = vmatpush1.bf16.msra.mxu0 %v4956
      %4990 = vmatprep.subr.bf16.mxu0 0
      %4991 = vmatpush1.bf16.msra.mxu0 %v4957
      %4992 = vmatprep.subr.bf16.mxu0 0
      %4993 = vmatpush1.bf16.msra.mxu0 %v4958
      %4994 = vmatprep.subr.bf16.mxu0 0
      %4995 = vmatpush1.bf16.msra.mxu0 %v4959
      %4996 = vmatprep.subr.bf16.mxu0 0
      %4997 = vmatpush1.bf16.msra.mxu0 %v4960
      %4998 = vmatprep.subr.bf16.mxu0 0
      %4999 = vmatpush1.bf16.msra.mxu0 %v4961
      %5000 = vmatprep.subr.bf16.mxu0 0
      %5001 = vmatpush1.bf16.msra.mxu0 %v4962
      %5002 = vmatprep.subr.bf16.mxu0 0
      %5003 = vmatpush1.bf16.msra.mxu0 %v4963
      %5004 = vmatprep.subr.bf16.mxu0 0
      %5005 = vmatpush1.bf16.msra.mxu0 %v4964
      %5006 = vmatprep.subr.bf16.mxu0 0
      %5007 = vmatpush1.bf16.msra.mxu0 %v4965
      %5008 = vmatprep.subr.bf16.mxu0 0
      %5009 = vmatpush1.bf16.msra.mxu0 %v4966
      %5010 = vmatprep.subr.bf16.mxu0 0
      %5011 = vmatpush1.bf16.msra.mxu0 %v4967
      %5012 = vmatprep.subr.bf16.mxu0 0
      %5013 = vmatpush1.bf16.msra.mxu0 %v4968
      %5014 = vmatprep.subr.bf16.mxu0 0
      %5015 = vmatpush1.bf16.msra.mxu0 %v4969
      %5016 = vmatprep.subr.bf16.mxu0 0
      %5017 = vmatpush1.bf16.msra.mxu0 %v4970
      %5018 = vmatprep.subr.bf16.mxu0 0
      %5019 = vmatpush1.bf16.msra.mxu0 %v4971
      %5020 = vmatprep.mubr.bf16.mxu0 %v4816
      %5021 = vmatmul.mubr.bf16.gmra.mrb[0].mxu0 %v4813
      %v5022 = vpop.f32.mrb[0].mxu0
      %v5023 = vadd.f32 0.0, %v5022
      %v5024 = vpop.f32.mrb[0].mxu0
      %v5025 = vpop.f32.mrb[0].mxu0
      %v5026 = vadd.f32 0.0, %v5025
      %v5027 = vpop.f32.mrb[0].mxu0
      %5028 = vmatprep.mubr.bf16.mxu0 %v4822
      %5029 = vmatmul.mubr.bf16.gmra.mrb[0].mxu0 %v4819
      %v5030 = vpop.f32.mrb[0].mxu0
      %v5031 = vadd.f32 0.0, %v5030
      %v5032 = vpop.f32.mrb[0].mxu0
      %v5033 = vpop.f32.mrb[0].mxu0
      %v5034 = vadd.f32 0.0, %v5033
      %v5035 = vpop.f32.mrb[0].mxu0
      %5036 = vmatprep.mubr.bf16.mxu0 %v4828
      %5037 = vmatmul.mubr.bf16.gmra.mrb[0].mxu0 %v4825
      %v5038 = vpop.f32.mrb[0].mxu0
      %v5039 = vadd.f32 0.0, %v5038
      %v5040 = vpop.f32.mrb[0].mxu0
      %v5041 = vpop.f32.mrb[0].mxu0
      %v5042 = vadd.f32 0.0, %v5041
      %v5043 = vpop.f32.mrb[0].mxu0
      %5044 = vmatprep.mubr.bf16.mxu0 %v4834
      %5045 = vmatmul.mubr.bf16.gmra.mrb[0].mxu0 %v4831
      %v5046 = vpop.f32.mrb[0].mxu0
      %v5047 = vadd.f32 0.0, %v5046
      %v5048 = vpop.f32.mrb[0].mxu0
      %v5049 = vpop.f32.mrb[0].mxu0
      %v5050 = vadd.f32 0.0, %v5049
      %v5051 = vpop.f32.mrb[0].mxu0
      %5052 = vmatprep.mubr.bf16.mxu0 %v4840
      %5053 = vmatmul.mubr.bf16.gmra.mrb[0].mxu0 %v4837
      %v5054 = vpop.f32.mrb[0].mxu0
      %v5055 = vadd.f32 0.0, %v5054
      %v5056 = vpop.f32.mrb[0].mxu0
      %v5057 = vpop.f32.mrb[0].mxu0
      %v5058 = vadd.f32 0.0, %v5057
      %v5059 = vpop.f32.mrb[0].mxu0
      %5060 = vmatprep.mubr.bf16.mxu0 %v4846
      %5061 = vmatmul.mubr.bf16.gmra.mrb[0].mxu0 %v4843
      %v5062 = vpop.f32.mrb[0].mxu0
      %v5063 = vadd.f32 0.0, %v5062
      %v5064 = vpop.f32.mrb[0].mxu0
      %v5065 = vpop.f32.mrb[0].mxu0
      %v5066 = vadd.f32 0.0, %v5065
      %v5067 = vpop.f32.mrb[0].mxu0
      %5068 = vmatprep.mubr.bf16.mxu0 %v4852
      %5069 = vmatmul.mubr.bf16.gmra.mrb[0].mxu0 %v4849
      %v5070 = vpop.f32.mrb[0].mxu0
      %v5071 = vadd.f32 0.0, %v5070
      %v5072 = vpop.f32.mrb[0].mxu0
      %v5073 = vpop.f32.mrb[0].mxu0
      %v5074 = vadd.f32 0.0, %v5073
      %v5075 = vpop.f32.mrb[0].mxu0
      %5076 = vmatprep.mubr.bf16.mxu0 %v4858
      %5077 = vmatmul.mubr.bf16.gmra.mrb[0].mxu0 %v4855
      %v5078 = vpop.f32.mrb[0].mxu0
      %v5079 = vadd.f32 0.0, %v5078
      %v5080 = vpop.f32.mrb[0].mxu0
      %v5081 = vpop.f32.mrb[0].mxu0
      %v5082 = vadd.f32 0.0, %v5081
      %v5083 = vpop.f32.mrb[0].mxu0
      %5084 = vdwg.mxu0
      %v5085 = vrcp.pop %v5023
      %v5086 = vrcp.pop %v5026
      %v5087 = vrcp.pop %v5031
      %v5088 = vrcp.pop %v5034
      %v5089 = vrcp.pop %v5039
      %v5090 = vrcp.pop %v5042
      %v5091 = vrcp.pop %v5047
      %v5092 = vrcp.pop %v5050
      %v5093 = vrcp.pop %v5055
      %v5094 = vrcp.pop %v5058
      %v5095 = vrcp.pop %v5063
      %v5096 = vrcp.pop %v5066
      %v5097 = vrcp.pop %v5071
      %v5098 = vrcp.pop %v5074
      %v5099 = vrcp.pop %v5079
      %v5100 = vrcp.pop %v5082
      %5102 = vset.pattern.permute.xlu0 16
      %5103 = vperm.xlu0 %5102, %v5085
      %v5104 = vpop.permute.xlu0 %5103
      %5107 = vset.pattern.permute.xlu0 16
      %5108 = vperm.xlu0 %5107, %v5086
      %v5109 = vpop.permute.xlu0 %5108
      %5112 = vset.pattern.permute.xlu0 16
      %5113 = vperm.xlu0 %5112, %v5087
      %v5114 = vpop.permute.xlu0 %5113
      %5117 = vset.pattern.permute.xlu0 16
      %5118 = vperm.xlu0 %5117, %v5088
      %v5119 = vpop.permute.xlu0 %5118
      %5122 = vset.pattern.permute.xlu0 16
      %5123 = vperm.xlu0 %5122, %v5089
      %v5124 = vpop.permute.xlu0 %5123
      %5127 = vset.pattern.permute.xlu0 16
      %5128 = vperm.xlu0 %5127, %v5090
      %v5129 = vpop.permute.xlu0 %5128
      %5132 = vset.pattern.permute.xlu0 16
      %5133 = vperm.xlu0 %5132, %v5091
      %v5134 = vpop.permute.xlu0 %5133
      %5137 = vset.pattern.permute.xlu0 16
      %5138 = vperm.xlu0 %5137, %v5092
      %v5139 = vpop.permute.xlu0 %5138
      %5142 = vset.pattern.permute.xlu0 16
      %5143 = vperm.xlu0 %5142, %v5093
      %v5144 = vpop.permute.xlu0 %5143
      %5147 = vset.pattern.permute.xlu0 16
      %5148 = vperm.xlu0 %5147, %v5094
      %v5149 = vpop.permute.xlu0 %5148
      %5152 = vset.pattern.permute.xlu0 16
      %5153 = vperm.xlu0 %5152, %v5095
      %v5154 = vpop.permute.xlu0 %5153
      %5157 = vset.pattern.permute.xlu0 16
      %5158 = vperm.xlu0 %5157, %v5096
      %v5159 = vpop.permute.xlu0 %5158
      %5162 = vset.pattern.permute.xlu0 16
      %5163 = vperm.xlu0 %5162, %v5097
      %v5164 = vpop.permute.xlu0 %5163
      %5167 = vset.pattern.permute.xlu0 16
      %5168 = vperm.xlu0 %5167, %v5098
      %v5169 = vpop.permute.xlu0 %5168
      %5172 = vset.pattern.permute.xlu0 16
      %5173 = vperm.xlu0 %5172, %v5099
      %v5174 = vpop.permute.xlu0 %5173
      %5177 = vset.pattern.permute.xlu0 16
      %5178 = vperm.xlu0 %5177, %v5100
      %v5179 = vpop.permute.xlu0 %5178
      %v5181 = vmul.f32 %v5023, %v5104
      %v5182 = vmul.f32 %v5026, %v5109
      %v5183 = vmul.f32 %v5031, %v5114
      %v5184 = vmul.f32 %v5034, %v5119
      %v5185 = vmul.f32 %v5039, %v5124
      %v5186 = vmul.f32 %v5042, %v5129
      %v5187 = vmul.f32 %v5047, %v5134
      %v5188 = vmul.f32 %v5050, %v5139
      %v5189 = vmul.f32 %v5055, %v5144
      %v5190 = vmul.f32 %v5058, %v5149
      %v5191 = vmul.f32 %v5063, %v5154
      %v5192 = vmul.f32 %v5066, %v5159
      %v5193 = vmul.f32 %v5071, %v5164
      %v5194 = vmul.f32 %v5074, %v5169
      %v5195 = vmul.f32 %v5079, %v5174
      %v5196 = vmul.f32 %v5082, %v5179
      %5197 = vset.pattern.permute.xlu0 7
      %5198 = vperm.xlu0 %5197, %v390
      %v5199 = vpop.permute.xlu0 %5198
      %5201 = vset.pattern.permute.xlu0 7
      %5202 = vperm.xlu0 %5201, %v391
      %v5203 = vpop.permute.xlu0 %5202
      %5205 = vset.pattern.permute.xlu0 7
      %5206 = vperm.xlu0 %5205, %v392
      %v5207 = vpop.permute.xlu0 %5206
      %5209 = vset.pattern.permute.xlu0 7
      %5210 = vperm.xlu0 %5209, %v393
      %v5211 = vpop.permute.xlu0 %5210
      %5213 = vset.pattern.permute.xlu0 7
      %5214 = vperm.xlu0 %5213, %v394
      %v5215 = vpop.permute.xlu0 %5214
      %5217 = vset.pattern.permute.xlu0 7
      %5218 = vperm.xlu0 %5217, %v395
      %v5219 = vpop.permute.xlu0 %5218
      %5221 = vset.pattern.permute.xlu0 7
      %5222 = vperm.xlu0 %5221, %v396
      %v5223 = vpop.permute.xlu0 %5222
      %5225 = vset.pattern.permute.xlu0 7
      %5226 = vperm.xlu0 %5225, %v397
      %v5227 = vpop.permute.xlu0 %5226
      %5229 = vset.pattern.permute.xlu0 7
      %5230 = vperm.xlu0 %5229, %v398
      %v5231 = vpop.permute.xlu0 %5230
      %5233 = vset.pattern.permute.xlu0 7
      %5234 = vperm.xlu0 %5233, %v399
      %v5235 = vpop.permute.xlu0 %5234
      %5237 = vset.pattern.permute.xlu0 7
      %5238 = vperm.xlu0 %5237, %v400
      %v5239 = vpop.permute.xlu0 %5238
      %5241 = vset.pattern.permute.xlu0 7
      %5242 = vperm.xlu0 %5241, %v401
      %v5243 = vpop.permute.xlu0 %5242
      %5245 = vset.pattern.permute.xlu0 7
      %5246 = vperm.xlu0 %5245, %v402
      %v5247 = vpop.permute.xlu0 %5246
      %5249 = vset.pattern.permute.xlu0 7
      %5250 = vperm.xlu0 %5249, %v403
      %v5251 = vpop.permute.xlu0 %5250
      %5253 = vset.pattern.permute.xlu0 7
      %5254 = vperm.xlu0 %5253, %v404
      %v5255 = vpop.permute.xlu0 %5254
      %5257 = vset.pattern.permute.xlu0 7
      %5258 = vperm.xlu0 %5257, %v405
      %v5259 = vpop.permute.xlu0 %5258
      %v5261 = vlaneseq
      %v5262 = vshrl.u32 %v5261, 7
      %v5263 = vsub.s32 7, %v5262
      %v5264 = vrot.slane %v406, %v5263
      %v5265 = vlaneseq
      %v5266 = vshrl.u32 %v5265, 7
      %v5267 = vsub.s32 7, %v5266
      %v5268 = vrot.slane %v407, %v5267
      %v5269 = vadd.f32 %v5199, %v5264
      %v5270 = vadd.f32 %v5199, %v5268
      %v5271 = vadd.f32 %v5203, %v5264
      %v5272 = vadd.f32 %v5203, %v5268
      %v5273 = vadd.f32 %v5207, %v5264
      %v5274 = vadd.f32 %v5207, %v5268
      %v5275 = vadd.f32 %v5211, %v5264
      %v5276 = vadd.f32 %v5211, %v5268
      %v5277 = vadd.f32 %v5215, %v5264
      %v5278 = vadd.f32 %v5215, %v5268
      %v5279 = vadd.f32 %v5219, %v5264
      %v5280 = vadd.f32 %v5219, %v5268
      %v5281 = vadd.f32 %v5223, %v5264
      %v5282 = vadd.f32 %v5223, %v5268
      %v5283 = vadd.f32 %v5227, %v5264
      %v5284 = vadd.f32 %v5227, %v5268
      %v5285 = vadd.f32 %v5231, %v5264
      %v5286 = vadd.f32 %v5231, %v5268
      %v5287 = vadd.f32 %v5235, %v5264
      %v5288 = vadd.f32 %v5235, %v5268
      %v5289 = vadd.f32 %v5239, %v5264
      %v5290 = vadd.f32 %v5239, %v5268
      %v5291 = vadd.f32 %v5243, %v5264
      %v5292 = vadd.f32 %v5243, %v5268
      %v5293 = vadd.f32 %v5247, %v5264
      %v5294 = vadd.f32 %v5247, %v5268
      %v5295 = vadd.f32 %v5251, %v5264
      %v5296 = vadd.f32 %v5251, %v5268
      %v5297 = vadd.f32 %v5255, %v5264
      %v5298 = vadd.f32 %v5255, %v5268
      %v5299 = vadd.f32 %v5259, %v5264
      %v5300 = vadd.f32 %v5259, %v5268
      %v5301 = vmul.f32 %v5269, 0.2
      %v5302 = vmul.f32 %v5270, 0.2
      %v5303 = vmul.f32 %v5271, 0.2
      %v5304 = vmul.f32 %v5272, 0.2
      %v5305 = vmul.f32 %v5273, 0.2
      %v5306 = vmul.f32 %v5274, 0.2
      %v5307 = vmul.f32 %v5275, 0.2
      %v5308 = vmul.f32 %v5276, 0.2
      %v5309 = vmul.f32 %v5277, 0.2
      %v5310 = vmul.f32 %v5278, 0.2
      %v5311 = vmul.f32 %v5279, 0.2
      %v5312 = vmul.f32 %v5280, 0.2
      %v5313 = vmul.f32 %v5281, 0.2
      %v5314 = vmul.f32 %v5282, 0.2
      %v5315 = vmul.f32 %v5283, 0.2
      %v5316 = vmul.f32 %v5284, 0.2
      %v5317 = vmul.f32 %v5285, 0.2
      %v5318 = vmul.f32 %v5286, 0.2
      %v5319 = vmul.f32 %v5287, 0.2
      %v5320 = vmul.f32 %v5288, 0.2
      %v5321 = vmul.f32 %v5289, 0.2
      %v5322 = vmul.f32 %v5290, 0.2
      %v5323 = vmul.f32 %v5291, 0.2
      %v5324 = vmul.f32 %v5292, 0.2
      %v5325 = vmul.f32 %v5293, 0.2
      %v5326 = vmul.f32 %v5294, 0.2
      %v5327 = vmul.f32 %v5295, 0.2
      %v5328 = vmul.f32 %v5296, 0.2
      %v5329 = vmul.f32 %v5297, 0.2
      %v5330 = vmul.f32 %v5298, 0.2
      %v5331 = vmul.f32 %v5299, 0.2
      %v5332 = vmul.f32 %v5300, 0.2
      %v5333 = vmax.f32 %v5269, %v5301
      %v5334 = vmax.f32 %v5270, %v5302
      %v5335 = vmax.f32 %v5271, %v5303
      %v5336 = vmax.f32 %v5272, %v5304
      %v5337 = vmax.f32 %v5273, %v5305
      %v5338 = vmax.f32 %v5274, %v5306
      %v5339 = vmax.f32 %v5275, %v5307
      %v5340 = vmax.f32 %v5276, %v5308
      %v5341 = vmax.f32 %v5277, %v5309
      %v5342 = vmax.f32 %v5278, %v5310
      %v5343 = vmax.f32 %v5279, %v5311
      %v5344 = vmax.f32 %v5280, %v5312
      %v5345 = vmax.f32 %v5281, %v5313
      %v5346 = vmax.f32 %v5282, %v5314
      %v5347 = vmax.f32 %v5283, %v5315
      %v5348 = vmax.f32 %v5284, %v5316
      %v5349 = vmax.f32 %v5285, %v5317
      %v5350 = vmax.f32 %v5286, %v5318
      %v5351 = vmax.f32 %v5287, %v5319
      %v5352 = vmax.f32 %v5288, %v5320
      %v5353 = vmax.f32 %v5289, %v5321
      %v5354 = vmax.f32 %v5290, %v5322
      %v5355 = vmax.f32 %v5291, %v5323
      %v5356 = vmax.f32 %v5292, %v5324
      %v5357 = vmax.f32 %v5293, %v5325
      %v5358 = vmax.f32 %v5294, %v5326
      %v5359 = vmax.f32 %v5295, %v5327
      %v5360 = vmax.f32 %v5296, %v5328
      %v5361 = vmax.f32 %v5297, %v5329
      %v5362 = vmax.f32 %v5298, %v5330
      %v5363 = vmax.f32 %v5299, %v5331
      %v5364 = vmax.f32 %v5300, %v5332
      %v5365 = vadd.f32 %v5333, %v358
      %v5366 = vadd.f32 %v5334, %v359
      %v5367 = vadd.f32 %v5335, %v360
      %v5368 = vadd.f32 %v5336, %v361
      %v5369 = vadd.f32 %v5337, %v362
      %v5370 = vadd.f32 %v5338, %v363
      %v5371 = vadd.f32 %v5339, %v364
      %v5372 = vadd.f32 %v5340, %v365
      %v5373 = vadd.f32 %v5341, %v366
      %v5374 = vadd.f32 %v5342, %v367
      %v5375 = vadd.f32 %v5343, %v368
      %v5376 = vadd.f32 %v5344, %v369
      %v5377 = vadd.f32 %v5345, %v370
      %v5378 = vadd.f32 %v5346, %v371
      %v5379 = vadd.f32 %v5347, %v372
      %v5380 = vadd.f32 %v5348, %v373
      %v5381 = vadd.f32 %v5349, %v374
      %v5382 = vadd.f32 %v5350, %v375
      %v5383 = vadd.f32 %v5351, %v376
      %v5384 = vadd.f32 %v5352, %v377
      %v5385 = vadd.f32 %v5353, %v378
      %v5386 = vadd.f32 %v5354, %v379
      %v5387 = vadd.f32 %v5355, %v380
      %v5388 = vadd.f32 %v5356, %v381
      %v5389 = vadd.f32 %v5357, %v382
      %v5390 = vadd.f32 %v5358, %v383
      %v5391 = vadd.f32 %v5359, %v384
      %v5392 = vadd.f32 %v5360, %v385
      %v5393 = vadd.f32 %v5361, %v386
      %v5394 = vadd.f32 %v5362, %v387
      %v5395 = vadd.f32 %v5363, %v388
      %v5396 = vadd.f32 %v5364, %v389
      %v5397 = vmax.f32 %v5365, %v5366
      %5398 = vmax.xlane.f32.xlu0 %v5397
      %v5399 = vpop.xlane.xlu0 %5398
      %v5400 = vmax.f32 %v5367, %v5368
      %5401 = vmax.xlane.f32.xlu0 %v5400
      %v5402 = vpop.xlane.xlu0 %5401
      %v5403 = vmax.f32 %v5369, %v5370
      %5404 = vmax.xlane.f32.xlu0 %v5403
      %v5405 = vpop.xlane.xlu0 %5404
      %v5406 = vmax.f32 %v5371, %v5372
      %5407 = vmax.xlane.f32.xlu0 %v5406
      %v5408 = vpop.xlane.xlu0 %5407
      %v5409 = vmax.f32 %v5373, %v5374
      %5410 = vmax.xlane.f32.xlu0 %v5409
      %v5411 = vpop.xlane.xlu0 %5410
      %v5412 = vmax.f32 %v5375, %v5376
      %5413 = vmax.xlane.f32.xlu0 %v5412
      %v5414 = vpop.xlane.xlu0 %5413
      %v5415 = vmax.f32 %v5377, %v5378
      %5416 = vmax.xlane.f32.xlu0 %v5415
      %v5417 = vpop.xlane.xlu0 %5416
      %v5418 = vmax.f32 %v5379, %v5380
      %5419 = vmax.xlane.f32.xlu0 %v5418
      %v5420 = vpop.xlane.xlu0 %5419
      %v5421 = vmax.f32 %v5381, %v5382
      %5422 = vmax.xlane.f32.xlu0 %v5421
      %v5423 = vpop.xlane.xlu0 %5422
      %v5424 = vmax.f32 %v5383, %v5384
      %5425 = vmax.xlane.f32.xlu0 %v5424
      %v5426 = vpop.xlane.xlu0 %5425
      %v5427 = vmax.f32 %v5385, %v5386
      %5428 = vmax.xlane.f32.xlu0 %v5427
      %v5429 = vpop.xlane.xlu0 %5428
      %v5430 = vmax.f32 %v5387, %v5388
      %5431 = vmax.xlane.f32.xlu0 %v5430
      %v5432 = vpop.xlane.xlu0 %5431
      %v5433 = vmax.f32 %v5389, %v5390
      %5434 = vmax.xlane.f32.xlu0 %v5433
      %v5435 = vpop.xlane.xlu0 %5434
      %v5436 = vmax.f32 %v5391, %v5392
      %5437 = vmax.xlane.f32.xlu0 %v5436
      %v5438 = vpop.xlane.xlu0 %5437
      %v5439 = vmax.f32 %v5393, %v5394
      %5440 = vmax.xlane.f32.xlu0 %v5439
      %v5441 = vpop.xlane.xlu0 %5440
      %v5442 = vmax.f32 %v5395, %v5396
      %5443 = vmax.xlane.f32.xlu0 %v5442
      %v5444 = vpop.xlane.xlu0 %5443
      %v5445 = vsub.f32 %v5365, %v5399
      %v5446 = vsub.f32 %v5366, %v5399
      %v5447 = vsub.f32 %v5367, %v5402
      %v5448 = vsub.f32 %v5368, %v5402
      %v5449 = vsub.f32 %v5369, %v5405
      %v5450 = vsub.f32 %v5370, %v5405
      %v5451 = vsub.f32 %v5371, %v5408
      %v5452 = vsub.f32 %v5372, %v5408
      %v5453 = vsub.f32 %v5373, %v5411
      %v5454 = vsub.f32 %v5374, %v5411
      %v5455 = vsub.f32 %v5375, %v5414
      %v5456 = vsub.f32 %v5376, %v5414
      %v5457 = vsub.f32 %v5377, %v5417
      %v5458 = vsub.f32 %v5378, %v5417
      %v5459 = vsub.f32 %v5379, %v5420
      %v5460 = vsub.f32 %v5380, %v5420
      %v5461 = vsub.f32 %v5381, %v5423
      %v5462 = vsub.f32 %v5382, %v5423
      %v5463 = vsub.f32 %v5383, %v5426
      %v5464 = vsub.f32 %v5384, %v5426
      %v5465 = vsub.f32 %v5385, %v5429
      %v5466 = vsub.f32 %v5386, %v5429
      %v5467 = vsub.f32 %v5387, %v5432
      %v5468 = vsub.f32 %v5388, %v5432
      %v5469 = vsub.f32 %v5389, %v5435
      %v5470 = vsub.f32 %v5390, %v5435
      %v5471 = vsub.f32 %v5391, %v5438
      %v5472 = vsub.f32 %v5392, %v5438
      %v5473 = vsub.f32 %v5393, %v5441
      %v5474 = vsub.f32 %v5394, %v5441
      %v5475 = vsub.f32 %v5395, %v5444
      %v5476 = vsub.f32 %v5396, %v5444
      %v5477 = vpack.c.bf16 %v5447, %v5445
      %v5478 = vpack.c.bf16 %v5448, %v5446
      %v5479 = vpack.c.bf16 %v5451, %v5449
      %v5480 = vpack.c.bf16 %v5452, %v5450
      %v5481 = vpack.c.bf16 %v5455, %v5453
      %v5482 = vpack.c.bf16 %v5456, %v5454
      %v5483 = vpack.c.bf16 %v5459, %v5457
      %v5484 = vpack.c.bf16 %v5460, %v5458
      %v5485 = vpack.c.bf16 %v5463, %v5461
      %v5486 = vpack.c.bf16 %v5464, %v5462
      %v5487 = vpack.c.bf16 %v5467, %v5465
      %v5488 = vpack.c.bf16 %v5468, %v5466
      %v5489 = vpack.c.bf16 %v5471, %v5469
      %v5490 = vpack.c.bf16 %v5472, %v5470
      %v5491 = vpack.c.bf16 %v5475, %v5473
      %v5492 = vpack.c.bf16 %v5476, %v5474
      %v5494 = vmul.bf16 %v5477, 1069105081
      %v5495 = vpow.bf16.pop %v5494
      %v5497 = vmul.bf16 %v5478, 1069105081
      %v5498 = vpow.bf16.pop %v5497
      %v5500 = vmul.bf16 %v5479, 1069105081
      %v5501 = vpow.bf16.pop %v5500
      %v5503 = vmul.bf16 %v5480, 1069105081
      %v5504 = vpow.bf16.pop %v5503
      %v5506 = vmul.bf16 %v5481, 1069105081
      %v5507 = vpow.bf16.pop %v5506
      %v5509 = vmul.bf16 %v5482, 1069105081
      %v5510 = vpow.bf16.pop %v5509
      %v5512 = vmul.bf16 %v5483, 1069105081
      %v5513 = vpow.bf16.pop %v5512
      %v5515 = vmul.bf16 %v5484, 1069105081
      %v5516 = vpow.bf16.pop %v5515
      %v5518 = vmul.bf16 %v5485, 1069105081
      %v5519 = vpow.bf16.pop %v5518
      %v5521 = vmul.bf16 %v5486, 1069105081
      %v5522 = vpow.bf16.pop %v5521
      %v5524 = vmul.bf16 %v5487, 1069105081
      %v5525 = vpow.bf16.pop %v5524
      %v5527 = vmul.bf16 %v5488, 1069105081
      %v5528 = vpow.bf16.pop %v5527
      %v5530 = vmul.bf16 %v5489, 1069105081
      %v5531 = vpow.bf16.pop %v5530
      %v5533 = vmul.bf16 %v5490, 1069105081
      %v5534 = vpow.bf16.pop %v5533
      %v5536 = vmul.bf16 %v5491, 1069105081
      %v5537 = vpow.bf16.pop %v5536
      %v5539 = vmul.bf16 %v5492, 1069105081
      %v5540 = vpow.bf16.pop %v5539
      %s5541 = scalar_lea.vmem %s3, 896
      %v5542 = vld [vmem:[%s5541] sm:$0xf]
      %v5543 = vld [vmem:[%s5541 + $0x4] sm:$0xf]
      %v5544 = vld [vmem:[%s5541 + $0x8] sm:$0xf]
      %v5545 = vld [vmem:[%s5541 + $0xc] sm:$0xf]
      %v5546 = vld [vmem:[%s5541 + $0x10] sm:$0xf]
      %v5547 = vld [vmem:[%s5541 + $0x14] sm:$0xf]
      %v5548 = vld [vmem:[%s5541 + $0x18] sm:$0xf]
      %v5549 = vld [vmem:[%s5541 + $0x1c] sm:$0xf]
      %v5550 = vld [vmem:[%s5541 + $0x20] sm:$0xf]
      %v5551 = vld [vmem:[%s5541 + $0x24] sm:$0xf]
      %v5552 = vld [vmem:[%s5541 + $0x28] sm:$0xf]
      %v5553 = vld [vmem:[%s5541 + $0x2c] sm:$0xf]
      %v5554 = vld [vmem:[%s5541 + $0x30] sm:$0xf]
      %v5555 = vld [vmem:[%s5541 + $0x34] sm:$0xf]
      %v5556 = vld [vmem:[%s5541 + $0x38] sm:$0xf]
      %v5557 = vld [vmem:[%s5541 + $0x3c] sm:$0xf]
      %v5558 = vld [vmem:[%s5541 + $0x40] sm:$0xf]
      %v5559 = vld [vmem:[%s5541 + $0x44] sm:$0xf]
      %v5560 = vld [vmem:[%s5541 + $0x48] sm:$0xf]
      %v5561 = vld [vmem:[%s5541 + $0x4c] sm:$0xf]
      %v5562 = vld [vmem:[%s5541 + $0x50] sm:$0xf]
      %v5563 = vld [vmem:[%s5541 + $0x54] sm:$0xf]
      %v5564 = vld [vmem:[%s5541 + $0x58] sm:$0xf]
      %v5565 = vld [vmem:[%s5541 + $0x5c] sm:$0xf]
      %v5566 = vld [vmem:[%s5541 + $0x60] sm:$0xf]
      %v5567 = vld [vmem:[%s5541 + $0x64] sm:$0xf]
      %v5568 = vld [vmem:[%s5541 + $0x68] sm:$0xf]
      %v5569 = vld [vmem:[%s5541 + $0x6c] sm:$0xf]
      %v5570 = vld [vmem:[%s5541 + $0x70] sm:$0xf]
      %v5571 = vld [vmem:[%s5541 + $0x74] sm:$0xf]
      %v5572 = vld [vmem:[%s5541 + $0x78] sm:$0xf]
      %v5573 = vld [vmem:[%s5541 + $0x7c] sm:$0xf]
      %v5606 = vunpack.c.l.b16 %v5542
      %v5607 = vunpack.c.l.b16 %v5543
      %v5608 = vunpack.c.l.b16 %v5544
      %v5609 = vunpack.c.l.b16 %v5545
      %v5610 = vunpack.c.l.b16 %v5546
      %v5611 = vunpack.c.l.b16 %v5547
      %v5612 = vunpack.c.l.b16 %v5548
      %v5613 = vunpack.c.l.b16 %v5549
      %v5614 = vunpack.c.l.b16 %v5550
      %v5615 = vunpack.c.l.b16 %v5551
      %v5616 = vunpack.c.l.b16 %v5552
      %v5617 = vunpack.c.l.b16 %v5553
      %v5618 = vunpack.c.l.b16 %v5554
      %v5619 = vunpack.c.l.b16 %v5555
      %v5620 = vunpack.c.l.b16 %v5556
      %v5621 = vunpack.c.l.b16 %v5557
      %v5622 = vunpack.c.l.b16 %v5558
      %v5623 = vunpack.c.l.b16 %v5559
      %v5624 = vunpack.c.l.b16 %v5560
      %v5625 = vunpack.c.l.b16 %v5561
      %v5626 = vunpack.c.l.b16 %v5562
      %v5627 = vunpack.c.l.b16 %v5563
      %v5628 = vunpack.c.l.b16 %v5564
      %v5629 = vunpack.c.l.b16 %v5565
      %v5630 = vunpack.c.l.b16 %v5566
      %v5631 = vunpack.c.l.b16 %v5567
      %v5632 = vunpack.c.l.b16 %v5568
      %v5633 = vunpack.c.l.b16 %v5569
      %v5634 = vunpack.c.l.b16 %v5570
      %v5635 = vunpack.c.l.b16 %v5571
      %v5636 = vunpack.c.l.b16 %v5572
      %v5637 = vunpack.c.l.b16 %v5573
      %v5638 = vpack.c.b16 %v5607, %v5606
      %v5639 = vpack.c.b16 %v5609, %v5608
      %v5640 = vpack.c.b16 %v5611, %v5610
      %v5641 = vpack.c.b16 %v5613, %v5612
      %v5642 = vpack.c.b16 %v5615, %v5614
      %v5643 = vpack.c.b16 %v5617, %v5616
      %v5644 = vpack.c.b16 %v5619, %v5618
      %v5645 = vpack.c.b16 %v5621, %v5620
      %v5646 = vpack.c.b16 %v5623, %v5622
      %v5647 = vpack.c.b16 %v5625, %v5624
      %v5648 = vpack.c.b16 %v5627, %v5626
      %v5649 = vpack.c.b16 %v5629, %v5628
      %v5650 = vpack.c.b16 %v5631, %v5630
      %v5651 = vpack.c.b16 %v5633, %v5632
      %v5652 = vpack.c.b16 %v5635, %v5634
      %v5653 = vpack.c.b16 %v5637, %v5636
      %5670 = vmatprep.subr.bf16.mxu0 0
      %5671 = vmatpush1.bf16.msra.mxu0 %v5638
      %5672 = vmatprep.subr.bf16.mxu0 0
      %5673 = vmatpush1.bf16.msra.mxu0 %v5639
      %5674 = vmatprep.subr.bf16.mxu0 0
      %5675 = vmatpush1.bf16.msra.mxu0 %v5640
      %5676 = vmatprep.subr.bf16.mxu0 0
      %5677 = vmatpush1.bf16.msra.mxu0 %v5641
      %5678 = vmatprep.subr.bf16.mxu0 0
      %5679 = vmatpush1.bf16.msra.mxu0 %v5642
      %5680 = vmatprep.subr.bf16.mxu0 0
      %5681 = vmatpush1.bf16.msra.mxu0 %v5643
      %5682 = vmatprep.subr.bf16.mxu0 0
      %5683 = vmatpush1.bf16.msra.mxu0 %v5644
      %5684 = vmatprep.subr.bf16.mxu0 0
      %5685 = vmatpush1.bf16.msra.mxu0 %v5645
      %5686 = vmatprep.subr.bf16.mxu0 0
      %5687 = vmatpush1.bf16.msra.mxu0 %v5646
      %5688 = vmatprep.subr.bf16.mxu0 0
      %5689 = vmatpush1.bf16.msra.mxu0 %v5647
      %5690 = vmatprep.subr.bf16.mxu0 0
      %5691 = vmatpush1.bf16.msra.mxu0 %v5648
      %5692 = vmatprep.subr.bf16.mxu0 0
      %5693 = vmatpush1.bf16.msra.mxu0 %v5649
      %5694 = vmatprep.subr.bf16.mxu0 0
      %5695 = vmatpush1.bf16.msra.mxu0 %v5650
      %5696 = vmatprep.subr.bf16.mxu0 0
      %5697 = vmatpush1.bf16.msra.mxu0 %v5651
      %5698 = vmatprep.subr.bf16.mxu0 0
      %5699 = vmatpush1.bf16.msra.mxu0 %v5652
      %5700 = vmatprep.subr.bf16.mxu0 0
      %5701 = vmatpush1.bf16.msra.mxu0 %v5653
      %5702 = vmatprep.mubr.bf16.mxu0 %v5498
      %5703 = vmatmul.mubr.bf16.gmra.mrb[0].mxu0 %v5495
      %v5704 = vpop.f32.mrb[0].mxu0
      %v5705 = vadd.f32 0.0, %v5704
      %v5706 = vpop.f32.mrb[0].mxu0
      %v5707 = vpop.f32.mrb[0].mxu0
      %v5708 = vadd.f32 0.0, %v5707
      %v5709 = vpop.f32.mrb[0].mxu0
      %5710 = vmatprep.mubr.bf16.mxu0 %v5504
      %5711 = vmatmul.mubr.bf16.gmra.mrb[0].mxu0 %v5501
      %v5712 = vpop.f32.mrb[0].mxu0
      %v5713 = vadd.f32 0.0, %v5712
      %v5714 = vpop.f32.mrb[0].mxu0
      %v5715 = vpop.f32.mrb[0].mxu0
      %v5716 = vadd.f32 0.0, %v5715
      %v5717 = vpop.f32.mrb[0].mxu0
      %5718 = vmatprep.mubr.bf16.mxu0 %v5510
      %5719 = vmatmul.mubr.bf16.gmra.mrb[0].mxu0 %v5507
      %v5720 = vpop.f32.mrb[0].mxu0
      %v5721 = vadd.f32 0.0, %v5720
      %v5722 = vpop.f32.mrb[0].mxu0
      %v5723 = vpop.f32.mrb[0].mxu0
      %v5724 = vadd.f32 0.0, %v5723
      %v5725 = vpop.f32.mrb[0].mxu0
      %5726 = vmatprep.mubr.bf16.mxu0 %v5516
      %5727 = vmatmul.mubr.bf16.gmra.mrb[0].mxu0 %v5513
      %v5728 = vpop.f32.mrb[0].mxu0
      %v5729 = vadd.f32 0.0, %v5728
      %v5730 = vpop.f32.mrb[0].mxu0
      %v5731 = vpop.f32.mrb[0].mxu0
      %v5732 = vadd.f32 0.0, %v5731
      %v5733 = vpop.f32.mrb[0].mxu0
      %5734 = vmatprep.mubr.bf16.mxu0 %v5522
      %5735 = vmatmul.mubr.bf16.gmra.mrb[0].mxu0 %v5519
      %v5736 = vpop.f32.mrb[0].mxu0
      %v5737 = vadd.f32 0.0, %v5736
      %v5738 = vpop.f32.mrb[0].mxu0
      %v5739 = vpop.f32.mrb[0].mxu0
      %v5740 = vadd.f32 0.0, %v5739
      %v5741 = vpop.f32.mrb[0].mxu0
      %5742 = vmatprep.mubr.bf16.mxu0 %v5528
      %5743 = vmatmul.mubr.bf16.gmra.mrb[0].mxu0 %v5525
      %v5744 = vpop.f32.mrb[0].mxu0
      %v5745 = vadd.f32 0.0, %v5744
      %v5746 = vpop.f32.mrb[0].mxu0
      %v5747 = vpop.f32.mrb[0].mxu0
      %v5748 = vadd.f32 0.0, %v5747
      %v5749 = vpop.f32.mrb[0].mxu0
      %5750 = vmatprep.mubr.bf16.mxu0 %v5534
      %5751 = vmatmul.mubr.bf16.gmra.mrb[0].mxu0 %v5531
      %v5752 = vpop.f32.mrb[0].mxu0
      %v5753 = vadd.f32 0.0, %v5752
      %v5754 = vpop.f32.mrb[0].mxu0
      %v5755 = vpop.f32.mrb[0].mxu0
      %v5756 = vadd.f32 0.0, %v5755
      %v5757 = vpop.f32.mrb[0].mxu0
      %5758 = vmatprep.mubr.bf16.mxu0 %v5540
      %5759 = vmatmul.mubr.bf16.gmra.mrb[0].mxu0 %v5537
      %v5760 = vpop.f32.mrb[0].mxu0
      %v5761 = vadd.f32 0.0, %v5760
      %v5762 = vpop.f32.mrb[0].mxu0
      %v5763 = vpop.f32.mrb[0].mxu0
      %v5764 = vadd.f32 0.0, %v5763
      %v5765 = vpop.f32.mrb[0].mxu0
      %5766 = vdwg.mxu0
      %v5767 = vrcp.pop %v5705
      %v5768 = vrcp.pop %v5708
      %v5769 = vrcp.pop %v5713
      %v5770 = vrcp.pop %v5716
      %v5771 = vrcp.pop %v5721
      %v5772 = vrcp.pop %v5724
      %v5773 = vrcp.pop %v5729
      %v5774 = vrcp.pop %v5732
      %v5775 = vrcp.pop %v5737
      %v5776 = vrcp.pop %v5740
      %v5777 = vrcp.pop %v5745
      %v5778 = vrcp.pop %v5748
      %v5779 = vrcp.pop %v5753
      %v5780 = vrcp.pop %v5756
      %v5781 = vrcp.pop %v5761
      %v5782 = vrcp.pop %v5764
      %5784 = vset.pattern.permute.xlu0 16
      %5785 = vperm.xlu0 %5784, %v5767
      %v5786 = vpop.permute.xlu0 %5785
      %5789 = vset.pattern.permute.xlu0 16
      %5790 = vperm.xlu0 %5789, %v5768
      %v5791 = vpop.permute.xlu0 %5790
      %5794 = vset.pattern.permute.xlu0 16
      %5795 = vperm.xlu0 %5794, %v5769
      %v5796 = vpop.permute.xlu0 %5795
      %5799 = vset.pattern.permute.xlu0 16
      %5800 = vperm.xlu0 %5799, %v5770
      %v5801 = vpop.permute.xlu0 %5800
      %5804 = vset.pattern.permute.xlu0 16
      %5805 = vperm.xlu0 %5804, %v5771
      %v5806 = vpop.permute.xlu0 %5805
      %5809 = vset.pattern.permute.xlu0 16
      %5810 = vperm.xlu0 %5809, %v5772
      %v5811 = vpop.permute.xlu0 %5810
      %5814 = vset.pattern.permute.xlu0 16
      %5815 = vperm.xlu0 %5814, %v5773
      %v5816 = vpop.permute.xlu0 %5815
      %5819 = vset.pattern.permute.xlu0 16
      %5820 = vperm.xlu0 %5819, %v5774
      %v5821 = vpop.permute.xlu0 %5820
      %5824 = vset.pattern.permute.xlu0 16
      %5825 = vperm.xlu0 %5824, %v5775
      %v5826 = vpop.permute.xlu0 %5825
      %5829 = vset.pattern.permute.xlu0 16
      %5830 = vperm.xlu0 %5829, %v5776
      %v5831 = vpop.permute.xlu0 %5830
      %5834 = vset.pattern.permute.xlu0 16
      %5835 = vperm.xlu0 %5834, %v5777
      %v5836 = vpop.permute.xlu0 %5835
      %5839 = vset.pattern.permute.xlu0 16
      %5840 = vperm.xlu0 %5839, %v5778
      %v5841 = vpop.permute.xlu0 %5840
      %5844 = vset.pattern.permute.xlu0 16
      %5845 = vperm.xlu0 %5844, %v5779
      %v5846 = vpop.permute.xlu0 %5845
      %5849 = vset.pattern.permute.xlu0 16
      %5850 = vperm.xlu0 %5849, %v5780
      %v5851 = vpop.permute.xlu0 %5850
      %5854 = vset.pattern.permute.xlu0 16
      %5855 = vperm.xlu0 %5854, %v5781
      %v5856 = vpop.permute.xlu0 %5855
      %5859 = vset.pattern.permute.xlu0 16
      %5860 = vperm.xlu0 %5859, %v5782
      %v5861 = vpop.permute.xlu0 %5860
      %v5863 = vmul.f32 %v5705, %v5786
      %v5864 = vmul.f32 %v5708, %v5791
      %v5865 = vmul.f32 %v5713, %v5796
      %v5866 = vmul.f32 %v5716, %v5801
      %v5867 = vmul.f32 %v5721, %v5806
      %v5868 = vmul.f32 %v5724, %v5811
      %v5869 = vmul.f32 %v5729, %v5816
      %v5870 = vmul.f32 %v5732, %v5821
      %v5871 = vmul.f32 %v5737, %v5826
      %v5872 = vmul.f32 %v5740, %v5831
      %v5873 = vmul.f32 %v5745, %v5836
      %v5874 = vmul.f32 %v5748, %v5841
      %v5875 = vmul.f32 %v5753, %v5846
      %v5876 = vmul.f32 %v5756, %v5851
      %v5877 = vmul.f32 %v5761, %v5856
      %v5878 = vmul.f32 %v5764, %v5861
      %5895 = vrot.lane.b32.xlu0 %v1771, 16
      %v5896 = vpop.permute.xlu0 %5895
      %5897 = vrot.lane.b32.xlu0 %v1772, 16
      %v5898 = vpop.permute.xlu0 %5897
      %5899 = vrot.lane.b32.xlu0 %v1773, 16
      %v5900 = vpop.permute.xlu0 %5899
      %5901 = vrot.lane.b32.xlu0 %v1774, 16
      %v5902 = vpop.permute.xlu0 %5901
      %5903 = vrot.lane.b32.xlu0 %v1775, 16
      %v5904 = vpop.permute.xlu0 %5903
      %5905 = vrot.lane.b32.xlu0 %v1776, 16
      %v5906 = vpop.permute.xlu0 %5905
      %5907 = vrot.lane.b32.xlu0 %v1777, 16
      %v5908 = vpop.permute.xlu0 %5907
      %5909 = vrot.lane.b32.xlu0 %v1778, 16
      %v5910 = vpop.permute.xlu0 %5909
      %5911 = vrot.lane.b32.xlu0 %v1779, 16
      %v5912 = vpop.permute.xlu0 %5911
      %5913 = vrot.lane.b32.xlu0 %v1780, 16
      %v5914 = vpop.permute.xlu0 %5913
      %5915 = vrot.lane.b32.xlu0 %v1781, 16
      %v5916 = vpop.permute.xlu0 %5915
      %5917 = vrot.lane.b32.xlu0 %v1782, 16
      %v5918 = vpop.permute.xlu0 %5917
      %5919 = vrot.lane.b32.xlu0 %v1783, 16
      %v5920 = vpop.permute.xlu0 %5919
      %5921 = vrot.lane.b32.xlu0 %v1784, 16
      %v5922 = vpop.permute.xlu0 %5921
      %5923 = vrot.lane.b32.xlu0 %v1785, 16
      %v5924 = vpop.permute.xlu0 %5923
      %5925 = vrot.lane.b32.xlu0 %v1786, 16
      %v5926 = vpop.permute.xlu0 %5925
      %5959 = vrot.lane.b32.xlu0 %v2453, 32
      %v5960 = vpop.permute.xlu0 %5959
      %5961 = vrot.lane.b32.xlu0 %v2454, 32
      %v5962 = vpop.permute.xlu0 %5961
      %5963 = vrot.lane.b32.xlu0 %v2455, 32
      %v5964 = vpop.permute.xlu0 %5963
      %5965 = vrot.lane.b32.xlu0 %v2456, 32
      %v5966 = vpop.permute.xlu0 %5965
      %5967 = vrot.lane.b32.xlu0 %v2457, 32
      %v5968 = vpop.permute.xlu0 %5967
      %5969 = vrot.lane.b32.xlu0 %v2458, 32
      %v5970 = vpop.permute.xlu0 %5969
      %5971 = vrot.lane.b32.xlu0 %v2459, 32
      %v5972 = vpop.permute.xlu0 %5971
      %5973 = vrot.lane.b32.xlu0 %v2460, 32
      %v5974 = vpop.permute.xlu0 %5973
      %5975 = vrot.lane.b32.xlu0 %v2461, 32
      %v5976 = vpop.permute.xlu0 %5975
      %5977 = vrot.lane.b32.xlu0 %v2462, 32
      %v5978 = vpop.permute.xlu0 %5977
      %5979 = vrot.lane.b32.xlu0 %v2463, 32
      %v5980 = vpop.permute.xlu0 %5979
      %5981 = vrot.lane.b32.xlu0 %v2464, 32
      %v5982 = vpop.permute.xlu0 %5981
      %5983 = vrot.lane.b32.xlu0 %v2465, 32
      %v5984 = vpop.permute.xlu0 %5983
      %5985 = vrot.lane.b32.xlu0 %v2466, 32
      %v5986 = vpop.permute.xlu0 %5985
      %5987 = vrot.lane.b32.xlu0 %v2467, 32
      %v5988 = vpop.permute.xlu0 %5987
      %5989 = vrot.lane.b32.xlu0 %v2468, 32
      %v5990 = vpop.permute.xlu0 %5989
      %6023 = vrot.lane.b32.xlu0 %v3135, 48
      %v6024 = vpop.permute.xlu0 %6023
      %6025 = vrot.lane.b32.xlu0 %v3136, 48
      %v6026 = vpop.permute.xlu0 %6025
      %6027 = vrot.lane.b32.xlu0 %v3137, 48
      %v6028 = vpop.permute.xlu0 %6027
      %6029 = vrot.lane.b32.xlu0 %v3138, 48
      %v6030 = vpop.permute.xlu0 %6029
      %6031 = vrot.lane.b32.xlu0 %v3139, 48
      %v6032 = vpop.permute.xlu0 %6031
      %6033 = vrot.lane.b32.xlu0 %v3140, 48
      %v6034 = vpop.permute.xlu0 %6033
      %6035 = vrot.lane.b32.xlu0 %v3141, 48
      %v6036 = vpop.permute.xlu0 %6035
      %6037 = vrot.lane.b32.xlu0 %v3142, 48
      %v6038 = vpop.permute.xlu0 %6037
      %6039 = vrot.lane.b32.xlu0 %v3143, 48
      %v6040 = vpop.permute.xlu0 %6039
      %6041 = vrot.lane.b32.xlu0 %v3144, 48
      %v6042 = vpop.permute.xlu0 %6041
      %6043 = vrot.lane.b32.xlu0 %v3145, 48
      %v6044 = vpop.permute.xlu0 %6043
      %6045 = vrot.lane.b32.xlu0 %v3146, 48
      %v6046 = vpop.permute.xlu0 %6045
      %6047 = vrot.lane.b32.xlu0 %v3147, 48
      %v6048 = vpop.permute.xlu0 %6047
      %6049 = vrot.lane.b32.xlu0 %v3148, 48
      %v6050 = vpop.permute.xlu0 %6049
      %6051 = vrot.lane.b32.xlu0 %v3149, 48
      %v6052 = vpop.permute.xlu0 %6051
      %6053 = vrot.lane.b32.xlu0 %v3150, 48
      %v6054 = vpop.permute.xlu0 %6053
      %6087 = vrot.lane.b32.xlu0 %v3817, 64
      %v6088 = vpop.permute.xlu0 %6087
      %6089 = vrot.lane.b32.xlu0 %v3818, 64
      %v6090 = vpop.permute.xlu0 %6089
      %6091 = vrot.lane.b32.xlu0 %v3819, 64
      %v6092 = vpop.permute.xlu0 %6091
      %6093 = vrot.lane.b32.xlu0 %v3820, 64
      %v6094 = vpop.permute.xlu0 %6093
      %6095 = vrot.lane.b32.xlu0 %v3821, 64
      %v6096 = vpop.permute.xlu0 %6095
      %6097 = vrot.lane.b32.xlu0 %v3822, 64
      %v6098 = vpop.permute.xlu0 %6097
      %6099 = vrot.lane.b32.xlu0 %v3823, 64
      %v6100 = vpop.permute.xlu0 %6099
      %6101 = vrot.lane.b32.xlu0 %v3824, 64
      %v6102 = vpop.permute.xlu0 %6101
      %6103 = vrot.lane.b32.xlu0 %v3825, 64
      %v6104 = vpop.permute.xlu0 %6103
      %6105 = vrot.lane.b32.xlu0 %v3826, 64
      %v6106 = vpop.permute.xlu0 %6105
      %6107 = vrot.lane.b32.xlu0 %v3827, 64
      %v6108 = vpop.permute.xlu0 %6107
      %6109 = vrot.lane.b32.xlu0 %v3828, 64
      %v6110 = vpop.permute.xlu0 %6109
      %6111 = vrot.lane.b32.xlu0 %v3829, 64
      %v6112 = vpop.permute.xlu0 %6111
      %6113 = vrot.lane.b32.xlu0 %v3830, 64
      %v6114 = vpop.permute.xlu0 %6113
      %6115 = vrot.lane.b32.xlu0 %v3831, 64
      %v6116 = vpop.permute.xlu0 %6115
      %6117 = vrot.lane.b32.xlu0 %v3832, 64
      %v6118 = vpop.permute.xlu0 %6117
      %6151 = vrot.lane.b32.xlu0 %v4499, 80
      %v6152 = vpop.permute.xlu0 %6151
      %6153 = vrot.lane.b32.xlu0 %v4500, 80
      %v6154 = vpop.permute.xlu0 %6153
      %6155 = vrot.lane.b32.xlu0 %v4501, 80
      %v6156 = vpop.permute.xlu0 %6155
      %6157 = vrot.lane.b32.xlu0 %v4502, 80
      %v6158 = vpop.permute.xlu0 %6157
      %6159 = vrot.lane.b32.xlu0 %v4503, 80
      %v6160 = vpop.permute.xlu0 %6159
      %6161 = vrot.lane.b32.xlu0 %v4504, 80
      %v6162 = vpop.permute.xlu0 %6161
      %6163 = vrot.lane.b32.xlu0 %v4505, 80
      %v6164 = vpop.permute.xlu0 %6163
      %6165 = vrot.lane.b32.xlu0 %v4506, 80
      %v6166 = vpop.permute.xlu0 %6165
      %6167 = vrot.lane.b32.xlu0 %v4507, 80
      %v6168 = vpop.permute.xlu0 %6167
      %6169 = vrot.lane.b32.xlu0 %v4508, 80
      %v6170 = vpop.permute.xlu0 %6169
      %6171 = vrot.lane.b32.xlu0 %v4509, 80
      %v6172 = vpop.permute.xlu0 %6171
      %6173 = vrot.lane.b32.xlu0 %v4510, 80
      %v6174 = vpop.permute.xlu0 %6173
      %6175 = vrot.lane.b32.xlu0 %v4511, 80
      %v6176 = vpop.permute.xlu0 %6175
      %6177 = vrot.lane.b32.xlu0 %v4512, 80
      %v6178 = vpop.permute.xlu0 %6177
      %6179 = vrot.lane.b32.xlu0 %v4513, 80
      %v6180 = vpop.permute.xlu0 %6179
      %6181 = vrot.lane.b32.xlu0 %v4514, 80
      %v6182 = vpop.permute.xlu0 %6181
      %6215 = vrot.lane.b32.xlu0 %v5181, 96
      %v6216 = vpop.permute.xlu0 %6215
      %6217 = vrot.lane.b32.xlu0 %v5182, 96
      %v6218 = vpop.permute.xlu0 %6217
      %6219 = vrot.lane.b32.xlu0 %v5183, 96
      %v6220 = vpop.permute.xlu0 %6219
      %6221 = vrot.lane.b32.xlu0 %v5184, 96
      %v6222 = vpop.permute.xlu0 %6221
      %6223 = vrot.lane.b32.xlu0 %v5185, 96
      %v6224 = vpop.permute.xlu0 %6223
      %6225 = vrot.lane.b32.xlu0 %v5186, 96
      %v6226 = vpop.permute.xlu0 %6225
      %6227 = vrot.lane.b32.xlu0 %v5187, 96
      %v6228 = vpop.permute.xlu0 %6227
      %6229 = vrot.lane.b32.xlu0 %v5188, 96
      %v6230 = vpop.permute.xlu0 %6229
      %6231 = vrot.lane.b32.xlu0 %v5189, 96
      %v6232 = vpop.permute.xlu0 %6231
      %6233 = vrot.lane.b32.xlu0 %v5190, 96
      %v6234 = vpop.permute.xlu0 %6233
      %6235 = vrot.lane.b32.xlu0 %v5191, 96
      %v6236 = vpop.permute.xlu0 %6235
      %6237 = vrot.lane.b32.xlu0 %v5192, 96
      %v6238 = vpop.permute.xlu0 %6237
      %6239 = vrot.lane.b32.xlu0 %v5193, 96
      %v6240 = vpop.permute.xlu0 %6239
      %6241 = vrot.lane.b32.xlu0 %v5194, 96
      %v6242 = vpop.permute.xlu0 %6241
      %6243 = vrot.lane.b32.xlu0 %v5195, 96
      %v6244 = vpop.permute.xlu0 %6243
      %6245 = vrot.lane.b32.xlu0 %v5196, 96
      %v6246 = vpop.permute.xlu0 %6245
      %6279 = vrot.lane.b32.xlu0 %v5863, 112
      %v6280 = vpop.permute.xlu0 %6279
      %6281 = vrot.lane.b32.xlu0 %v5864, 112
      %v6282 = vpop.permute.xlu0 %6281
      %6283 = vrot.lane.b32.xlu0 %v5865, 112
      %v6284 = vpop.permute.xlu0 %6283
      %6285 = vrot.lane.b32.xlu0 %v5866, 112
      %v6286 = vpop.permute.xlu0 %6285
      %6287 = vrot.lane.b32.xlu0 %v5867, 112
      %v6288 = vpop.permute.xlu0 %6287
      %6289 = vrot.lane.b32.xlu0 %v5868, 112
      %v6290 = vpop.permute.xlu0 %6289
      %6291 = vrot.lane.b32.xlu0 %v5869, 112
      %v6292 = vpop.permute.xlu0 %6291
      %6293 = vrot.lane.b32.xlu0 %v5870, 112
      %v6294 = vpop.permute.xlu0 %6293
      %6295 = vrot.lane.b32.xlu0 %v5871, 112
      %v6296 = vpop.permute.xlu0 %6295
      %6297 = vrot.lane.b32.xlu0 %v5872, 112
      %v6298 = vpop.permute.xlu0 %6297
      %6299 = vrot.lane.b32.xlu0 %v5873, 112
      %v6300 = vpop.permute.xlu0 %6299
      %6301 = vrot.lane.b32.xlu0 %v5874, 112
      %v6302 = vpop.permute.xlu0 %6301
      %6303 = vrot.lane.b32.xlu0 %v5875, 112
      %v6304 = vpop.permute.xlu0 %6303
      %6305 = vrot.lane.b32.xlu0 %v5876, 112
      %v6306 = vpop.permute.xlu0 %6305
      %6307 = vrot.lane.b32.xlu0 %v5877, 112
      %v6308 = vpop.permute.xlu0 %6307
      %6309 = vrot.lane.b32.xlu0 %v5878, 112
      %v6310 = vpop.permute.xlu0 %6309
      %vm6327 = vcmask 130048
      %v6328 = vsel %vm6327, %v1089, %v5896
      %v6329 = vsel %vm6327, %v1090, %v5898
      %v6330 = vsel %vm6327, %v1091, %v5900
      %v6331 = vsel %vm6327, %v1092, %v5902
      %v6332 = vsel %vm6327, %v1093, %v5904
      %v6333 = vsel %vm6327, %v1094, %v5906
      %v6334 = vsel %vm6327, %v1095, %v5908
      %v6335 = vsel %vm6327, %v1096, %v5910
      %v6336 = vsel %vm6327, %v1097, %v5912
      %v6337 = vsel %vm6327, %v1098, %v5914
      %v6338 = vsel %vm6327, %v1099, %v5916
      %v6339 = vsel %vm6327, %v1100, %v5918
      %v6340 = vsel %vm6327, %v1101, %v5920
      %v6341 = vsel %vm6327, %v1102, %v5922
      %v6342 = vsel %vm6327, %v1103, %v5924
      %v6343 = vsel %vm6327, %v1104, %v5926
      %vm6344 = vcmask 261120
      %v6345 = vsel %vm6344, %v6328, %v5960
      %v6346 = vsel %vm6344, %v6329, %v5962
      %v6347 = vsel %vm6344, %v6330, %v5964
      %v6348 = vsel %vm6344, %v6331, %v5966
      %v6349 = vsel %vm6344, %v6332, %v5968
      %v6350 = vsel %vm6344, %v6333, %v5970
      %v6351 = vsel %vm6344, %v6334, %v5972
      %v6352 = vsel %vm6344, %v6335, %v5974
      %v6353 = vsel %vm6344, %v6336, %v5976
      %v6354 = vsel %vm6344, %v6337, %v5978
      %v6355 = vsel %vm6344, %v6338, %v5980
      %v6356 = vsel %vm6344, %v6339, %v5982
      %v6357 = vsel %vm6344, %v6340, %v5984
      %v6358 = vsel %vm6344, %v6341, %v5986
      %v6359 = vsel %vm6344, %v6342, %v5988
      %v6360 = vsel %vm6344, %v6343, %v5990
      %vm6361 = vcmask 392192
      %v6362 = vsel %vm6361, %v6345, %v6024
      %v6363 = vsel %vm6361, %v6346, %v6026
      %v6364 = vsel %vm6361, %v6347, %v6028
      %v6365 = vsel %vm6361, %v6348, %v6030
      %v6366 = vsel %vm6361, %v6349, %v6032
      %v6367 = vsel %vm6361, %v6350, %v6034
      %v6368 = vsel %vm6361, %v6351, %v6036
      %v6369 = vsel %vm6361, %v6352, %v6038
      %v6370 = vsel %vm6361, %v6353, %v6040
      %v6371 = vsel %vm6361, %v6354, %v6042
      %v6372 = vsel %vm6361, %v6355, %v6044
      %v6373 = vsel %vm6361, %v6356, %v6046
      %v6374 = vsel %vm6361, %v6357, %v6048
      %v6375 = vsel %vm6361, %v6358, %v6050
      %v6376 = vsel %vm6361, %v6359, %v6052
      %v6377 = vsel %vm6361, %v6360, %v6054
      %vm6378 = vcmask 523264
      %v6379 = vsel %vm6378, %v6362, %v6088
      %v6380 = vsel %vm6378, %v6363, %v6090
      %v6381 = vsel %vm6378, %v6364, %v6092
      %v6382 = vsel %vm6378, %v6365, %v6094
      %v6383 = vsel %vm6378, %v6366, %v6096
      %v6384 = vsel %vm6378, %v6367, %v6098
      %v6385 = vsel %vm6378, %v6368, %v6100
      %v6386 = vsel %vm6378, %v6369, %v6102
      %v6387 = vsel %vm6378, %v6370, %v6104
      %v6388 = vsel %vm6378, %v6371, %v6106
      %v6389 = vsel %vm6378, %v6372, %v6108
      %v6390 = vsel %vm6378, %v6373, %v6110
      %v6391 = vsel %vm6378, %v6374, %v6112
      %v6392 = vsel %vm6378, %v6375, %v6114
      %v6393 = vsel %vm6378, %v6376, %v6116
      %v6394 = vsel %vm6378, %v6377, %v6118
      %vm6395 = vcmask 654336
      %v6396 = vsel %vm6395, %v6379, %v6152
      %v6397 = vsel %vm6395, %v6380, %v6154
      %v6398 = vsel %vm6395, %v6381, %v6156
      %v6399 = vsel %vm6395, %v6382, %v6158
      %v6400 = vsel %vm6395, %v6383, %v6160
      %v6401 = vsel %vm6395, %v6384, %v6162
      %v6402 = vsel %vm6395, %v6385, %v6164
      %v6403 = vsel %vm6395, %v6386, %v6166
      %v6404 = vsel %vm6395, %v6387, %v6168
      %v6405 = vsel %vm6395, %v6388, %v6170
      %v6406 = vsel %vm6395, %v6389, %v6172
      %v6407 = vsel %vm6395, %v6390, %v6174
      %v6408 = vsel %vm6395, %v6391, %v6176
      %v6409 = vsel %vm6395, %v6392, %v6178
      %v6410 = vsel %vm6395, %v6393, %v6180
      %v6411 = vsel %vm6395, %v6394, %v6182
      %vm6412 = vcmask 785408
      %v6413 = vsel %vm6412, %v6396, %v6216
      %v6414 = vsel %vm6412, %v6397, %v6218
      %v6415 = vsel %vm6412, %v6398, %v6220
      %v6416 = vsel %vm6412, %v6399, %v6222
      %v6417 = vsel %vm6412, %v6400, %v6224
      %v6418 = vsel %vm6412, %v6401, %v6226
      %v6419 = vsel %vm6412, %v6402, %v6228
      %v6420 = vsel %vm6412, %v6403, %v6230
      %v6421 = vsel %vm6412, %v6404, %v6232
      %v6422 = vsel %vm6412, %v6405, %v6234
      %v6423 = vsel %vm6412, %v6406, %v6236
      %v6424 = vsel %vm6412, %v6407, %v6238
      %v6425 = vsel %vm6412, %v6408, %v6240
      %v6426 = vsel %vm6412, %v6409, %v6242
      %v6427 = vsel %vm6412, %v6410, %v6244
      %v6428 = vsel %vm6412, %v6411, %v6246
      %vm6429 = vcmask 916480
      %v6430 = vsel %vm6429, %v6413, %v6280
      %v6431 = vsel %vm6429, %v6414, %v6282
      %v6432 = vsel %vm6429, %v6415, %v6284
      %v6433 = vsel %vm6429, %v6416, %v6286
      %v6434 = vsel %vm6429, %v6417, %v6288
      %v6435 = vsel %vm6429, %v6418, %v6290
      %v6436 = vsel %vm6429, %v6419, %v6292
      %v6437 = vsel %vm6429, %v6420, %v6294
      %v6438 = vsel %vm6429, %v6421, %v6296
      %v6439 = vsel %vm6429, %v6422, %v6298
      %v6440 = vsel %vm6429, %v6423, %v6300
      %v6441 = vsel %vm6429, %v6424, %v6302
      %v6442 = vsel %vm6429, %v6425, %v6304
      %v6443 = vsel %vm6429, %v6426, %v6306
      %v6444 = vsel %vm6429, %v6427, %v6308
      %v6445 = vsel %vm6429, %v6428, %v6310
      %v6446 = vld [vmem:[%s4] sm:$0x1]
      %v6448 = vlaneseq
      %v6449 = vshrl.u32 %v6448, 7
      %v6450 = vsub.s32 0, %v6449
      %v6451 = vrot.slane %v6446, %v6450
      %v6453 = vadd.f32 %v6430, %v6451
      %v6454 = vadd.f32 %v6431, %v6451
      %v6455 = vadd.f32 %v6432, %v6451
      %v6456 = vadd.f32 %v6433, %v6451
      %v6457 = vadd.f32 %v6434, %v6451
      %v6458 = vadd.f32 %v6435, %v6451
      %v6459 = vadd.f32 %v6436, %v6451
      %v6460 = vadd.f32 %v6437, %v6451
      %v6461 = vadd.f32 %v6438, %v6451
      %v6462 = vadd.f32 %v6439, %v6451
      %v6463 = vadd.f32 %v6440, %v6451
      %v6464 = vadd.f32 %v6441, %v6451
      %v6465 = vadd.f32 %v6442, %v6451
      %v6466 = vadd.f32 %v6443, %v6451
      %v6467 = vadd.f32 %v6444, %v6451
      %v6468 = vadd.f32 %v6445, %v6451
      %v6469 = vmax.f32 %v6453, 0.0
      %v6470 = vmax.f32 %v6454, 0.0
      %v6471 = vmax.f32 %v6455, 0.0
      %v6472 = vmax.f32 %v6456, 0.0
      %v6473 = vmax.f32 %v6457, 0.0
      %v6474 = vmax.f32 %v6458, 0.0
      %v6475 = vmax.f32 %v6459, 0.0
      %v6476 = vmax.f32 %v6460, 0.0
      %v6477 = vmax.f32 %v6461, 0.0
      %v6478 = vmax.f32 %v6462, 0.0
      %v6479 = vmax.f32 %v6463, 0.0
      %v6480 = vmax.f32 %v6464, 0.0
      %v6481 = vmax.f32 %v6465, 0.0
      %v6482 = vmax.f32 %v6466, 0.0
      %v6483 = vmax.f32 %v6467, 0.0
      %v6484 = vmax.f32 %v6468, 0.0
      %v6485 = vpack.c.bf16 %v6470, %v6469
      %v6486 = vpack.c.bf16 %v6472, %v6471
      %v6487 = vpack.c.bf16 %v6474, %v6473
      %v6488 = vpack.c.bf16 %v6476, %v6475
      %v6489 = vpack.c.bf16 %v6478, %v6477
      %v6490 = vpack.c.bf16 %v6480, %v6479
      %v6491 = vpack.c.bf16 %v6482, %v6481
      %v6492 = vpack.c.bf16 %v6484, %v6483
      %v6501 = vunpack.c.l.b16 %v6485
      %v6502 = vunpack.c.h.b16 %v6485
      %v6503 = vunpack.c.l.b16 %v6486
      %v6504 = vunpack.c.h.b16 %v6486
      %v6505 = vunpack.c.l.b16 %v6487
      %v6506 = vunpack.c.h.b16 %v6487
      %v6507 = vunpack.c.l.b16 %v6488
      %v6508 = vunpack.c.h.b16 %v6488
      %v6509 = vunpack.c.l.b16 %v6489
      %v6510 = vunpack.c.h.b16 %v6489
      %v6511 = vunpack.c.l.b16 %v6490
      %v6512 = vunpack.c.h.b16 %v6490
      %v6513 = vunpack.c.l.b16 %v6491
      %v6514 = vunpack.c.h.b16 %v6491
      %v6515 = vunpack.c.l.b16 %v6492
      %v6516 = vunpack.c.h.b16 %v6492
      %v6517 = vpack.c.b16 %v6501, %v6501
      %v6518 = vpack.c.b16 %v6502, %v6502
      %v6519 = vpack.c.b16 %v6503, %v6503
      %v6520 = vpack.c.b16 %v6504, %v6504
      %v6521 = vpack.c.b16 %v6505, %v6505
      %v6522 = vpack.c.b16 %v6506, %v6506
      %v6523 = vpack.c.b16 %v6507, %v6507
      %v6524 = vpack.c.b16 %v6508, %v6508
      %v6525 = vpack.c.b16 %v6509, %v6509
      %v6526 = vpack.c.b16 %v6510, %v6510
      %v6527 = vpack.c.b16 %v6511, %v6511
      %v6528 = vpack.c.b16 %v6512, %v6512
      %v6529 = vpack.c.b16 %v6513, %v6513
      %v6530 = vpack.c.b16 %v6514, %v6514
      %v6531 = vpack.c.b16 %v6515, %v6515
      %v6532 = vpack.c.b16 %v6516, %v6516
      %6549 = vst [vmem:[%s251] sm:$0xf] %v6517
      %6550 = vst [vmem:[%s251 + $0x4] sm:$0xf] %v6518
      %6551 = vst [vmem:[%s251 + $0x8] sm:$0xf] %v6519
      %6552 = vst [vmem:[%s251 + $0xc] sm:$0xf] %v6520
      %6553 = vst [vmem:[%s251 + $0x10] sm:$0xf] %v6521
      %6554 = vst [vmem:[%s251 + $0x14] sm:$0xf] %v6522
      %6555 = vst [vmem:[%s251 + $0x18] sm:$0xf] %v6523
      %6556 = vst [vmem:[%s251 + $0x1c] sm:$0xf] %v6524
      %6557 = vst [vmem:[%s251 + $0x20] sm:$0xf] %v6525
      %6558 = vst [vmem:[%s251 + $0x24] sm:$0xf] %v6526
      %6559 = vst [vmem:[%s251 + $0x28] sm:$0xf] %v6527
      %6560 = vst [vmem:[%s251 + $0x2c] sm:$0xf] %v6528
      %6561 = vst [vmem:[%s251 + $0x30] sm:$0xf] %v6529
      %6562 = vst [vmem:[%s251 + $0x34] sm:$0xf] %v6530
      %6563 = vst [vmem:[%s251 + $0x38] sm:$0xf] %v6531
      %6564 = vst [vmem:[%s251 + $0x3c] sm:$0xf] %v6532
      %s6565 = smul.u32 16, %s16
      %p6566 = scmp.lt.s32.totalorder %s6565, 31
      %s6567 = scalar_select %p6566, %s6565, 31
      %s6568 = smul.addr %s6567, 4
      %s6569 = scalar_lea.vmem %s5, %s6568
      // Predicated region
      $region41: #{netgat_forward.5} parent=39 // pred_check
        %p6570 = pneg %p149
      $region42: #{netgat_forward.5} parent=39 // pred_check_branch
        %6572 = sbr.rel (%p6570) target = $region44
      $region43: #{netgat_forward.5} parent=39 // pred_region
        %s6573 = smul.u32 16, %s16
      $region44: #{netgat_forward.5} parent=39 // pred_fallthru
        _
    $region40: #{netgat_forward.5} parent=5 // pred_fallthru
      _
    %p6574 = scmp.le.s32.totalorder 2, %s11
    // Predicated region
    $region45: #{netgat_forward.5} parent=5 // pred_check
      %p6575 = pneg %p6574
    $region46: #{netgat_forward.5} parent=5 // pred_check_branch
      %6577 = sbr.rel (%p6575) target = $region48
    $region47: #{netgat_forward.5} parent=5 // pred_region
      %s6578 = ssub.s32 %s11, 2
      // Predicated region
      $region49: #{netgat_forward.5} parent=47 // pred_check
        %p6579 = pneg %p155
      $region50: #{netgat_forward.5} parent=47 // pred_check_branch
        %6581 = sbr.rel (%p6579) target = $region52
      $region51: #{netgat_forward.5} parent=47 // pred_region
        %s6582 = smul.u32 16, %s17
        %p6583 = scmp.lt.s32.totalorder %s6582, 31
        %s6584 = scalar_select %p6583, %s6582, 31
        %s6585 = smul.addr %s6584, 4
        %s6586 = scalar_lea.vmem %s5, %s6585
      $region52: #{netgat_forward.5} parent=47 // pred_fallthru
        _
    $region48: #{netgat_forward.5} parent=5 // pred_fallthru
      _
  $region6: #{netgat_forward.5} parent=0 // loop_footer
    %s15 = sadd.s32 1, %s11
  $region7: #{netgat_forward.5} parent=0 // loop_footer_branch
    %10 = sbr.rel target = $region3
  $region8: #{netgat_forward.5} parent=0 // loop_exit
    _

</llo_original>
